<compile_context>
chip_gen: v7x
topology: tpu7x:2x2x1
jax: 0.10.0
libtpu: 0.0.40
codegen_flags: <defaults>
</compile_context>

<pallas_src>
import jax
import jax.numpy as jnp
from jax.experimental import pallas as pl
from jax.experimental.pallas import tpu as pltpu

EPS = 1e-5                    # PyTorch BatchNorm2d default eps
CBAM_REDUCTION = 4
_SQRT_HALF = 0.7071067811865476


def _gelu(y):
    # exact (erf) GELU, PyTorch nn.GELU() default
    return 0.5 * y * (1.0 + jax.lax.erf(y * _SQRT_HALF))


def _zero_index_map(ndim):
    return lambda b: (0,) * ndim


# ---------------------------------------------------------------------------
# Kernel
# ---------------------------------------------------------------------------
def _make_kernel(treedef, H, W):
    HW = H * W

    def kernel(*refs):
        x_ref, o_ref = refs[0], refs[-1]
        p = jax.tree_util.tree_unflatten(treedef, refs[1:-1])

        # Column-index vector (1, HW), hoisted once and reused by every mask.
        pos = jax.lax.broadcasted_iota(jnp.int32, (1, HW), 1)
        if W & (W - 1) == 0:
            xpos = pos & (W - 1)
        else:  # not exercised in the demo (W=16)
            xpos = jax.lax.rem(pos, W)

        mask_cache = {}

        def col_mask(dx):
            if dx not in mask_cache:
                mask_cache[dx] = (xpos < W - dx) if dx > 0 else (xpos >= -dx)
            return mask_cache[dx]

        def shift_img(x, dy, dx):
            # out[c, y*W + u] = x_img[c, y + dy, u + dx], zero outside image.
            c = x.shape[0]
            s = dy * W + dx
            if s > 0:
                shifted = jnp.concatenate(
                    [x[:, s:], jnp.zeros((c, s), x.dtype)], axis=1)
            elif s < 0:
                shifted = jnp.concatenate(
                    [jnp.zeros((c, -s), x.dtype), x[:, :HW + s]], axis=1)
            else:
                shifted = x
            if dx != 0:
                shifted = jnp.where(col_mask(dx), shifted, 0.0)
            return shifted

        def conv3x3(x, w_ref, dilation):
            # 'same' dilated 3x3 conv: x (Cin, HW), w_ref (3, Cout, 3*Cin).
            # One (3*Cin, HW) column-shifted stack, 3 MXU matmuls (one per
            # ky), then a row shift of each partial sum.
            cout = w_ref.shape[1]
            offs = (-dilation, 0, dilation)
            stack = jnp.concatenate(
                [shift_img(x, 0, dx) for dx in offs], axis=0)     # (3Cin, HW)
            acc = jnp.zeros((cout, HW), jnp.float32)
            for ky in range(3):
                part = jnp.dot(w_ref[ky], stack,
                               preferred_element_type=jnp.float32)
                acc = acc + shift_img(part, offs[ky], 0)
            return acc

        def cbam(xc, cp):
            # ---- channel attention: shared MLP over global avg/max pool ---
            avg = jnp.mean(xc, axis=1, keepdims=True)             # (C, 1)
            mx = jnp.max(xc, axis=1, keepdims=True)               # (C, 1)
            stats = jnp.concatenate([avg, mx], axis=1)            # (C, 2)
            h = jnp.maximum(
                jnp.dot(cp["fc1"][...], stats,
                        preferred_element_type=jnp.float32), 0.0)
            h = jnp.dot(cp["fc2"][...], h,
                        preferred_element_type=jnp.float32)       # (C, 2)
            ch_att = jax.nn.sigmoid(h[:, 0:1] + h[:, 1:2])        # (C, 1)
            xc = xc * ch_att
            # ---- spatial attention: 7x7 conv over [mean_c, max_c], VPU ----
            mean_c = jnp.mean(xc, axis=0, keepdims=True)          # (1, HW)
            max_c = jnp.max(xc, axis=0, keepdims=True)            # (1, HW)
            stack = jnp.concatenate(
                [shift_img(mean_c, 0, dx) for dx in range(-3, 4)]
                + [shift_img(max_c, 0, dx) for dx in range(-3, 4)],
                axis=0)                                           # (14, HW)
            wsp = cp["wsp"][...]                                  # (14, 7)
            acc = jnp.zeros((1, HW), jnp.float32)
            for ky in range(7):
                row = jnp.sum(stack * wsp[:, ky:ky + 1], axis=0,
                              keepdims=True)                      # (1, HW)
                acc = acc + shift_img(row, ky - 3, 0)
            return xc * jax.nn.sigmoid(acc)

        def block(x, bp, dilation):
            dc = x.shape[0] // 2                                  # n_div = 2
            y1 = conv3x3(x[:dc, :], bp["wp"], dilation)           # PConv half
            xc = jnp.concatenate([y1, x[dc:, :]], axis=0)
            xc = cbam(xc, bp["cbam"])
            y = jnp.dot(bp["wc2"][...], xc,
                        preferred_element_type=jnp.float32)       # 1x1, C->2C
            y = _gelu(y + bp["bc2"][...])                         # BN + GELU
            y = jnp.dot(bp["wc3"][...], y,
                        preferred_element_type=jnp.float32)       # 1x1, 2C->C
            return x + y                                          # residual

        def decoder(a, b, dp, dilation):
            xcat = jnp.concatenate([a, b], axis=0)                # torch.cat
            y = conv3x3(xcat, dp["w"], dilation)
            return _gelu(y + dp["b"][...])                        # BN + GELU

        # ----------------------------- forward ----------------------------
        x = x_ref[0]                                              # (Cin, HW)
        hxin = _gelu(conv3x3(x, p["in"]["w"], 1) + p["in"]["b"][...])

        hx1 = block(hxin, p["b1"], 1)
        hx2 = block(hx1, p["b2"], 2)
        hx3 = block(hx2, p["b3"], 4)
        hx4 = block(hx3, p["b4"], 8)

        hx3d = decoder(hx4, hx3, p["d3"], 4)
        hx2d = decoder(hx3d, hx2, p["d2"], 2)
        hx1d = decoder(hx2d, hx1, p["d1"], 1)

        o_ref[0] = hx1d + hxin

    return kernel


# ---------------------------------------------------------------------------
# Wrapper-side parameter preparation (layout + BN folding; one-time, eager)
# ---------------------------------------------------------------------------
def _prepare_kernel_params(params):
    def bn_affine(bn):
        s = bn["gamma"] * jax.lax.rsqrt(bn["var"] + EPS)
        b = bn["beta"] - bn["mean"] * s
        return s, b

    def conv3_layout(w):
        # (Cout, Cin, 3, 3) -> (3, Cout, 3*Cin):
        #   wk[ky][co, kx*Cin + ci] = w[co, ci, ky, kx]
        cout, cin = w.shape[0], w.shape[1]
        return jnp.transpose(w, (2, 0, 3, 1)).reshape(3, cout, 3 * cin)

    def pwconv3(q):
        # 3x3 conv + BN + GELU: fold BN scale into the weights.
        s, b = bn_affine(q["bn"])
        w = q["w"] * s[:, None, None, None]
        return {"w": conv3_layout(w), "b": b[:, None]}

    def cbam_p(q):
        return {
            "fc1": q["fc1"][:, :, 0, 0],
            "fc2": q["fc2"][:, :, 0, 0],
            # (1, 2, 7, 7) -> (14, 7): rows 0..6 = mean-map weights for
            # kx = -3..3, rows 7..13 = max-map weights; column = ky.
            "wsp": jnp.transpose(q["wsp"][0], (0, 2, 1)).reshape(14, 7),
        }

    def block_p(q):
        s2, b2 = bn_affine(q["bn2"])
        return {
            "wp": conv3_layout(q["wp"]),                  # PConv (no BN)
            "cbam": cbam_p(q["cbam"]),
            "wc2": q["wc2"][:, :, 0, 0] * s2[:, None],    # BN scale folded
            "bc2": b2[:, None],
            "wc3": q["wc3"][:, :, 0, 0],                  # act=None: Identity
        }

    kp = {"in": pwconv3(params["in"])}
    for name in ("b1", "b2", "b3", "b4"):
        kp[name] = block_p(params[name])
    for name in ("d3", "d2", "d1"):
        kp[name] = pwconv3(params[name])
    return kp


def build_forward(params, H, W):
    mid_ch = params["in"]["w"].shape[0]
    in_ch = params["in"]["w"].shape[1]
    HW = H * W

    kparams = _prepare_kernel_params(params)
    leaves, treedef = jax.tree_util.tree_flatten(kparams)
    kernel = _make_kernel(treedef, H, W)

    leaf_specs = [pl.BlockSpec(l.shape, _zero_index_map(l.ndim))
                  for l in leaves]

    def forward(x_nchw):
        B = x_nchw.shape[0]
        x = x_nchw.reshape(B, in_ch, HW).astype(jnp.float32)
        out = pl.pallas_call(
            kernel,
            out_shape=jax.ShapeDtypeStruct((B, mid_ch, HW), jnp.float32),
            grid=(B,),
            in_specs=[pl.BlockSpec((1, in_ch, HW), lambda b: (b, 0, 0))]
            + leaf_specs,
            out_specs=pl.BlockSpec((1, mid_ch, HW), lambda b: (b, 0, 0)),
            compiler_params=pltpu.CompilerParams(
                dimension_semantics=("parallel",)),
        )(x, *leaves)
        return out.reshape(B, mid_ch, H, W)

    return forward


# ---------------------------------------------------------------------------
# Deterministic parameter initialization (synthetic, PyTorch layout)
# ---------------------------------------------------------------------------
def init_params(key, in_ch=3, mid_ch=12):
    keys = iter(jax.random.split(key, 64))

    def conv_w(cout, cin, k):
        return 0.1 * jax.random.normal(next(keys), (cout, cin, k, k),
                                       jnp.float32)

    def bn(c):
        # inference-mode BatchNorm2d stats
        return {"gamma": jnp.ones((c,), jnp.float32),
                "beta": jnp.zeros((c,), jnp.float32),
                "mean": jnp.zeros((c,), jnp.float32),
                "var": jnp.ones((c,), jnp.float32)}

    def cbam(c):
        hid = max(c // CBAM_REDUCTION, 1)
        return {"fc1": conv_w(hid, c, 1),
                "fc2": conv_w(c, hid, 1),
                "wsp": conv_w(1, 2, 7)}

    def block(c, mid=2):
        return {"wp": conv_w(c // 2, c // 2, 3),
                "cbam": cbam(c),
                "wc2": conv_w(c * mid, c, 1), "bn2": bn(c * mid),
                "wc3": conv_w(c, c * mid, 1)}

    def pwconv3(cout, cin):
        return {"w": conv_w(cout, cin, 3), "bn": bn(cout)}

    params = {"in": pwconv3(mid_ch, in_ch)}
    for name in ("b1", "b2", "b3", "b4"):
        params[name] = block(mid_ch)
    for name in ("d3", "d2", "d1"):
        params[name] = pwconv3(mid_ch, mid_ch * 2)
    return params


# ---------------------------------------------------------------------------
if __name__ == "__main__":
    key = jax.random.PRNGKey(0)
    kx, kp = jax.random.split(key)

    B, IN_CH, MID_CH, H, W = 2, 3, 12, 16, 16
    x_nchw = jax.random.normal(kx, (B, IN_CH, H, W), jnp.float32)
    params = init_params(kp, in_ch=IN_CH, mid_ch=MID_CH)

    fwd = jax.jit(build_forward(params, H, W))
    out = jax.block_until_ready(fwd(x_nchw))

    assert out.shape == (B, MID_CH, H, W), out.shape
    assert bool(jnp.all(jnp.isfinite(out)))
    print("KERNEL_OK")
</pallas_src>

<mosaic_0001>
module attributes {stable_mosaic.version = 11 : i64} {
  func.func @kernel(%arg0: i32, %arg1: memref<1x3x256xf32, #tpu.memory_space<vmem>>, %arg2: memref<24x1xf32, #tpu.memory_space<vmem>>, %arg3: memref<3x12xf32, #tpu.memory_space<vmem>>, %arg4: memref<12x3xf32, #tpu.memory_space<vmem>>, %arg5: memref<14x7xf32, #tpu.memory_space<vmem>>, %arg6: memref<24x12xf32, #tpu.memory_space<vmem>>, %arg7: memref<12x24xf32, #tpu.memory_space<vmem>>, %arg8: memref<3x6x18xf32, #tpu.memory_space<vmem>>, %arg9: memref<24x1xf32, #tpu.memory_space<vmem>>, %arg10: memref<3x12xf32, #tpu.memory_space<vmem>>, %arg11: memref<12x3xf32, #tpu.memory_space<vmem>>, %arg12: memref<14x7xf32, #tpu.memory_space<vmem>>, %arg13: memref<24x12xf32, #tpu.memory_space<vmem>>, %arg14: memref<12x24xf32, #tpu.memory_space<vmem>>, %arg15: memref<3x6x18xf32, #tpu.memory_space<vmem>>, %arg16: memref<24x1xf32, #tpu.memory_space<vmem>>, %arg17: memref<3x12xf32, #tpu.memory_space<vmem>>, %arg18: memref<12x3xf32, #tpu.memory_space<vmem>>, %arg19: memref<14x7xf32, #tpu.memory_space<vmem>>, %arg20: memref<24x12xf32, #tpu.memory_space<vmem>>, %arg21: memref<12x24xf32, #tpu.memory_space<vmem>>, %arg22: memref<3x6x18xf32, #tpu.memory_space<vmem>>, %arg23: memref<24x1xf32, #tpu.memory_space<vmem>>, %arg24: memref<3x12xf32, #tpu.memory_space<vmem>>, %arg25: memref<12x3xf32, #tpu.memory_space<vmem>>, %arg26: memref<14x7xf32, #tpu.memory_space<vmem>>, %arg27: memref<24x12xf32, #tpu.memory_space<vmem>>, %arg28: memref<12x24xf32, #tpu.memory_space<vmem>>, %arg29: memref<3x6x18xf32, #tpu.memory_space<vmem>>, %arg30: memref<12x1xf32, #tpu.memory_space<vmem>>, %arg31: memref<3x12x72xf32, #tpu.memory_space<vmem>>, %arg32: memref<12x1xf32, #tpu.memory_space<vmem>>, %arg33: memref<3x12x72xf32, #tpu.memory_space<vmem>>, %arg34: memref<12x1xf32, #tpu.memory_space<vmem>>, %arg35: memref<3x12x72xf32, #tpu.memory_space<vmem>>, %arg36: memref<12x1xf32, #tpu.memory_space<vmem>>, %arg37: memref<3x12x9xf32, #tpu.memory_space<vmem>>, %arg38: memref<1x12x256xf32, #tpu.memory_space<vmem>>) attributes {dimension_semantics = [#tpu.dimension_semantics<parallel>], iteration_bounds = array<i64: 2>, scalar_prefetch = 0 : i64, scratch_operands = 0 : i64, tpu.core_type = #tpu.core_type<tc>, window_params = [{transform_indices = @transform_0, window_bounds = array<i64: 1, 3, 256>}, {pipeline_mode = #tpu.pipeline_mode<synchronous>, transform_indices = @transform_1, window_bounds = array<i64: 24, 1>}, {pipeline_mode = #tpu.pipeline_mode<synchronous>, transform_indices = @transform_2, window_bounds = array<i64: 3, 12>}, {pipeline_mode = #tpu.pipeline_mode<synchronous>, transform_indices = @transform_3, window_bounds = array<i64: 12, 3>}, {pipeline_mode = #tpu.pipeline_mode<synchronous>, transform_indices = @transform_4, window_bounds = array<i64: 14, 7>}, {pipeline_mode = #tpu.pipeline_mode<synchronous>, transform_indices = @transform_5, window_bounds = array<i64: 24, 12>}, {pipeline_mode = #tpu.pipeline_mode<synchronous>, transform_indices = @transform_6, window_bounds = array<i64: 12, 24>}, {pipeline_mode = #tpu.pipeline_mode<synchronous>, transform_indices = @transform_7, window_bounds = array<i64: 3, 6, 18>}, {pipeline_mode = #tpu.pipeline_mode<synchronous>, transform_indices = @transform_8, window_bounds = array<i64: 24, 1>}, {pipeline_mode = #tpu.pipeline_mode<synchronous>, transform_indices = @transform_9, window_bounds = array<i64: 3, 12>}, {pipeline_mode = #tpu.pipeline_mode<synchronous>, transform_indices = @transform_10, window_bounds = array<i64: 12, 3>}, {pipeline_mode = #tpu.pipeline_mode<synchronous>, transform_indices = @transform_11, window_bounds = array<i64: 14, 7>}, {pipeline_mode = #tpu.pipeline_mode<synchronous>, transform_indices = @transform_12, window_bounds = array<i64: 24, 12>}, {pipeline_mode = #tpu.pipeline_mode<synchronous>, transform_indices = @transform_13, window_bounds = array<i64: 12, 24>}, {pipeline_mode = #tpu.pipeline_mode<synchronous>, transform_indices = @transform_14, window_bounds = array<i64: 3, 6, 18>}, {pipeline_mode = #tpu.pipeline_mode<synchronous>, transform_indices = @transform_15, window_bounds = array<i64: 24, 1>}, {pipeline_mode = #tpu.pipeline_mode<synchronous>, transform_indices = @transform_16, window_bounds = array<i64: 3, 12>}, {pipeline_mode = #tpu.pipeline_mode<synchronous>, transform_indices = @transform_17, window_bounds = array<i64: 12, 3>}, {pipeline_mode = #tpu.pipeline_mode<synchronous>, transform_indices = @transform_18, window_bounds = array<i64: 14, 7>}, {pipeline_mode = #tpu.pipeline_mode<synchronous>, transform_indices = @transform_19, window_bounds = array<i64: 24, 12>}, {pipeline_mode = #tpu.pipeline_mode<synchronous>, transform_indices = @transform_20, window_bounds = array<i64: 12, 24>}, {pipeline_mode = #tpu.pipeline_mode<synchronous>, transform_indices = @transform_21, window_bounds = array<i64: 3, 6, 18>}, {pipeline_mode = #tpu.pipeline_mode<synchronous>, transform_indices = @transform_22, window_bounds = array<i64: 24, 1>}, {pipeline_mode = #tpu.pipeline_mode<synchronous>, transform_indices = @transform_23, window_bounds = array<i64: 3, 12>}, {pipeline_mode = #tpu.pipeline_mode<synchronous>, transform_indices = @transform_24, window_bounds = array<i64: 12, 3>}, {pipeline_mode = #tpu.pipeline_mode<synchronous>, transform_indices = @transform_25, window_bounds = array<i64: 14, 7>}, {pipeline_mode = #tpu.pipeline_mode<synchronous>, transform_indices = @transform_26, window_bounds = array<i64: 24, 12>}, {pipeline_mode = #tpu.pipeline_mode<synchronous>, transform_indices = @transform_27, window_bounds = array<i64: 12, 24>}, {pipeline_mode = #tpu.pipeline_mode<synchronous>, transform_indices = @transform_28, window_bounds = array<i64: 3, 6, 18>}, {pipeline_mode = #tpu.pipeline_mode<synchronous>, transform_indices = @transform_29, window_bounds = array<i64: 12, 1>}, {pipeline_mode = #tpu.pipeline_mode<synchronous>, transform_indices = @transform_30, window_bounds = array<i64: 3, 12, 72>}, {pipeline_mode = #tpu.pipeline_mode<synchronous>, transform_indices = @transform_31, window_bounds = array<i64: 12, 1>}, {pipeline_mode = #tpu.pipeline_mode<synchronous>, transform_indices = @transform_32, window_bounds = array<i64: 3, 12, 72>}, {pipeline_mode = #tpu.pipeline_mode<synchronous>, transform_indices = @transform_33, window_bounds = array<i64: 12, 1>}, {pipeline_mode = #tpu.pipeline_mode<synchronous>, transform_indices = @transform_34, window_bounds = array<i64: 3, 12, 72>}, {pipeline_mode = #tpu.pipeline_mode<synchronous>, transform_indices = @transform_35, window_bounds = array<i64: 12, 1>}, {pipeline_mode = #tpu.pipeline_mode<synchronous>, transform_indices = @transform_36, window_bounds = array<i64: 3, 12, 9>}, {transform_indices = @transform_37, window_bounds = array<i64: 1, 12, 256>}]} {
    %0 = tpu.iota {dimensions = array<i32: 1>} : vector<1x256xi32>
    %c15_i32 = arith.constant 15 : i32
    %1 = vector.broadcast %c15_i32 : i32 to vector<1x256xi32>
    %2 = arith.andi %0, %1 : vector<1x256xi32>
    %c0 = arith.constant 0 : index
    %c0_0 = arith.constant 0 : index
    %c0_1 = arith.constant 0 : index
    %3 = vector.load %arg1[%c0, %c0_0, %c0_1] : memref<1x3x256xf32, #tpu.memory_space<vmem>>, vector<1x3x256xf32>
    %4 = vector.shape_cast %3 : vector<1x3x256xf32> to vector<3x256xf32>
    %cst = arith.constant 0.000000e+00 : f32
    %5 = vector.broadcast %cst : f32 to vector<3x1xf32>
    %6 = vector.extract_strided_slice %4 {offsets = [0, 0], sizes = [3, 255], strides = [1, 1]} : vector<3x256xf32> to vector<3x255xf32>
    %7 = tpu.concatenate %5, %6 in 1 : vector<3x1xf32>, vector<3x255xf32> -> vector<3x256xf32>
    %c1_i32 = arith.constant 1 : i32
    %8 = vector.broadcast %c1_i32 : i32 to vector<1x256xi32>
    %9 = arith.cmpi sge, %2, %8 : vector<1x256xi32>
    %cst_2 = arith.constant 0.000000e+00 : f32
    %10 = vector.shape_cast %9 : vector<1x256xi1> to vector<1x256xi1>
    %11 = vector.broadcast %10 : vector<1x256xi1> to vector<3x256xi1>
    %12 = vector.broadcast %cst_2 : f32 to vector<3x256xf32>
    %13 = arith.select %11, %7, %12 : vector<3x256xi1>, vector<3x256xf32>
    %14 = vector.extract_strided_slice %4 {offsets = [0, 1], sizes = [3, 255], strides = [1, 1]} : vector<3x256xf32> to vector<3x255xf32>
    %cst_3 = arith.constant 0.000000e+00 : f32
    %15 = vector.broadcast %cst_3 : f32 to vector<3x1xf32>
    %16 = tpu.concatenate %14, %15 in 1 : vector<3x255xf32>, vector<3x1xf32> -> vector<3x256xf32>
    %c15_i32_4 = arith.constant 15 : i32
    %17 = vector.broadcast %c15_i32_4 : i32 to vector<1x256xi32>
    %18 = arith.cmpi slt, %2, %17 : vector<1x256xi32>
    %cst_5 = arith.constant 0.000000e+00 : f32
    %19 = vector.shape_cast %18 : vector<1x256xi1> to vector<1x256xi1>
    %20 = vector.broadcast %19 : vector<1x256xi1> to vector<3x256xi1>
    %21 = vector.broadcast %cst_5 : f32 to vector<3x256xf32>
    %22 = arith.select %20, %16, %21 : vector<3x256xi1>, vector<3x256xf32>
    %23 = tpu.concatenate %13, %4, %22 in 0 : vector<3x256xf32>, vector<3x256xf32>, vector<3x256xf32> -> vector<9x256xf32>
    %cst_6 = arith.constant 0.000000e+00 : f32
    %24 = vector.broadcast %cst_6 : f32 to vector<12x256xf32>
    %c0_7 = arith.constant 0 : index
    %c0_8 = arith.constant 0 : index
    %c0_9 = arith.constant 0 : index
    %25 = vector.load %arg37[%c0_7, %c0_8, %c0_9] : memref<3x12x9xf32, #tpu.memory_space<vmem>>, vector<1x12x9xf32>
    %26 = vector.shape_cast %25 : vector<1x12x9xf32> to vector<12x9xf32>
    %cst_10 = arith.constant dense<0.000000e+00> : vector<12x256xf32>
    %27 = tpu.matmul %26, %23, %cst_10 {dimension_numbers = #tpu.dot_dimension_numbers<[1], [0], [0], [1], [0, 0, 1, 1], [], []>} : vector<12x9xf32>, vector<9x256xf32>, vector<12x256xf32> -> vector<12x256xf32>
    %cst_11 = arith.constant 0.000000e+00 : f32
    %28 = vector.broadcast %cst_11 : f32 to vector<12x16xf32>
    %29 = vector.extract_strided_slice %27 {offsets = [0, 0], sizes = [12, 240], strides = [1, 1]} : vector<12x256xf32> to vector<12x240xf32>
    %30 = tpu.concatenate %28, %29 in 1 : vector<12x16xf32>, vector<12x240xf32> -> vector<12x256xf32>
    %31 = arith.addf %24, %30 : vector<12x256xf32>
    %c1 = arith.constant 1 : index
    %c0_12 = arith.constant 0 : index
    %c0_13 = arith.constant 0 : index
    %32 = vector.load %arg37[%c1, %c0_12, %c0_13] : memref<3x12x9xf32, #tpu.memory_space<vmem>>, vector<1x12x9xf32>
    %33 = vector.shape_cast %32 : vector<1x12x9xf32> to vector<12x9xf32>
    %cst_14 = arith.constant dense<0.000000e+00> : vector<12x256xf32>
    %34 = tpu.matmul %33, %23, %cst_14 {dimension_numbers = #tpu.dot_dimension_numbers<[1], [0], [0], [1], [0, 0, 1, 1], [], []>} : vector<12x9xf32>, vector<9x256xf32>, vector<12x256xf32> -> vector<12x256xf32>
    %35 = arith.addf %31, %34 : vector<12x256xf32>
    %c2 = arith.constant 2 : index
    %c0_15 = arith.constant 0 : index
    %c0_16 = arith.constant 0 : index
    %36 = vector.load %arg37[%c2, %c0_15, %c0_16] : memref<3x12x9xf32, #tpu.memory_space<vmem>>, vector<1x12x9xf32>
    %37 = vector.shape_cast %36 : vector<1x12x9xf32> to vector<12x9xf32>
    %cst_17 = arith.constant dense<0.000000e+00> : vector<12x256xf32>
    %38 = tpu.matmul %37, %23, %cst_17 {dimension_numbers = #tpu.dot_dimension_numbers<[1], [0], [0], [1], [0, 0, 1, 1], [], []>} : vector<12x9xf32>, vector<9x256xf32>, vector<12x256xf32> -> vector<12x256xf32>
    %39 = vector.extract_strided_slice %38 {offsets = [0, 16], sizes = [12, 240], strides = [1, 1]} : vector<12x256xf32> to vector<12x240xf32>
    %cst_18 = arith.constant 0.000000e+00 : f32
    %40 = vector.broadcast %cst_18 : f32 to vector<12x16xf32>
    %41 = tpu.concatenate %39, %40 in 1 : vector<12x240xf32>, vector<12x16xf32> -> vector<12x256xf32>
    %42 = arith.addf %35, %41 : vector<12x256xf32>
    %c0_19 = arith.constant 0 : index
    %c0_20 = arith.constant 0 : index
    %43 = vector.load %arg36[%c0_19, %c0_20] : memref<12x1xf32, #tpu.memory_space<vmem>>, vector<12x1xf32>
    %44 = vector.broadcast %43 : vector<12x1xf32> to vector<12x256xf32>
    %45 = arith.addf %42, %44 : vector<12x256xf32>
    %cst_21 = arith.constant 5.000000e-01 : f32
    %46 = vector.broadcast %cst_21 : f32 to vector<12x256xf32>
    %47 = arith.mulf %46, %45 : vector<12x256xf32>
    %cst_22 = arith.constant 0.707106769 : f32
    %48 = vector.broadcast %cst_22 : f32 to vector<12x256xf32>
    %49 = arith.mulf %45, %48 : vector<12x256xf32>
    %50 = math.erf %49 : vector<12x256xf32>
    %cst_23 = arith.constant 1.000000e+00 : f32
    %51 = vector.broadcast %cst_23 : f32 to vector<12x256xf32>
    %52 = arith.addf %51, %50 : vector<12x256xf32>
    %53 = arith.mulf %47, %52 : vector<12x256xf32>
    %54 = vector.extract_strided_slice %53 {offsets = [0, 0], sizes = [6, 256], strides = [1, 1]} : vector<12x256xf32> to vector<6x256xf32>
    %cst_24 = arith.constant 0.000000e+00 : f32
    %55 = vector.broadcast %cst_24 : f32 to vector<6x1xf32>
    %56 = vector.extract_strided_slice %54 {offsets = [0, 0], sizes = [6, 255], strides = [1, 1]} : vector<6x256xf32> to vector<6x255xf32>
    %57 = tpu.concatenate %55, %56 in 1 : vector<6x1xf32>, vector<6x255xf32> -> vector<6x256xf32>
    %cst_25 = arith.constant 0.000000e+00 : f32
    %58 = vector.shape_cast %9 : vector<1x256xi1> to vector<1x256xi1>
    %59 = vector.broadcast %58 : vector<1x256xi1> to vector<6x256xi1>
    %60 = vector.broadcast %cst_25 : f32 to vector<6x256xf32>
    %61 = arith.select %59, %57, %60 : vector<6x256xi1>, vector<6x256xf32>
    %62 = vector.extract_strided_slice %54 {offsets = [0, 1], sizes = [6, 255], strides = [1, 1]} : vector<6x256xf32> to vector<6x255xf32>
    %cst_26 = arith.constant 0.000000e+00 : f32
    %63 = vector.broadcast %cst_26 : f32 to vector<6x1xf32>
    %64 = tpu.concatenate %62, %63 in 1 : vector<6x255xf32>, vector<6x1xf32> -> vector<6x256xf32>
    %cst_27 = arith.constant 0.000000e+00 : f32
    %65 = vector.shape_cast %18 : vector<1x256xi1> to vector<1x256xi1>
    %66 = vector.broadcast %65 : vector<1x256xi1> to vector<6x256xi1>
    %67 = vector.broadcast %cst_27 : f32 to vector<6x256xf32>
    %68 = arith.select %66, %64, %67 : vector<6x256xi1>, vector<6x256xf32>
    %69 = tpu.concatenate %61, %54, %68 in 0 : vector<6x256xf32>, vector<6x256xf32>, vector<6x256xf32> -> vector<18x256xf32>
    %cst_28 = arith.constant 0.000000e+00 : f32
    %70 = vector.broadcast %cst_28 : f32 to vector<6x256xf32>
    %c0_29 = arith.constant 0 : index
    %c0_30 = arith.constant 0 : index
    %c0_31 = arith.constant 0 : index
    %71 = vector.load %arg8[%c0_29, %c0_30, %c0_31] : memref<3x6x18xf32, #tpu.memory_space<vmem>>, vector<1x6x18xf32>
    %72 = vector.shape_cast %71 : vector<1x6x18xf32> to vector<6x18xf32>
    %cst_32 = arith.constant dense<0.000000e+00> : vector<6x256xf32>
    %73 = tpu.matmul %72, %69, %cst_32 {dimension_numbers = #tpu.dot_dimension_numbers<[1], [0], [0], [1], [0, 0, 1, 1], [], []>} : vector<6x18xf32>, vector<18x256xf32>, vector<6x256xf32> -> vector<6x256xf32>
    %cst_33 = arith.constant 0.000000e+00 : f32
    %74 = vector.broadcast %cst_33 : f32 to vector<6x16xf32>
    %75 = vector.extract_strided_slice %73 {offsets = [0, 0], sizes = [6, 240], strides = [1, 1]} : vector<6x256xf32> to vector<6x240xf32>
    %76 = tpu.concatenate %74, %75 in 1 : vector<6x16xf32>, vector<6x240xf32> -> vector<6x256xf32>
    %77 = arith.addf %70, %76 : vector<6x256xf32>
    %c1_34 = arith.constant 1 : index
    %c0_35 = arith.constant 0 : index
    %c0_36 = arith.constant 0 : index
    %78 = vector.load %arg8[%c1_34, %c0_35, %c0_36] : memref<3x6x18xf32, #tpu.memory_space<vmem>>, vector<1x6x18xf32>
    %79 = vector.shape_cast %78 : vector<1x6x18xf32> to vector<6x18xf32>
    %cst_37 = arith.constant dense<0.000000e+00> : vector<6x256xf32>
    %80 = tpu.matmul %79, %69, %cst_37 {dimension_numbers = #tpu.dot_dimension_numbers<[1], [0], [0], [1], [0, 0, 1, 1], [], []>} : vector<6x18xf32>, vector<18x256xf32>, vector<6x256xf32> -> vector<6x256xf32>
    %81 = arith.addf %77, %80 : vector<6x256xf32>
    %c2_38 = arith.constant 2 : index
    %c0_39 = arith.constant 0 : index
    %c0_40 = arith.constant 0 : index
    %82 = vector.load %arg8[%c2_38, %c0_39, %c0_40] : memref<3x6x18xf32, #tpu.memory_space<vmem>>, vector<1x6x18xf32>
    %83 = vector.shape_cast %82 : vector<1x6x18xf32> to vector<6x18xf32>
    %cst_41 = arith.constant dense<0.000000e+00> : vector<6x256xf32>
    %84 = tpu.matmul %83, %69, %cst_41 {dimension_numbers = #tpu.dot_dimension_numbers<[1], [0], [0], [1], [0, 0, 1, 1], [], []>} : vector<6x18xf32>, vector<18x256xf32>, vector<6x256xf32> -> vector<6x256xf32>
    %85 = vector.extract_strided_slice %84 {offsets = [0, 16], sizes = [6, 240], strides = [1, 1]} : vector<6x256xf32> to vector<6x240xf32>
    %cst_42 = arith.constant 0.000000e+00 : f32
    %86 = vector.broadcast %cst_42 : f32 to vector<6x16xf32>
    %87 = tpu.concatenate %85, %86 in 1 : vector<6x240xf32>, vector<6x16xf32> -> vector<6x256xf32>
    %88 = arith.addf %81, %87 : vector<6x256xf32>
    %89 = vector.extract_strided_slice %53 {offsets = [6, 0], sizes = [6, 256], strides = [1, 1]} : vector<12x256xf32> to vector<6x256xf32>
    %90 = tpu.concatenate %88, %89 in 0 : vector<6x256xf32>, vector<6x256xf32> -> vector<12x256xf32>
    %cst_43 = arith.constant dense<0.000000e+00> : vector<12xf32>
    %91 = vector.multi_reduction <add>, %90, %cst_43 [1] : vector<12x256xf32> to vector<12xf32>
    %92 = vector.shape_cast %91 : vector<12xf32> to vector<12x1xf32>
    %cst_44 = arith.constant 2.560000e+02 : f32
    %93 = vector.broadcast %cst_44 : f32 to vector<12x1xf32>
    %94 = arith.divf %92, %93 : vector<12x1xf32>
    %cst_45 = arith.constant dense<0xFF800000> : vector<12xf32>
    %95 = vector.multi_reduction <maximumf>, %90, %cst_45 [1] : vector<12x256xf32> to vector<12xf32>
    %96 = vector.shape_cast %95 : vector<12xf32> to vector<12x1xf32>
    %97 = tpu.concatenate %94, %96 in 1 : vector<12x1xf32>, vector<12x1xf32> -> vector<12x2xf32>
    %c0_46 = arith.constant 0 : index
    %c0_47 = arith.constant 0 : index
    %98 = vector.load %arg3[%c0_46, %c0_47] : memref<3x12xf32, #tpu.memory_space<vmem>>, vector<3x12xf32>
    %cst_48 = arith.constant dense<0.000000e+00> : vector<3x2xf32>
    %99 = tpu.matmul %98, %97, %cst_48 {dimension_numbers = #tpu.dot_dimension_numbers<[1], [0], [0], [1], [0, 0, 1, 1], [], []>} : vector<3x12xf32>, vector<12x2xf32>, vector<3x2xf32> -> vector<3x2xf32>
    %cst_49 = arith.constant 0.000000e+00 : f32
    %100 = vector.broadcast %cst_49 : f32 to vector<3x2xf32>
    %101 = arith.maximumf %99, %100 : vector<3x2xf32>
    %c0_50 = arith.constant 0 : index
    %c0_51 = arith.constant 0 : index
    %102 = vector.load %arg4[%c0_50, %c0_51] : memref<12x3xf32, #tpu.memory_space<vmem>>, vector<12x3xf32>
    %cst_52 = arith.constant dense<0.000000e+00> : vector<12x2xf32>
    %103 = tpu.matmul %102, %101, %cst_52 {dimension_numbers = #tpu.dot_dimension_numbers<[1], [0], [0], [1], [0, 0, 1, 1], [], []>} : vector<12x3xf32>, vector<3x2xf32>, vector<12x2xf32> -> vector<12x2xf32>
    %104 = vector.extract_strided_slice %103 {offsets = [0, 0], sizes = [12, 1], strides = [1, 1]} : vector<12x2xf32> to vector<12x1xf32>
    %105 = vector.extract_strided_slice %103 {offsets = [0, 1], sizes = [12, 1], strides = [1, 1]} : vector<12x2xf32> to vector<12x1xf32>
    %106 = arith.addf %104, %105 : vector<12x1xf32>
    %107 = arith.negf %106 : vector<12x1xf32>
    %108 = math.exp %107 : vector<12x1xf32>
    %cst_53 = arith.constant 1.000000e+00 : f32
    %109 = vector.broadcast %cst_53 : f32 to vector<12x1xf32>
    %110 = arith.addf %109, %108 : vector<12x1xf32>
    %111 = arith.divf %109, %110 : vector<12x1xf32>
    %112 = vector.broadcast %111 : vector<12x1xf32> to vector<12x256xf32>
    %113 = arith.mulf %90, %112 : vector<12x256xf32>
    %cst_54 = arith.constant dense<0.000000e+00> : vector<256xf32>
    %114 = vector.multi_reduction <add>, %113, %cst_54 [0] : vector<12x256xf32> to vector<256xf32>
    %115 = vector.shape_cast %114 : vector<256xf32> to vector<1x256xf32>
    %cst_55 = arith.constant 1.200000e+01 : f32
    %116 = vector.broadcast %cst_55 : f32 to vector<1x256xf32>
    %117 = arith.divf %115, %116 : vector<1x256xf32>
    %cst_56 = arith.constant dense<0xFF800000> : vector<256xf32>
    %118 = vector.multi_reduction <maximumf>, %113, %cst_56 [0] : vector<12x256xf32> to vector<256xf32>
    %119 = vector.shape_cast %118 : vector<256xf32> to vector<1x256xf32>
    %cst_57 = arith.constant 0.000000e+00 : f32
    %120 = vector.broadcast %cst_57 : f32 to vector<1x3xf32>
    %121 = vector.extract_strided_slice %117 {offsets = [0, 0], sizes = [1, 253], strides = [1, 1]} : vector<1x256xf32> to vector<1x253xf32>
    %122 = tpu.concatenate %120, %121 in 1 : vector<1x3xf32>, vector<1x253xf32> -> vector<1x256xf32>
    %c3_i32 = arith.constant 3 : i32
    %123 = vector.broadcast %c3_i32 : i32 to vector<1x256xi32>
    %124 = arith.cmpi sge, %2, %123 : vector<1x256xi32>
    %cst_58 = arith.constant 0.000000e+00 : f32
    %125 = vector.broadcast %cst_58 : f32 to vector<1x256xf32>
    %126 = arith.select %124, %122, %125 : vector<1x256xi1>, vector<1x256xf32>
    %cst_59 = arith.constant 0.000000e+00 : f32
    %127 = vector.broadcast %cst_59 : f32 to vector<1x2xf32>
    %128 = vector.extract_strided_slice %117 {offsets = [0, 0], sizes = [1, 254], strides = [1, 1]} : vector<1x256xf32> to vector<1x254xf32>
    %129 = tpu.concatenate %127, %128 in 1 : vector<1x2xf32>, vector<1x254xf32> -> vector<1x256xf32>
    %c2_i32 = arith.constant 2 : i32
    %130 = vector.broadcast %c2_i32 : i32 to vector<1x256xi32>
    %131 = arith.cmpi sge, %2, %130 : vector<1x256xi32>
    %cst_60 = arith.constant 0.000000e+00 : f32
    %132 = vector.broadcast %cst_60 : f32 to vector<1x256xf32>
    %133 = arith.select %131, %129, %132 : vector<1x256xi1>, vector<1x256xf32>
    %cst_61 = arith.constant 0.000000e+00 : f32
    %134 = vector.broadcast %cst_61 : f32 to vector<1x1xf32>
    %135 = vector.extract_strided_slice %117 {offsets = [0, 0], sizes = [1, 255], strides = [1, 1]} : vector<1x256xf32> to vector<1x255xf32>
    %136 = tpu.concatenate %134, %135 in 1 : vector<1x1xf32>, vector<1x255xf32> -> vector<1x256xf32>
    %cst_62 = arith.constant 0.000000e+00 : f32
    %137 = vector.broadcast %cst_62 : f32 to vector<1x256xf32>
    %138 = arith.select %9, %136, %137 : vector<1x256xi1>, vector<1x256xf32>
    %139 = vector.extract_strided_slice %117 {offsets = [0, 1], sizes = [1, 255], strides = [1, 1]} : vector<1x256xf32> to vector<1x255xf32>
    %cst_63 = arith.constant 0.000000e+00 : f32
    %140 = vector.broadcast %cst_63 : f32 to vector<1x1xf32>
    %141 = tpu.concatenate %139, %140 in 1 : vector<1x255xf32>, vector<1x1xf32> -> vector<1x256xf32>
    %cst_64 = arith.constant 0.000000e+00 : f32
    %142 = vector.broadcast %cst_64 : f32 to vector<1x256xf32>
    %143 = arith.select %18, %141, %142 : vector<1x256xi1>, vector<1x256xf32>
    %144 = vector.extract_strided_slice %117 {offsets = [0, 2], sizes = [1, 254], strides = [1, 1]} : vector<1x256xf32> to vector<1x254xf32>
    %cst_65 = arith.constant 0.000000e+00 : f32
    %145 = vector.broadcast %cst_65 : f32 to vector<1x2xf32>
    %146 = tpu.concatenate %144, %145 in 1 : vector<1x254xf32>, vector<1x2xf32> -> vector<1x256xf32>
    %c14_i32 = arith.constant 14 : i32
    %147 = vector.broadcast %c14_i32 : i32 to vector<1x256xi32>
    %148 = arith.cmpi slt, %2, %147 : vector<1x256xi32>
    %cst_66 = arith.constant 0.000000e+00 : f32
    %149 = vector.broadcast %cst_66 : f32 to vector<1x256xf32>
    %150 = arith.select %148, %146, %149 : vector<1x256xi1>, vector<1x256xf32>
    %151 = vector.extract_strided_slice %117 {offsets = [0, 3], sizes = [1, 253], strides = [1, 1]} : vector<1x256xf32> to vector<1x253xf32>
    %cst_67 = arith.constant 0.000000e+00 : f32
    %152 = vector.broadcast %cst_67 : f32 to vector<1x3xf32>
    %153 = tpu.concatenate %151, %152 in 1 : vector<1x253xf32>, vector<1x3xf32> -> vector<1x256xf32>
    %c13_i32 = arith.constant 13 : i32
    %154 = vector.broadcast %c13_i32 : i32 to vector<1x256xi32>
    %155 = arith.cmpi slt, %2, %154 : vector<1x256xi32>
    %cst_68 = arith.constant 0.000000e+00 : f32
    %156 = vector.broadcast %cst_68 : f32 to vector<1x256xf32>
    %157 = arith.select %155, %153, %156 : vector<1x256xi1>, vector<1x256xf32>
    %cst_69 = arith.constant 0.000000e+00 : f32
    %158 = vector.broadcast %cst_69 : f32 to vector<1x3xf32>
    %159 = vector.extract_strided_slice %119 {offsets = [0, 0], sizes = [1, 253], strides = [1, 1]} : vector<1x256xf32> to vector<1x253xf32>
    %160 = tpu.concatenate %158, %159 in 1 : vector<1x3xf32>, vector<1x253xf32> -> vector<1x256xf32>
    %cst_70 = arith.constant 0.000000e+00 : f32
    %161 = vector.broadcast %cst_70 : f32 to vector<1x256xf32>
    %162 = arith.select %124, %160, %161 : vector<1x256xi1>, vector<1x256xf32>
    %cst_71 = arith.constant 0.000000e+00 : f32
    %163 = vector.broadcast %cst_71 : f32 to vector<1x2xf32>
    %164 = vector.extract_strided_slice %119 {offsets = [0, 0], sizes = [1, 254], strides = [1, 1]} : vector<1x256xf32> to vector<1x254xf32>
    %165 = tpu.concatenate %163, %164 in 1 : vector<1x2xf32>, vector<1x254xf32> -> vector<1x256xf32>
    %cst_72 = arith.constant 0.000000e+00 : f32
    %166 = vector.broadcast %cst_72 : f32 to vector<1x256xf32>
    %167 = arith.select %131, %165, %166 : vector<1x256xi1>, vector<1x256xf32>
    %cst_73 = arith.constant 0.000000e+00 : f32
    %168 = vector.broadcast %cst_73 : f32 to vector<1x1xf32>
    %169 = vector.extract_strided_slice %119 {offsets = [0, 0], sizes = [1, 255], strides = [1, 1]} : vector<1x256xf32> to vector<1x255xf32>
    %170 = tpu.concatenate %168, %169 in 1 : vector<1x1xf32>, vector<1x255xf32> -> vector<1x256xf32>
    %cst_74 = arith.constant 0.000000e+00 : f32
    %171 = vector.broadcast %cst_74 : f32 to vector<1x256xf32>
    %172 = arith.select %9, %170, %171 : vector<1x256xi1>, vector<1x256xf32>
    %173 = vector.extract_strided_slice %119 {offsets = [0, 1], sizes = [1, 255], strides = [1, 1]} : vector<1x256xf32> to vector<1x255xf32>
    %cst_75 = arith.constant 0.000000e+00 : f32
    %174 = vector.broadcast %cst_75 : f32 to vector<1x1xf32>
    %175 = tpu.concatenate %173, %174 in 1 : vector<1x255xf32>, vector<1x1xf32> -> vector<1x256xf32>
    %cst_76 = arith.constant 0.000000e+00 : f32
    %176 = vector.broadcast %cst_76 : f32 to vector<1x256xf32>
    %177 = arith.select %18, %175, %176 : vector<1x256xi1>, vector<1x256xf32>
    %178 = vector.extract_strided_slice %119 {offsets = [0, 2], sizes = [1, 254], strides = [1, 1]} : vector<1x256xf32> to vector<1x254xf32>
    %cst_77 = arith.constant 0.000000e+00 : f32
    %179 = vector.broadcast %cst_77 : f32 to vector<1x2xf32>
    %180 = tpu.concatenate %178, %179 in 1 : vector<1x254xf32>, vector<1x2xf32> -> vector<1x256xf32>
    %cst_78 = arith.constant 0.000000e+00 : f32
    %181 = vector.broadcast %cst_78 : f32 to vector<1x256xf32>
    %182 = arith.select %148, %180, %181 : vector<1x256xi1>, vector<1x256xf32>
    %183 = vector.extract_strided_slice %119 {offsets = [0, 3], sizes = [1, 253], strides = [1, 1]} : vector<1x256xf32> to vector<1x253xf32>
    %cst_79 = arith.constant 0.000000e+00 : f32
    %184 = vector.broadcast %cst_79 : f32 to vector<1x3xf32>
    %185 = tpu.concatenate %183, %184 in 1 : vector<1x253xf32>, vector<1x3xf32> -> vector<1x256xf32>
    %cst_80 = arith.constant 0.000000e+00 : f32
    %186 = vector.broadcast %cst_80 : f32 to vector<1x256xf32>
    %187 = arith.select %155, %185, %186 : vector<1x256xi1>, vector<1x256xf32>
    %188 = tpu.concatenate %126, %133, %138, %117, %143, %150, %157, %162, %167, %172, %119, %177, %182, %187 in 0 : vector<1x256xf32>, vector<1x256xf32>, vector<1x256xf32>, vector<1x256xf32>, vector<1x256xf32>, vector<1x256xf32>, vector<1x256xf32>, vector<1x256xf32>, vector<1x256xf32>, vector<1x256xf32>, vector<1x256xf32>, vector<1x256xf32>, vector<1x256xf32>, vector<1x256xf32> -> vector<14x256xf32>
    %c0_81 = arith.constant 0 : index
    %c0_82 = arith.constant 0 : index
    %189 = vector.load %arg5[%c0_81, %c0_82] : memref<14x7xf32, #tpu.memory_space<vmem>>, vector<14x7xf32>
    %cst_83 = arith.constant 0.000000e+00 : f32
    %190 = vector.broadcast %cst_83 : f32 to vector<1x256xf32>
    %191 = vector.extract_strided_slice %189 {offsets = [0, 0], sizes = [14, 1], strides = [1, 1]} : vector<14x7xf32> to vector<14x1xf32>
    %192 = vector.broadcast %191 : vector<14x1xf32> to vector<14x256xf32>
    %193 = arith.mulf %188, %192 : vector<14x256xf32>
    %cst_84 = arith.constant dense<0.000000e+00> : vector<256xf32>
    %194 = vector.multi_reduction <add>, %193, %cst_84 [0] : vector<14x256xf32> to vector<256xf32>
    %195 = vector.shape_cast %194 : vector<256xf32> to vector<1x256xf32>
    %cst_85 = arith.constant 0.000000e+00 : f32
    %196 = vector.broadcast %cst_85 : f32 to vector<1x48xf32>
    %197 = vector.extract_strided_slice %195 {offsets = [0, 0], sizes = [1, 208], strides = [1, 1]} : vector<1x256xf32> to vector<1x208xf32>
    %198 = tpu.concatenate %196, %197 in 1 : vector<1x48xf32>, vector<1x208xf32> -> vector<1x256xf32>
    %199 = arith.addf %190, %198 : vector<1x256xf32>
    %200 = vector.extract_strided_slice %189 {offsets = [0, 1], sizes = [14, 1], strides = [1, 1]} : vector<14x7xf32> to vector<14x1xf32>
    %201 = vector.broadcast %200 : vector<14x1xf32> to vector<14x256xf32>
    %202 = arith.mulf %188, %201 : vector<14x256xf32>
    %cst_86 = arith.constant dense<0.000000e+00> : vector<256xf32>
    %203 = vector.multi_reduction <add>, %202, %cst_86 [0] : vector<14x256xf32> to vector<256xf32>
    %204 = vector.shape_cast %203 : vector<256xf32> to vector<1x256xf32>
    %cst_87 = arith.constant 0.000000e+00 : f32
    %205 = vector.broadcast %cst_87 : f32 to vector<1x32xf32>
    %206 = vector.extract_strided_slice %204 {offsets = [0, 0], sizes = [1, 224], strides = [1, 1]} : vector<1x256xf32> to vector<1x224xf32>
    %207 = tpu.concatenate %205, %206 in 1 : vector<1x32xf32>, vector<1x224xf32> -> vector<1x256xf32>
    %208 = arith.addf %199, %207 : vector<1x256xf32>
    %209 = vector.extract_strided_slice %189 {offsets = [0, 2], sizes = [14, 1], strides = [1, 1]} : vector<14x7xf32> to vector<14x1xf32>
    %210 = vector.broadcast %209 : vector<14x1xf32> to vector<14x256xf32>
    %211 = arith.mulf %188, %210 : vector<14x256xf32>
    %cst_88 = arith.constant dense<0.000000e+00> : vector<256xf32>
    %212 = vector.multi_reduction <add>, %211, %cst_88 [0] : vector<14x256xf32> to vector<256xf32>
    %213 = vector.shape_cast %212 : vector<256xf32> to vector<1x256xf32>
    %cst_89 = arith.constant 0.000000e+00 : f32
    %214 = vector.broadcast %cst_89 : f32 to vector<1x16xf32>
    %215 = vector.extract_strided_slice %213 {offsets = [0, 0], sizes = [1, 240], strides = [1, 1]} : vector<1x256xf32> to vector<1x240xf32>
    %216 = tpu.concatenate %214, %215 in 1 : vector<1x16xf32>, vector<1x240xf32> -> vector<1x256xf32>
    %217 = arith.addf %208, %216 : vector<1x256xf32>
    %218 = vector.extract_strided_slice %189 {offsets = [0, 3], sizes = [14, 1], strides = [1, 1]} : vector<14x7xf32> to vector<14x1xf32>
    %219 = vector.broadcast %218 : vector<14x1xf32> to vector<14x256xf32>
    %220 = arith.mulf %188, %219 : vector<14x256xf32>
    %cst_90 = arith.constant dense<0.000000e+00> : vector<256xf32>
    %221 = vector.multi_reduction <add>, %220, %cst_90 [0] : vector<14x256xf32> to vector<256xf32>
    %222 = vector.shape_cast %221 : vector<256xf32> to vector<1x256xf32>
    %223 = arith.addf %217, %222 : vector<1x256xf32>
    %224 = vector.extract_strided_slice %189 {offsets = [0, 4], sizes = [14, 1], strides = [1, 1]} : vector<14x7xf32> to vector<14x1xf32>
    %225 = vector.broadcast %224 : vector<14x1xf32> to vector<14x256xf32>
    %226 = arith.mulf %188, %225 : vector<14x256xf32>
    %cst_91 = arith.constant dense<0.000000e+00> : vector<256xf32>
    %227 = vector.multi_reduction <add>, %226, %cst_91 [0] : vector<14x256xf32> to vector<256xf32>
    %228 = vector.shape_cast %227 : vector<256xf32> to vector<1x256xf32>
    %229 = vector.extract_strided_slice %228 {offsets = [0, 16], sizes = [1, 240], strides = [1, 1]} : vector<1x256xf32> to vector<1x240xf32>
    %cst_92 = arith.constant 0.000000e+00 : f32
    %230 = vector.broadcast %cst_92 : f32 to vector<1x16xf32>
    %231 = tpu.concatenate %229, %230 in 1 : vector<1x240xf32>, vector<1x16xf32> -> vector<1x256xf32>
    %232 = arith.addf %223, %231 : vector<1x256xf32>
    %233 = vector.extract_strided_slice %189 {offsets = [0, 5], sizes = [14, 1], strides = [1, 1]} : vector<14x7xf32> to vector<14x1xf32>
    %234 = vector.broadcast %233 : vector<14x1xf32> to vector<14x256xf32>
    %235 = arith.mulf %188, %234 : vector<14x256xf32>
    %cst_93 = arith.constant dense<0.000000e+00> : vector<256xf32>
    %236 = vector.multi_reduction <add>, %235, %cst_93 [0] : vector<14x256xf32> to vector<256xf32>
    %237 = vector.shape_cast %236 : vector<256xf32> to vector<1x256xf32>
    %238 = vector.extract_strided_slice %237 {offsets = [0, 32], sizes = [1, 224], strides = [1, 1]} : vector<1x256xf32> to vector<1x224xf32>
    %cst_94 = arith.constant 0.000000e+00 : f32
    %239 = vector.broadcast %cst_94 : f32 to vector<1x32xf32>
    %240 = tpu.concatenate %238, %239 in 1 : vector<1x224xf32>, vector<1x32xf32> -> vector<1x256xf32>
    %241 = arith.addf %232, %240 : vector<1x256xf32>
    %242 = vector.extract_strided_slice %189 {offsets = [0, 6], sizes = [14, 1], strides = [1, 1]} : vector<14x7xf32> to vector<14x1xf32>
    %243 = vector.broadcast %242 : vector<14x1xf32> to vector<14x256xf32>
    %244 = arith.mulf %188, %243 : vector<14x256xf32>
    %cst_95 = arith.constant dense<0.000000e+00> : vector<256xf32>
    %245 = vector.multi_reduction <add>, %244, %cst_95 [0] : vector<14x256xf32> to vector<256xf32>
    %246 = vector.shape_cast %245 : vector<256xf32> to vector<1x256xf32>
    %247 = vector.extract_strided_slice %246 {offsets = [0, 48], sizes = [1, 208], strides = [1, 1]} : vector<1x256xf32> to vector<1x208xf32>
    %cst_96 = arith.constant 0.000000e+00 : f32
    %248 = vector.broadcast %cst_96 : f32 to vector<1x48xf32>
    %249 = tpu.concatenate %247, %248 in 1 : vector<1x208xf32>, vector<1x48xf32> -> vector<1x256xf32>
    %250 = arith.addf %241, %249 : vector<1x256xf32>
    %251 = arith.negf %250 : vector<1x256xf32>
    %252 = math.exp %251 : vector<1x256xf32>
    %cst_97 = arith.constant 1.000000e+00 : f32
    %253 = vector.broadcast %cst_97 : f32 to vector<1x256xf32>
    %254 = arith.addf %253, %252 : vector<1x256xf32>
    %255 = arith.divf %253, %254 : vector<1x256xf32>
    %256 = vector.broadcast %255 : vector<1x256xf32> to vector<12x256xf32>
    %257 = arith.mulf %113, %256 : vector<12x256xf32>
    %c0_98 = arith.constant 0 : index
    %c0_99 = arith.constant 0 : index
    %258 = vector.load %arg6[%c0_98, %c0_99] : memref<24x12xf32, #tpu.memory_space<vmem>>, vector<24x12xf32>
    %cst_100 = arith.constant dense<0.000000e+00> : vector<24x256xf32>
    %259 = tpu.matmul %258, %257, %cst_100 {dimension_numbers = #tpu.dot_dimension_numbers<[1], [0], [0], [1], [0, 0, 1, 1], [], []>} : vector<24x12xf32>, vector<12x256xf32>, vector<24x256xf32> -> vector<24x256xf32>
    %c0_101 = arith.constant 0 : index
    %c0_102 = arith.constant 0 : index
    %260 = vector.load %arg2[%c0_101, %c0_102] : memref<24x1xf32, #tpu.memory_space<vmem>>, vector<24x1xf32>
    %261 = vector.broadcast %260 : vector<24x1xf32> to vector<24x256xf32>
    %262 = arith.addf %259, %261 : vector<24x256xf32>
    %cst_103 = arith.constant 5.000000e-01 : f32
    %263 = vector.broadcast %cst_103 : f32 to vector<24x256xf32>
    %264 = arith.mulf %263, %262 : vector<24x256xf32>
    %cst_104 = arith.constant 0.707106769 : f32
    %265 = vector.broadcast %cst_104 : f32 to vector<24x256xf32>
    %266 = arith.mulf %262, %265 : vector<24x256xf32>
    %267 = math.erf %266 : vector<24x256xf32>
    %cst_105 = arith.constant 1.000000e+00 : f32
    %268 = vector.broadcast %cst_105 : f32 to vector<24x256xf32>
    %269 = arith.addf %268, %267 : vector<24x256xf32>
    %270 = arith.mulf %264, %269 : vector<24x256xf32>
    %c0_106 = arith.constant 0 : index
    %c0_107 = arith.constant 0 : index
    %271 = vector.load %arg7[%c0_106, %c0_107] : memref<12x24xf32, #tpu.memory_space<vmem>>, vector<12x24xf32>
    %cst_108 = arith.constant dense<0.000000e+00> : vector<12x256xf32>
    %272 = tpu.matmul %271, %270, %cst_108 {dimension_numbers = #tpu.dot_dimension_numbers<[1], [0], [0], [1], [0, 0, 1, 1], [], []>} : vector<12x24xf32>, vector<24x256xf32>, vector<12x256xf32> -> vector<12x256xf32>
    %273 = arith.addf %53, %272 : vector<12x256xf32>
    %274 = vector.extract_strided_slice %273 {offsets = [0, 0], sizes = [6, 256], strides = [1, 1]} : vector<12x256xf32> to vector<6x256xf32>
    %cst_109 = arith.constant 0.000000e+00 : f32
    %275 = vector.broadcast %cst_109 : f32 to vector<6x2xf32>
    %276 = vector.extract_strided_slice %274 {offsets = [0, 0], sizes = [6, 254], strides = [1, 1]} : vector<6x256xf32> to vector<6x254xf32>
    %277 = tpu.concatenate %275, %276 in 1 : vector<6x2xf32>, vector<6x254xf32> -> vector<6x256xf32>
    %cst_110 = arith.constant 0.000000e+00 : f32
    %278 = vector.shape_cast %131 : vector<1x256xi1> to vector<1x256xi1>
    %279 = vector.broadcast %278 : vector<1x256xi1> to vector<6x256xi1>
    %280 = vector.broadcast %cst_110 : f32 to vector<6x256xf32>
    %281 = arith.select %279, %277, %280 : vector<6x256xi1>, vector<6x256xf32>
    %282 = vector.extract_strided_slice %274 {offsets = [0, 2], sizes = [6, 254], strides = [1, 1]} : vector<6x256xf32> to vector<6x254xf32>
    %cst_111 = arith.constant 0.000000e+00 : f32
    %283 = vector.broadcast %cst_111 : f32 to vector<6x2xf32>
    %284 = tpu.concatenate %282, %283 in 1 : vector<6x254xf32>, vector<6x2xf32> -> vector<6x256xf32>
    %cst_112 = arith.constant 0.000000e+00 : f32
    %285 = vector.shape_cast %148 : vector<1x256xi1> to vector<1x256xi1>
    %286 = vector.broadcast %285 : vector<1x256xi1> to vector<6x256xi1>
    %287 = vector.broadcast %cst_112 : f32 to vector<6x256xf32>
    %288 = arith.select %286, %284, %287 : vector<6x256xi1>, vector<6x256xf32>
    %289 = tpu.concatenate %281, %274, %288 in 0 : vector<6x256xf32>, vector<6x256xf32>, vector<6x256xf32> -> vector<18x256xf32>
    %cst_113 = arith.constant 0.000000e+00 : f32
    %290 = vector.broadcast %cst_113 : f32 to vector<6x256xf32>
    %c0_114 = arith.constant 0 : index
    %c0_115 = arith.constant 0 : index
    %c0_116 = arith.constant 0 : index
    %291 = vector.load %arg15[%c0_114, %c0_115, %c0_116] : memref<3x6x18xf32, #tpu.memory_space<vmem>>, vector<1x6x18xf32>
    %292 = vector.shape_cast %291 : vector<1x6x18xf32> to vector<6x18xf32>
    %cst_117 = arith.constant dense<0.000000e+00> : vector<6x256xf32>
    %293 = tpu.matmul %292, %289, %cst_117 {dimension_numbers = #tpu.dot_dimension_numbers<[1], [0], [0], [1], [0, 0, 1, 1], [], []>} : vector<6x18xf32>, vector<18x256xf32>, vector<6x256xf32> -> vector<6x256xf32>
    %cst_118 = arith.constant 0.000000e+00 : f32
    %294 = vector.broadcast %cst_118 : f32 to vector<6x32xf32>
    %295 = vector.extract_strided_slice %293 {offsets = [0, 0], sizes = [6, 224], strides = [1, 1]} : vector<6x256xf32> to vector<6x224xf32>
    %296 = tpu.concatenate %294, %295 in 1 : vector<6x32xf32>, vector<6x224xf32> -> vector<6x256xf32>
    %297 = arith.addf %290, %296 : vector<6x256xf32>
    %c1_119 = arith.constant 1 : index
    %c0_120 = arith.constant 0 : index
    %c0_121 = arith.constant 0 : index
    %298 = vector.load %arg15[%c1_119, %c0_120, %c0_121] : memref<3x6x18xf32, #tpu.memory_space<vmem>>, vector<1x6x18xf32>
    %299 = vector.shape_cast %298 : vector<1x6x18xf32> to vector<6x18xf32>
    %cst_122 = arith.constant dense<0.000000e+00> : vector<6x256xf32>
    %300 = tpu.matmul %299, %289, %cst_122 {dimension_numbers = #tpu.dot_dimension_numbers<[1], [0], [0], [1], [0, 0, 1, 1], [], []>} : vector<6x18xf32>, vector<18x256xf32>, vector<6x256xf32> -> vector<6x256xf32>
    %301 = arith.addf %297, %300 : vector<6x256xf32>
    %c2_123 = arith.constant 2 : index
    %c0_124 = arith.constant 0 : index
    %c0_125 = arith.constant 0 : index
    %302 = vector.load %arg15[%c2_123, %c0_124, %c0_125] : memref<3x6x18xf32, #tpu.memory_space<vmem>>, vector<1x6x18xf32>
    %303 = vector.shape_cast %302 : vector<1x6x18xf32> to vector<6x18xf32>
    %cst_126 = arith.constant dense<0.000000e+00> : vector<6x256xf32>
    %304 = tpu.matmul %303, %289, %cst_126 {dimension_numbers = #tpu.dot_dimension_numbers<[1], [0], [0], [1], [0, 0, 1, 1], [], []>} : vector<6x18xf32>, vector<18x256xf32>, vector<6x256xf32> -> vector<6x256xf32>
    %305 = vector.extract_strided_slice %304 {offsets = [0, 32], sizes = [6, 224], strides = [1, 1]} : vector<6x256xf32> to vector<6x224xf32>
    %cst_127 = arith.constant 0.000000e+00 : f32
    %306 = vector.broadcast %cst_127 : f32 to vector<6x32xf32>
    %307 = tpu.concatenate %305, %306 in 1 : vector<6x224xf32>, vector<6x32xf32> -> vector<6x256xf32>
    %308 = arith.addf %301, %307 : vector<6x256xf32>
    %309 = vector.extract_strided_slice %273 {offsets = [6, 0], sizes = [6, 256], strides = [1, 1]} : vector<12x256xf32> to vector<6x256xf32>
    %310 = tpu.concatenate %308, %309 in 0 : vector<6x256xf32>, vector<6x256xf32> -> vector<12x256xf32>
    %cst_128 = arith.constant dense<0.000000e+00> : vector<12xf32>
    %311 = vector.multi_reduction <add>, %310, %cst_128 [1] : vector<12x256xf32> to vector<12xf32>
    %312 = vector.shape_cast %311 : vector<12xf32> to vector<12x1xf32>
    %cst_129 = arith.constant 2.560000e+02 : f32
    %313 = vector.broadcast %cst_129 : f32 to vector<12x1xf32>
    %314 = arith.divf %312, %313 : vector<12x1xf32>
    %cst_130 = arith.constant dense<0xFF800000> : vector<12xf32>
    %315 = vector.multi_reduction <maximumf>, %310, %cst_130 [1] : vector<12x256xf32> to vector<12xf32>
    %316 = vector.shape_cast %315 : vector<12xf32> to vector<12x1xf32>
    %317 = tpu.concatenate %314, %316 in 1 : vector<12x1xf32>, vector<12x1xf32> -> vector<12x2xf32>
    %c0_131 = arith.constant 0 : index
    %c0_132 = arith.constant 0 : index
    %318 = vector.load %arg10[%c0_131, %c0_132] : memref<3x12xf32, #tpu.memory_space<vmem>>, vector<3x12xf32>
    %cst_133 = arith.constant dense<0.000000e+00> : vector<3x2xf32>
    %319 = tpu.matmul %318, %317, %cst_133 {dimension_numbers = #tpu.dot_dimension_numbers<[1], [0], [0], [1], [0, 0, 1, 1], [], []>} : vector<3x12xf32>, vector<12x2xf32>, vector<3x2xf32> -> vector<3x2xf32>
    %cst_134 = arith.constant 0.000000e+00 : f32
    %320 = vector.broadcast %cst_134 : f32 to vector<3x2xf32>
    %321 = arith.maximumf %319, %320 : vector<3x2xf32>
    %c0_135 = arith.constant 0 : index
    %c0_136 = arith.constant 0 : index
    %322 = vector.load %arg11[%c0_135, %c0_136] : memref<12x3xf32, #tpu.memory_space<vmem>>, vector<12x3xf32>
    %cst_137 = arith.constant dense<0.000000e+00> : vector<12x2xf32>
    %323 = tpu.matmul %322, %321, %cst_137 {dimension_numbers = #tpu.dot_dimension_numbers<[1], [0], [0], [1], [0, 0, 1, 1], [], []>} : vector<12x3xf32>, vector<3x2xf32>, vector<12x2xf32> -> vector<12x2xf32>
    %324 = vector.extract_strided_slice %323 {offsets = [0, 0], sizes = [12, 1], strides = [1, 1]} : vector<12x2xf32> to vector<12x1xf32>
    %325 = vector.extract_strided_slice %323 {offsets = [0, 1], sizes = [12, 1], strides = [1, 1]} : vector<12x2xf32> to vector<12x1xf32>
    %326 = arith.addf %324, %325 : vector<12x1xf32>
    %327 = arith.negf %326 : vector<12x1xf32>
    %328 = math.exp %327 : vector<12x1xf32>
    %cst_138 = arith.constant 1.000000e+00 : f32
    %329 = vector.broadcast %cst_138 : f32 to vector<12x1xf32>
    %330 = arith.addf %329, %328 : vector<12x1xf32>
    %331 = arith.divf %329, %330 : vector<12x1xf32>
    %332 = vector.broadcast %331 : vector<12x1xf32> to vector<12x256xf32>
    %333 = arith.mulf %310, %332 : vector<12x256xf32>
    %cst_139 = arith.constant dense<0.000000e+00> : vector<256xf32>
    %334 = vector.multi_reduction <add>, %333, %cst_139 [0] : vector<12x256xf32> to vector<256xf32>
    %335 = vector.shape_cast %334 : vector<256xf32> to vector<1x256xf32>
    %cst_140 = arith.constant 1.200000e+01 : f32
    %336 = vector.broadcast %cst_140 : f32 to vector<1x256xf32>
    %337 = arith.divf %335, %336 : vector<1x256xf32>
    %cst_141 = arith.constant dense<0xFF800000> : vector<256xf32>
    %338 = vector.multi_reduction <maximumf>, %333, %cst_141 [0] : vector<12x256xf32> to vector<256xf32>
    %339 = vector.shape_cast %338 : vector<256xf32> to vector<1x256xf32>
    %cst_142 = arith.constant 0.000000e+00 : f32
    %340 = vector.broadcast %cst_142 : f32 to vector<1x3xf32>
    %341 = vector.extract_strided_slice %337 {offsets = [0, 0], sizes = [1, 253], strides = [1, 1]} : vector<1x256xf32> to vector<1x253xf32>
    %342 = tpu.concatenate %340, %341 in 1 : vector<1x3xf32>, vector<1x253xf32> -> vector<1x256xf32>
    %cst_143 = arith.constant 0.000000e+00 : f32
    %343 = vector.broadcast %cst_143 : f32 to vector<1x256xf32>
    %344 = arith.select %124, %342, %343 : vector<1x256xi1>, vector<1x256xf32>
    %cst_144 = arith.constant 0.000000e+00 : f32
    %345 = vector.broadcast %cst_144 : f32 to vector<1x2xf32>
    %346 = vector.extract_strided_slice %337 {offsets = [0, 0], sizes = [1, 254], strides = [1, 1]} : vector<1x256xf32> to vector<1x254xf32>
    %347 = tpu.concatenate %345, %346 in 1 : vector<1x2xf32>, vector<1x254xf32> -> vector<1x256xf32>
    %cst_145 = arith.constant 0.000000e+00 : f32
    %348 = vector.broadcast %cst_145 : f32 to vector<1x256xf32>
    %349 = arith.select %131, %347, %348 : vector<1x256xi1>, vector<1x256xf32>
    %cst_146 = arith.constant 0.000000e+00 : f32
    %350 = vector.broadcast %cst_146 : f32 to vector<1x1xf32>
    %351 = vector.extract_strided_slice %337 {offsets = [0, 0], sizes = [1, 255], strides = [1, 1]} : vector<1x256xf32> to vector<1x255xf32>
    %352 = tpu.concatenate %350, %351 in 1 : vector<1x1xf32>, vector<1x255xf32> -> vector<1x256xf32>
    %cst_147 = arith.constant 0.000000e+00 : f32
    %353 = vector.broadcast %cst_147 : f32 to vector<1x256xf32>
    %354 = arith.select %9, %352, %353 : vector<1x256xi1>, vector<1x256xf32>
    %355 = vector.extract_strided_slice %337 {offsets = [0, 1], sizes = [1, 255], strides = [1, 1]} : vector<1x256xf32> to vector<1x255xf32>
    %cst_148 = arith.constant 0.000000e+00 : f32
    %356 = vector.broadcast %cst_148 : f32 to vector<1x1xf32>
    %357 = tpu.concatenate %355, %356 in 1 : vector<1x255xf32>, vector<1x1xf32> -> vector<1x256xf32>
    %cst_149 = arith.constant 0.000000e+00 : f32
    %358 = vector.broadcast %cst_149 : f32 to vector<1x256xf32>
    %359 = arith.select %18, %357, %358 : vector<1x256xi1>, vector<1x256xf32>
    %360 = vector.extract_strided_slice %337 {offsets = [0, 2], sizes = [1, 254], strides = [1, 1]} : vector<1x256xf32> to vector<1x254xf32>
    %cst_150 = arith.constant 0.000000e+00 : f32
    %361 = vector.broadcast %cst_150 : f32 to vector<1x2xf32>
    %362 = tpu.concatenate %360, %361 in 1 : vector<1x254xf32>, vector<1x2xf32> -> vector<1x256xf32>
    %cst_151 = arith.constant 0.000000e+00 : f32
    %363 = vector.broadcast %cst_151 : f32 to vector<1x256xf32>
    %364 = arith.select %148, %362, %363 : vector<1x256xi1>, vector<1x256xf32>
    %365 = vector.extract_strided_slice %337 {offsets = [0, 3], sizes = [1, 253], strides = [1, 1]} : vector<1x256xf32> to vector<1x253xf32>
    %cst_152 = arith.constant 0.000000e+00 : f32
    %366 = vector.broadcast %cst_152 : f32 to vector<1x3xf32>
    %367 = tpu.concatenate %365, %366 in 1 : vector<1x253xf32>, vector<1x3xf32> -> vector<1x256xf32>
    %cst_153 = arith.constant 0.000000e+00 : f32
    %368 = vector.broadcast %cst_153 : f32 to vector<1x256xf32>
    %369 = arith.select %155, %367, %368 : vector<1x256xi1>, vector<1x256xf32>
    %cst_154 = arith.constant 0.000000e+00 : f32
    %370 = vector.broadcast %cst_154 : f32 to vector<1x3xf32>
    %371 = vector.extract_strided_slice %339 {offsets = [0, 0], sizes = [1, 253], strides = [1, 1]} : vector<1x256xf32> to vector<1x253xf32>
    %372 = tpu.concatenate %370, %371 in 1 : vector<1x3xf32>, vector<1x253xf32> -> vector<1x256xf32>
    %cst_155 = arith.constant 0.000000e+00 : f32
    %373 = vector.broadcast %cst_155 : f32 to vector<1x256xf32>
    %374 = arith.select %124, %372, %373 : vector<1x256xi1>, vector<1x256xf32>
    %cst_156 = arith.constant 0.000000e+00 : f32
    %375 = vector.broadcast %cst_156 : f32 to vector<1x2xf32>
    %376 = vector.extract_strided_slice %339 {offsets = [0, 0], sizes = [1, 254], strides = [1, 1]} : vector<1x256xf32> to vector<1x254xf32>
    %377 = tpu.concatenate %375, %376 in 1 : vector<1x2xf32>, vector<1x254xf32> -> vector<1x256xf32>
    %cst_157 = arith.constant 0.000000e+00 : f32
    %378 = vector.broadcast %cst_157 : f32 to vector<1x256xf32>
    %379 = arith.select %131, %377, %378 : vector<1x256xi1>, vector<1x256xf32>
    %cst_158 = arith.constant 0.000000e+00 : f32
    %380 = vector.broadcast %cst_158 : f32 to vector<1x1xf32>
    %381 = vector.extract_strided_slice %339 {offsets = [0, 0], sizes = [1, 255], strides = [1, 1]} : vector<1x256xf32> to vector<1x255xf32>
    %382 = tpu.concatenate %380, %381 in 1 : vector<1x1xf32>, vector<1x255xf32> -> vector<1x256xf32>
    %cst_159 = arith.constant 0.000000e+00 : f32
    %383 = vector.broadcast %cst_159 : f32 to vector<1x256xf32>
    %384 = arith.select %9, %382, %383 : vector<1x256xi1>, vector<1x256xf32>
    %385 = vector.extract_strided_slice %339 {offsets = [0, 1], sizes = [1, 255], strides = [1, 1]} : vector<1x256xf32> to vector<1x255xf32>
    %cst_160 = arith.constant 0.000000e+00 : f32
    %386 = vector.broadcast %cst_160 : f32 to vector<1x1xf32>
    %387 = tpu.concatenate %385, %386 in 1 : vector<1x255xf32>, vector<1x1xf32> -> vector<1x256xf32>
    %cst_161 = arith.constant 0.000000e+00 : f32
    %388 = vector.broadcast %cst_161 : f32 to vector<1x256xf32>
    %389 = arith.select %18, %387, %388 : vector<1x256xi1>, vector<1x256xf32>
    %390 = vector.extract_strided_slice %339 {offsets = [0, 2], sizes = [1, 254], strides = [1, 1]} : vector<1x256xf32> to vector<1x254xf32>
    %cst_162 = arith.constant 0.000000e+00 : f32
    %391 = vector.broadcast %cst_162 : f32 to vector<1x2xf32>
    %392 = tpu.concatenate %390, %391 in 1 : vector<1x254xf32>, vector<1x2xf32> -> vector<1x256xf32>
    %cst_163 = arith.constant 0.000000e+00 : f32
    %393 = vector.broadcast %cst_163 : f32 to vector<1x256xf32>
    %394 = arith.select %148, %392, %393 : vector<1x256xi1>, vector<1x256xf32>
    %395 = vector.extract_strided_slice %339 {offsets = [0, 3], sizes = [1, 253], strides = [1, 1]} : vector<1x256xf32> to vector<1x253xf32>
    %cst_164 = arith.constant 0.000000e+00 : f32
    %396 = vector.broadcast %cst_164 : f32 to vector<1x3xf32>
    %397 = tpu.concatenate %395, %396 in 1 : vector<1x253xf32>, vector<1x3xf32> -> vector<1x256xf32>
    %cst_165 = arith.constant 0.000000e+00 : f32
    %398 = vector.broadcast %cst_165 : f32 to vector<1x256xf32>
    %399 = arith.select %155, %397, %398 : vector<1x256xi1>, vector<1x256xf32>
    %400 = tpu.concatenate %344, %349, %354, %337, %359, %364, %369, %374, %379, %384, %339, %389, %394, %399 in 0 : vector<1x256xf32>, vector<1x256xf32>, vector<1x256xf32>, vector<1x256xf32>, vector<1x256xf32>, vector<1x256xf32>, vector<1x256xf32>, vector<1x256xf32>, vector<1x256xf32>, vector<1x256xf32>, vector<1x256xf32>, vector<1x256xf32>, vector<1x256xf32>, vector<1x256xf32> -> vector<14x256xf32>
    %c0_166 = arith.constant 0 : index
    %c0_167 = arith.constant 0 : index
    %401 = vector.load %arg12[%c0_166, %c0_167] : memref<14x7xf32, #tpu.memory_space<vmem>>, vector<14x7xf32>
    %cst_168 = arith.constant 0.000000e+00 : f32
    %402 = vector.broadcast %cst_168 : f32 to vector<1x256xf32>
    %403 = vector.extract_strided_slice %401 {offsets = [0, 0], sizes = [14, 1], strides = [1, 1]} : vector<14x7xf32> to vector<14x1xf32>
    %404 = vector.broadcast %403 : vector<14x1xf32> to vector<14x256xf32>
    %405 = arith.mulf %400, %404 : vector<14x256xf32>
    %cst_169 = arith.constant dense<0.000000e+00> : vector<256xf32>
    %406 = vector.multi_reduction <add>, %405, %cst_169 [0] : vector<14x256xf32> to vector<256xf32>
    %407 = vector.shape_cast %406 : vector<256xf32> to vector<1x256xf32>
    %cst_170 = arith.constant 0.000000e+00 : f32
    %408 = vector.broadcast %cst_170 : f32 to vector<1x48xf32>
    %409 = vector.extract_strided_slice %407 {offsets = [0, 0], sizes = [1, 208], strides = [1, 1]} : vector<1x256xf32> to vector<1x208xf32>
    %410 = tpu.concatenate %408, %409 in 1 : vector<1x48xf32>, vector<1x208xf32> -> vector<1x256xf32>
    %411 = arith.addf %402, %410 : vector<1x256xf32>
    %412 = vector.extract_strided_slice %401 {offsets = [0, 1], sizes = [14, 1], strides = [1, 1]} : vector<14x7xf32> to vector<14x1xf32>
    %413 = vector.broadcast %412 : vector<14x1xf32> to vector<14x256xf32>
    %414 = arith.mulf %400, %413 : vector<14x256xf32>
    %cst_171 = arith.constant dense<0.000000e+00> : vector<256xf32>
    %415 = vector.multi_reduction <add>, %414, %cst_171 [0] : vector<14x256xf32> to vector<256xf32>
    %416 = vector.shape_cast %415 : vector<256xf32> to vector<1x256xf32>
    %cst_172 = arith.constant 0.000000e+00 : f32
    %417 = vector.broadcast %cst_172 : f32 to vector<1x32xf32>
    %418 = vector.extract_strided_slice %416 {offsets = [0, 0], sizes = [1, 224], strides = [1, 1]} : vector<1x256xf32> to vector<1x224xf32>
    %419 = tpu.concatenate %417, %418 in 1 : vector<1x32xf32>, vector<1x224xf32> -> vector<1x256xf32>
    %420 = arith.addf %411, %419 : vector<1x256xf32>
    %421 = vector.extract_strided_slice %401 {offsets = [0, 2], sizes = [14, 1], strides = [1, 1]} : vector<14x7xf32> to vector<14x1xf32>
    %422 = vector.broadcast %421 : vector<14x1xf32> to vector<14x256xf32>
    %423 = arith.mulf %400, %422 : vector<14x256xf32>
    %cst_173 = arith.constant dense<0.000000e+00> : vector<256xf32>
    %424 = vector.multi_reduction <add>, %423, %cst_173 [0] : vector<14x256xf32> to vector<256xf32>
    %425 = vector.shape_cast %424 : vector<256xf32> to vector<1x256xf32>
    %cst_174 = arith.constant 0.000000e+00 : f32
    %426 = vector.broadcast %cst_174 : f32 to vector<1x16xf32>
    %427 = vector.extract_strided_slice %425 {offsets = [0, 0], sizes = [1, 240], strides = [1, 1]} : vector<1x256xf32> to vector<1x240xf32>
    %428 = tpu.concatenate %426, %427 in 1 : vector<1x16xf32>, vector<1x240xf32> -> vector<1x256xf32>
    %429 = arith.addf %420, %428 : vector<1x256xf32>
    %430 = vector.extract_strided_slice %401 {offsets = [0, 3], sizes = [14, 1], strides = [1, 1]} : vector<14x7xf32> to vector<14x1xf32>
    %431 = vector.broadcast %430 : vector<14x1xf32> to vector<14x256xf32>
    %432 = arith.mulf %400, %431 : vector<14x256xf32>
    %cst_175 = arith.constant dense<0.000000e+00> : vector<256xf32>
    %433 = vector.multi_reduction <add>, %432, %cst_175 [0] : vector<14x256xf32> to vector<256xf32>
    %434 = vector.shape_cast %433 : vector<256xf32> to vector<1x256xf32>
    %435 = arith.addf %429, %434 : vector<1x256xf32>
    %436 = vector.extract_strided_slice %401 {offsets = [0, 4], sizes = [14, 1], strides = [1, 1]} : vector<14x7xf32> to vector<14x1xf32>
    %437 = vector.broadcast %436 : vector<14x1xf32> to vector<14x256xf32>
    %438 = arith.mulf %400, %437 : vector<14x256xf32>
    %cst_176 = arith.constant dense<0.000000e+00> : vector<256xf32>
    %439 = vector.multi_reduction <add>, %438, %cst_176 [0] : vector<14x256xf32> to vector<256xf32>
    %440 = vector.shape_cast %439 : vector<256xf32> to vector<1x256xf32>
    %441 = vector.extract_strided_slice %440 {offsets = [0, 16], sizes = [1, 240], strides = [1, 1]} : vector<1x256xf32> to vector<1x240xf32>
    %cst_177 = arith.constant 0.000000e+00 : f32
    %442 = vector.broadcast %cst_177 : f32 to vector<1x16xf32>
    %443 = tpu.concatenate %441, %442 in 1 : vector<1x240xf32>, vector<1x16xf32> -> vector<1x256xf32>
    %444 = arith.addf %435, %443 : vector<1x256xf32>
    %445 = vector.extract_strided_slice %401 {offsets = [0, 5], sizes = [14, 1], strides = [1, 1]} : vector<14x7xf32> to vector<14x1xf32>
    %446 = vector.broadcast %445 : vector<14x1xf32> to vector<14x256xf32>
    %447 = arith.mulf %400, %446 : vector<14x256xf32>
    %cst_178 = arith.constant dense<0.000000e+00> : vector<256xf32>
    %448 = vector.multi_reduction <add>, %447, %cst_178 [0] : vector<14x256xf32> to vector<256xf32>
    %449 = vector.shape_cast %448 : vector<256xf32> to vector<1x256xf32>
    %450 = vector.extract_strided_slice %449 {offsets = [0, 32], sizes = [1, 224], strides = [1, 1]} : vector<1x256xf32> to vector<1x224xf32>
    %cst_179 = arith.constant 0.000000e+00 : f32
    %451 = vector.broadcast %cst_179 : f32 to vector<1x32xf32>
    %452 = tpu.concatenate %450, %451 in 1 : vector<1x224xf32>, vector<1x32xf32> -> vector<1x256xf32>
    %453 = arith.addf %444, %452 : vector<1x256xf32>
    %454 = vector.extract_strided_slice %401 {offsets = [0, 6], sizes = [14, 1], strides = [1, 1]} : vector<14x7xf32> to vector<14x1xf32>
    %455 = vector.broadcast %454 : vector<14x1xf32> to vector<14x256xf32>
    %456 = arith.mulf %400, %455 : vector<14x256xf32>
    %cst_180 = arith.constant dense<0.000000e+00> : vector<256xf32>
    %457 = vector.multi_reduction <add>, %456, %cst_180 [0] : vector<14x256xf32> to vector<256xf32>
    %458 = vector.shape_cast %457 : vector<256xf32> to vector<1x256xf32>
    %459 = vector.extract_strided_slice %458 {offsets = [0, 48], sizes = [1, 208], strides = [1, 1]} : vector<1x256xf32> to vector<1x208xf32>
    %cst_181 = arith.constant 0.000000e+00 : f32
    %460 = vector.broadcast %cst_181 : f32 to vector<1x48xf32>
    %461 = tpu.concatenate %459, %460 in 1 : vector<1x208xf32>, vector<1x48xf32> -> vector<1x256xf32>
    %462 = arith.addf %453, %461 : vector<1x256xf32>
    %463 = arith.negf %462 : vector<1x256xf32>
    %464 = math.exp %463 : vector<1x256xf32>
    %cst_182 = arith.constant 1.000000e+00 : f32
    %465 = vector.broadcast %cst_182 : f32 to vector<1x256xf32>
    %466 = arith.addf %465, %464 : vector<1x256xf32>
    %467 = arith.divf %465, %466 : vector<1x256xf32>
    %468 = vector.broadcast %467 : vector<1x256xf32> to vector<12x256xf32>
    %469 = arith.mulf %333, %468 : vector<12x256xf32>
    %c0_183 = arith.constant 0 : index
    %c0_184 = arith.constant 0 : index
    %470 = vector.load %arg13[%c0_183, %c0_184] : memref<24x12xf32, #tpu.memory_space<vmem>>, vector<24x12xf32>
    %cst_185 = arith.constant dense<0.000000e+00> : vector<24x256xf32>
    %471 = tpu.matmul %470, %469, %cst_185 {dimension_numbers = #tpu.dot_dimension_numbers<[1], [0], [0], [1], [0, 0, 1, 1], [], []>} : vector<24x12xf32>, vector<12x256xf32>, vector<24x256xf32> -> vector<24x256xf32>
    %c0_186 = arith.constant 0 : index
    %c0_187 = arith.constant 0 : index
    %472 = vector.load %arg9[%c0_186, %c0_187] : memref<24x1xf32, #tpu.memory_space<vmem>>, vector<24x1xf32>
    %473 = vector.broadcast %472 : vector<24x1xf32> to vector<24x256xf32>
    %474 = arith.addf %471, %473 : vector<24x256xf32>
    %cst_188 = arith.constant 5.000000e-01 : f32
    %475 = vector.broadcast %cst_188 : f32 to vector<24x256xf32>
    %476 = arith.mulf %475, %474 : vector<24x256xf32>
    %cst_189 = arith.constant 0.707106769 : f32
    %477 = vector.broadcast %cst_189 : f32 to vector<24x256xf32>
    %478 = arith.mulf %474, %477 : vector<24x256xf32>
    %479 = math.erf %478 : vector<24x256xf32>
    %cst_190 = arith.constant 1.000000e+00 : f32
    %480 = vector.broadcast %cst_190 : f32 to vector<24x256xf32>
    %481 = arith.addf %480, %479 : vector<24x256xf32>
    %482 = arith.mulf %476, %481 : vector<24x256xf32>
    %c0_191 = arith.constant 0 : index
    %c0_192 = arith.constant 0 : index
    %483 = vector.load %arg14[%c0_191, %c0_192] : memref<12x24xf32, #tpu.memory_space<vmem>>, vector<12x24xf32>
    %cst_193 = arith.constant dense<0.000000e+00> : vector<12x256xf32>
    %484 = tpu.matmul %483, %482, %cst_193 {dimension_numbers = #tpu.dot_dimension_numbers<[1], [0], [0], [1], [0, 0, 1, 1], [], []>} : vector<12x24xf32>, vector<24x256xf32>, vector<12x256xf32> -> vector<12x256xf32>
    %485 = arith.addf %273, %484 : vector<12x256xf32>
    %486 = vector.extract_strided_slice %485 {offsets = [0, 0], sizes = [6, 256], strides = [1, 1]} : vector<12x256xf32> to vector<6x256xf32>
    %cst_194 = arith.constant 0.000000e+00 : f32
    %487 = vector.broadcast %cst_194 : f32 to vector<6x4xf32>
    %488 = vector.extract_strided_slice %486 {offsets = [0, 0], sizes = [6, 252], strides = [1, 1]} : vector<6x256xf32> to vector<6x252xf32>
    %489 = tpu.concatenate %487, %488 in 1 : vector<6x4xf32>, vector<6x252xf32> -> vector<6x256xf32>
    %c4_i32 = arith.constant 4 : i32
    %490 = vector.broadcast %c4_i32 : i32 to vector<1x256xi32>
    %491 = arith.cmpi sge, %2, %490 : vector<1x256xi32>
    %cst_195 = arith.constant 0.000000e+00 : f32
    %492 = vector.shape_cast %491 : vector<1x256xi1> to vector<1x256xi1>
    %493 = vector.broadcast %492 : vector<1x256xi1> to vector<6x256xi1>
    %494 = vector.broadcast %cst_195 : f32 to vector<6x256xf32>
    %495 = arith.select %493, %489, %494 : vector<6x256xi1>, vector<6x256xf32>
    %496 = vector.extract_strided_slice %486 {offsets = [0, 4], sizes = [6, 252], strides = [1, 1]} : vector<6x256xf32> to vector<6x252xf32>
    %cst_196 = arith.constant 0.000000e+00 : f32
    %497 = vector.broadcast %cst_196 : f32 to vector<6x4xf32>
    %498 = tpu.concatenate %496, %497 in 1 : vector<6x252xf32>, vector<6x4xf32> -> vector<6x256xf32>
    %c12_i32 = arith.constant 12 : i32
    %499 = vector.broadcast %c12_i32 : i32 to vector<1x256xi32>
    %500 = arith.cmpi slt, %2, %499 : vector<1x256xi32>
    %cst_197 = arith.constant 0.000000e+00 : f32
    %501 = vector.shape_cast %500 : vector<1x256xi1> to vector<1x256xi1>
    %502 = vector.broadcast %501 : vector<1x256xi1> to vector<6x256xi1>
    %503 = vector.broadcast %cst_197 : f32 to vector<6x256xf32>
    %504 = arith.select %502, %498, %503 : vector<6x256xi1>, vector<6x256xf32>
    %505 = tpu.concatenate %495, %486, %504 in 0 : vector<6x256xf32>, vector<6x256xf32>, vector<6x256xf32> -> vector<18x256xf32>
    %cst_198 = arith.constant 0.000000e+00 : f32
    %506 = vector.broadcast %cst_198 : f32 to vector<6x256xf32>
    %c0_199 = arith.constant 0 : index
    %c0_200 = arith.constant 0 : index
    %c0_201 = arith.constant 0 : index
    %507 = vector.load %arg22[%c0_199, %c0_200, %c0_201] : memref<3x6x18xf32, #tpu.memory_space<vmem>>, vector<1x6x18xf32>
    %508 = vector.shape_cast %507 : vector<1x6x18xf32> to vector<6x18xf32>
    %cst_202 = arith.constant dense<0.000000e+00> : vector<6x256xf32>
    %509 = tpu.matmul %508, %505, %cst_202 {dimension_numbers = #tpu.dot_dimension_numbers<[1], [0], [0], [1], [0, 0, 1, 1], [], []>} : vector<6x18xf32>, vector<18x256xf32>, vector<6x256xf32> -> vector<6x256xf32>
    %cst_203 = arith.constant 0.000000e+00 : f32
    %510 = vector.broadcast %cst_203 : f32 to vector<6x64xf32>
    %511 = vector.extract_strided_slice %509 {offsets = [0, 0], sizes = [6, 192], strides = [1, 1]} : vector<6x256xf32> to vector<6x192xf32>
    %512 = tpu.concatenate %510, %511 in 1 : vector<6x64xf32>, vector<6x192xf32> -> vector<6x256xf32>
    %513 = arith.addf %506, %512 : vector<6x256xf32>
    %c1_204 = arith.constant 1 : index
    %c0_205 = arith.constant 0 : index
    %c0_206 = arith.constant 0 : index
    %514 = vector.load %arg22[%c1_204, %c0_205, %c0_206] : memref<3x6x18xf32, #tpu.memory_space<vmem>>, vector<1x6x18xf32>
    %515 = vector.shape_cast %514 : vector<1x6x18xf32> to vector<6x18xf32>
    %cst_207 = arith.constant dense<0.000000e+00> : vector<6x256xf32>
    %516 = tpu.matmul %515, %505, %cst_207 {dimension_numbers = #tpu.dot_dimension_numbers<[1], [0], [0], [1], [0, 0, 1, 1], [], []>} : vector<6x18xf32>, vector<18x256xf32>, vector<6x256xf32> -> vector<6x256xf32>
    %517 = arith.addf %513, %516 : vector<6x256xf32>
    %c2_208 = arith.constant 2 : index
    %c0_209 = arith.constant 0 : index
    %c0_210 = arith.constant 0 : index
    %518 = vector.load %arg22[%c2_208, %c0_209, %c0_210] : memref<3x6x18xf32, #tpu.memory_space<vmem>>, vector<1x6x18xf32>
    %519 = vector.shape_cast %518 : vector<1x6x18xf32> to vector<6x18xf32>
    %cst_211 = arith.constant dense<0.000000e+00> : vector<6x256xf32>
    %520 = tpu.matmul %519, %505, %cst_211 {dimension_numbers = #tpu.dot_dimension_numbers<[1], [0], [0], [1], [0, 0, 1, 1], [], []>} : vector<6x18xf32>, vector<18x256xf32>, vector<6x256xf32> -> vector<6x256xf32>
    %521 = vector.extract_strided_slice %520 {offsets = [0, 64], sizes = [6, 192], strides = [1, 1]} : vector<6x256xf32> to vector<6x192xf32>
    %cst_212 = arith.constant 0.000000e+00 : f32
    %522 = vector.broadcast %cst_212 : f32 to vector<6x64xf32>
    %523 = tpu.concatenate %521, %522 in 1 : vector<6x192xf32>, vector<6x64xf32> -> vector<6x256xf32>
    %524 = arith.addf %517, %523 : vector<6x256xf32>
    %525 = vector.extract_strided_slice %485 {offsets = [6, 0], sizes = [6, 256], strides = [1, 1]} : vector<12x256xf32> to vector<6x256xf32>
    %526 = tpu.concatenate %524, %525 in 0 : vector<6x256xf32>, vector<6x256xf32> -> vector<12x256xf32>
    %cst_213 = arith.constant dense<0.000000e+00> : vector<12xf32>
    %527 = vector.multi_reduction <add>, %526, %cst_213 [1] : vector<12x256xf32> to vector<12xf32>
    %528 = vector.shape_cast %527 : vector<12xf32> to vector<12x1xf32>
    %cst_214 = arith.constant 2.560000e+02 : f32
    %529 = vector.broadcast %cst_214 : f32 to vector<12x1xf32>
    %530 = arith.divf %528, %529 : vector<12x1xf32>
    %cst_215 = arith.constant dense<0xFF800000> : vector<12xf32>
    %531 = vector.multi_reduction <maximumf>, %526, %cst_215 [1] : vector<12x256xf32> to vector<12xf32>
    %532 = vector.shape_cast %531 : vector<12xf32> to vector<12x1xf32>
    %533 = tpu.concatenate %530, %532 in 1 : vector<12x1xf32>, vector<12x1xf32> -> vector<12x2xf32>
    %c0_216 = arith.constant 0 : index
    %c0_217 = arith.constant 0 : index
    %534 = vector.load %arg17[%c0_216, %c0_217] : memref<3x12xf32, #tpu.memory_space<vmem>>, vector<3x12xf32>
    %cst_218 = arith.constant dense<0.000000e+00> : vector<3x2xf32>
    %535 = tpu.matmul %534, %533, %cst_218 {dimension_numbers = #tpu.dot_dimension_numbers<[1], [0], [0], [1], [0, 0, 1, 1], [], []>} : vector<3x12xf32>, vector<12x2xf32>, vector<3x2xf32> -> vector<3x2xf32>
    %cst_219 = arith.constant 0.000000e+00 : f32
    %536 = vector.broadcast %cst_219 : f32 to vector<3x2xf32>
    %537 = arith.maximumf %535, %536 : vector<3x2xf32>
    %c0_220 = arith.constant 0 : index
    %c0_221 = arith.constant 0 : index
    %538 = vector.load %arg18[%c0_220, %c0_221] : memref<12x3xf32, #tpu.memory_space<vmem>>, vector<12x3xf32>
    %cst_222 = arith.constant dense<0.000000e+00> : vector<12x2xf32>
    %539 = tpu.matmul %538, %537, %cst_222 {dimension_numbers = #tpu.dot_dimension_numbers<[1], [0], [0], [1], [0, 0, 1, 1], [], []>} : vector<12x3xf32>, vector<3x2xf32>, vector<12x2xf32> -> vector<12x2xf32>
    %540 = vector.extract_strided_slice %539 {offsets = [0, 0], sizes = [12, 1], strides = [1, 1]} : vector<12x2xf32> to vector<12x1xf32>
    %541 = vector.extract_strided_slice %539 {offsets = [0, 1], sizes = [12, 1], strides = [1, 1]} : vector<12x2xf32> to vector<12x1xf32>
    %542 = arith.addf %540, %541 : vector<12x1xf32>
    %543 = arith.negf %542 : vector<12x1xf32>
    %544 = math.exp %543 : vector<12x1xf32>
    %cst_223 = arith.constant 1.000000e+00 : f32
    %545 = vector.broadcast %cst_223 : f32 to vector<12x1xf32>
    %546 = arith.addf %545, %544 : vector<12x1xf32>
    %547 = arith.divf %545, %546 : vector<12x1xf32>
    %548 = vector.broadcast %547 : vector<12x1xf32> to vector<12x256xf32>
    %549 = arith.mulf %526, %548 : vector<12x256xf32>
    %cst_224 = arith.constant dense<0.000000e+00> : vector<256xf32>
    %550 = vector.multi_reduction <add>, %549, %cst_224 [0] : vector<12x256xf32> to vector<256xf32>
    %551 = vector.shape_cast %550 : vector<256xf32> to vector<1x256xf32>
    %cst_225 = arith.constant 1.200000e+01 : f32
    %552 = vector.broadcast %cst_225 : f32 to vector<1x256xf32>
    %553 = arith.divf %551, %552 : vector<1x256xf32>
    %cst_226 = arith.constant dense<0xFF800000> : vector<256xf32>
    %554 = vector.multi_reduction <maximumf>, %549, %cst_226 [0] : vector<12x256xf32> to vector<256xf32>
    %555 = vector.shape_cast %554 : vector<256xf32> to vector<1x256xf32>
    %cst_227 = arith.constant 0.000000e+00 : f32
    %556 = vector.broadcast %cst_227 : f32 to vector<1x3xf32>
    %557 = vector.extract_strided_slice %553 {offsets = [0, 0], sizes = [1, 253], strides = [1, 1]} : vector<1x256xf32> to vector<1x253xf32>
    %558 = tpu.concatenate %556, %557 in 1 : vector<1x3xf32>, vector<1x253xf32> -> vector<1x256xf32>
    %cst_228 = arith.constant 0.000000e+00 : f32
    %559 = vector.broadcast %cst_228 : f32 to vector<1x256xf32>
    %560 = arith.select %124, %558, %559 : vector<1x256xi1>, vector<1x256xf32>
    %cst_229 = arith.constant 0.000000e+00 : f32
    %561 = vector.broadcast %cst_229 : f32 to vector<1x2xf32>
    %562 = vector.extract_strided_slice %553 {offsets = [0, 0], sizes = [1, 254], strides = [1, 1]} : vector<1x256xf32> to vector<1x254xf32>
    %563 = tpu.concatenate %561, %562 in 1 : vector<1x2xf32>, vector<1x254xf32> -> vector<1x256xf32>
    %cst_230 = arith.constant 0.000000e+00 : f32
    %564 = vector.broadcast %cst_230 : f32 to vector<1x256xf32>
    %565 = arith.select %131, %563, %564 : vector<1x256xi1>, vector<1x256xf32>
    %cst_231 = arith.constant 0.000000e+00 : f32
    %566 = vector.broadcast %cst_231 : f32 to vector<1x1xf32>
    %567 = vector.extract_strided_slice %553 {offsets = [0, 0], sizes = [1, 255], strides = [1, 1]} : vector<1x256xf32> to vector<1x255xf32>
    %568 = tpu.concatenate %566, %567 in 1 : vector<1x1xf32>, vector<1x255xf32> -> vector<1x256xf32>
    %cst_232 = arith.constant 0.000000e+00 : f32
    %569 = vector.broadcast %cst_232 : f32 to vector<1x256xf32>
    %570 = arith.select %9, %568, %569 : vector<1x256xi1>, vector<1x256xf32>
    %571 = vector.extract_strided_slice %553 {offsets = [0, 1], sizes = [1, 255], strides = [1, 1]} : vector<1x256xf32> to vector<1x255xf32>
    %cst_233 = arith.constant 0.000000e+00 : f32
    %572 = vector.broadcast %cst_233 : f32 to vector<1x1xf32>
    %573 = tpu.concatenate %571, %572 in 1 : vector<1x255xf32>, vector<1x1xf32> -> vector<1x256xf32>
    %cst_234 = arith.constant 0.000000e+00 : f32
    %574 = vector.broadcast %cst_234 : f32 to vector<1x256xf32>
    %575 = arith.select %18, %573, %574 : vector<1x256xi1>, vector<1x256xf32>
    %576 = vector.extract_strided_slice %553 {offsets = [0, 2], sizes = [1, 254], strides = [1, 1]} : vector<1x256xf32> to vector<1x254xf32>
    %cst_235 = arith.constant 0.000000e+00 : f32
    %577 = vector.broadcast %cst_235 : f32 to vector<1x2xf32>
    %578 = tpu.concatenate %576, %577 in 1 : vector<1x254xf32>, vector<1x2xf32> -> vector<1x256xf32>
    %cst_236 = arith.constant 0.000000e+00 : f32
    %579 = vector.broadcast %cst_236 : f32 to vector<1x256xf32>
    %580 = arith.select %148, %578, %579 : vector<1x256xi1>, vector<1x256xf32>
    %581 = vector.extract_strided_slice %553 {offsets = [0, 3], sizes = [1, 253], strides = [1, 1]} : vector<1x256xf32> to vector<1x253xf32>
    %cst_237 = arith.constant 0.000000e+00 : f32
    %582 = vector.broadcast %cst_237 : f32 to vector<1x3xf32>
    %583 = tpu.concatenate %581, %582 in 1 : vector<1x253xf32>, vector<1x3xf32> -> vector<1x256xf32>
    %cst_238 = arith.constant 0.000000e+00 : f32
    %584 = vector.broadcast %cst_238 : f32 to vector<1x256xf32>
    %585 = arith.select %155, %583, %584 : vector<1x256xi1>, vector<1x256xf32>
    %cst_239 = arith.constant 0.000000e+00 : f32
    %586 = vector.broadcast %cst_239 : f32 to vector<1x3xf32>
    %587 = vector.extract_strided_slice %555 {offsets = [0, 0], sizes = [1, 253], strides = [1, 1]} : vector<1x256xf32> to vector<1x253xf32>
    %588 = tpu.concatenate %586, %587 in 1 : vector<1x3xf32>, vector<1x253xf32> -> vector<1x256xf32>
    %cst_240 = arith.constant 0.000000e+00 : f32
    %589 = vector.broadcast %cst_240 : f32 to vector<1x256xf32>
    %590 = arith.select %124, %588, %589 : vector<1x256xi1>, vector<1x256xf32>
    %cst_241 = arith.constant 0.000000e+00 : f32
    %591 = vector.broadcast %cst_241 : f32 to vector<1x2xf32>
    %592 = vector.extract_strided_slice %555 {offsets = [0, 0], sizes = [1, 254], strides = [1, 1]} : vector<1x256xf32> to vector<1x254xf32>
    %593 = tpu.concatenate %591, %592 in 1 : vector<1x2xf32>, vector<1x254xf32> -> vector<1x256xf32>
    %cst_242 = arith.constant 0.000000e+00 : f32
    %594 = vector.broadcast %cst_242 : f32 to vector<1x256xf32>
    %595 = arith.select %131, %593, %594 : vector<1x256xi1>, vector<1x256xf32>
    %cst_243 = arith.constant 0.000000e+00 : f32
    %596 = vector.broadcast %cst_243 : f32 to vector<1x1xf32>
    %597 = vector.extract_strided_slice %555 {offsets = [0, 0], sizes = [1, 255], strides = [1, 1]} : vector<1x256xf32> to vector<1x255xf32>
    %598 = tpu.concatenate %596, %597 in 1 : vector<1x1xf32>, vector<1x255xf32> -> vector<1x256xf32>
    %cst_244 = arith.constant 0.000000e+00 : f32
    %599 = vector.broadcast %cst_244 : f32 to vector<1x256xf32>
    %600 = arith.select %9, %598, %599 : vector<1x256xi1>, vector<1x256xf32>
    %601 = vector.extract_strided_slice %555 {offsets = [0, 1], sizes = [1, 255], strides = [1, 1]} : vector<1x256xf32> to vector<1x255xf32>
    %cst_245 = arith.constant 0.000000e+00 : f32
    %602 = vector.broadcast %cst_245 : f32 to vector<1x1xf32>
    %603 = tpu.concatenate %601, %602 in 1 : vector<1x255xf32>, vector<1x1xf32> -> vector<1x256xf32>
    %cst_246 = arith.constant 0.000000e+00 : f32
    %604 = vector.broadcast %cst_246 : f32 to vector<1x256xf32>
    %605 = arith.select %18, %603, %604 : vector<1x256xi1>, vector<1x256xf32>
    %606 = vector.extract_strided_slice %555 {offsets = [0, 2], sizes = [1, 254], strides = [1, 1]} : vector<1x256xf32> to vector<1x254xf32>
    %cst_247 = arith.constant 0.000000e+00 : f32
    %607 = vector.broadcast %cst_247 : f32 to vector<1x2xf32>
    %608 = tpu.concatenate %606, %607 in 1 : vector<1x254xf32>, vector<1x2xf32> -> vector<1x256xf32>
    %cst_248 = arith.constant 0.000000e+00 : f32
    %609 = vector.broadcast %cst_248 : f32 to vector<1x256xf32>
    %610 = arith.select %148, %608, %609 : vector<1x256xi1>, vector<1x256xf32>
    %611 = vector.extract_strided_slice %555 {offsets = [0, 3], sizes = [1, 253], strides = [1, 1]} : vector<1x256xf32> to vector<1x253xf32>
    %cst_249 = arith.constant 0.000000e+00 : f32
    %612 = vector.broadcast %cst_249 : f32 to vector<1x3xf32>
    %613 = tpu.concatenate %611, %612 in 1 : vector<1x253xf32>, vector<1x3xf32> -> vector<1x256xf32>
    %cst_250 = arith.constant 0.000000e+00 : f32
    %614 = vector.broadcast %cst_250 : f32 to vector<1x256xf32>
    %615 = arith.select %155, %613, %614 : vector<1x256xi1>, vector<1x256xf32>
    %616 = tpu.concatenate %560, %565, %570, %553, %575, %580, %585, %590, %595, %600, %555, %605, %610, %615 in 0 : vector<1x256xf32>, vector<1x256xf32>, vector<1x256xf32>, vector<1x256xf32>, vector<1x256xf32>, vector<1x256xf32>, vector<1x256xf32>, vector<1x256xf32>, vector<1x256xf32>, vector<1x256xf32>, vector<1x256xf32>, vector<1x256xf32>, vector<1x256xf32>, vector<1x256xf32> -> vector<14x256xf32>
    %c0_251 = arith.constant 0 : index
    %c0_252 = arith.constant 0 : index
    %617 = vector.load %arg19[%c0_251, %c0_252] : memref<14x7xf32, #tpu.memory_space<vmem>>, vector<14x7xf32>
    %cst_253 = arith.constant 0.000000e+00 : f32
    %618 = vector.broadcast %cst_253 : f32 to vector<1x256xf32>
    %619 = vector.extract_strided_slice %617 {offsets = [0, 0], sizes = [14, 1], strides = [1, 1]} : vector<14x7xf32> to vector<14x1xf32>
    %620 = vector.broadcast %619 : vector<14x1xf32> to vector<14x256xf32>
    %621 = arith.mulf %616, %620 : vector<14x256xf32>
    %cst_254 = arith.constant dense<0.000000e+00> : vector<256xf32>
    %622 = vector.multi_reduction <add>, %621, %cst_254 [0] : vector<14x256xf32> to vector<256xf32>
    %623 = vector.shape_cast %622 : vector<256xf32> to vector<1x256xf32>
    %cst_255 = arith.constant 0.000000e+00 : f32
    %624 = vector.broadcast %cst_255 : f32 to vector<1x48xf32>
    %625 = vector.extract_strided_slice %623 {offsets = [0, 0], sizes = [1, 208], strides = [1, 1]} : vector<1x256xf32> to vector<1x208xf32>
    %626 = tpu.concatenate %624, %625 in 1 : vector<1x48xf32>, vector<1x208xf32> -> vector<1x256xf32>
    %627 = arith.addf %618, %626 : vector<1x256xf32>
    %628 = vector.extract_strided_slice %617 {offsets = [0, 1], sizes = [14, 1], strides = [1, 1]} : vector<14x7xf32> to vector<14x1xf32>
    %629 = vector.broadcast %628 : vector<14x1xf32> to vector<14x256xf32>
    %630 = arith.mulf %616, %629 : vector<14x256xf32>
    %cst_256 = arith.constant dense<0.000000e+00> : vector<256xf32>
    %631 = vector.multi_reduction <add>, %630, %cst_256 [0] : vector<14x256xf32> to vector<256xf32>
    %632 = vector.shape_cast %631 : vector<256xf32> to vector<1x256xf32>
    %cst_257 = arith.constant 0.000000e+00 : f32
    %633 = vector.broadcast %cst_257 : f32 to vector<1x32xf32>
    %634 = vector.extract_strided_slice %632 {offsets = [0, 0], sizes = [1, 224], strides = [1, 1]} : vector<1x256xf32> to vector<1x224xf32>
    %635 = tpu.concatenate %633, %634 in 1 : vector<1x32xf32>, vector<1x224xf32> -> vector<1x256xf32>
    %636 = arith.addf %627, %635 : vector<1x256xf32>
    %637 = vector.extract_strided_slice %617 {offsets = [0, 2], sizes = [14, 1], strides = [1, 1]} : vector<14x7xf32> to vector<14x1xf32>
    %638 = vector.broadcast %637 : vector<14x1xf32> to vector<14x256xf32>
    %639 = arith.mulf %616, %638 : vector<14x256xf32>
    %cst_258 = arith.constant dense<0.000000e+00> : vector<256xf32>
    %640 = vector.multi_reduction <add>, %639, %cst_258 [0] : vector<14x256xf32> to vector<256xf32>
    %641 = vector.shape_cast %640 : vector<256xf32> to vector<1x256xf32>
    %cst_259 = arith.constant 0.000000e+00 : f32
    %642 = vector.broadcast %cst_259 : f32 to vector<1x16xf32>
    %643 = vector.extract_strided_slice %641 {offsets = [0, 0], sizes = [1, 240], strides = [1, 1]} : vector<1x256xf32> to vector<1x240xf32>
    %644 = tpu.concatenate %642, %643 in 1 : vector<1x16xf32>, vector<1x240xf32> -> vector<1x256xf32>
    %645 = arith.addf %636, %644 : vector<1x256xf32>
    %646 = vector.extract_strided_slice %617 {offsets = [0, 3], sizes = [14, 1], strides = [1, 1]} : vector<14x7xf32> to vector<14x1xf32>
    %647 = vector.broadcast %646 : vector<14x1xf32> to vector<14x256xf32>
    %648 = arith.mulf %616, %647 : vector<14x256xf32>
    %cst_260 = arith.constant dense<0.000000e+00> : vector<256xf32>
    %649 = vector.multi_reduction <add>, %648, %cst_260 [0] : vector<14x256xf32> to vector<256xf32>
    %650 = vector.shape_cast %649 : vector<256xf32> to vector<1x256xf32>
    %651 = arith.addf %645, %650 : vector<1x256xf32>
    %652 = vector.extract_strided_slice %617 {offsets = [0, 4], sizes = [14, 1], strides = [1, 1]} : vector<14x7xf32> to vector<14x1xf32>
    %653 = vector.broadcast %652 : vector<14x1xf32> to vector<14x256xf32>
    %654 = arith.mulf %616, %653 : vector<14x256xf32>
    %cst_261 = arith.constant dense<0.000000e+00> : vector<256xf32>
    %655 = vector.multi_reduction <add>, %654, %cst_261 [0] : vector<14x256xf32> to vector<256xf32>
    %656 = vector.shape_cast %655 : vector<256xf32> to vector<1x256xf32>
    %657 = vector.extract_strided_slice %656 {offsets = [0, 16], sizes = [1, 240], strides = [1, 1]} : vector<1x256xf32> to vector<1x240xf32>
    %cst_262 = arith.constant 0.000000e+00 : f32
    %658 = vector.broadcast %cst_262 : f32 to vector<1x16xf32>
    %659 = tpu.concatenate %657, %658 in 1 : vector<1x240xf32>, vector<1x16xf32> -> vector<1x256xf32>
    %660 = arith.addf %651, %659 : vector<1x256xf32>
    %661 = vector.extract_strided_slice %617 {offsets = [0, 5], sizes = [14, 1], strides = [1, 1]} : vector<14x7xf32> to vector<14x1xf32>
    %662 = vector.broadcast %661 : vector<14x1xf32> to vector<14x256xf32>
    %663 = arith.mulf %616, %662 : vector<14x256xf32>
    %cst_263 = arith.constant dense<0.000000e+00> : vector<256xf32>
    %664 = vector.multi_reduction <add>, %663, %cst_263 [0] : vector<14x256xf32> to vector<256xf32>
    %665 = vector.shape_cast %664 : vector<256xf32> to vector<1x256xf32>
    %666 = vector.extract_strided_slice %665 {offsets = [0, 32], sizes = [1, 224], strides = [1, 1]} : vector<1x256xf32> to vector<1x224xf32>
    %cst_264 = arith.constant 0.000000e+00 : f32
    %667 = vector.broadcast %cst_264 : f32 to vector<1x32xf32>
    %668 = tpu.concatenate %666, %667 in 1 : vector<1x224xf32>, vector<1x32xf32> -> vector<1x256xf32>
    %669 = arith.addf %660, %668 : vector<1x256xf32>
    %670 = vector.extract_strided_slice %617 {offsets = [0, 6], sizes = [14, 1], strides = [1, 1]} : vector<14x7xf32> to vector<14x1xf32>
    %671 = vector.broadcast %670 : vector<14x1xf32> to vector<14x256xf32>
    %672 = arith.mulf %616, %671 : vector<14x256xf32>
    %cst_265 = arith.constant dense<0.000000e+00> : vector<256xf32>
    %673 = vector.multi_reduction <add>, %672, %cst_265 [0] : vector<14x256xf32> to vector<256xf32>
    %674 = vector.shape_cast %673 : vector<256xf32> to vector<1x256xf32>
    %675 = vector.extract_strided_slice %674 {offsets = [0, 48], sizes = [1, 208], strides = [1, 1]} : vector<1x256xf32> to vector<1x208xf32>
    %cst_266 = arith.constant 0.000000e+00 : f32
    %676 = vector.broadcast %cst_266 : f32 to vector<1x48xf32>
    %677 = tpu.concatenate %675, %676 in 1 : vector<1x208xf32>, vector<1x48xf32> -> vector<1x256xf32>
    %678 = arith.addf %669, %677 : vector<1x256xf32>
    %679 = arith.negf %678 : vector<1x256xf32>
    %680 = math.exp %679 : vector<1x256xf32>
    %cst_267 = arith.constant 1.000000e+00 : f32
    %681 = vector.broadcast %cst_267 : f32 to vector<1x256xf32>
    %682 = arith.addf %681, %680 : vector<1x256xf32>
    %683 = arith.divf %681, %682 : vector<1x256xf32>
    %684 = vector.broadcast %683 : vector<1x256xf32> to vector<12x256xf32>
    %685 = arith.mulf %549, %684 : vector<12x256xf32>
    %c0_268 = arith.constant 0 : index
    %c0_269 = arith.constant 0 : index
    %686 = vector.load %arg20[%c0_268, %c0_269] : memref<24x12xf32, #tpu.memory_space<vmem>>, vector<24x12xf32>
    %cst_270 = arith.constant dense<0.000000e+00> : vector<24x256xf32>
    %687 = tpu.matmul %686, %685, %cst_270 {dimension_numbers = #tpu.dot_dimension_numbers<[1], [0], [0], [1], [0, 0, 1, 1], [], []>} : vector<24x12xf32>, vector<12x256xf32>, vector<24x256xf32> -> vector<24x256xf32>
    %c0_271 = arith.constant 0 : index
    %c0_272 = arith.constant 0 : index
    %688 = vector.load %arg16[%c0_271, %c0_272] : memref<24x1xf32, #tpu.memory_space<vmem>>, vector<24x1xf32>
    %689 = vector.broadcast %688 : vector<24x1xf32> to vector<24x256xf32>
    %690 = arith.addf %687, %689 : vector<24x256xf32>
    %cst_273 = arith.constant 5.000000e-01 : f32
    %691 = vector.broadcast %cst_273 : f32 to vector<24x256xf32>
    %692 = arith.mulf %691, %690 : vector<24x256xf32>
    %cst_274 = arith.constant 0.707106769 : f32
    %693 = vector.broadcast %cst_274 : f32 to vector<24x256xf32>
    %694 = arith.mulf %690, %693 : vector<24x256xf32>
    %695 = math.erf %694 : vector<24x256xf32>
    %cst_275 = arith.constant 1.000000e+00 : f32
    %696 = vector.broadcast %cst_275 : f32 to vector<24x256xf32>
    %697 = arith.addf %696, %695 : vector<24x256xf32>
    %698 = arith.mulf %692, %697 : vector<24x256xf32>
    %c0_276 = arith.constant 0 : index
    %c0_277 = arith.constant 0 : index
    %699 = vector.load %arg21[%c0_276, %c0_277] : memref<12x24xf32, #tpu.memory_space<vmem>>, vector<12x24xf32>
    %cst_278 = arith.constant dense<0.000000e+00> : vector<12x256xf32>
    %700 = tpu.matmul %699, %698, %cst_278 {dimension_numbers = #tpu.dot_dimension_numbers<[1], [0], [0], [1], [0, 0, 1, 1], [], []>} : vector<12x24xf32>, vector<24x256xf32>, vector<12x256xf32> -> vector<12x256xf32>
    %701 = arith.addf %485, %700 : vector<12x256xf32>
    %702 = vector.extract_strided_slice %701 {offsets = [0, 0], sizes = [6, 256], strides = [1, 1]} : vector<12x256xf32> to vector<6x256xf32>
    %cst_279 = arith.constant 0.000000e+00 : f32
    %703 = vector.broadcast %cst_279 : f32 to vector<6x8xf32>
    %704 = vector.extract_strided_slice %702 {offsets = [0, 0], sizes = [6, 248], strides = [1, 1]} : vector<6x256xf32> to vector<6x248xf32>
    %705 = tpu.concatenate %703, %704 in 1 : vector<6x8xf32>, vector<6x248xf32> -> vector<6x256xf32>
    %c8_i32 = arith.constant 8 : i32
    %706 = vector.broadcast %c8_i32 : i32 to vector<1x256xi32>
    %707 = arith.cmpi sge, %2, %706 : vector<1x256xi32>
    %cst_280 = arith.constant 0.000000e+00 : f32
    %708 = vector.shape_cast %707 : vector<1x256xi1> to vector<1x256xi1>
    %709 = vector.broadcast %708 : vector<1x256xi1> to vector<6x256xi1>
    %710 = vector.broadcast %cst_280 : f32 to vector<6x256xf32>
    %711 = arith.select %709, %705, %710 : vector<6x256xi1>, vector<6x256xf32>
    %712 = vector.extract_strided_slice %702 {offsets = [0, 8], sizes = [6, 248], strides = [1, 1]} : vector<6x256xf32> to vector<6x248xf32>
    %cst_281 = arith.constant 0.000000e+00 : f32
    %713 = vector.broadcast %cst_281 : f32 to vector<6x8xf32>
    %714 = tpu.concatenate %712, %713 in 1 : vector<6x248xf32>, vector<6x8xf32> -> vector<6x256xf32>
    %c8_i32_282 = arith.constant 8 : i32
    %715 = vector.broadcast %c8_i32_282 : i32 to vector<1x256xi32>
    %716 = arith.cmpi slt, %2, %715 : vector<1x256xi32>
    %cst_283 = arith.constant 0.000000e+00 : f32
    %717 = vector.shape_cast %716 : vector<1x256xi1> to vector<1x256xi1>
    %718 = vector.broadcast %717 : vector<1x256xi1> to vector<6x256xi1>
    %719 = vector.broadcast %cst_283 : f32 to vector<6x256xf32>
    %720 = arith.select %718, %714, %719 : vector<6x256xi1>, vector<6x256xf32>
    %721 = tpu.concatenate %711, %702, %720 in 0 : vector<6x256xf32>, vector<6x256xf32>, vector<6x256xf32> -> vector<18x256xf32>
    %cst_284 = arith.constant 0.000000e+00 : f32
    %722 = vector.broadcast %cst_284 : f32 to vector<6x256xf32>
    %c0_285 = arith.constant 0 : index
    %c0_286 = arith.constant 0 : index
    %c0_287 = arith.constant 0 : index
    %723 = vector.load %arg29[%c0_285, %c0_286, %c0_287] : memref<3x6x18xf32, #tpu.memory_space<vmem>>, vector<1x6x18xf32>
    %724 = vector.shape_cast %723 : vector<1x6x18xf32> to vector<6x18xf32>
    %cst_288 = arith.constant dense<0.000000e+00> : vector<6x256xf32>
    %725 = tpu.matmul %724, %721, %cst_288 {dimension_numbers = #tpu.dot_dimension_numbers<[1], [0], [0], [1], [0, 0, 1, 1], [], []>} : vector<6x18xf32>, vector<18x256xf32>, vector<6x256xf32> -> vector<6x256xf32>
    %cst_289 = arith.constant 0.000000e+00 : f32
    %726 = vector.broadcast %cst_289 : f32 to vector<6x128xf32>
    %727 = vector.extract_strided_slice %725 {offsets = [0, 0], sizes = [6, 128], strides = [1, 1]} : vector<6x256xf32> to vector<6x128xf32>
    %728 = tpu.concatenate %726, %727 in 1 : vector<6x128xf32>, vector<6x128xf32> -> vector<6x256xf32>
    %729 = arith.addf %722, %728 : vector<6x256xf32>
    %c1_290 = arith.constant 1 : index
    %c0_291 = arith.constant 0 : index
    %c0_292 = arith.constant 0 : index
    %730 = vector.load %arg29[%c1_290, %c0_291, %c0_292] : memref<3x6x18xf32, #tpu.memory_space<vmem>>, vector<1x6x18xf32>
    %731 = vector.shape_cast %730 : vector<1x6x18xf32> to vector<6x18xf32>
    %cst_293 = arith.constant dense<0.000000e+00> : vector<6x256xf32>
    %732 = tpu.matmul %731, %721, %cst_293 {dimension_numbers = #tpu.dot_dimension_numbers<[1], [0], [0], [1], [0, 0, 1, 1], [], []>} : vector<6x18xf32>, vector<18x256xf32>, vector<6x256xf32> -> vector<6x256xf32>
    %733 = arith.addf %729, %732 : vector<6x256xf32>
    %c2_294 = arith.constant 2 : index
    %c0_295 = arith.constant 0 : index
    %c0_296 = arith.constant 0 : index
    %734 = vector.load %arg29[%c2_294, %c0_295, %c0_296] : memref<3x6x18xf32, #tpu.memory_space<vmem>>, vector<1x6x18xf32>
    %735 = vector.shape_cast %734 : vector<1x6x18xf32> to vector<6x18xf32>
    %cst_297 = arith.constant dense<0.000000e+00> : vector<6x256xf32>
    %736 = tpu.matmul %735, %721, %cst_297 {dimension_numbers = #tpu.dot_dimension_numbers<[1], [0], [0], [1], [0, 0, 1, 1], [], []>} : vector<6x18xf32>, vector<18x256xf32>, vector<6x256xf32> -> vector<6x256xf32>
    %737 = vector.extract_strided_slice %736 {offsets = [0, 128], sizes = [6, 128], strides = [1, 1]} : vector<6x256xf32> to vector<6x128xf32>
    %cst_298 = arith.constant 0.000000e+00 : f32
    %738 = vector.broadcast %cst_298 : f32 to vector<6x128xf32>
    %739 = tpu.concatenate %737, %738 in 1 : vector<6x128xf32>, vector<6x128xf32> -> vector<6x256xf32>
    %740 = arith.addf %733, %739 : vector<6x256xf32>
    %741 = vector.extract_strided_slice %701 {offsets = [6, 0], sizes = [6, 256], strides = [1, 1]} : vector<12x256xf32> to vector<6x256xf32>
    %742 = tpu.concatenate %740, %741 in 0 : vector<6x256xf32>, vector<6x256xf32> -> vector<12x256xf32>
    %cst_299 = arith.constant dense<0.000000e+00> : vector<12xf32>
    %743 = vector.multi_reduction <add>, %742, %cst_299 [1] : vector<12x256xf32> to vector<12xf32>
    %744 = vector.shape_cast %743 : vector<12xf32> to vector<12x1xf32>
    %cst_300 = arith.constant 2.560000e+02 : f32
    %745 = vector.broadcast %cst_300 : f32 to vector<12x1xf32>
    %746 = arith.divf %744, %745 : vector<12x1xf32>
    %cst_301 = arith.constant dense<0xFF800000> : vector<12xf32>
    %747 = vector.multi_reduction <maximumf>, %742, %cst_301 [1] : vector<12x256xf32> to vector<12xf32>
    %748 = vector.shape_cast %747 : vector<12xf32> to vector<12x1xf32>
    %749 = tpu.concatenate %746, %748 in 1 : vector<12x1xf32>, vector<12x1xf32> -> vector<12x2xf32>
    %c0_302 = arith.constant 0 : index
    %c0_303 = arith.constant 0 : index
    %750 = vector.load %arg24[%c0_302, %c0_303] : memref<3x12xf32, #tpu.memory_space<vmem>>, vector<3x12xf32>
    %cst_304 = arith.constant dense<0.000000e+00> : vector<3x2xf32>
    %751 = tpu.matmul %750, %749, %cst_304 {dimension_numbers = #tpu.dot_dimension_numbers<[1], [0], [0], [1], [0, 0, 1, 1], [], []>} : vector<3x12xf32>, vector<12x2xf32>, vector<3x2xf32> -> vector<3x2xf32>
    %cst_305 = arith.constant 0.000000e+00 : f32
    %752 = vector.broadcast %cst_305 : f32 to vector<3x2xf32>
    %753 = arith.maximumf %751, %752 : vector<3x2xf32>
    %c0_306 = arith.constant 0 : index
    %c0_307 = arith.constant 0 : index
    %754 = vector.load %arg25[%c0_306, %c0_307] : memref<12x3xf32, #tpu.memory_space<vmem>>, vector<12x3xf32>
    %cst_308 = arith.constant dense<0.000000e+00> : vector<12x2xf32>
    %755 = tpu.matmul %754, %753, %cst_308 {dimension_numbers = #tpu.dot_dimension_numbers<[1], [0], [0], [1], [0, 0, 1, 1], [], []>} : vector<12x3xf32>, vector<3x2xf32>, vector<12x2xf32> -> vector<12x2xf32>
    %756 = vector.extract_strided_slice %755 {offsets = [0, 0], sizes = [12, 1], strides = [1, 1]} : vector<12x2xf32> to vector<12x1xf32>
    %757 = vector.extract_strided_slice %755 {offsets = [0, 1], sizes = [12, 1], strides = [1, 1]} : vector<12x2xf32> to vector<12x1xf32>
    %758 = arith.addf %756, %757 : vector<12x1xf32>
    %759 = arith.negf %758 : vector<12x1xf32>
    %760 = math.exp %759 : vector<12x1xf32>
    %cst_309 = arith.constant 1.000000e+00 : f32
    %761 = vector.broadcast %cst_309 : f32 to vector<12x1xf32>
    %762 = arith.addf %761, %760 : vector<12x1xf32>
    %763 = arith.divf %761, %762 : vector<12x1xf32>
    %764 = vector.broadcast %763 : vector<12x1xf32> to vector<12x256xf32>
    %765 = arith.mulf %742, %764 : vector<12x256xf32>
    %cst_310 = arith.constant dense<0.000000e+00> : vector<256xf32>
    %766 = vector.multi_reduction <add>, %765, %cst_310 [0] : vector<12x256xf32> to vector<256xf32>
    %767 = vector.shape_cast %766 : vector<256xf32> to vector<1x256xf32>
    %cst_311 = arith.constant 1.200000e+01 : f32
    %768 = vector.broadcast %cst_311 : f32 to vector<1x256xf32>
    %769 = arith.divf %767, %768 : vector<1x256xf32>
    %cst_312 = arith.constant dense<0xFF800000> : vector<256xf32>
    %770 = vector.multi_reduction <maximumf>, %765, %cst_312 [0] : vector<12x256xf32> to vector<256xf32>
    %771 = vector.shape_cast %770 : vector<256xf32> to vector<1x256xf32>
    %cst_313 = arith.constant 0.000000e+00 : f32
    %772 = vector.broadcast %cst_313 : f32 to vector<1x3xf32>
    %773 = vector.extract_strided_slice %769 {offsets = [0, 0], sizes = [1, 253], strides = [1, 1]} : vector<1x256xf32> to vector<1x253xf32>
    %774 = tpu.concatenate %772, %773 in 1 : vector<1x3xf32>, vector<1x253xf32> -> vector<1x256xf32>
    %cst_314 = arith.constant 0.000000e+00 : f32
    %775 = vector.broadcast %cst_314 : f32 to vector<1x256xf32>
    %776 = arith.select %124, %774, %775 : vector<1x256xi1>, vector<1x256xf32>
    %cst_315 = arith.constant 0.000000e+00 : f32
    %777 = vector.broadcast %cst_315 : f32 to vector<1x2xf32>
    %778 = vector.extract_strided_slice %769 {offsets = [0, 0], sizes = [1, 254], strides = [1, 1]} : vector<1x256xf32> to vector<1x254xf32>
    %779 = tpu.concatenate %777, %778 in 1 : vector<1x2xf32>, vector<1x254xf32> -> vector<1x256xf32>
    %cst_316 = arith.constant 0.000000e+00 : f32
    %780 = vector.broadcast %cst_316 : f32 to vector<1x256xf32>
    %781 = arith.select %131, %779, %780 : vector<1x256xi1>, vector<1x256xf32>
    %cst_317 = arith.constant 0.000000e+00 : f32
    %782 = vector.broadcast %cst_317 : f32 to vector<1x1xf32>
    %783 = vector.extract_strided_slice %769 {offsets = [0, 0], sizes = [1, 255], strides = [1, 1]} : vector<1x256xf32> to vector<1x255xf32>
    %784 = tpu.concatenate %782, %783 in 1 : vector<1x1xf32>, vector<1x255xf32> -> vector<1x256xf32>
    %cst_318 = arith.constant 0.000000e+00 : f32
    %785 = vector.broadcast %cst_318 : f32 to vector<1x256xf32>
    %786 = arith.select %9, %784, %785 : vector<1x256xi1>, vector<1x256xf32>
    %787 = vector.extract_strided_slice %769 {offsets = [0, 1], sizes = [1, 255], strides = [1, 1]} : vector<1x256xf32> to vector<1x255xf32>
    %cst_319 = arith.constant 0.000000e+00 : f32
    %788 = vector.broadcast %cst_319 : f32 to vector<1x1xf32>
    %789 = tpu.concatenate %787, %788 in 1 : vector<1x255xf32>, vector<1x1xf32> -> vector<1x256xf32>
    %cst_320 = arith.constant 0.000000e+00 : f32
    %790 = vector.broadcast %cst_320 : f32 to vector<1x256xf32>
    %791 = arith.select %18, %789, %790 : vector<1x256xi1>, vector<1x256xf32>
    %792 = vector.extract_strided_slice %769 {offsets = [0, 2], sizes = [1, 254], strides = [1, 1]} : vector<1x256xf32> to vector<1x254xf32>
    %cst_321 = arith.constant 0.000000e+00 : f32
    %793 = vector.broadcast %cst_321 : f32 to vector<1x2xf32>
    %794 = tpu.concatenate %792, %793 in 1 : vector<1x254xf32>, vector<1x2xf32> -> vector<1x256xf32>
    %cst_322 = arith.constant 0.000000e+00 : f32
    %795 = vector.broadcast %cst_322 : f32 to vector<1x256xf32>
    %796 = arith.select %148, %794, %795 : vector<1x256xi1>, vector<1x256xf32>
    %797 = vector.extract_strided_slice %769 {offsets = [0, 3], sizes = [1, 253], strides = [1, 1]} : vector<1x256xf32> to vector<1x253xf32>
    %cst_323 = arith.constant 0.000000e+00 : f32
    %798 = vector.broadcast %cst_323 : f32 to vector<1x3xf32>
    %799 = tpu.concatenate %797, %798 in 1 : vector<1x253xf32>, vector<1x3xf32> -> vector<1x256xf32>
    %cst_324 = arith.constant 0.000000e+00 : f32
    %800 = vector.broadcast %cst_324 : f32 to vector<1x256xf32>
    %801 = arith.select %155, %799, %800 : vector<1x256xi1>, vector<1x256xf32>
    %cst_325 = arith.constant 0.000000e+00 : f32
    %802 = vector.broadcast %cst_325 : f32 to vector<1x3xf32>
    %803 = vector.extract_strided_slice %771 {offsets = [0, 0], sizes = [1, 253], strides = [1, 1]} : vector<1x256xf32> to vector<1x253xf32>
    %804 = tpu.concatenate %802, %803 in 1 : vector<1x3xf32>, vector<1x253xf32> -> vector<1x256xf32>
    %cst_326 = arith.constant 0.000000e+00 : f32
    %805 = vector.broadcast %cst_326 : f32 to vector<1x256xf32>
    %806 = arith.select %124, %804, %805 : vector<1x256xi1>, vector<1x256xf32>
    %cst_327 = arith.constant 0.000000e+00 : f32
    %807 = vector.broadcast %cst_327 : f32 to vector<1x2xf32>
    %808 = vector.extract_strided_slice %771 {offsets = [0, 0], sizes = [1, 254], strides = [1, 1]} : vector<1x256xf32> to vector<1x254xf32>
    %809 = tpu.concatenate %807, %808 in 1 : vector<1x2xf32>, vector<1x254xf32> -> vector<1x256xf32>
    %cst_328 = arith.constant 0.000000e+00 : f32
    %810 = vector.broadcast %cst_328 : f32 to vector<1x256xf32>
    %811 = arith.select %131, %809, %810 : vector<1x256xi1>, vector<1x256xf32>
    %cst_329 = arith.constant 0.000000e+00 : f32
    %812 = vector.broadcast %cst_329 : f32 to vector<1x1xf32>
    %813 = vector.extract_strided_slice %771 {offsets = [0, 0], sizes = [1, 255], strides = [1, 1]} : vector<1x256xf32> to vector<1x255xf32>
    %814 = tpu.concatenate %812, %813 in 1 : vector<1x1xf32>, vector<1x255xf32> -> vector<1x256xf32>
    %cst_330 = arith.constant 0.000000e+00 : f32
    %815 = vector.broadcast %cst_330 : f32 to vector<1x256xf32>
    %816 = arith.select %9, %814, %815 : vector<1x256xi1>, vector<1x256xf32>
    %817 = vector.extract_strided_slice %771 {offsets = [0, 1], sizes = [1, 255], strides = [1, 1]} : vector<1x256xf32> to vector<1x255xf32>
    %cst_331 = arith.constant 0.000000e+00 : f32
    %818 = vector.broadcast %cst_331 : f32 to vector<1x1xf32>
    %819 = tpu.concatenate %817, %818 in 1 : vector<1x255xf32>, vector<1x1xf32> -> vector<1x256xf32>
    %cst_332 = arith.constant 0.000000e+00 : f32
    %820 = vector.broadcast %cst_332 : f32 to vector<1x256xf32>
    %821 = arith.select %18, %819, %820 : vector<1x256xi1>, vector<1x256xf32>
    %822 = vector.extract_strided_slice %771 {offsets = [0, 2], sizes = [1, 254], strides = [1, 1]} : vector<1x256xf32> to vector<1x254xf32>
    %cst_333 = arith.constant 0.000000e+00 : f32
    %823 = vector.broadcast %cst_333 : f32 to vector<1x2xf32>
    %824 = tpu.concatenate %822, %823 in 1 : vector<1x254xf32>, vector<1x2xf32> -> vector<1x256xf32>
    %cst_334 = arith.constant 0.000000e+00 : f32
    %825 = vector.broadcast %cst_334 : f32 to vector<1x256xf32>
    %826 = arith.select %148, %824, %825 : vector<1x256xi1>, vector<1x256xf32>
    %827 = vector.extract_strided_slice %771 {offsets = [0, 3], sizes = [1, 253], strides = [1, 1]} : vector<1x256xf32> to vector<1x253xf32>
    %cst_335 = arith.constant 0.000000e+00 : f32
    %828 = vector.broadcast %cst_335 : f32 to vector<1x3xf32>
    %829 = tpu.concatenate %827, %828 in 1 : vector<1x253xf32>, vector<1x3xf32> -> vector<1x256xf32>
    %cst_336 = arith.constant 0.000000e+00 : f32
    %830 = vector.broadcast %cst_336 : f32 to vector<1x256xf32>
    %831 = arith.select %155, %829, %830 : vector<1x256xi1>, vector<1x256xf32>
    %832 = tpu.concatenate %776, %781, %786, %769, %791, %796, %801, %806, %811, %816, %771, %821, %826, %831 in 0 : vector<1x256xf32>, vector<1x256xf32>, vector<1x256xf32>, vector<1x256xf32>, vector<1x256xf32>, vector<1x256xf32>, vector<1x256xf32>, vector<1x256xf32>, vector<1x256xf32>, vector<1x256xf32>, vector<1x256xf32>, vector<1x256xf32>, vector<1x256xf32>, vector<1x256xf32> -> vector<14x256xf32>
    %c0_337 = arith.constant 0 : index
    %c0_338 = arith.constant 0 : index
    %833 = vector.load %arg26[%c0_337, %c0_338] : memref<14x7xf32, #tpu.memory_space<vmem>>, vector<14x7xf32>
    %cst_339 = arith.constant 0.000000e+00 : f32
    %834 = vector.broadcast %cst_339 : f32 to vector<1x256xf32>
    %835 = vector.extract_strided_slice %833 {offsets = [0, 0], sizes = [14, 1], strides = [1, 1]} : vector<14x7xf32> to vector<14x1xf32>
    %836 = vector.broadcast %835 : vector<14x1xf32> to vector<14x256xf32>
    %837 = arith.mulf %832, %836 : vector<14x256xf32>
    %cst_340 = arith.constant dense<0.000000e+00> : vector<256xf32>
    %838 = vector.multi_reduction <add>, %837, %cst_340 [0] : vector<14x256xf32> to vector<256xf32>
    %839 = vector.shape_cast %838 : vector<256xf32> to vector<1x256xf32>
    %cst_341 = arith.constant 0.000000e+00 : f32
    %840 = vector.broadcast %cst_341 : f32 to vector<1x48xf32>
    %841 = vector.extract_strided_slice %839 {offsets = [0, 0], sizes = [1, 208], strides = [1, 1]} : vector<1x256xf32> to vector<1x208xf32>
    %842 = tpu.concatenate %840, %841 in 1 : vector<1x48xf32>, vector<1x208xf32> -> vector<1x256xf32>
    %843 = arith.addf %834, %842 : vector<1x256xf32>
    %844 = vector.extract_strided_slice %833 {offsets = [0, 1], sizes = [14, 1], strides = [1, 1]} : vector<14x7xf32> to vector<14x1xf32>
    %845 = vector.broadcast %844 : vector<14x1xf32> to vector<14x256xf32>
    %846 = arith.mulf %832, %845 : vector<14x256xf32>
    %cst_342 = arith.constant dense<0.000000e+00> : vector<256xf32>
    %847 = vector.multi_reduction <add>, %846, %cst_342 [0] : vector<14x256xf32> to vector<256xf32>
    %848 = vector.shape_cast %847 : vector<256xf32> to vector<1x256xf32>
    %cst_343 = arith.constant 0.000000e+00 : f32
    %849 = vector.broadcast %cst_343 : f32 to vector<1x32xf32>
    %850 = vector.extract_strided_slice %848 {offsets = [0, 0], sizes = [1, 224], strides = [1, 1]} : vector<1x256xf32> to vector<1x224xf32>
    %851 = tpu.concatenate %849, %850 in 1 : vector<1x32xf32>, vector<1x224xf32> -> vector<1x256xf32>
    %852 = arith.addf %843, %851 : vector<1x256xf32>
    %853 = vector.extract_strided_slice %833 {offsets = [0, 2], sizes = [14, 1], strides = [1, 1]} : vector<14x7xf32> to vector<14x1xf32>
    %854 = vector.broadcast %853 : vector<14x1xf32> to vector<14x256xf32>
    %855 = arith.mulf %832, %854 : vector<14x256xf32>
    %cst_344 = arith.constant dense<0.000000e+00> : vector<256xf32>
    %856 = vector.multi_reduction <add>, %855, %cst_344 [0] : vector<14x256xf32> to vector<256xf32>
    %857 = vector.shape_cast %856 : vector<256xf32> to vector<1x256xf32>
    %cst_345 = arith.constant 0.000000e+00 : f32
    %858 = vector.broadcast %cst_345 : f32 to vector<1x16xf32>
    %859 = vector.extract_strided_slice %857 {offsets = [0, 0], sizes = [1, 240], strides = [1, 1]} : vector<1x256xf32> to vector<1x240xf32>
    %860 = tpu.concatenate %858, %859 in 1 : vector<1x16xf32>, vector<1x240xf32> -> vector<1x256xf32>
    %861 = arith.addf %852, %860 : vector<1x256xf32>
    %862 = vector.extract_strided_slice %833 {offsets = [0, 3], sizes = [14, 1], strides = [1, 1]} : vector<14x7xf32> to vector<14x1xf32>
    %863 = vector.broadcast %862 : vector<14x1xf32> to vector<14x256xf32>
    %864 = arith.mulf %832, %863 : vector<14x256xf32>
    %cst_346 = arith.constant dense<0.000000e+00> : vector<256xf32>
    %865 = vector.multi_reduction <add>, %864, %cst_346 [0] : vector<14x256xf32> to vector<256xf32>
    %866 = vector.shape_cast %865 : vector<256xf32> to vector<1x256xf32>
    %867 = arith.addf %861, %866 : vector<1x256xf32>
    %868 = vector.extract_strided_slice %833 {offsets = [0, 4], sizes = [14, 1], strides = [1, 1]} : vector<14x7xf32> to vector<14x1xf32>
    %869 = vector.broadcast %868 : vector<14x1xf32> to vector<14x256xf32>
    %870 = arith.mulf %832, %869 : vector<14x256xf32>
    %cst_347 = arith.constant dense<0.000000e+00> : vector<256xf32>
    %871 = vector.multi_reduction <add>, %870, %cst_347 [0] : vector<14x256xf32> to vector<256xf32>
    %872 = vector.shape_cast %871 : vector<256xf32> to vector<1x256xf32>
    %873 = vector.extract_strided_slice %872 {offsets = [0, 16], sizes = [1, 240], strides = [1, 1]} : vector<1x256xf32> to vector<1x240xf32>
    %cst_348 = arith.constant 0.000000e+00 : f32
    %874 = vector.broadcast %cst_348 : f32 to vector<1x16xf32>
    %875 = tpu.concatenate %873, %874 in 1 : vector<1x240xf32>, vector<1x16xf32> -> vector<1x256xf32>
    %876 = arith.addf %867, %875 : vector<1x256xf32>
    %877 = vector.extract_strided_slice %833 {offsets = [0, 5], sizes = [14, 1], strides = [1, 1]} : vector<14x7xf32> to vector<14x1xf32>
    %878 = vector.broadcast %877 : vector<14x1xf32> to vector<14x256xf32>
    %879 = arith.mulf %832, %878 : vector<14x256xf32>
    %cst_349 = arith.constant dense<0.000000e+00> : vector<256xf32>
    %880 = vector.multi_reduction <add>, %879, %cst_349 [0] : vector<14x256xf32> to vector<256xf32>
    %881 = vector.shape_cast %880 : vector<256xf32> to vector<1x256xf32>
    %882 = vector.extract_strided_slice %881 {offsets = [0, 32], sizes = [1, 224], strides = [1, 1]} : vector<1x256xf32> to vector<1x224xf32>
    %cst_350 = arith.constant 0.000000e+00 : f32
    %883 = vector.broadcast %cst_350 : f32 to vector<1x32xf32>
    %884 = tpu.concatenate %882, %883 in 1 : vector<1x224xf32>, vector<1x32xf32> -> vector<1x256xf32>
    %885 = arith.addf %876, %884 : vector<1x256xf32>
    %886 = vector.extract_strided_slice %833 {offsets = [0, 6], sizes = [14, 1], strides = [1, 1]} : vector<14x7xf32> to vector<14x1xf32>
    %887 = vector.broadcast %886 : vector<14x1xf32> to vector<14x256xf32>
    %888 = arith.mulf %832, %887 : vector<14x256xf32>
    %cst_351 = arith.constant dense<0.000000e+00> : vector<256xf32>
    %889 = vector.multi_reduction <add>, %888, %cst_351 [0] : vector<14x256xf32> to vector<256xf32>
    %890 = vector.shape_cast %889 : vector<256xf32> to vector<1x256xf32>
    %891 = vector.extract_strided_slice %890 {offsets = [0, 48], sizes = [1, 208], strides = [1, 1]} : vector<1x256xf32> to vector<1x208xf32>
    %cst_352 = arith.constant 0.000000e+00 : f32
    %892 = vector.broadcast %cst_352 : f32 to vector<1x48xf32>
    %893 = tpu.concatenate %891, %892 in 1 : vector<1x208xf32>, vector<1x48xf32> -> vector<1x256xf32>
    %894 = arith.addf %885, %893 : vector<1x256xf32>
    %895 = arith.negf %894 : vector<1x256xf32>
    %896 = math.exp %895 : vector<1x256xf32>
    %cst_353 = arith.constant 1.000000e+00 : f32
    %897 = vector.broadcast %cst_353 : f32 to vector<1x256xf32>
    %898 = arith.addf %897, %896 : vector<1x256xf32>
    %899 = arith.divf %897, %898 : vector<1x256xf32>
    %900 = vector.broadcast %899 : vector<1x256xf32> to vector<12x256xf32>
    %901 = arith.mulf %765, %900 : vector<12x256xf32>
    %c0_354 = arith.constant 0 : index
    %c0_355 = arith.constant 0 : index
    %902 = vector.load %arg27[%c0_354, %c0_355] : memref<24x12xf32, #tpu.memory_space<vmem>>, vector<24x12xf32>
    %cst_356 = arith.constant dense<0.000000e+00> : vector<24x256xf32>
    %903 = tpu.matmul %902, %901, %cst_356 {dimension_numbers = #tpu.dot_dimension_numbers<[1], [0], [0], [1], [0, 0, 1, 1], [], []>} : vector<24x12xf32>, vector<12x256xf32>, vector<24x256xf32> -> vector<24x256xf32>
    %c0_357 = arith.constant 0 : index
    %c0_358 = arith.constant 0 : index
    %904 = vector.load %arg23[%c0_357, %c0_358] : memref<24x1xf32, #tpu.memory_space<vmem>>, vector<24x1xf32>
    %905 = vector.broadcast %904 : vector<24x1xf32> to vector<24x256xf32>
    %906 = arith.addf %903, %905 : vector<24x256xf32>
    %cst_359 = arith.constant 5.000000e-01 : f32
    %907 = vector.broadcast %cst_359 : f32 to vector<24x256xf32>
    %908 = arith.mulf %907, %906 : vector<24x256xf32>
    %cst_360 = arith.constant 0.707106769 : f32
    %909 = vector.broadcast %cst_360 : f32 to vector<24x256xf32>
    %910 = arith.mulf %906, %909 : vector<24x256xf32>
    %911 = math.erf %910 : vector<24x256xf32>
    %cst_361 = arith.constant 1.000000e+00 : f32
    %912 = vector.broadcast %cst_361 : f32 to vector<24x256xf32>
    %913 = arith.addf %912, %911 : vector<24x256xf32>
    %914 = arith.mulf %908, %913 : vector<24x256xf32>
    %c0_362 = arith.constant 0 : index
    %c0_363 = arith.constant 0 : index
    %915 = vector.load %arg28[%c0_362, %c0_363] : memref<12x24xf32, #tpu.memory_space<vmem>>, vector<12x24xf32>
    %cst_364 = arith.constant dense<0.000000e+00> : vector<12x256xf32>
    %916 = tpu.matmul %915, %914, %cst_364 {dimension_numbers = #tpu.dot_dimension_numbers<[1], [0], [0], [1], [0, 0, 1, 1], [], []>} : vector<12x24xf32>, vector<24x256xf32>, vector<12x256xf32> -> vector<12x256xf32>
    %917 = arith.addf %701, %916 : vector<12x256xf32>
    %918 = tpu.concatenate %917, %701 in 0 : vector<12x256xf32>, vector<12x256xf32> -> vector<24x256xf32>
    %cst_365 = arith.constant 0.000000e+00 : f32
    %919 = vector.broadcast %cst_365 : f32 to vector<24x4xf32>
    %920 = vector.extract_strided_slice %918 {offsets = [0, 0], sizes = [24, 252], strides = [1, 1]} : vector<24x256xf32> to vector<24x252xf32>
    %921 = tpu.concatenate %919, %920 in 1 : vector<24x4xf32>, vector<24x252xf32> -> vector<24x256xf32>
    %cst_366 = arith.constant 0.000000e+00 : f32
    %922 = vector.shape_cast %491 : vector<1x256xi1> to vector<1x256xi1>
    %923 = vector.broadcast %922 : vector<1x256xi1> to vector<24x256xi1>
    %924 = vector.broadcast %cst_366 : f32 to vector<24x256xf32>
    %925 = arith.select %923, %921, %924 : vector<24x256xi1>, vector<24x256xf32>
    %926 = vector.extract_strided_slice %918 {offsets = [0, 4], sizes = [24, 252], strides = [1, 1]} : vector<24x256xf32> to vector<24x252xf32>
    %cst_367 = arith.constant 0.000000e+00 : f32
    %927 = vector.broadcast %cst_367 : f32 to vector<24x4xf32>
    %928 = tpu.concatenate %926, %927 in 1 : vector<24x252xf32>, vector<24x4xf32> -> vector<24x256xf32>
    %cst_368 = arith.constant 0.000000e+00 : f32
    %929 = vector.shape_cast %500 : vector<1x256xi1> to vector<1x256xi1>
    %930 = vector.broadcast %929 : vector<1x256xi1> to vector<24x256xi1>
    %931 = vector.broadcast %cst_368 : f32 to vector<24x256xf32>
    %932 = arith.select %930, %928, %931 : vector<24x256xi1>, vector<24x256xf32>
    %933 = tpu.concatenate %925, %918, %932 in 0 : vector<24x256xf32>, vector<24x256xf32>, vector<24x256xf32> -> vector<72x256xf32>
    %cst_369 = arith.constant 0.000000e+00 : f32
    %934 = vector.broadcast %cst_369 : f32 to vector<12x256xf32>
    %c0_370 = arith.constant 0 : index
    %c0_371 = arith.constant 0 : index
    %c0_372 = arith.constant 0 : index
    %935 = vector.load %arg35[%c0_370, %c0_371, %c0_372] : memref<3x12x72xf32, #tpu.memory_space<vmem>>, vector<1x12x72xf32>
    %936 = vector.shape_cast %935 : vector<1x12x72xf32> to vector<12x72xf32>
    %cst_373 = arith.constant dense<0.000000e+00> : vector<12x256xf32>
    %937 = tpu.matmul %936, %933, %cst_373 {dimension_numbers = #tpu.dot_dimension_numbers<[1], [0], [0], [1], [0, 0, 1, 1], [], []>} : vector<12x72xf32>, vector<72x256xf32>, vector<12x256xf32> -> vector<12x256xf32>
    %cst_374 = arith.constant 0.000000e+00 : f32
    %938 = vector.broadcast %cst_374 : f32 to vector<12x64xf32>
    %939 = vector.extract_strided_slice %937 {offsets = [0, 0], sizes = [12, 192], strides = [1, 1]} : vector<12x256xf32> to vector<12x192xf32>
    %940 = tpu.concatenate %938, %939 in 1 : vector<12x64xf32>, vector<12x192xf32> -> vector<12x256xf32>
    %941 = arith.addf %934, %940 : vector<12x256xf32>
    %c1_375 = arith.constant 1 : index
    %c0_376 = arith.constant 0 : index
    %c0_377 = arith.constant 0 : index
    %942 = vector.load %arg35[%c1_375, %c0_376, %c0_377] : memref<3x12x72xf32, #tpu.memory_space<vmem>>, vector<1x12x72xf32>
    %943 = vector.shape_cast %942 : vector<1x12x72xf32> to vector<12x72xf32>
    %cst_378 = arith.constant dense<0.000000e+00> : vector<12x256xf32>
    %944 = tpu.matmul %943, %933, %cst_378 {dimension_numbers = #tpu.dot_dimension_numbers<[1], [0], [0], [1], [0, 0, 1, 1], [], []>} : vector<12x72xf32>, vector<72x256xf32>, vector<12x256xf32> -> vector<12x256xf32>
    %945 = arith.addf %941, %944 : vector<12x256xf32>
    %c2_379 = arith.constant 2 : index
    %c0_380 = arith.constant 0 : index
    %c0_381 = arith.constant 0 : index
    %946 = vector.load %arg35[%c2_379, %c0_380, %c0_381] : memref<3x12x72xf32, #tpu.memory_space<vmem>>, vector<1x12x72xf32>
    %947 = vector.shape_cast %946 : vector<1x12x72xf32> to vector<12x72xf32>
    %cst_382 = arith.constant dense<0.000000e+00> : vector<12x256xf32>
    %948 = tpu.matmul %947, %933, %cst_382 {dimension_numbers = #tpu.dot_dimension_numbers<[1], [0], [0], [1], [0, 0, 1, 1], [], []>} : vector<12x72xf32>, vector<72x256xf32>, vector<12x256xf32> -> vector<12x256xf32>
    %949 = vector.extract_strided_slice %948 {offsets = [0, 64], sizes = [12, 192], strides = [1, 1]} : vector<12x256xf32> to vector<12x192xf32>
    %cst_383 = arith.constant 0.000000e+00 : f32
    %950 = vector.broadcast %cst_383 : f32 to vector<12x64xf32>
    %951 = tpu.concatenate %949, %950 in 1 : vector<12x192xf32>, vector<12x64xf32> -> vector<12x256xf32>
    %952 = arith.addf %945, %951 : vector<12x256xf32>
    %c0_384 = arith.constant 0 : index
    %c0_385 = arith.constant 0 : index
    %953 = vector.load %arg34[%c0_384, %c0_385] : memref<12x1xf32, #tpu.memory_space<vmem>>, vector<12x1xf32>
    %954 = vector.broadcast %953 : vector<12x1xf32> to vector<12x256xf32>
    %955 = arith.addf %952, %954 : vector<12x256xf32>
    %cst_386 = arith.constant 5.000000e-01 : f32
    %956 = vector.broadcast %cst_386 : f32 to vector<12x256xf32>
    %957 = arith.mulf %956, %955 : vector<12x256xf32>
    %cst_387 = arith.constant 0.707106769 : f32
    %958 = vector.broadcast %cst_387 : f32 to vector<12x256xf32>
    %959 = arith.mulf %955, %958 : vector<12x256xf32>
    %960 = math.erf %959 : vector<12x256xf32>
    %cst_388 = arith.constant 1.000000e+00 : f32
    %961 = vector.broadcast %cst_388 : f32 to vector<12x256xf32>
    %962 = arith.addf %961, %960 : vector<12x256xf32>
    %963 = arith.mulf %957, %962 : vector<12x256xf32>
    %964 = tpu.concatenate %963, %485 in 0 : vector<12x256xf32>, vector<12x256xf32> -> vector<24x256xf32>
    %cst_389 = arith.constant 0.000000e+00 : f32
    %965 = vector.broadcast %cst_389 : f32 to vector<24x2xf32>
    %966 = vector.extract_strided_slice %964 {offsets = [0, 0], sizes = [24, 254], strides = [1, 1]} : vector<24x256xf32> to vector<24x254xf32>
    %967 = tpu.concatenate %965, %966 in 1 : vector<24x2xf32>, vector<24x254xf32> -> vector<24x256xf32>
    %cst_390 = arith.constant 0.000000e+00 : f32
    %968 = vector.shape_cast %131 : vector<1x256xi1> to vector<1x256xi1>
    %969 = vector.broadcast %968 : vector<1x256xi1> to vector<24x256xi1>
    %970 = vector.broadcast %cst_390 : f32 to vector<24x256xf32>
    %971 = arith.select %969, %967, %970 : vector<24x256xi1>, vector<24x256xf32>
    %972 = vector.extract_strided_slice %964 {offsets = [0, 2], sizes = [24, 254], strides = [1, 1]} : vector<24x256xf32> to vector<24x254xf32>
    %cst_391 = arith.constant 0.000000e+00 : f32
    %973 = vector.broadcast %cst_391 : f32 to vector<24x2xf32>
    %974 = tpu.concatenate %972, %973 in 1 : vector<24x254xf32>, vector<24x2xf32> -> vector<24x256xf32>
    %cst_392 = arith.constant 0.000000e+00 : f32
    %975 = vector.shape_cast %148 : vector<1x256xi1> to vector<1x256xi1>
    %976 = vector.broadcast %975 : vector<1x256xi1> to vector<24x256xi1>
    %977 = vector.broadcast %cst_392 : f32 to vector<24x256xf32>
    %978 = arith.select %976, %974, %977 : vector<24x256xi1>, vector<24x256xf32>
    %979 = tpu.concatenate %971, %964, %978 in 0 : vector<24x256xf32>, vector<24x256xf32>, vector<24x256xf32> -> vector<72x256xf32>
    %cst_393 = arith.constant 0.000000e+00 : f32
    %980 = vector.broadcast %cst_393 : f32 to vector<12x256xf32>
    %c0_394 = arith.constant 0 : index
    %c0_395 = arith.constant 0 : index
    %c0_396 = arith.constant 0 : index
    %981 = vector.load %arg33[%c0_394, %c0_395, %c0_396] : memref<3x12x72xf32, #tpu.memory_space<vmem>>, vector<1x12x72xf32>
    %982 = vector.shape_cast %981 : vector<1x12x72xf32> to vector<12x72xf32>
    %cst_397 = arith.constant dense<0.000000e+00> : vector<12x256xf32>
    %983 = tpu.matmul %982, %979, %cst_397 {dimension_numbers = #tpu.dot_dimension_numbers<[1], [0], [0], [1], [0, 0, 1, 1], [], []>} : vector<12x72xf32>, vector<72x256xf32>, vector<12x256xf32> -> vector<12x256xf32>
    %cst_398 = arith.constant 0.000000e+00 : f32
    %984 = vector.broadcast %cst_398 : f32 to vector<12x32xf32>
    %985 = vector.extract_strided_slice %983 {offsets = [0, 0], sizes = [12, 224], strides = [1, 1]} : vector<12x256xf32> to vector<12x224xf32>
    %986 = tpu.concatenate %984, %985 in 1 : vector<12x32xf32>, vector<12x224xf32> -> vector<12x256xf32>
    %987 = arith.addf %980, %986 : vector<12x256xf32>
    %c1_399 = arith.constant 1 : index
    %c0_400 = arith.constant 0 : index
    %c0_401 = arith.constant 0 : index
    %988 = vector.load %arg33[%c1_399, %c0_400, %c0_401] : memref<3x12x72xf32, #tpu.memory_space<vmem>>, vector<1x12x72xf32>
    %989 = vector.shape_cast %988 : vector<1x12x72xf32> to vector<12x72xf32>
    %cst_402 = arith.constant dense<0.000000e+00> : vector<12x256xf32>
    %990 = tpu.matmul %989, %979, %cst_402 {dimension_numbers = #tpu.dot_dimension_numbers<[1], [0], [0], [1], [0, 0, 1, 1], [], []>} : vector<12x72xf32>, vector<72x256xf32>, vector<12x256xf32> -> vector<12x256xf32>
    %991 = arith.addf %987, %990 : vector<12x256xf32>
    %c2_403 = arith.constant 2 : index
    %c0_404 = arith.constant 0 : index
    %c0_405 = arith.constant 0 : index
    %992 = vector.load %arg33[%c2_403, %c0_404, %c0_405] : memref<3x12x72xf32, #tpu.memory_space<vmem>>, vector<1x12x72xf32>
    %993 = vector.shape_cast %992 : vector<1x12x72xf32> to vector<12x72xf32>
    %cst_406 = arith.constant dense<0.000000e+00> : vector<12x256xf32>
    %994 = tpu.matmul %993, %979, %cst_406 {dimension_numbers = #tpu.dot_dimension_numbers<[1], [0], [0], [1], [0, 0, 1, 1], [], []>} : vector<12x72xf32>, vector<72x256xf32>, vector<12x256xf32> -> vector<12x256xf32>
    %995 = vector.extract_strided_slice %994 {offsets = [0, 32], sizes = [12, 224], strides = [1, 1]} : vector<12x256xf32> to vector<12x224xf32>
    %cst_407 = arith.constant 0.000000e+00 : f32
    %996 = vector.broadcast %cst_407 : f32 to vector<12x32xf32>
    %997 = tpu.concatenate %995, %996 in 1 : vector<12x224xf32>, vector<12x32xf32> -> vector<12x256xf32>
    %998 = arith.addf %991, %997 : vector<12x256xf32>
    %c0_408 = arith.constant 0 : index
    %c0_409 = arith.constant 0 : index
    %999 = vector.load %arg32[%c0_408, %c0_409] : memref<12x1xf32, #tpu.memory_space<vmem>>, vector<12x1xf32>
    %1000 = vector.broadcast %999 : vector<12x1xf32> to vector<12x256xf32>
    %1001 = arith.addf %998, %1000 : vector<12x256xf32>
    %cst_410 = arith.constant 5.000000e-01 : f32
    %1002 = vector.broadcast %cst_410 : f32 to vector<12x256xf32>
    %1003 = arith.mulf %1002, %1001 : vector<12x256xf32>
    %cst_411 = arith.constant 0.707106769 : f32
    %1004 = vector.broadcast %cst_411 : f32 to vector<12x256xf32>
    %1005 = arith.mulf %1001, %1004 : vector<12x256xf32>
    %1006 = math.erf %1005 : vector<12x256xf32>
    %cst_412 = arith.constant 1.000000e+00 : f32
    %1007 = vector.broadcast %cst_412 : f32 to vector<12x256xf32>
    %1008 = arith.addf %1007, %1006 : vector<12x256xf32>
    %1009 = arith.mulf %1003, %1008 : vector<12x256xf32>
    %1010 = tpu.concatenate %1009, %273 in 0 : vector<12x256xf32>, vector<12x256xf32> -> vector<24x256xf32>
    %cst_413 = arith.constant 0.000000e+00 : f32
    %1011 = vector.broadcast %cst_413 : f32 to vector<24x1xf32>
    %1012 = vector.extract_strided_slice %1010 {offsets = [0, 0], sizes = [24, 255], strides = [1, 1]} : vector<24x256xf32> to vector<24x255xf32>
    %1013 = tpu.concatenate %1011, %1012 in 1 : vector<24x1xf32>, vector<24x255xf32> -> vector<24x256xf32>
    %cst_414 = arith.constant 0.000000e+00 : f32
    %1014 = vector.shape_cast %9 : vector<1x256xi1> to vector<1x256xi1>
    %1015 = vector.broadcast %1014 : vector<1x256xi1> to vector<24x256xi1>
    %1016 = vector.broadcast %cst_414 : f32 to vector<24x256xf32>
    %1017 = arith.select %1015, %1013, %1016 : vector<24x256xi1>, vector<24x256xf32>
    %1018 = vector.extract_strided_slice %1010 {offsets = [0, 1], sizes = [24, 255], strides = [1, 1]} : vector<24x256xf32> to vector<24x255xf32>
    %cst_415 = arith.constant 0.000000e+00 : f32
    %1019 = vector.broadcast %cst_415 : f32 to vector<24x1xf32>
    %1020 = tpu.concatenate %1018, %1019 in 1 : vector<24x255xf32>, vector<24x1xf32> -> vector<24x256xf32>
    %cst_416 = arith.constant 0.000000e+00 : f32
    %1021 = vector.shape_cast %18 : vector<1x256xi1> to vector<1x256xi1>
    %1022 = vector.broadcast %1021 : vector<1x256xi1> to vector<24x256xi1>
    %1023 = vector.broadcast %cst_416 : f32 to vector<24x256xf32>
    %1024 = arith.select %1022, %1020, %1023 : vector<24x256xi1>, vector<24x256xf32>
    %1025 = tpu.concatenate %1017, %1010, %1024 in 0 : vector<24x256xf32>, vector<24x256xf32>, vector<24x256xf32> -> vector<72x256xf32>
    %cst_417 = arith.constant 0.000000e+00 : f32
    %1026 = vector.broadcast %cst_417 : f32 to vector<12x256xf32>
    %c0_418 = arith.constant 0 : index
    %c0_419 = arith.constant 0 : index
    %c0_420 = arith.constant 0 : index
    %1027 = vector.load %arg31[%c0_418, %c0_419, %c0_420] : memref<3x12x72xf32, #tpu.memory_space<vmem>>, vector<1x12x72xf32>
    %1028 = vector.shape_cast %1027 : vector<1x12x72xf32> to vector<12x72xf32>
    %cst_421 = arith.constant dense<0.000000e+00> : vector<12x256xf32>
    %1029 = tpu.matmul %1028, %1025, %cst_421 {dimension_numbers = #tpu.dot_dimension_numbers<[1], [0], [0], [1], [0, 0, 1, 1], [], []>} : vector<12x72xf32>, vector<72x256xf32>, vector<12x256xf32> -> vector<12x256xf32>
    %cst_422 = arith.constant 0.000000e+00 : f32
    %1030 = vector.broadcast %cst_422 : f32 to vector<12x16xf32>
    %1031 = vector.extract_strided_slice %1029 {offsets = [0, 0], sizes = [12, 240], strides = [1, 1]} : vector<12x256xf32> to vector<12x240xf32>
    %1032 = tpu.concatenate %1030, %1031 in 1 : vector<12x16xf32>, vector<12x240xf32> -> vector<12x256xf32>
    %1033 = arith.addf %1026, %1032 : vector<12x256xf32>
    %c1_423 = arith.constant 1 : index
    %c0_424 = arith.constant 0 : index
    %c0_425 = arith.constant 0 : index
    %1034 = vector.load %arg31[%c1_423, %c0_424, %c0_425] : memref<3x12x72xf32, #tpu.memory_space<vmem>>, vector<1x12x72xf32>
    %1035 = vector.shape_cast %1034 : vector<1x12x72xf32> to vector<12x72xf32>
    %cst_426 = arith.constant dense<0.000000e+00> : vector<12x256xf32>
    %1036 = tpu.matmul %1035, %1025, %cst_426 {dimension_numbers = #tpu.dot_dimension_numbers<[1], [0], [0], [1], [0, 0, 1, 1], [], []>} : vector<12x72xf32>, vector<72x256xf32>, vector<12x256xf32> -> vector<12x256xf32>
    %1037 = arith.addf %1033, %1036 : vector<12x256xf32>
    %c2_427 = arith.constant 2 : index
    %c0_428 = arith.constant 0 : index
    %c0_429 = arith.constant 0 : index
    %1038 = vector.load %arg31[%c2_427, %c0_428, %c0_429] : memref<3x12x72xf32, #tpu.memory_space<vmem>>, vector<1x12x72xf32>
    %1039 = vector.shape_cast %1038 : vector<1x12x72xf32> to vector<12x72xf32>
    %cst_430 = arith.constant dense<0.000000e+00> : vector<12x256xf32>
    %1040 = tpu.matmul %1039, %1025, %cst_430 {dimension_numbers = #tpu.dot_dimension_numbers<[1], [0], [0], [1], [0, 0, 1, 1], [], []>} : vector<12x72xf32>, vector<72x256xf32>, vector<12x256xf32> -> vector<12x256xf32>
    %1041 = vector.extract_strided_slice %1040 {offsets = [0, 16], sizes = [12, 240], strides = [1, 1]} : vector<12x256xf32> to vector<12x240xf32>
    %cst_431 = arith.constant 0.000000e+00 : f32
    %1042 = vector.broadcast %cst_431 : f32 to vector<12x16xf32>
    %1043 = tpu.concatenate %1041, %1042 in 1 : vector<12x240xf32>, vector<12x16xf32> -> vector<12x256xf32>
    %1044 = arith.addf %1037, %1043 : vector<12x256xf32>
    %c0_432 = arith.constant 0 : index
    %c0_433 = arith.constant 0 : index
    %1045 = vector.load %arg30[%c0_432, %c0_433] : memref<12x1xf32, #tpu.memory_space<vmem>>, vector<12x1xf32>
    %1046 = vector.broadcast %1045 : vector<12x1xf32> to vector<12x256xf32>
    %1047 = arith.addf %1044, %1046 : vector<12x256xf32>
    %cst_434 = arith.constant 5.000000e-01 : f32
    %1048 = vector.broadcast %cst_434 : f32 to vector<12x256xf32>
    %1049 = arith.mulf %1048, %1047 : vector<12x256xf32>
    %cst_435 = arith.constant 0.707106769 : f32
    %1050 = vector.broadcast %cst_435 : f32 to vector<12x256xf32>
    %1051 = arith.mulf %1047, %1050 : vector<12x256xf32>
    %1052 = math.erf %1051 : vector<12x256xf32>
    %cst_436 = arith.constant 1.000000e+00 : f32
    %1053 = vector.broadcast %cst_436 : f32 to vector<12x256xf32>
    %1054 = arith.addf %1053, %1052 : vector<12x256xf32>
    %1055 = arith.mulf %1049, %1054 : vector<12x256xf32>
    %1056 = arith.addf %1055, %53 : vector<12x256xf32>
    %c0_437 = arith.constant 0 : index
    %c0_438 = arith.constant 0 : index
    %c0_439 = arith.constant 0 : index
    %1057 = vector.load %arg38[%c0_437, %c0_438, %c0_439] : memref<1x12x256xf32, #tpu.memory_space<vmem>>, vector<1x12x256xf32>
    %1058 = vector.shape_cast %1057 : vector<1x12x256xf32> to vector<12x256xf32>
    %1059 = vector.shape_cast %1056 : vector<12x256xf32> to vector<1x12x256xf32>
    tpu.vector_store %arg38[%c0_437, %c0_438, %c0_439], %1059 {strides = array<i32>} : memref<1x12x256xf32, #tpu.memory_space<vmem>>, vector<1x12x256xf32>,
    return
  }
  func.func @transform_0(%arg0: i32) -> (i32, i32, i32) {
    %c0_i32 = arith.constant 0 : i32
    %c0_i32_0 = arith.constant 0 : i32
    %c0_i32_1 = arith.constant 0 : i32
    return %arg0, %c0_i32, %c0_i32_0 : i32, i32, i32
  }
  func.func @transform_1(%arg0: i32) -> (i32, i32) {
    %c0_i32 = arith.constant 0 : i32
    %c0_i32_0 = arith.constant 0 : i32
    %c0_i32_1 = arith.constant 0 : i32
    return %c0_i32, %c0_i32_0 : i32, i32
  }
  func.func @transform_2(%arg0: i32) -> (i32, i32) {
    %c0_i32 = arith.constant 0 : i32
    %c0_i32_0 = arith.constant 0 : i32
    %c0_i32_1 = arith.constant 0 : i32
    return %c0_i32, %c0_i32_0 : i32, i32
  }
  func.func @transform_3(%arg0: i32) -> (i32, i32) {
    %c0_i32 = arith.constant 0 : i32
    %c0_i32_0 = arith.constant 0 : i32
    %c0_i32_1 = arith.constant 0 : i32
    return %c0_i32, %c0_i32_0 : i32, i32
  }
  func.func @transform_4(%arg0: i32) -> (i32, i32) {
    %c0_i32 = arith.constant 0 : i32
    %c0_i32_0 = arith.constant 0 : i32
    %c0_i32_1 = arith.constant 0 : i32
    return %c0_i32, %c0_i32_0 : i32, i32
  }
  func.func @transform_5(%arg0: i32) -> (i32, i32) {
    %c0_i32 = arith.constant 0 : i32
    %c0_i32_0 = arith.constant 0 : i32
    %c0_i32_1 = arith.constant 0 : i32
    return %c0_i32, %c0_i32_0 : i32, i32
  }
  func.func @transform_6(%arg0: i32) -> (i32, i32) {
    %c0_i32 = arith.constant 0 : i32
    %c0_i32_0 = arith.constant 0 : i32
    %c0_i32_1 = arith.constant 0 : i32
    return %c0_i32, %c0_i32_0 : i32, i32
  }
  func.func @transform_7(%arg0: i32) -> (i32, i32, i32) {
    %c0_i32 = arith.constant 0 : i32
    %c0_i32_0 = arith.constant 0 : i32
    %c0_i32_1 = arith.constant 0 : i32
    %c0_i32_2 = arith.constant 0 : i32
    return %c0_i32, %c0_i32_0, %c0_i32_1 : i32, i32, i32
  }
  func.func @transform_8(%arg0: i32) -> (i32, i32) {
    %c0_i32 = arith.constant 0 : i32
    %c0_i32_0 = arith.constant 0 : i32
    %c0_i32_1 = arith.constant 0 : i32
    return %c0_i32, %c0_i32_0 : i32, i32
  }
  func.func @transform_9(%arg0: i32) -> (i32, i32) {
    %c0_i32 = arith.constant 0 : i32
    %c0_i32_0 = arith.constant 0 : i32
    %c0_i32_1 = arith.constant 0 : i32
    return %c0_i32, %c0_i32_0 : i32, i32
  }
  func.func @transform_10(%arg0: i32) -> (i32, i32) {
    %c0_i32 = arith.constant 0 : i32
    %c0_i32_0 = arith.constant 0 : i32
    %c0_i32_1 = arith.constant 0 : i32
    return %c0_i32, %c0_i32_0 : i32, i32
  }
  func.func @transform_11(%arg0: i32) -> (i32, i32) {
    %c0_i32 = arith.constant 0 : i32
    %c0_i32_0 = arith.constant 0 : i32
    %c0_i32_1 = arith.constant 0 : i32
    return %c0_i32, %c0_i32_0 : i32, i32
  }
  func.func @transform_12(%arg0: i32) -> (i32, i32) {
    %c0_i32 = arith.constant 0 : i32
    %c0_i32_0 = arith.constant 0 : i32
    %c0_i32_1 = arith.constant 0 : i32
    return %c0_i32, %c0_i32_0 : i32, i32
  }
  func.func @transform_13(%arg0: i32) -> (i32, i32) {
    %c0_i32 = arith.constant 0 : i32
    %c0_i32_0 = arith.constant 0 : i32
    %c0_i32_1 = arith.constant 0 : i32
    return %c0_i32, %c0_i32_0 : i32, i32
  }
  func.func @transform_14(%arg0: i32) -> (i32, i32, i32) {
    %c0_i32 = arith.constant 0 : i32
    %c0_i32_0 = arith.constant 0 : i32
    %c0_i32_1 = arith.constant 0 : i32
    %c0_i32_2 = arith.constant 0 : i32
    return %c0_i32, %c0_i32_0, %c0_i32_1 : i32, i32, i32
  }
  func.func @transform_15(%arg0: i32) -> (i32, i32) {
    %c0_i32 = arith.constant 0 : i32
    %c0_i32_0 = arith.constant 0 : i32
    %c0_i32_1 = arith.constant 0 : i32
    return %c0_i32, %c0_i32_0 : i32, i32
  }
  func.func @transform_16(%arg0: i32) -> (i32, i32) {
    %c0_i32 = arith.constant 0 : i32
    %c0_i32_0 = arith.constant 0 : i32
    %c0_i32_1 = arith.constant 0 : i32
    return %c0_i32, %c0_i32_0 : i32, i32
  }
  func.func @transform_17(%arg0: i32) -> (i32, i32) {
    %c0_i32 = arith.constant 0 : i32
    %c0_i32_0 = arith.constant 0 : i32
    %c0_i32_1 = arith.constant 0 : i32
    return %c0_i32, %c0_i32_0 : i32, i32
  }
  func.func @transform_18(%arg0: i32) -> (i32, i32) {
    %c0_i32 = arith.constant 0 : i32
    %c0_i32_0 = arith.constant 0 : i32
    %c0_i32_1 = arith.constant 0 : i32
    return %c0_i32, %c0_i32_0 : i32, i32
  }
  func.func @transform_19(%arg0: i32) -> (i32, i32) {
    %c0_i32 = arith.constant 0 : i32
    %c0_i32_0 = arith.constant 0 : i32
    %c0_i32_1 = arith.constant 0 : i32
    return %c0_i32, %c0_i32_0 : i32, i32
  }
  func.func @transform_20(%arg0: i32) -> (i32, i32) {
    %c0_i32 = arith.constant 0 : i32
    %c0_i32_0 = arith.constant 0 : i32
    %c0_i32_1 = arith.constant 0 : i32
    return %c0_i32, %c0_i32_0 : i32, i32
  }
  func.func @transform_21(%arg0: i32) -> (i32, i32, i32) {
    %c0_i32 = arith.constant 0 : i32
    %c0_i32_0 = arith.constant 0 : i32
    %c0_i32_1 = arith.constant 0 : i32
    %c0_i32_2 = arith.constant 0 : i32
    return %c0_i32, %c0_i32_0, %c0_i32_1 : i32, i32, i32
  }
  func.func @transform_22(%arg0: i32) -> (i32, i32) {
    %c0_i32 = arith.constant 0 : i32
    %c0_i32_0 = arith.constant 0 : i32
    %c0_i32_1 = arith.constant 0 : i32
    return %c0_i32, %c0_i32_0 : i32, i32
  }
  func.func @transform_23(%arg0: i32) -> (i32, i32) {
    %c0_i32 = arith.constant 0 : i32
    %c0_i32_0 = arith.constant 0 : i32
    %c0_i32_1 = arith.constant 0 : i32
    return %c0_i32, %c0_i32_0 : i32, i32
  }
  func.func @transform_24(%arg0: i32) -> (i32, i32) {
    %c0_i32 = arith.constant 0 : i32
    %c0_i32_0 = arith.constant 0 : i32
    %c0_i32_1 = arith.constant 0 : i32
    return %c0_i32, %c0_i32_0 : i32, i32
  }
  func.func @transform_25(%arg0: i32) -> (i32, i32) {
    %c0_i32 = arith.constant 0 : i32
    %c0_i32_0 = arith.constant 0 : i32
    %c0_i32_1 = arith.constant 0 : i32
    return %c0_i32, %c0_i32_0 : i32, i32
  }
  func.func @transform_26(%arg0: i32) -> (i32, i32) {
    %c0_i32 = arith.constant 0 : i32
    %c0_i32_0 = arith.constant 0 : i32
    %c0_i32_1 = arith.constant 0 : i32
    return %c0_i32, %c0_i32_0 : i32, i32
  }
  func.func @transform_27(%arg0: i32) -> (i32, i32) {
    %c0_i32 = arith.constant 0 : i32
    %c0_i32_0 = arith.constant 0 : i32
    %c0_i32_1 = arith.constant 0 : i32
    return %c0_i32, %c0_i32_0 : i32, i32
  }
  func.func @transform_28(%arg0: i32) -> (i32, i32, i32) {
    %c0_i32 = arith.constant 0 : i32
    %c0_i32_0 = arith.constant 0 : i32
    %c0_i32_1 = arith.constant 0 : i32
    %c0_i32_2 = arith.constant 0 : i32
    return %c0_i32, %c0_i32_0, %c0_i32_1 : i32, i32, i32
  }
  func.func @transform_29(%arg0: i32) -> (i32, i32) {
    %c0_i32 = arith.constant 0 : i32
    %c0_i32_0 = arith.constant 0 : i32
    %c0_i32_1 = arith.constant 0 : i32
    return %c0_i32, %c0_i32_0 : i32, i32
  }
  func.func @transform_30(%arg0: i32) -> (i32, i32, i32) {
    %c0_i32 = arith.constant 0 : i32
    %c0_i32_0 = arith.constant 0 : i32
    %c0_i32_1 = arith.constant 0 : i32
    %c0_i32_2 = arith.constant 0 : i32
    return %c0_i32, %c0_i32_0, %c0_i32_1 : i32, i32, i32
  }
  func.func @transform_31(%arg0: i32) -> (i32, i32) {
    %c0_i32 = arith.constant 0 : i32
    %c0_i32_0 = arith.constant 0 : i32
    %c0_i32_1 = arith.constant 0 : i32
    return %c0_i32, %c0_i32_0 : i32, i32
  }
  func.func @transform_32(%arg0: i32) -> (i32, i32, i32) {
    %c0_i32 = arith.constant 0 : i32
    %c0_i32_0 = arith.constant 0 : i32
    %c0_i32_1 = arith.constant 0 : i32
    %c0_i32_2 = arith.constant 0 : i32
    return %c0_i32, %c0_i32_0, %c0_i32_1 : i32, i32, i32
  }
  func.func @transform_33(%arg0: i32) -> (i32, i32) {
    %c0_i32 = arith.constant 0 : i32
    %c0_i32_0 = arith.constant 0 : i32
    %c0_i32_1 = arith.constant 0 : i32
    return %c0_i32, %c0_i32_0 : i32, i32
  }
  func.func @transform_34(%arg0: i32) -> (i32, i32, i32) {
    %c0_i32 = arith.constant 0 : i32
    %c0_i32_0 = arith.constant 0 : i32
    %c0_i32_1 = arith.constant 0 : i32
    %c0_i32_2 = arith.constant 0 : i32
    return %c0_i32, %c0_i32_0, %c0_i32_1 : i32, i32, i32
  }
  func.func @transform_35(%arg0: i32) -> (i32, i32) {
    %c0_i32 = arith.constant 0 : i32
    %c0_i32_0 = arith.constant 0 : i32
    %c0_i32_1 = arith.constant 0 : i32
    return %c0_i32, %c0_i32_0 : i32, i32
  }
  func.func @transform_36(%arg0: i32) -> (i32, i32, i32) {
    %c0_i32 = arith.constant 0 : i32
    %c0_i32_0 = arith.constant 0 : i32
    %c0_i32_1 = arith.constant 0 : i32
    %c0_i32_2 = arith.constant 0 : i32
    return %c0_i32, %c0_i32_0, %c0_i32_1 : i32, i32, i32
  }
  func.func @transform_37(%arg0: i32) -> (i32, i32, i32) {
    %c0_i32 = arith.constant 0 : i32
    %c0_i32_0 = arith.constant 0 : i32
    %c0_i32_1 = arith.constant 0 : i32
    return %arg0, %c0_i32, %c0_i32_0 : i32, i32, i32
  }
}

</mosaic_0001>

<llo_original>
// kernel: forward.1
$region0: #{forward.1}
  #allocation0 [shape = 'u32[]', space=smem, size = 0x4, offset = 0x4, fixed_abs, tag = 'smem constant byte address 0x4 - core index']
  #allocation1 [shape = 'u32[144,128]{1,0:T(1,128)}', space=vmem, size = 0x12000, scoped, tag = 'internal scratch']
  %s0 = inlined_call_operand.smem [shape: u32[38], index: -1, kind: input, shape index: {}]
  %s1 = sld [smem:[%s0]]
  %s2 = scalar_lea.smem %s0, 1
  %s3 = sld [smem:[%s2]]
  %s4 = scalar_lea.smem %s0, 2
  %s5 = sld [smem:[%s4]]
  %s6 = scalar_lea.smem %s0, 3
  %s7 = sld [smem:[%s6]]
  %s8 = scalar_lea.smem %s0, 4
  %s9 = sld [smem:[%s8]]
  %s10 = scalar_lea.smem %s0, 5
  %s11 = sld [smem:[%s10]]
  %s12 = scalar_lea.smem %s0, 6
  %s13 = sld [smem:[%s12]]
  %s14 = scalar_lea.smem %s0, 7
  %s15 = sld [smem:[%s14]]
  %s16 = scalar_lea.smem %s0, 8
  %s17 = sld [smem:[%s16]]
  %s18 = scalar_lea.smem %s0, 9
  %s19 = sld [smem:[%s18]]
  %s20 = scalar_lea.smem %s0, 10
  %s21 = sld [smem:[%s20]]
  %s22 = scalar_lea.smem %s0, 11
  %s23 = sld [smem:[%s22]]
  %s24 = scalar_lea.smem %s0, 12
  %s25 = sld [smem:[%s24]]
  %s26 = scalar_lea.smem %s0, 13
  %s27 = sld [smem:[%s26]]
  %s28 = scalar_lea.smem %s0, 14
  %s29 = sld [smem:[%s28]]
  %s30 = scalar_lea.smem %s0, 15
  %s31 = sld [smem:[%s30]]
  %s32 = scalar_lea.smem %s0, 16
  %s33 = sld [smem:[%s32]]
  %s34 = scalar_lea.smem %s0, 17
  %s35 = sld [smem:[%s34]]
  %s36 = scalar_lea.smem %s0, 18
  %s37 = sld [smem:[%s36]]
  %s38 = scalar_lea.smem %s0, 19
  %s39 = sld [smem:[%s38]]
  %s40 = scalar_lea.smem %s0, 20
  %s41 = sld [smem:[%s40]]
  %s42 = scalar_lea.smem %s0, 21
  %s43 = sld [smem:[%s42]]
  %s44 = scalar_lea.smem %s0, 22
  %s45 = sld [smem:[%s44]]
  %s46 = scalar_lea.smem %s0, 23
  %s47 = sld [smem:[%s46]]
  %s48 = scalar_lea.smem %s0, 24
  %s49 = sld [smem:[%s48]]
  %s50 = scalar_lea.smem %s0, 25
  %s51 = sld [smem:[%s50]]
  %s52 = scalar_lea.smem %s0, 26
  %s53 = sld [smem:[%s52]]
  %s54 = scalar_lea.smem %s0, 27
  %s55 = sld [smem:[%s54]]
  %s56 = scalar_lea.smem %s0, 28
  %s57 = sld [smem:[%s56]]
  %s58 = scalar_lea.smem %s0, 29
  %s59 = sld [smem:[%s58]]
  %s60 = scalar_lea.smem %s0, 30
  %s61 = sld [smem:[%s60]]
  %s62 = scalar_lea.smem %s0, 31
  %s63 = sld [smem:[%s62]]
  %s64 = scalar_lea.smem %s0, 32
  %s65 = sld [smem:[%s64]]
  %s66 = scalar_lea.smem %s0, 33
  %s67 = sld [smem:[%s66]]
  %s68 = scalar_lea.smem %s0, 34
  %s69 = sld [smem:[%s68]]
  %s70 = scalar_lea.smem %s0, 35
  %s71 = sld [smem:[%s70]]
  %s72 = scalar_lea.smem %s0, 36
  %s73 = sld [smem:[%s72]]
  %s74 = scalar_lea.smem %s0, 37
  %s75 = sld [smem:[%s74]]
  %s76 = sld [smem:[#allocation0]]
  $region269: #{forward.1} parent=0
    _
  %s78 = ssub.s32 1, %s76
  %s79 = scalar_select 0, %s78, %s76
  $region1: #{forward.1} parent=0
    #allocation2 [shape = 'u8[2048]{0}', space=vmem, size = 0x800, scoped, tag = 'input window, operand 2, single buffered']
    #allocation3 [shape = 's32[2]{0}', space=sflag, size = 0x8, scoped, tag = 'scoped memory for forward.1']
    #allocation4 [shape = 'u8[8192]{0}', space=vmem, size = 0x2000, scoped, tag = 'input window, operand 3, single buffered']
    #allocation5 [shape = 's32[1]{0}', space=sflag, size = 0x4, scoped, tag = 'scoped memory for forward.1']
    #allocation6 [shape = 'u8[8192]{0}', space=vmem, size = 0x2000, scoped, tag = 'input window, operand 4, single buffered']
    #allocation7 [shape = 'u8[12288]{0}', space=vmem, size = 0x3000, scoped, tag = 'input window, operand 5, single buffered']
    #allocation8 [shape = 's32[1]{0}', space=sflag, size = 0x4, scoped, tag = 'scoped memory for forward.1']
    #allocation9 [shape = 'u8[8192]{0}', space=vmem, size = 0x2000, scoped, tag = 'input window, operand 6, single buffered']
    #allocation10 [shape = 'u8[12288]{0}', space=vmem, size = 0x3000, scoped, tag = 'input window, operand 7, single buffered']
    #allocation11 [shape = 's32[1]{0}', space=sflag, size = 0x4, scoped, tag = 'scoped memory for forward.1']
    #allocation12 [shape = 'u8[2048]{0}', space=vmem, size = 0x800, scoped, tag = 'input window, operand 9, single buffered']
    #allocation13 [shape = 'u8[8192]{0}', space=vmem, size = 0x2000, scoped, tag = 'input window, operand 10, single buffered']
    #allocation14 [shape = 's32[1]{0}', space=sflag, size = 0x4, scoped, tag = 'scoped memory for forward.1']
    #allocation15 [shape = 'u8[8192]{0}', space=vmem, size = 0x2000, scoped, tag = 'input window, operand 11, single buffered']
    #allocation16 [shape = 'u8[12288]{0}', space=vmem, size = 0x3000, scoped, tag = 'input window, operand 12, single buffered']
    #allocation17 [shape = 's32[1]{0}', space=sflag, size = 0x4, scoped, tag = 'scoped memory for forward.1']
    #allocation18 [shape = 'u8[8192]{0}', space=vmem, size = 0x2000, scoped, tag = 'input window, operand 13, single buffered']
    #allocation19 [shape = 'u8[12288]{0}', space=vmem, size = 0x3000, scoped, tag = 'input window, operand 14, single buffered']
    #allocation20 [shape = 's32[1]{0}', space=sflag, size = 0x4, scoped, tag = 'scoped memory for forward.1']
    #allocation21 [shape = 'u8[2048]{0}', space=vmem, size = 0x800, scoped, tag = 'input window, operand 16, single buffered']
    #allocation22 [shape = 'u8[8192]{0}', space=vmem, size = 0x2000, scoped, tag = 'input window, operand 17, single buffered']
    #allocation23 [shape = 's32[1]{0}', space=sflag, size = 0x4, scoped, tag = 'scoped memory for forward.1']
    #allocation24 [shape = 'u8[8192]{0}', space=vmem, size = 0x2000, scoped, tag = 'input window, operand 18, single buffered']
    #allocation25 [shape = 'u8[12288]{0}', space=vmem, size = 0x3000, scoped, tag = 'input window, operand 19, single buffered']
    #allocation26 [shape = 's32[1]{0}', space=sflag, size = 0x4, scoped, tag = 'scoped memory for forward.1']
    #allocation27 [shape = 'u8[8192]{0}', space=vmem, size = 0x2000, scoped, tag = 'input window, operand 20, single buffered']
    #allocation28 [shape = 'u8[12288]{0}', space=vmem, size = 0x3000, scoped, tag = 'input window, operand 21, single buffered']
    #allocation29 [shape = 's32[1]{0}', space=sflag, size = 0x4, scoped, tag = 'scoped memory for forward.1']
    #allocation30 [shape = 'u8[2048]{0}', space=vmem, size = 0x800, scoped, tag = 'input window, operand 23, single buffered']
    #allocation31 [shape = 'u8[8192]{0}', space=vmem, size = 0x2000, scoped, tag = 'input window, operand 24, single buffered']
    #allocation32 [shape = 's32[1]{0}', space=sflag, size = 0x4, scoped, tag = 'scoped memory for forward.1']
    #allocation33 [shape = 'u8[8192]{0}', space=vmem, size = 0x2000, scoped, tag = 'input window, operand 25, single buffered']
    #allocation34 [shape = 'u8[8192]{0}', space=vmem, size = 0x2000, scoped, tag = 'input window, operand 27, single buffered']
    #allocation35 [shape = 's32[1]{0}', space=sflag, size = 0x4, scoped, tag = 'scoped memory for forward.1']
    %80 = vsyncpa [#allocation3], 0
    %81 = vsyncpa [#allocation5], 0
    %82 = vsyncpa [#allocation8], 0
    %83 = vsyncpa [#allocation11], 0
    %84 = vsyncpa [#allocation14], 0
    %85 = vsyncpa [#allocation17], 0
    %86 = vsyncpa [#allocation20], 0
    %87 = vsyncpa [#allocation23], 0
    %88 = vsyncpa [#allocation26], 0
    %89 = vsyncpa [#allocation29], 0
    %90 = vsyncpa [#allocation32], 0
    %91 = vsyncpa [#allocation35], 0
    loop: start=0, step=1, limit=4
    $region2: #{forward.1} parent=1 // loop_pre_header
      _
    $region3: #{forward.1} parent=1 // loop_header
      %s93 = sphi 0, %s97
      %p94 = scmp.ge.s32.totalorder %s93, 4
      %s103 = sphi 0, %s105
      %s106 = sphi 0, %s103
      %s107 = sphi 0, %s106
      %s123 = sphi 0, %s107
      %s127 = sphi 0, %s127
      %s129 = sphi 0, %s127
      %s130 = sphi 0, %s129
      %s144 = sphi 0, %s130
      %s148 = sphi 0, %s148
      %s150 = sphi 0, %s148
      %s151 = sphi 0, %s150
      %s165 = sphi 0, %s151
      %s169 = sphi 0, %s169
      %s171 = sphi 0, %s169
      %s172 = sphi 0, %s171
      %s186 = sphi 0, %s172
      %s190 = sphi 0, %s190
      %s192 = sphi 0, %s190
      %s193 = sphi 0, %s192
      %s207 = sphi 0, %s193
      %s211 = sphi 0, %s211
      %s213 = sphi 0, %s211
      %s214 = sphi 0, %s213
      %s228 = sphi 0, %s214
      %s232 = sphi 0, %s232
      %s234 = sphi 0, %s232
      %s235 = sphi 0, %s234
      %s249 = sphi 0, %s235
      %s253 = sphi 0, %s253
      %s255 = sphi 0, %s253
      %s256 = sphi 0, %s255
      %s270 = sphi 0, %s256
      %s274 = sphi 0, %s274
      %s276 = sphi 0, %s274
      %s277 = sphi 0, %s276
      %s291 = sphi 0, %s277
      %s295 = sphi 0, %s295
      %s297 = sphi 0, %s295
      %s298 = sphi 0, %s297
      %s312 = sphi 0, %s298
      %s316 = sphi 0, %s316
      %s318 = sphi 0, %s316
      %s319 = sphi 0, %s318
      %s333 = sphi 0, %s319
      %s337 = sphi 0, %s337
      %s339 = sphi 0, %s337
      %s340 = sphi 0, %s339
      %s354 = sphi 0, %s340
      %s358 = sphi 0, %s358
      %s360 = sphi 0, %s358
      %s361 = sphi 0, %s360
      %s375 = sphi 0, %s361
      %s379 = sphi 0, %s379
      %s381 = sphi 0, %s379
      %s382 = sphi 0, %s381
      %s396 = sphi 0, %s382
      %s400 = sphi 0, %s400
      %s402 = sphi 0, %s400
      %s403 = sphi 0, %s402
      %s417 = sphi 0, %s403
      %s421 = sphi 0, %s421
      %s423 = sphi 0, %s421
      %s424 = sphi 0, %s423
      %s438 = sphi 0, %s424
      %s442 = sphi 0, %s442
      %s444 = sphi 0, %s442
      %s445 = sphi 0, %s444
      %s459 = sphi 0, %s445
      %s463 = sphi 0, %s463
      %s465 = sphi 0, %s463
      %s466 = sphi 0, %s465
      %s480 = sphi 0, %s466
      %s484 = sphi 0, %s484
      %s486 = sphi 0, %s484
      %s487 = sphi 0, %s486
      %s501 = sphi 0, %s487
      %s505 = sphi 0, %s505
      %s507 = sphi 0, %s505
      %s508 = sphi 0, %s507
      %s522 = sphi 0, %s508
      %s526 = sphi 0, %s526
      %s528 = sphi 0, %s526
      %s529 = sphi 0, %s528
      %s543 = sphi 0, %s529
      %s547 = sphi 0, %s547
      %s549 = sphi 0, %s547
      %s550 = sphi 0, %s549
      %s564 = sphi 0, %s550
      %s568 = sphi 0, %s568
      %s570 = sphi 0, %s568
      %s571 = sphi 0, %s570
      %s585 = sphi 0, %s571
      %s589 = sphi 0, %s589
      %s591 = sphi 0, %s589
      %s592 = sphi 0, %s591
      %s606 = sphi 0, %s592
      %s610 = sphi 0, %s610
      %s612 = sphi 0, %s610
      %s613 = sphi 0, %s612
      %s627 = sphi 0, %s613
      %s631 = sphi 0, %s631
      %s633 = sphi 0, %s631
      %s634 = sphi 0, %s633
      %s648 = sphi 0, %s634
      %s652 = sphi 0, %s652
      %s654 = sphi 0, %s652
      %s655 = sphi 0, %s654
      %s669 = sphi 0, %s655
      %s673 = sphi 0, %s673
      %s675 = sphi 0, %s673
      %s676 = sphi 0, %s675
      %s690 = sphi 0, %s676
      %s694 = sphi 0, %s694
      %s696 = sphi 0, %s694
      %s697 = sphi 0, %s696
      %s711 = sphi 0, %s697
      %s715 = sphi 0, %s715
      %s717 = sphi 0, %s715
      %s718 = sphi 0, %s717
      %s732 = sphi 0, %s718
      %s736 = sphi 0, %s736
      %s738 = sphi 0, %s736
      %s739 = sphi 0, %s738
      %s753 = sphi 0, %s739
      %s757 = sphi 0, %s757
      %s759 = sphi 0, %s757
      %s760 = sphi 0, %s759
      %s774 = sphi 0, %s760
      %s778 = sphi 0, %s778
      %s780 = sphi 0, %s778
      %s781 = sphi 0, %s780
      %s795 = sphi 0, %s781
      %s799 = sphi 0, %s799
      %s801 = sphi 0, %s799
      %s802 = sphi 0, %s801
      %s816 = sphi 0, %s802
      %s820 = sphi 0, %s820
      %s822 = sphi 0, %s820
      %s823 = sphi 0, %s822
      %s837 = sphi 0, %s823
      %s841 = sphi 0, %s841
      %s843 = sphi 0, %s841
      %s844 = sphi 0, %s843
      %s858 = sphi 0, %s844
      %s862 = sphi 0, %s862
      %s864 = sphi 0, %s862
      %s865 = sphi 0, %s864
      %s879 = sphi 0, %s865
      %s885 = sphi 0, %s887
      %s888 = sphi 0, %s885
      %s889 = sphi 0, %s888
      %s905 = sphi 0, %s889
    $region4: #{forward.1} parent=1 // loop_header_branch
      %96 = sbr.rel (%p94) target = $region8
    $region5: #{forward.1} parent=1 // loop_body
      %s98 = ssub.s32 %s93, 1
      %s99 = ssub.s32 %s93, 2
      %s100 = sadd.s32 %s93, 1
      %s101 = ssub.s32 %s93, %s100
      %p102 = scmp.eq.s32.totalorder %s101, 0
      %s104 = sadd.s32 %s103, 1
      %s105 = scalar_select %p102, %s103, %s104
      %p108 = pneg %p102
      %p109 = scmp.eq.s32.totalorder %s93, 1
      %p110 = por %p108, %p109
      %p111 = scmp.ne.s32.totalorder %s103, %s106
      %p112 = scmp.eq.s32.totalorder %s93, 0
      %p113 = por %p111, %p112
      %p114 = scmp.ne.s32.totalorder %s103, %s106
      %p115 = scmp.eq.s32.totalorder %s98, 1
      %p116 = por %p114, %p115
      %p117 = scmp.ne.s32.totalorder %s106, %s107
      %p118 = scmp.eq.s32.totalorder %s98, 0
      %p119 = por %p117, %p118
      %p120 = scmp.ne.s32.totalorder %s106, %s107
      %p121 = scmp.eq.s32.totalorder %s99, 1
      %p122 = por %p120, %p121
      %p124 = scmp.ne.s32.totalorder %s107, %s123
      %p125 = scmp.eq.s32.totalorder %s99, 0
      %p126 = por %p124, %p125
      %s128 = sadd.s32 %s127, 1
      %p131 = scmp.eq.s32.totalorder %s93, 1
      %p132 = scmp.ne.s32.totalorder %s127, %s129
      %p133 = scmp.eq.s32.totalorder %s93, 0
      %p134 = por %p132, %p133
      %p135 = scmp.ne.s32.totalorder %s127, %s129
      %p136 = scmp.eq.s32.totalorder %s98, 1
      %p137 = por %p135, %p136
      %p138 = scmp.ne.s32.totalorder %s129, %s130
      %p139 = scmp.eq.s32.totalorder %s98, 0
      %p140 = por %p138, %p139
      %p141 = scmp.ne.s32.totalorder %s129, %s130
      %p142 = scmp.eq.s32.totalorder %s99, 1
      %p143 = por %p141, %p142
      %p145 = scmp.ne.s32.totalorder %s130, %s144
      %p146 = scmp.eq.s32.totalorder %s99, 0
      %p147 = por %p145, %p146
      %s149 = sadd.s32 %s148, 1
      %p152 = scmp.eq.s32.totalorder %s93, 1
      %p153 = scmp.ne.s32.totalorder %s148, %s150
      %p154 = scmp.eq.s32.totalorder %s93, 0
      %p155 = por %p153, %p154
      %p156 = scmp.ne.s32.totalorder %s148, %s150
      %p157 = scmp.eq.s32.totalorder %s98, 1
      %p158 = por %p156, %p157
      %p159 = scmp.ne.s32.totalorder %s150, %s151
      %p160 = scmp.eq.s32.totalorder %s98, 0
      %p161 = por %p159, %p160
      %p162 = scmp.ne.s32.totalorder %s150, %s151
      %p163 = scmp.eq.s32.totalorder %s99, 1
      %p164 = por %p162, %p163
      %p166 = scmp.ne.s32.totalorder %s151, %s165
      %p167 = scmp.eq.s32.totalorder %s99, 0
      %p168 = por %p166, %p167
      %s170 = sadd.s32 %s169, 1
      %p173 = scmp.eq.s32.totalorder %s93, 1
      %p174 = scmp.ne.s32.totalorder %s169, %s171
      %p175 = scmp.eq.s32.totalorder %s93, 0
      %p176 = por %p174, %p175
      %p177 = scmp.ne.s32.totalorder %s169, %s171
      %p178 = scmp.eq.s32.totalorder %s98, 1
      %p179 = por %p177, %p178
      %p180 = scmp.ne.s32.totalorder %s171, %s172
      %p181 = scmp.eq.s32.totalorder %s98, 0
      %p182 = por %p180, %p181
      %p183 = scmp.ne.s32.totalorder %s171, %s172
      %p184 = scmp.eq.s32.totalorder %s99, 1
      %p185 = por %p183, %p184
      %p187 = scmp.ne.s32.totalorder %s172, %s186
      %p188 = scmp.eq.s32.totalorder %s99, 0
      %p189 = por %p187, %p188
      %s191 = sadd.s32 %s190, 1
      %p194 = scmp.eq.s32.totalorder %s93, 1
      %p195 = scmp.ne.s32.totalorder %s190, %s192
      %p196 = scmp.eq.s32.totalorder %s93, 0
      %p197 = por %p195, %p196
      %p198 = scmp.ne.s32.totalorder %s190, %s192
      %p199 = scmp.eq.s32.totalorder %s98, 1
      %p200 = por %p198, %p199
      %p201 = scmp.ne.s32.totalorder %s192, %s193
      %p202 = scmp.eq.s32.totalorder %s98, 0
      %p203 = por %p201, %p202
      %p204 = scmp.ne.s32.totalorder %s192, %s193
      %p205 = scmp.eq.s32.totalorder %s99, 1
      %p206 = por %p204, %p205
      %p208 = scmp.ne.s32.totalorder %s193, %s207
      %p209 = scmp.eq.s32.totalorder %s99, 0
      %p210 = por %p208, %p209
      %s212 = sadd.s32 %s211, 1
      %p215 = scmp.eq.s32.totalorder %s93, 1
      %p216 = scmp.ne.s32.totalorder %s211, %s213
      %p217 = scmp.eq.s32.totalorder %s93, 0
      %p218 = por %p216, %p217
      %p219 = scmp.ne.s32.totalorder %s211, %s213
      %p220 = scmp.eq.s32.totalorder %s98, 1
      %p221 = por %p219, %p220
      %p222 = scmp.ne.s32.totalorder %s213, %s214
      %p223 = scmp.eq.s32.totalorder %s98, 0
      %p224 = por %p222, %p223
      %p225 = scmp.ne.s32.totalorder %s213, %s214
      %p226 = scmp.eq.s32.totalorder %s99, 1
      %p227 = por %p225, %p226
      %p229 = scmp.ne.s32.totalorder %s214, %s228
      %p230 = scmp.eq.s32.totalorder %s99, 0
      %p231 = por %p229, %p230
      %s233 = sadd.s32 %s232, 1
      %p236 = scmp.eq.s32.totalorder %s93, 1
      %p237 = scmp.ne.s32.totalorder %s232, %s234
      %p238 = scmp.eq.s32.totalorder %s93, 0
      %p239 = por %p237, %p238
      %p240 = scmp.ne.s32.totalorder %s232, %s234
      %p241 = scmp.eq.s32.totalorder %s98, 1
      %p242 = por %p240, %p241
      %p243 = scmp.ne.s32.totalorder %s234, %s235
      %p244 = scmp.eq.s32.totalorder %s98, 0
      %p245 = por %p243, %p244
      %p246 = scmp.ne.s32.totalorder %s234, %s235
      %p247 = scmp.eq.s32.totalorder %s99, 1
      %p248 = por %p246, %p247
      %p250 = scmp.ne.s32.totalorder %s235, %s249
      %p251 = scmp.eq.s32.totalorder %s99, 0
      %p252 = por %p250, %p251
      %s254 = sadd.s32 %s253, 1
      %p257 = scmp.eq.s32.totalorder %s93, 1
      %p258 = scmp.ne.s32.totalorder %s253, %s255
      %p259 = scmp.eq.s32.totalorder %s93, 0
      %p260 = por %p258, %p259
      %p261 = scmp.ne.s32.totalorder %s253, %s255
      %p262 = scmp.eq.s32.totalorder %s98, 1
      %p263 = por %p261, %p262
      %p264 = scmp.ne.s32.totalorder %s255, %s256
      %p265 = scmp.eq.s32.totalorder %s98, 0
      %p266 = por %p264, %p265
      %p267 = scmp.ne.s32.totalorder %s255, %s256
      %p268 = scmp.eq.s32.totalorder %s99, 1
      %p269 = por %p267, %p268
      %p271 = scmp.ne.s32.totalorder %s256, %s270
      %p272 = scmp.eq.s32.totalorder %s99, 0
      %p273 = por %p271, %p272
      %s275 = sadd.s32 %s274, 1
      %p278 = scmp.eq.s32.totalorder %s93, 1
      %p279 = scmp.ne.s32.totalorder %s274, %s276
      %p280 = scmp.eq.s32.totalorder %s93, 0
      %p281 = por %p279, %p280
      %p282 = scmp.ne.s32.totalorder %s274, %s276
      %p283 = scmp.eq.s32.totalorder %s98, 1
      %p284 = por %p282, %p283
      %p285 = scmp.ne.s32.totalorder %s276, %s277
      %p286 = scmp.eq.s32.totalorder %s98, 0
      %p287 = por %p285, %p286
      %p288 = scmp.ne.s32.totalorder %s276, %s277
      %p289 = scmp.eq.s32.totalorder %s99, 1
      %p290 = por %p288, %p289
      %p292 = scmp.ne.s32.totalorder %s277, %s291
      %p293 = scmp.eq.s32.totalorder %s99, 0
      %p294 = por %p292, %p293
      %s296 = sadd.s32 %s295, 1
      %p299 = scmp.eq.s32.totalorder %s93, 1
      %p300 = scmp.ne.s32.totalorder %s295, %s297
      %p301 = scmp.eq.s32.totalorder %s93, 0
      %p302 = por %p300, %p301
      %p303 = scmp.ne.s32.totalorder %s295, %s297
      %p304 = scmp.eq.s32.totalorder %s98, 1
      %p305 = por %p303, %p304
      %p306 = scmp.ne.s32.totalorder %s297, %s298
      %p307 = scmp.eq.s32.totalorder %s98, 0
      %p308 = por %p306, %p307
      %p309 = scmp.ne.s32.totalorder %s297, %s298
      %p310 = scmp.eq.s32.totalorder %s99, 1
      %p311 = por %p309, %p310
      %p313 = scmp.ne.s32.totalorder %s298, %s312
      %p314 = scmp.eq.s32.totalorder %s99, 0
      %p315 = por %p313, %p314
      %s317 = sadd.s32 %s316, 1
      %p320 = scmp.eq.s32.totalorder %s93, 1
      %p321 = scmp.ne.s32.totalorder %s316, %s318
      %p322 = scmp.eq.s32.totalorder %s93, 0
      %p323 = por %p321, %p322
      %p324 = scmp.ne.s32.totalorder %s316, %s318
      %p325 = scmp.eq.s32.totalorder %s98, 1
      %p326 = por %p324, %p325
      %p327 = scmp.ne.s32.totalorder %s318, %s319
      %p328 = scmp.eq.s32.totalorder %s98, 0
      %p329 = por %p327, %p328
      %p330 = scmp.ne.s32.totalorder %s318, %s319
      %p331 = scmp.eq.s32.totalorder %s99, 1
      %p332 = por %p330, %p331
      %p334 = scmp.ne.s32.totalorder %s319, %s333
      %p335 = scmp.eq.s32.totalorder %s99, 0
      %p336 = por %p334, %p335
      %s338 = sadd.s32 %s337, 1
      %p341 = scmp.eq.s32.totalorder %s93, 1
      %p342 = scmp.ne.s32.totalorder %s337, %s339
      %p343 = scmp.eq.s32.totalorder %s93, 0
      %p344 = por %p342, %p343
      %p345 = scmp.ne.s32.totalorder %s337, %s339
      %p346 = scmp.eq.s32.totalorder %s98, 1
      %p347 = por %p345, %p346
      %p348 = scmp.ne.s32.totalorder %s339, %s340
      %p349 = scmp.eq.s32.totalorder %s98, 0
      %p350 = por %p348, %p349
      %p351 = scmp.ne.s32.totalorder %s339, %s340
      %p352 = scmp.eq.s32.totalorder %s99, 1
      %p353 = por %p351, %p352
      %p355 = scmp.ne.s32.totalorder %s340, %s354
      %p356 = scmp.eq.s32.totalorder %s99, 0
      %p357 = por %p355, %p356
      %s359 = sadd.s32 %s358, 1
      %p362 = scmp.eq.s32.totalorder %s93, 1
      %p363 = scmp.ne.s32.totalorder %s358, %s360
      %p364 = scmp.eq.s32.totalorder %s93, 0
      %p365 = por %p363, %p364
      %p366 = scmp.ne.s32.totalorder %s358, %s360
      %p367 = scmp.eq.s32.totalorder %s98, 1
      %p368 = por %p366, %p367
      %p369 = scmp.ne.s32.totalorder %s360, %s361
      %p370 = scmp.eq.s32.totalorder %s98, 0
      %p371 = por %p369, %p370
      %p372 = scmp.ne.s32.totalorder %s360, %s361
      %p373 = scmp.eq.s32.totalorder %s99, 1
      %p374 = por %p372, %p373
      %p376 = scmp.ne.s32.totalorder %s361, %s375
      %p377 = scmp.eq.s32.totalorder %s99, 0
      %p378 = por %p376, %p377
      %s380 = sadd.s32 %s379, 1
      %p383 = scmp.eq.s32.totalorder %s93, 1
      %p384 = scmp.ne.s32.totalorder %s379, %s381
      %p385 = scmp.eq.s32.totalorder %s93, 0
      %p386 = por %p384, %p385
      %p387 = scmp.ne.s32.totalorder %s379, %s381
      %p388 = scmp.eq.s32.totalorder %s98, 1
      %p389 = por %p387, %p388
      %p390 = scmp.ne.s32.totalorder %s381, %s382
      %p391 = scmp.eq.s32.totalorder %s98, 0
      %p392 = por %p390, %p391
      %p393 = scmp.ne.s32.totalorder %s381, %s382
      %p394 = scmp.eq.s32.totalorder %s99, 1
      %p395 = por %p393, %p394
      %p397 = scmp.ne.s32.totalorder %s382, %s396
      %p398 = scmp.eq.s32.totalorder %s99, 0
      %p399 = por %p397, %p398
      %s401 = sadd.s32 %s400, 1
      %p404 = scmp.eq.s32.totalorder %s93, 1
      %p405 = scmp.ne.s32.totalorder %s400, %s402
      %p406 = scmp.eq.s32.totalorder %s93, 0
      %p407 = por %p405, %p406
      %p408 = scmp.ne.s32.totalorder %s400, %s402
      %p409 = scmp.eq.s32.totalorder %s98, 1
      %p410 = por %p408, %p409
      %p411 = scmp.ne.s32.totalorder %s402, %s403
      %p412 = scmp.eq.s32.totalorder %s98, 0
      %p413 = por %p411, %p412
      %p414 = scmp.ne.s32.totalorder %s402, %s403
      %p415 = scmp.eq.s32.totalorder %s99, 1
      %p416 = por %p414, %p415
      %p418 = scmp.ne.s32.totalorder %s403, %s417
      %p419 = scmp.eq.s32.totalorder %s99, 0
      %p420 = por %p418, %p419
      %s422 = sadd.s32 %s421, 1
      %p425 = scmp.eq.s32.totalorder %s93, 1
      %p426 = scmp.ne.s32.totalorder %s421, %s423
      %p427 = scmp.eq.s32.totalorder %s93, 0
      %p428 = por %p426, %p427
      %p429 = scmp.ne.s32.totalorder %s421, %s423
      %p430 = scmp.eq.s32.totalorder %s98, 1
      %p431 = por %p429, %p430
      %p432 = scmp.ne.s32.totalorder %s423, %s424
      %p433 = scmp.eq.s32.totalorder %s98, 0
      %p434 = por %p432, %p433
      %p435 = scmp.ne.s32.totalorder %s423, %s424
      %p436 = scmp.eq.s32.totalorder %s99, 1
      %p437 = por %p435, %p436
      %p439 = scmp.ne.s32.totalorder %s424, %s438
      %p440 = scmp.eq.s32.totalorder %s99, 0
      %p441 = por %p439, %p440
      %s443 = sadd.s32 %s442, 1
      %p446 = scmp.eq.s32.totalorder %s93, 1
      %p447 = scmp.ne.s32.totalorder %s442, %s444
      %p448 = scmp.eq.s32.totalorder %s93, 0
      %p449 = por %p447, %p448
      %p450 = scmp.ne.s32.totalorder %s442, %s444
      %p451 = scmp.eq.s32.totalorder %s98, 1
      %p452 = por %p450, %p451
      %p453 = scmp.ne.s32.totalorder %s444, %s445
      %p454 = scmp.eq.s32.totalorder %s98, 0
      %p455 = por %p453, %p454
      %p456 = scmp.ne.s32.totalorder %s444, %s445
      %p457 = scmp.eq.s32.totalorder %s99, 1
      %p458 = por %p456, %p457
      %p460 = scmp.ne.s32.totalorder %s445, %s459
      %p461 = scmp.eq.s32.totalorder %s99, 0
      %p462 = por %p460, %p461
      %s464 = sadd.s32 %s463, 1
      %p467 = scmp.eq.s32.totalorder %s93, 1
      %p468 = scmp.ne.s32.totalorder %s463, %s465
      %p469 = scmp.eq.s32.totalorder %s93, 0
      %p470 = por %p468, %p469
      %p471 = scmp.ne.s32.totalorder %s463, %s465
      %p472 = scmp.eq.s32.totalorder %s98, 1
      %p473 = por %p471, %p472
      %p474 = scmp.ne.s32.totalorder %s465, %s466
      %p475 = scmp.eq.s32.totalorder %s98, 0
      %p476 = por %p474, %p475
      %p477 = scmp.ne.s32.totalorder %s465, %s466
      %p478 = scmp.eq.s32.totalorder %s99, 1
      %p479 = por %p477, %p478
      %p481 = scmp.ne.s32.totalorder %s466, %s480
      %p482 = scmp.eq.s32.totalorder %s99, 0
      %p483 = por %p481, %p482
      %s485 = sadd.s32 %s484, 1
      %p488 = scmp.eq.s32.totalorder %s93, 1
      %p489 = scmp.ne.s32.totalorder %s484, %s486
      %p490 = scmp.eq.s32.totalorder %s93, 0
      %p491 = por %p489, %p490
      %p492 = scmp.ne.s32.totalorder %s484, %s486
      %p493 = scmp.eq.s32.totalorder %s98, 1
      %p494 = por %p492, %p493
      %p495 = scmp.ne.s32.totalorder %s486, %s487
      %p496 = scmp.eq.s32.totalorder %s98, 0
      %p497 = por %p495, %p496
      %p498 = scmp.ne.s32.totalorder %s486, %s487
      %p499 = scmp.eq.s32.totalorder %s99, 1
      %p500 = por %p498, %p499
      %p502 = scmp.ne.s32.totalorder %s487, %s501
      %p503 = scmp.eq.s32.totalorder %s99, 0
      %p504 = por %p502, %p503
      %s506 = sadd.s32 %s505, 1
      %p509 = scmp.eq.s32.totalorder %s93, 1
      %p510 = scmp.ne.s32.totalorder %s505, %s507
      %p511 = scmp.eq.s32.totalorder %s93, 0
      %p512 = por %p510, %p511
      %p513 = scmp.ne.s32.totalorder %s505, %s507
      %p514 = scmp.eq.s32.totalorder %s98, 1
      %p515 = por %p513, %p514
      %p516 = scmp.ne.s32.totalorder %s507, %s508
      %p517 = scmp.eq.s32.totalorder %s98, 0
      %p518 = por %p516, %p517
      %p519 = scmp.ne.s32.totalorder %s507, %s508
      %p520 = scmp.eq.s32.totalorder %s99, 1
      %p521 = por %p519, %p520
      %p523 = scmp.ne.s32.totalorder %s508, %s522
      %p524 = scmp.eq.s32.totalorder %s99, 0
      %p525 = por %p523, %p524
      %s527 = sadd.s32 %s526, 1
      %p530 = scmp.eq.s32.totalorder %s93, 1
      %p531 = scmp.ne.s32.totalorder %s526, %s528
      %p532 = scmp.eq.s32.totalorder %s93, 0
      %p533 = por %p531, %p532
      %p534 = scmp.ne.s32.totalorder %s526, %s528
      %p535 = scmp.eq.s32.totalorder %s98, 1
      %p536 = por %p534, %p535
      %p537 = scmp.ne.s32.totalorder %s528, %s529
      %p538 = scmp.eq.s32.totalorder %s98, 0
      %p539 = por %p537, %p538
      %p540 = scmp.ne.s32.totalorder %s528, %s529
      %p541 = scmp.eq.s32.totalorder %s99, 1
      %p542 = por %p540, %p541
      %p544 = scmp.ne.s32.totalorder %s529, %s543
      %p545 = scmp.eq.s32.totalorder %s99, 0
      %p546 = por %p544, %p545
      %s548 = sadd.s32 %s547, 1
      %p551 = scmp.eq.s32.totalorder %s93, 1
      %p552 = scmp.ne.s32.totalorder %s547, %s549
      %p553 = scmp.eq.s32.totalorder %s93, 0
      %p554 = por %p552, %p553
      %p555 = scmp.ne.s32.totalorder %s547, %s549
      %p556 = scmp.eq.s32.totalorder %s98, 1
      %p557 = por %p555, %p556
      %p558 = scmp.ne.s32.totalorder %s549, %s550
      %p559 = scmp.eq.s32.totalorder %s98, 0
      %p560 = por %p558, %p559
      %p561 = scmp.ne.s32.totalorder %s549, %s550
      %p562 = scmp.eq.s32.totalorder %s99, 1
      %p563 = por %p561, %p562
      %p565 = scmp.ne.s32.totalorder %s550, %s564
      %p566 = scmp.eq.s32.totalorder %s99, 0
      %p567 = por %p565, %p566
      %s569 = sadd.s32 %s568, 1
      %p572 = scmp.eq.s32.totalorder %s93, 1
      %p573 = scmp.ne.s32.totalorder %s568, %s570
      %p574 = scmp.eq.s32.totalorder %s93, 0
      %p575 = por %p573, %p574
      %p576 = scmp.ne.s32.totalorder %s568, %s570
      %p577 = scmp.eq.s32.totalorder %s98, 1
      %p578 = por %p576, %p577
      %p579 = scmp.ne.s32.totalorder %s570, %s571
      %p580 = scmp.eq.s32.totalorder %s98, 0
      %p581 = por %p579, %p580
      %p582 = scmp.ne.s32.totalorder %s570, %s571
      %p583 = scmp.eq.s32.totalorder %s99, 1
      %p584 = por %p582, %p583
      %p586 = scmp.ne.s32.totalorder %s571, %s585
      %p587 = scmp.eq.s32.totalorder %s99, 0
      %p588 = por %p586, %p587
      %s590 = sadd.s32 %s589, 1
      %p593 = scmp.eq.s32.totalorder %s93, 1
      %p594 = scmp.ne.s32.totalorder %s589, %s591
      %p595 = scmp.eq.s32.totalorder %s93, 0
      %p596 = por %p594, %p595
      %p597 = scmp.ne.s32.totalorder %s589, %s591
      %p598 = scmp.eq.s32.totalorder %s98, 1
      %p599 = por %p597, %p598
      %p600 = scmp.ne.s32.totalorder %s591, %s592
      %p601 = scmp.eq.s32.totalorder %s98, 0
      %p602 = por %p600, %p601
      %p603 = scmp.ne.s32.totalorder %s591, %s592
      %p604 = scmp.eq.s32.totalorder %s99, 1
      %p605 = por %p603, %p604
      %p607 = scmp.ne.s32.totalorder %s592, %s606
      %p608 = scmp.eq.s32.totalorder %s99, 0
      %p609 = por %p607, %p608
      %s611 = sadd.s32 %s610, 1
      %p614 = scmp.eq.s32.totalorder %s93, 1
      %p615 = scmp.ne.s32.totalorder %s610, %s612
      %p616 = scmp.eq.s32.totalorder %s93, 0
      %p617 = por %p615, %p616
      %p618 = scmp.ne.s32.totalorder %s610, %s612
      %p619 = scmp.eq.s32.totalorder %s98, 1
      %p620 = por %p618, %p619
      %p621 = scmp.ne.s32.totalorder %s612, %s613
      %p622 = scmp.eq.s32.totalorder %s98, 0
      %p623 = por %p621, %p622
      %p624 = scmp.ne.s32.totalorder %s612, %s613
      %p625 = scmp.eq.s32.totalorder %s99, 1
      %p626 = por %p624, %p625
      %p628 = scmp.ne.s32.totalorder %s613, %s627
      %p629 = scmp.eq.s32.totalorder %s99, 0
      %p630 = por %p628, %p629
      %s632 = sadd.s32 %s631, 1
      %p635 = scmp.eq.s32.totalorder %s93, 1
      %p636 = scmp.ne.s32.totalorder %s631, %s633
      %p637 = scmp.eq.s32.totalorder %s93, 0
      %p638 = por %p636, %p637
      %p639 = scmp.ne.s32.totalorder %s631, %s633
      %p640 = scmp.eq.s32.totalorder %s98, 1
      %p641 = por %p639, %p640
      %p642 = scmp.ne.s32.totalorder %s633, %s634
      %p643 = scmp.eq.s32.totalorder %s98, 0
      %p644 = por %p642, %p643
      %p645 = scmp.ne.s32.totalorder %s633, %s634
      %p646 = scmp.eq.s32.totalorder %s99, 1
      %p647 = por %p645, %p646
      %p649 = scmp.ne.s32.totalorder %s634, %s648
      %p650 = scmp.eq.s32.totalorder %s99, 0
      %p651 = por %p649, %p650
      %s653 = sadd.s32 %s652, 1
      %p656 = scmp.eq.s32.totalorder %s93, 1
      %p657 = scmp.ne.s32.totalorder %s652, %s654
      %p658 = scmp.eq.s32.totalorder %s93, 0
      %p659 = por %p657, %p658
      %p660 = scmp.ne.s32.totalorder %s652, %s654
      %p661 = scmp.eq.s32.totalorder %s98, 1
      %p662 = por %p660, %p661
      %p663 = scmp.ne.s32.totalorder %s654, %s655
      %p664 = scmp.eq.s32.totalorder %s98, 0
      %p665 = por %p663, %p664
      %p666 = scmp.ne.s32.totalorder %s654, %s655
      %p667 = scmp.eq.s32.totalorder %s99, 1
      %p668 = por %p666, %p667
      %p670 = scmp.ne.s32.totalorder %s655, %s669
      %p671 = scmp.eq.s32.totalorder %s99, 0
      %p672 = por %p670, %p671
      %s674 = sadd.s32 %s673, 1
      %p677 = scmp.eq.s32.totalorder %s93, 1
      %p678 = scmp.ne.s32.totalorder %s673, %s675
      %p679 = scmp.eq.s32.totalorder %s93, 0
      %p680 = por %p678, %p679
      %p681 = scmp.ne.s32.totalorder %s673, %s675
      %p682 = scmp.eq.s32.totalorder %s98, 1
      %p683 = por %p681, %p682
      %p684 = scmp.ne.s32.totalorder %s675, %s676
      %p685 = scmp.eq.s32.totalorder %s98, 0
      %p686 = por %p684, %p685
      %p687 = scmp.ne.s32.totalorder %s675, %s676
      %p688 = scmp.eq.s32.totalorder %s99, 1
      %p689 = por %p687, %p688
      %p691 = scmp.ne.s32.totalorder %s676, %s690
      %p692 = scmp.eq.s32.totalorder %s99, 0
      %p693 = por %p691, %p692
      %s695 = sadd.s32 %s694, 1
      %p698 = scmp.eq.s32.totalorder %s93, 1
      %p699 = scmp.ne.s32.totalorder %s694, %s696
      %p700 = scmp.eq.s32.totalorder %s93, 0
      %p701 = por %p699, %p700
      %p702 = scmp.ne.s32.totalorder %s694, %s696
      %p703 = scmp.eq.s32.totalorder %s98, 1
      %p704 = por %p702, %p703
      %p705 = scmp.ne.s32.totalorder %s696, %s697
      %p706 = scmp.eq.s32.totalorder %s98, 0
      %p707 = por %p705, %p706
      %p708 = scmp.ne.s32.totalorder %s696, %s697
      %p709 = scmp.eq.s32.totalorder %s99, 1
      %p710 = por %p708, %p709
      %p712 = scmp.ne.s32.totalorder %s697, %s711
      %p713 = scmp.eq.s32.totalorder %s99, 0
      %p714 = por %p712, %p713
      %s716 = sadd.s32 %s715, 1
      %p719 = scmp.eq.s32.totalorder %s93, 1
      %p720 = scmp.ne.s32.totalorder %s715, %s717
      %p721 = scmp.eq.s32.totalorder %s93, 0
      %p722 = por %p720, %p721
      %p723 = scmp.ne.s32.totalorder %s715, %s717
      %p724 = scmp.eq.s32.totalorder %s98, 1
      %p725 = por %p723, %p724
      %p726 = scmp.ne.s32.totalorder %s717, %s718
      %p727 = scmp.eq.s32.totalorder %s98, 0
      %p728 = por %p726, %p727
      %p729 = scmp.ne.s32.totalorder %s717, %s718
      %p730 = scmp.eq.s32.totalorder %s99, 1
      %p731 = por %p729, %p730
      %p733 = scmp.ne.s32.totalorder %s718, %s732
      %p734 = scmp.eq.s32.totalorder %s99, 0
      %p735 = por %p733, %p734
      %s737 = sadd.s32 %s736, 1
      %p740 = scmp.eq.s32.totalorder %s93, 1
      %p741 = scmp.ne.s32.totalorder %s736, %s738
      %p742 = scmp.eq.s32.totalorder %s93, 0
      %p743 = por %p741, %p742
      %p744 = scmp.ne.s32.totalorder %s736, %s738
      %p745 = scmp.eq.s32.totalorder %s98, 1
      %p746 = por %p744, %p745
      %p747 = scmp.ne.s32.totalorder %s738, %s739
      %p748 = scmp.eq.s32.totalorder %s98, 0
      %p749 = por %p747, %p748
      %p750 = scmp.ne.s32.totalorder %s738, %s739
      %p751 = scmp.eq.s32.totalorder %s99, 1
      %p752 = por %p750, %p751
      %p754 = scmp.ne.s32.totalorder %s739, %s753
      %p755 = scmp.eq.s32.totalorder %s99, 0
      %p756 = por %p754, %p755
      %s758 = sadd.s32 %s757, 1
      %p761 = scmp.eq.s32.totalorder %s93, 1
      %p762 = scmp.ne.s32.totalorder %s757, %s759
      %p763 = scmp.eq.s32.totalorder %s93, 0
      %p764 = por %p762, %p763
      %p765 = scmp.ne.s32.totalorder %s757, %s759
      %p766 = scmp.eq.s32.totalorder %s98, 1
      %p767 = por %p765, %p766
      %p768 = scmp.ne.s32.totalorder %s759, %s760
      %p769 = scmp.eq.s32.totalorder %s98, 0
      %p770 = por %p768, %p769
      %p771 = scmp.ne.s32.totalorder %s759, %s760
      %p772 = scmp.eq.s32.totalorder %s99, 1
      %p773 = por %p771, %p772
      %p775 = scmp.ne.s32.totalorder %s760, %s774
      %p776 = scmp.eq.s32.totalorder %s99, 0
      %p777 = por %p775, %p776
      %s779 = sadd.s32 %s778, 1
      %p782 = scmp.eq.s32.totalorder %s93, 1
      %p783 = scmp.ne.s32.totalorder %s778, %s780
      %p784 = scmp.eq.s32.totalorder %s93, 0
      %p785 = por %p783, %p784
      %p786 = scmp.ne.s32.totalorder %s778, %s780
      %p787 = scmp.eq.s32.totalorder %s98, 1
      %p788 = por %p786, %p787
      %p789 = scmp.ne.s32.totalorder %s780, %s781
      %p790 = scmp.eq.s32.totalorder %s98, 0
      %p791 = por %p789, %p790
      %p792 = scmp.ne.s32.totalorder %s780, %s781
      %p793 = scmp.eq.s32.totalorder %s99, 1
      %p794 = por %p792, %p793
      %p796 = scmp.ne.s32.totalorder %s781, %s795
      %p797 = scmp.eq.s32.totalorder %s99, 0
      %p798 = por %p796, %p797
      %s800 = sadd.s32 %s799, 1
      %p803 = scmp.eq.s32.totalorder %s93, 1
      %p804 = scmp.ne.s32.totalorder %s799, %s801
      %p805 = scmp.eq.s32.totalorder %s93, 0
      %p806 = por %p804, %p805
      %p807 = scmp.ne.s32.totalorder %s799, %s801
      %p808 = scmp.eq.s32.totalorder %s98, 1
      %p809 = por %p807, %p808
      %p810 = scmp.ne.s32.totalorder %s801, %s802
      %p811 = scmp.eq.s32.totalorder %s98, 0
      %p812 = por %p810, %p811
      %p813 = scmp.ne.s32.totalorder %s801, %s802
      %p814 = scmp.eq.s32.totalorder %s99, 1
      %p815 = por %p813, %p814
      %p817 = scmp.ne.s32.totalorder %s802, %s816
      %p818 = scmp.eq.s32.totalorder %s99, 0
      %p819 = por %p817, %p818
      %s821 = sadd.s32 %s820, 1
      %p824 = scmp.eq.s32.totalorder %s93, 1
      %p825 = scmp.ne.s32.totalorder %s820, %s822
      %p826 = scmp.eq.s32.totalorder %s93, 0
      %p827 = por %p825, %p826
      %p828 = scmp.ne.s32.totalorder %s820, %s822
      %p829 = scmp.eq.s32.totalorder %s98, 1
      %p830 = por %p828, %p829
      %p831 = scmp.ne.s32.totalorder %s822, %s823
      %p832 = scmp.eq.s32.totalorder %s98, 0
      %p833 = por %p831, %p832
      %p834 = scmp.ne.s32.totalorder %s822, %s823
      %p835 = scmp.eq.s32.totalorder %s99, 1
      %p836 = por %p834, %p835
      %p838 = scmp.ne.s32.totalorder %s823, %s837
      %p839 = scmp.eq.s32.totalorder %s99, 0
      %p840 = por %p838, %p839
      %s842 = sadd.s32 %s841, 1
      %p845 = scmp.eq.s32.totalorder %s93, 1
      %p846 = scmp.ne.s32.totalorder %s841, %s843
      %p847 = scmp.eq.s32.totalorder %s93, 0
      %p848 = por %p846, %p847
      %p849 = scmp.ne.s32.totalorder %s841, %s843
      %p850 = scmp.eq.s32.totalorder %s98, 1
      %p851 = por %p849, %p850
      %p852 = scmp.ne.s32.totalorder %s843, %s844
      %p853 = scmp.eq.s32.totalorder %s98, 0
      %p854 = por %p852, %p853
      %p855 = scmp.ne.s32.totalorder %s843, %s844
      %p856 = scmp.eq.s32.totalorder %s99, 1
      %p857 = por %p855, %p856
      %p859 = scmp.ne.s32.totalorder %s844, %s858
      %p860 = scmp.eq.s32.totalorder %s99, 0
      %p861 = por %p859, %p860
      %s863 = sadd.s32 %s862, 1
      %p866 = scmp.eq.s32.totalorder %s93, 1
      %p867 = scmp.ne.s32.totalorder %s862, %s864
      %p868 = scmp.eq.s32.totalorder %s93, 0
      %p869 = por %p867, %p868
      %p870 = scmp.ne.s32.totalorder %s862, %s864
      %p871 = scmp.eq.s32.totalorder %s98, 1
      %p872 = por %p870, %p871
      %p873 = scmp.ne.s32.totalorder %s864, %s865
      %p874 = scmp.eq.s32.totalorder %s98, 0
      %p875 = por %p873, %p874
      %p876 = scmp.ne.s32.totalorder %s864, %s865
      %p877 = scmp.eq.s32.totalorder %s99, 1
      %p878 = por %p876, %p877
      %p880 = scmp.ne.s32.totalorder %s865, %s879
      %p881 = scmp.eq.s32.totalorder %s99, 0
      %p882 = por %p880, %p881
      %s883 = ssub.s32 %s93, %s100
      %p884 = scmp.eq.s32.totalorder %s883, 0
      %s886 = sadd.s32 %s885, 1
      %s887 = scalar_select %p884, %s885, %s886
      %p890 = pneg %p884
      %p891 = scmp.eq.s32.totalorder %s93, 1
      %p892 = por %p890, %p891
      %p893 = scmp.ne.s32.totalorder %s885, %s888
      %p894 = scmp.eq.s32.totalorder %s93, 0
      %p895 = por %p893, %p894
      %p896 = scmp.ne.s32.totalorder %s885, %s888
      %p897 = scmp.eq.s32.totalorder %s98, 1
      %p898 = por %p896, %p897
      %p899 = scmp.ne.s32.totalorder %s888, %s889
      %p900 = scmp.eq.s32.totalorder %s98, 0
      %p901 = por %p899, %p900
      %p902 = scmp.ne.s32.totalorder %s888, %s889
      %p903 = scmp.eq.s32.totalorder %s99, 1
      %p904 = por %p902, %p903
      %p906 = scmp.ne.s32.totalorder %s889, %s905
      %p907 = scmp.eq.s32.totalorder %s99, 0
      %p908 = por %p906, %p907
      %p909 = scmp.le.s32.totalorder 1, %s93
      %p910 = scmp.lt.s32.totalorder %s93, 3
      %p911 = pnand %p909, %p910
      %p912 = pneg %p911
      // Predicated region
      $region9: #{forward.1} parent=5 // pred_check
        _
      $region10: #{forward.1} parent=5 // pred_check_branch
        %914 = sbr.rel (%p911) target = $region12
      $region11: #{forward.1} parent=5 // pred_region
        %s915 = ssub.s32 %s93, 1
        // Predicated region
        $region13: #{forward.1} parent=11 // pred_check
          %p916 = pneg %p140
        $region14: #{forward.1} parent=11 // pred_check_branch
          %918 = sbr.rel (%p916) target = $region16
        $region15: #{forward.1} parent=11 // pred_region
          _
        $region16: #{forward.1} parent=11 // pred_fallthru
          _
        // Predicated region
        $region17: #{forward.1} parent=11 // pred_check
          %p919 = pneg %p161
        $region18: #{forward.1} parent=11 // pred_check_branch
          %921 = sbr.rel (%p919) target = $region20
        $region19: #{forward.1} parent=11 // pred_region
          %s923 = ssub.s32 64, 64
          %924 = vsyncadd [#allocation3], %s923
          %s926 = sshll.u32 [#allocation2], 4
          %s927 = int_to_ptr.vmem [resolvable:$true] %s926
          %929 = dma.hbm_to_vmem [thread:$0]  %s5, 64, %s927, [#allocation3]
        $region20: #{forward.1} parent=11 // pred_fallthru
          _
        // Predicated region
        $region21: #{forward.1} parent=11 // pred_check
          %p930 = pneg %p182
        $region22: #{forward.1} parent=11 // pred_check_branch
          %932 = sbr.rel (%p930) target = $region24
        $region23: #{forward.1} parent=11 // pred_region
          %s934 = ssub.s32 256, 256
          %935 = vsyncadd [#allocation5], %s934
          %s936 = sshll.u32 [#allocation4], 4
          %s937 = int_to_ptr.vmem [resolvable:$true] %s936
          %942 = dma.hbm_to_vmem [thread:$0]  %s7, 256, %s937, [#allocation5], 128, 128, 8
        $region24: #{forward.1} parent=11 // pred_fallthru
          _
        // Predicated region
        $region25: #{forward.1} parent=11 // pred_check
          %p943 = pneg %p203
        $region26: #{forward.1} parent=11 // pred_check_branch
          %945 = sbr.rel (%p943) target = $region28
        $region27: #{forward.1} parent=11 // pred_region
          %s947 = ssub.s32 256, 256
          %948 = vsyncadd [#allocation5], %s947
          %s949 = sshll.u32 [#allocation6], 4
          %s950 = int_to_ptr.vmem [resolvable:$true] %s949
          %955 = dma.hbm_to_vmem [thread:$0]  %s9, 256, %s950, [#allocation5], 128, 128, 8
        $region28: #{forward.1} parent=11 // pred_fallthru
          _
        // Predicated region
        $region29: #{forward.1} parent=11 // pred_check
          %p956 = pneg %p224
        $region30: #{forward.1} parent=11 // pred_check_branch
          %958 = sbr.rel (%p956) target = $region32
        $region31: #{forward.1} parent=11 // pred_region
          %s960 = ssub.s32 384, 384
          %961 = vsyncadd [#allocation8], %s960
          %s962 = sshll.u32 [#allocation7], 4
          %s963 = int_to_ptr.vmem [resolvable:$true] %s962
          %968 = dma.hbm_to_vmem [thread:$0]  %s11, 384, %s963, [#allocation8], 128, 128, 8
        $region32: #{forward.1} parent=11 // pred_fallthru
          _
        // Predicated region
        $region33: #{forward.1} parent=11 // pred_check
          %p969 = pneg %p245
        $region34: #{forward.1} parent=11 // pred_check_branch
          %971 = sbr.rel (%p969) target = $region36
        $region35: #{forward.1} parent=11 // pred_region
          %s973 = ssub.s32 256, 256
          %974 = vsyncadd [#allocation8], %s973
          %s975 = sshll.u32 [#allocation9], 4
          %s976 = int_to_ptr.vmem [resolvable:$true] %s975
          %981 = dma.hbm_to_vmem [thread:$0]  %s13, 256, %s976, [#allocation8], 128, 128, 8
        $region36: #{forward.1} parent=11 // pred_fallthru
          _
        // Predicated region
        $region37: #{forward.1} parent=11 // pred_check
          %p982 = pneg %p266
        $region38: #{forward.1} parent=11 // pred_check_branch
          %984 = sbr.rel (%p982) target = $region40
        $region39: #{forward.1} parent=11 // pred_region
          %s986 = ssub.s32 384, 384
          %987 = vsyncadd [#allocation11], %s986
          %s988 = sshll.u32 [#allocation10], 4
          %s989 = int_to_ptr.vmem [resolvable:$true] %s988
          %994 = dma.hbm_to_vmem [thread:$0]  %s15, 384, %s989, [#allocation11], 128, 128, 8
        $region40: #{forward.1} parent=11 // pred_fallthru
          _
        // Predicated region
        $region41: #{forward.1} parent=11 // pred_check
          %p995 = pneg %p287
        $region42: #{forward.1} parent=11 // pred_check_branch
          %997 = sbr.rel (%p995) target = $region44
        $region43: #{forward.1} parent=11 // pred_region
          _
        $region44: #{forward.1} parent=11 // pred_fallthru
          _
        // Predicated region
        $region45: #{forward.1} parent=11 // pred_check
          %p998 = pneg %p308
        $region46: #{forward.1} parent=11 // pred_check_branch
          %1000 = sbr.rel (%p998) target = $region48
        $region47: #{forward.1} parent=11 // pred_region
          %s1002 = ssub.s32 64, 64
          %1003 = vsyncadd [#allocation11], %s1002
          %s1005 = sshll.u32 [#allocation12], 4
          %s1006 = int_to_ptr.vmem [resolvable:$true] %s1005
          %1008 = dma.hbm_to_vmem [thread:$0]  %s19, 64, %s1006, [#allocation11]
        $region48: #{forward.1} parent=11 // pred_fallthru
          _
        // Predicated region
        $region49: #{forward.1} parent=11 // pred_check
          %p1009 = pneg %p329
        $region50: #{forward.1} parent=11 // pred_check_branch
          %1011 = sbr.rel (%p1009) target = $region52
        $region51: #{forward.1} parent=11 // pred_region
          %s1013 = ssub.s32 256, 256
          %1014 = vsyncadd [#allocation14], %s1013
          %s1015 = sshll.u32 [#allocation13], 4
          %s1016 = int_to_ptr.vmem [resolvable:$true] %s1015
          %1021 = dma.hbm_to_vmem [thread:$0]  %s21, 256, %s1016, [#allocation14], 128, 128, 8
        $region52: #{forward.1} parent=11 // pred_fallthru
          _
        // Predicated region
        $region53: #{forward.1} parent=11 // pred_check
          %p1022 = pneg %p350
        $region54: #{forward.1} parent=11 // pred_check_branch
          %1024 = sbr.rel (%p1022) target = $region56
        $region55: #{forward.1} parent=11 // pred_region
          %s1026 = ssub.s32 256, 256
          %1027 = vsyncadd [#allocation14], %s1026
          %s1028 = sshll.u32 [#allocation15], 4
          %s1029 = int_to_ptr.vmem [resolvable:$true] %s1028
          %1034 = dma.hbm_to_vmem [thread:$0]  %s23, 256, %s1029, [#allocation14], 128, 128, 8
        $region56: #{forward.1} parent=11 // pred_fallthru
          _
        // Predicated region
        $region57: #{forward.1} parent=11 // pred_check
          %p1035 = pneg %p371
        $region58: #{forward.1} parent=11 // pred_check_branch
          %1037 = sbr.rel (%p1035) target = $region60
        $region59: #{forward.1} parent=11 // pred_region
          %s1039 = ssub.s32 384, 384
          %1040 = vsyncadd [#allocation17], %s1039
          %s1041 = sshll.u32 [#allocation16], 4
          %s1042 = int_to_ptr.vmem [resolvable:$true] %s1041
          %1047 = dma.hbm_to_vmem [thread:$0]  %s25, 384, %s1042, [#allocation17], 128, 128, 8
        $region60: #{forward.1} parent=11 // pred_fallthru
          _
        // Predicated region
        $region61: #{forward.1} parent=11 // pred_check
          %p1048 = pneg %p392
        $region62: #{forward.1} parent=11 // pred_check_branch
          %1050 = sbr.rel (%p1048) target = $region64
        $region63: #{forward.1} parent=11 // pred_region
          %s1052 = ssub.s32 256, 256
          %1053 = vsyncadd [#allocation17], %s1052
          %s1054 = sshll.u32 [#allocation18], 4
          %s1055 = int_to_ptr.vmem [resolvable:$true] %s1054
          %1060 = dma.hbm_to_vmem [thread:$0]  %s27, 256, %s1055, [#allocation17], 128, 128, 8
        $region64: #{forward.1} parent=11 // pred_fallthru
          _
        // Predicated region
        $region65: #{forward.1} parent=11 // pred_check
          %p1061 = pneg %p413
        $region66: #{forward.1} parent=11 // pred_check_branch
          %1063 = sbr.rel (%p1061) target = $region68
        $region67: #{forward.1} parent=11 // pred_region
          %s1065 = ssub.s32 384, 384
          %1066 = vsyncadd [#allocation20], %s1065
          %s1067 = sshll.u32 [#allocation19], 4
          %s1068 = int_to_ptr.vmem [resolvable:$true] %s1067
          %1073 = dma.hbm_to_vmem [thread:$0]  %s29, 384, %s1068, [#allocation20], 128, 128, 8
        $region68: #{forward.1} parent=11 // pred_fallthru
          _
        // Predicated region
        $region69: #{forward.1} parent=11 // pred_check
          %p1074 = pneg %p434
        $region70: #{forward.1} parent=11 // pred_check_branch
          %1076 = sbr.rel (%p1074) target = $region72
        $region71: #{forward.1} parent=11 // pred_region
          _
        $region72: #{forward.1} parent=11 // pred_fallthru
          _
        // Predicated region
        $region73: #{forward.1} parent=11 // pred_check
          %p1077 = pneg %p455
        $region74: #{forward.1} parent=11 // pred_check_branch
          %1079 = sbr.rel (%p1077) target = $region76
        $region75: #{forward.1} parent=11 // pred_region
          %s1081 = ssub.s32 64, 64
          %1082 = vsyncadd [#allocation20], %s1081
          %s1084 = sshll.u32 [#allocation21], 4
          %s1085 = int_to_ptr.vmem [resolvable:$true] %s1084
          %1087 = dma.hbm_to_vmem [thread:$0]  %s33, 64, %s1085, [#allocation20]
        $region76: #{forward.1} parent=11 // pred_fallthru
          _
        // Predicated region
        $region77: #{forward.1} parent=11 // pred_check
          %p1088 = pneg %p476
        $region78: #{forward.1} parent=11 // pred_check_branch
          %1090 = sbr.rel (%p1088) target = $region80
        $region79: #{forward.1} parent=11 // pred_region
          %s1092 = ssub.s32 256, 256
          %1093 = vsyncadd [#allocation23], %s1092
          %s1094 = sshll.u32 [#allocation22], 4
          %s1095 = int_to_ptr.vmem [resolvable:$true] %s1094
          %1100 = dma.hbm_to_vmem [thread:$0]  %s35, 256, %s1095, [#allocation23], 128, 128, 8
        $region80: #{forward.1} parent=11 // pred_fallthru
          _
        // Predicated region
        $region81: #{forward.1} parent=11 // pred_check
          %p1101 = pneg %p497
        $region82: #{forward.1} parent=11 // pred_check_branch
          %1103 = sbr.rel (%p1101) target = $region84
        $region83: #{forward.1} parent=11 // pred_region
          %s1105 = ssub.s32 256, 256
          %1106 = vsyncadd [#allocation23], %s1105
          %s1107 = sshll.u32 [#allocation24], 4
          %s1108 = int_to_ptr.vmem [resolvable:$true] %s1107
          %1113 = dma.hbm_to_vmem [thread:$0]  %s37, 256, %s1108, [#allocation23], 128, 128, 8
        $region84: #{forward.1} parent=11 // pred_fallthru
          _
        // Predicated region
        $region85: #{forward.1} parent=11 // pred_check
          %p1114 = pneg %p518
        $region86: #{forward.1} parent=11 // pred_check_branch
          %1116 = sbr.rel (%p1114) target = $region88
        $region87: #{forward.1} parent=11 // pred_region
          %s1118 = ssub.s32 384, 384
          %1119 = vsyncadd [#allocation26], %s1118
          %s1120 = sshll.u32 [#allocation25], 4
          %s1121 = int_to_ptr.vmem [resolvable:$true] %s1120
          %1126 = dma.hbm_to_vmem [thread:$0]  %s39, 384, %s1121, [#allocation26], 128, 128, 8
        $region88: #{forward.1} parent=11 // pred_fallthru
          _
        // Predicated region
        $region89: #{forward.1} parent=11 // pred_check
          %p1127 = pneg %p539
        $region90: #{forward.1} parent=11 // pred_check_branch
          %1129 = sbr.rel (%p1127) target = $region92
        $region91: #{forward.1} parent=11 // pred_region
          %s1131 = ssub.s32 256, 256
          %1132 = vsyncadd [#allocation26], %s1131
          %s1133 = sshll.u32 [#allocation27], 4
          %s1134 = int_to_ptr.vmem [resolvable:$true] %s1133
          %1139 = dma.hbm_to_vmem [thread:$0]  %s41, 256, %s1134, [#allocation26], 128, 128, 8
        $region92: #{forward.1} parent=11 // pred_fallthru
          _
        // Predicated region
        $region93: #{forward.1} parent=11 // pred_check
          %p1140 = pneg %p560
        $region94: #{forward.1} parent=11 // pred_check_branch
          %1142 = sbr.rel (%p1140) target = $region96
        $region95: #{forward.1} parent=11 // pred_region
          %s1144 = ssub.s32 384, 384
          %1145 = vsyncadd [#allocation29], %s1144
          %s1146 = sshll.u32 [#allocation28], 4
          %s1147 = int_to_ptr.vmem [resolvable:$true] %s1146
          %1152 = dma.hbm_to_vmem [thread:$0]  %s43, 384, %s1147, [#allocation29], 128, 128, 8
        $region96: #{forward.1} parent=11 // pred_fallthru
          _
        // Predicated region
        $region97: #{forward.1} parent=11 // pred_check
          %p1153 = pneg %p581
        $region98: #{forward.1} parent=11 // pred_check_branch
          %1155 = sbr.rel (%p1153) target = $region100
        $region99: #{forward.1} parent=11 // pred_region
          _
        $region100: #{forward.1} parent=11 // pred_fallthru
          _
        // Predicated region
        $region101: #{forward.1} parent=11 // pred_check
          %p1156 = pneg %p602
        $region102: #{forward.1} parent=11 // pred_check_branch
          %1158 = sbr.rel (%p1156) target = $region104
        $region103: #{forward.1} parent=11 // pred_region
          %s1160 = ssub.s32 64, 64
          %1161 = vsyncadd [#allocation29], %s1160
          %s1163 = sshll.u32 [#allocation30], 4
          %s1164 = int_to_ptr.vmem [resolvable:$true] %s1163
          %1166 = dma.hbm_to_vmem [thread:$0]  %s47, 64, %s1164, [#allocation29]
        $region104: #{forward.1} parent=11 // pred_fallthru
          _
        // Predicated region
        $region105: #{forward.1} parent=11 // pred_check
          %p1167 = pneg %p623
        $region106: #{forward.1} parent=11 // pred_check_branch
          %1169 = sbr.rel (%p1167) target = $region108
        $region107: #{forward.1} parent=11 // pred_region
          %s1171 = ssub.s32 256, 256
          %1172 = vsyncadd [#allocation32], %s1171
          %s1173 = sshll.u32 [#allocation31], 4
          %s1174 = int_to_ptr.vmem [resolvable:$true] %s1173
          %1179 = dma.hbm_to_vmem [thread:$0]  %s49, 256, %s1174, [#allocation32], 128, 128, 8
        $region108: #{forward.1} parent=11 // pred_fallthru
          _
        // Predicated region
        $region109: #{forward.1} parent=11 // pred_check
          %p1180 = pneg %p644
        $region110: #{forward.1} parent=11 // pred_check_branch
          %1182 = sbr.rel (%p1180) target = $region112
        $region111: #{forward.1} parent=11 // pred_region
          %s1184 = ssub.s32 256, 256
          %1185 = vsyncadd [#allocation32], %s1184
          %s1186 = sshll.u32 [#allocation33], 4
          %s1187 = int_to_ptr.vmem [resolvable:$true] %s1186
          %1192 = dma.hbm_to_vmem [thread:$0]  %s51, 256, %s1187, [#allocation32], 128, 128, 8
        $region112: #{forward.1} parent=11 // pred_fallthru
          _
        // Predicated region
        $region113: #{forward.1} parent=11 // pred_check
          %p1193 = pneg %p665
        $region114: #{forward.1} parent=11 // pred_check_branch
          %1195 = sbr.rel (%p1193) target = $region116
        $region115: #{forward.1} parent=11 // pred_region
          _
        $region116: #{forward.1} parent=11 // pred_fallthru
          _
        // Predicated region
        $region117: #{forward.1} parent=11 // pred_check
          %p1196 = pneg %p686
        $region118: #{forward.1} parent=11 // pred_check_branch
          %1198 = sbr.rel (%p1196) target = $region120
        $region119: #{forward.1} parent=11 // pred_region
          %s1200 = ssub.s32 256, 256
          %1201 = vsyncadd [#allocation35], %s1200
          %s1202 = sshll.u32 [#allocation34], 4
          %s1203 = int_to_ptr.vmem [resolvable:$true] %s1202
          %1208 = dma.hbm_to_vmem [thread:$0]  %s55, 256, %s1203, [#allocation35], 128, 128, 8
        $region120: #{forward.1} parent=11 // pred_fallthru
          _
        // Predicated region
        $region121: #{forward.1} parent=11 // pred_check
          %p1209 = pneg %p707
        $region122: #{forward.1} parent=11 // pred_check_branch
          %1211 = sbr.rel (%p1209) target = $region124
        $region123: #{forward.1} parent=11 // pred_region
          _
        $region124: #{forward.1} parent=11 // pred_fallthru
          _
        // Predicated region
        $region125: #{forward.1} parent=11 // pred_check
          %p1212 = pneg %p728
        $region126: #{forward.1} parent=11 // pred_check_branch
          %1214 = sbr.rel (%p1212) target = $region128
        $region127: #{forward.1} parent=11 // pred_region
          _
        $region128: #{forward.1} parent=11 // pred_fallthru
          _
        // Predicated region
        $region129: #{forward.1} parent=11 // pred_check
          %p1215 = pneg %p749
        $region130: #{forward.1} parent=11 // pred_check_branch
          %1217 = sbr.rel (%p1215) target = $region132
        $region131: #{forward.1} parent=11 // pred_region
          _
        $region132: #{forward.1} parent=11 // pred_fallthru
          _
        // Predicated region
        $region133: #{forward.1} parent=11 // pred_check
          %p1218 = pneg %p770
        $region134: #{forward.1} parent=11 // pred_check_branch
          %1220 = sbr.rel (%p1218) target = $region136
        $region135: #{forward.1} parent=11 // pred_region
          _
        $region136: #{forward.1} parent=11 // pred_fallthru
          _
        // Predicated region
        $region137: #{forward.1} parent=11 // pred_check
          %p1221 = pneg %p791
        $region138: #{forward.1} parent=11 // pred_check_branch
          %1223 = sbr.rel (%p1221) target = $region140
        $region139: #{forward.1} parent=11 // pred_region
          _
        $region140: #{forward.1} parent=11 // pred_fallthru
          _
        // Predicated region
        $region141: #{forward.1} parent=11 // pred_check
          %p1224 = pneg %p812
        $region142: #{forward.1} parent=11 // pred_check_branch
          %1226 = sbr.rel (%p1224) target = $region144
        $region143: #{forward.1} parent=11 // pred_region
          _
        $region144: #{forward.1} parent=11 // pred_fallthru
          _
        // Predicated region
        $region145: #{forward.1} parent=11 // pred_check
          %p1227 = pneg %p833
        $region146: #{forward.1} parent=11 // pred_check_branch
          %1229 = sbr.rel (%p1227) target = $region148
        $region147: #{forward.1} parent=11 // pred_region
          _
        $region148: #{forward.1} parent=11 // pred_fallthru
          _
        // Predicated region
        $region149: #{forward.1} parent=11 // pred_check
          %p1230 = pneg %p854
        $region150: #{forward.1} parent=11 // pred_check_branch
          %1232 = sbr.rel (%p1230) target = $region152
        $region151: #{forward.1} parent=11 // pred_region
          _
        $region152: #{forward.1} parent=11 // pred_fallthru
          _
        // Predicated region
        $region153: #{forward.1} parent=11 // pred_check
          %p1233 = pneg %p875
        $region154: #{forward.1} parent=11 // pred_check_branch
          %1235 = sbr.rel (%p1233) target = $region156
        $region155: #{forward.1} parent=11 // pred_region
          _
        $region156: #{forward.1} parent=11 // pred_fallthru
          _
      $region12: #{forward.1} parent=5 // pred_fallthru
        _
      %p1236 = scmp.lt.s32.totalorder %s93, 2
      // Predicated region
      $region157: #{forward.1} parent=5 // pred_check
        %p1237 = pneg %p1236
      $region158: #{forward.1} parent=5 // pred_check_branch
        %1239 = sbr.rel (%p1237) target = $region160
      $region159: #{forward.1} parent=5 // pred_region
        // Predicated region
        $region161: #{forward.1} parent=159 // pred_check
          %p1240 = pneg %p113
        $region162: #{forward.1} parent=159 // pred_check_branch
          %1242 = sbr.rel (%p1240) target = $region164
        $region163: #{forward.1} parent=159 // pred_region
          %p1243 = scmp.lt.s32.totalorder %s93, 1
          %s1244 = scalar_select %p1243, %s93, 1
          %s1245 = smul.addr %s1244, 2
          %s1246 = smul.addr %s1245, 4
          %s1247 = scalar_lea.vmem %s1, %s1246
        $region164: #{forward.1} parent=159 // pred_fallthru
          _
      $region160: #{forward.1} parent=5 // pred_fallthru
        _
      %p1248 = scmp.le.s32.totalorder 1, %s93
      %p1249 = scmp.lt.s32.totalorder %s93, 3
      %p1250 = pnand %p1248, %p1249
      %p1251 = pneg %p1250
      // Predicated region
      $region165: #{forward.1} parent=5 // pred_check
        _
      $region166: #{forward.1} parent=5 // pred_check_branch
        %1253 = sbr.rel (%p1250) target = $region168
      $region167: #{forward.1} parent=5 // pred_region
        %s1254 = ssub.s32 %s93, 1
        // Predicated region
        $region169: #{forward.1} parent=167 // pred_check
          %p1255 = pneg %p161
        $region170: #{forward.1} parent=167 // pred_check_branch
          %1257 = sbr.rel (%p1255) target = $region172
        $region171: #{forward.1} parent=167 // pred_region
          %1258 = dma.done [#allocation3], 64
        $region172: #{forward.1} parent=167 // pred_fallthru
          _
        // Predicated region
        $region173: #{forward.1} parent=167 // pred_check
          %p1259 = pneg %p182
        $region174: #{forward.1} parent=167 // pred_check_branch
          %1261 = sbr.rel (%p1259) target = $region176
        $region175: #{forward.1} parent=167 // pred_region
          %1262 = dma.done [#allocation5], 256
        $region176: #{forward.1} parent=167 // pred_fallthru
          _
        // Predicated region
        $region177: #{forward.1} parent=167 // pred_check
          %p1263 = pneg %p203
        $region178: #{forward.1} parent=167 // pred_check_branch
          %1265 = sbr.rel (%p1263) target = $region180
        $region179: #{forward.1} parent=167 // pred_region
          %1266 = dma.done [#allocation5], 256
        $region180: #{forward.1} parent=167 // pred_fallthru
          _
        // Predicated region
        $region181: #{forward.1} parent=167 // pred_check
          %p1267 = pneg %p224
        $region182: #{forward.1} parent=167 // pred_check_branch
          %1269 = sbr.rel (%p1267) target = $region184
        $region183: #{forward.1} parent=167 // pred_region
          %1270 = dma.done [#allocation8], 384
        $region184: #{forward.1} parent=167 // pred_fallthru
          _
        // Predicated region
        $region185: #{forward.1} parent=167 // pred_check
          %p1271 = pneg %p245
        $region186: #{forward.1} parent=167 // pred_check_branch
          %1273 = sbr.rel (%p1271) target = $region188
        $region187: #{forward.1} parent=167 // pred_region
          %1274 = dma.done [#allocation8], 256
        $region188: #{forward.1} parent=167 // pred_fallthru
          _
        // Predicated region
        $region189: #{forward.1} parent=167 // pred_check
          %p1275 = pneg %p266
        $region190: #{forward.1} parent=167 // pred_check_branch
          %1277 = sbr.rel (%p1275) target = $region192
        $region191: #{forward.1} parent=167 // pred_region
          %1278 = dma.done [#allocation11], 384
        $region192: #{forward.1} parent=167 // pred_fallthru
          _
        // Predicated region
        $region193: #{forward.1} parent=167 // pred_check
          %p1279 = pneg %p308
        $region194: #{forward.1} parent=167 // pred_check_branch
          %1281 = sbr.rel (%p1279) target = $region196
        $region195: #{forward.1} parent=167 // pred_region
          %1282 = dma.done [#allocation11], 64
        $region196: #{forward.1} parent=167 // pred_fallthru
          _
        // Predicated region
        $region197: #{forward.1} parent=167 // pred_check
          %p1283 = pneg %p329
        $region198: #{forward.1} parent=167 // pred_check_branch
          %1285 = sbr.rel (%p1283) target = $region200
        $region199: #{forward.1} parent=167 // pred_region
          %1286 = dma.done [#allocation14], 256
        $region200: #{forward.1} parent=167 // pred_fallthru
          _
        // Predicated region
        $region201: #{forward.1} parent=167 // pred_check
          %p1287 = pneg %p350
        $region202: #{forward.1} parent=167 // pred_check_branch
          %1289 = sbr.rel (%p1287) target = $region204
        $region203: #{forward.1} parent=167 // pred_region
          %1290 = dma.done [#allocation14], 256
        $region204: #{forward.1} parent=167 // pred_fallthru
          _
        // Predicated region
        $region205: #{forward.1} parent=167 // pred_check
          %p1291 = pneg %p371
        $region206: #{forward.1} parent=167 // pred_check_branch
          %1293 = sbr.rel (%p1291) target = $region208
        $region207: #{forward.1} parent=167 // pred_region
          %1294 = dma.done [#allocation17], 384
        $region208: #{forward.1} parent=167 // pred_fallthru
          _
        // Predicated region
        $region209: #{forward.1} parent=167 // pred_check
          %p1295 = pneg %p392
        $region210: #{forward.1} parent=167 // pred_check_branch
          %1297 = sbr.rel (%p1295) target = $region212
        $region211: #{forward.1} parent=167 // pred_region
          %1298 = dma.done [#allocation17], 256
        $region212: #{forward.1} parent=167 // pred_fallthru
          _
        // Predicated region
        $region213: #{forward.1} parent=167 // pred_check
          %p1299 = pneg %p413
        $region214: #{forward.1} parent=167 // pred_check_branch
          %1301 = sbr.rel (%p1299) target = $region216
        $region215: #{forward.1} parent=167 // pred_region
          %1302 = dma.done [#allocation20], 384
        $region216: #{forward.1} parent=167 // pred_fallthru
          _
        // Predicated region
        $region217: #{forward.1} parent=167 // pred_check
          %p1303 = pneg %p455
        $region218: #{forward.1} parent=167 // pred_check_branch
          %1305 = sbr.rel (%p1303) target = $region220
        $region219: #{forward.1} parent=167 // pred_region
          %1306 = dma.done [#allocation20], 64
        $region220: #{forward.1} parent=167 // pred_fallthru
          _
        // Predicated region
        $region221: #{forward.1} parent=167 // pred_check
          %p1307 = pneg %p476
        $region222: #{forward.1} parent=167 // pred_check_branch
          %1309 = sbr.rel (%p1307) target = $region224
        $region223: #{forward.1} parent=167 // pred_region
          %1310 = dma.done [#allocation23], 256
        $region224: #{forward.1} parent=167 // pred_fallthru
          _
        // Predicated region
        $region225: #{forward.1} parent=167 // pred_check
          %p1311 = pneg %p497
        $region226: #{forward.1} parent=167 // pred_check_branch
          %1313 = sbr.rel (%p1311) target = $region228
        $region227: #{forward.1} parent=167 // pred_region
          %1314 = dma.done [#allocation23], 256
        $region228: #{forward.1} parent=167 // pred_fallthru
          _
        // Predicated region
        $region229: #{forward.1} parent=167 // pred_check
          %p1315 = pneg %p518
        $region230: #{forward.1} parent=167 // pred_check_branch
          %1317 = sbr.rel (%p1315) target = $region232
        $region231: #{forward.1} parent=167 // pred_region
          %1318 = dma.done [#allocation26], 384
        $region232: #{forward.1} parent=167 // pred_fallthru
          _
        // Predicated region
        $region233: #{forward.1} parent=167 // pred_check
          %p1319 = pneg %p539
        $region234: #{forward.1} parent=167 // pred_check_branch
          %1321 = sbr.rel (%p1319) target = $region236
        $region235: #{forward.1} parent=167 // pred_region
          %1322 = dma.done [#allocation26], 256
        $region236: #{forward.1} parent=167 // pred_fallthru
          _
        // Predicated region
        $region237: #{forward.1} parent=167 // pred_check
          %p1323 = pneg %p560
        $region238: #{forward.1} parent=167 // pred_check_branch
          %1325 = sbr.rel (%p1323) target = $region240
        $region239: #{forward.1} parent=167 // pred_region
          %1326 = dma.done [#allocation29], 384
        $region240: #{forward.1} parent=167 // pred_fallthru
          _
        // Predicated region
        $region241: #{forward.1} parent=167 // pred_check
          %p1327 = pneg %p602
        $region242: #{forward.1} parent=167 // pred_check_branch
          %1329 = sbr.rel (%p1327) target = $region244
        $region243: #{forward.1} parent=167 // pred_region
          %1330 = dma.done [#allocation29], 64
        $region244: #{forward.1} parent=167 // pred_fallthru
          _
        // Predicated region
        $region245: #{forward.1} parent=167 // pred_check
          %p1331 = pneg %p623
        $region246: #{forward.1} parent=167 // pred_check_branch
          %1333 = sbr.rel (%p1331) target = $region248
        $region247: #{forward.1} parent=167 // pred_region
          %1334 = dma.done [#allocation32], 256
        $region248: #{forward.1} parent=167 // pred_fallthru
          _
        // Predicated region
        $region249: #{forward.1} parent=167 // pred_check
          %p1335 = pneg %p644
        $region250: #{forward.1} parent=167 // pred_check_branch
          %1337 = sbr.rel (%p1335) target = $region252
        $region251: #{forward.1} parent=167 // pred_region
          %1338 = dma.done [#allocation32], 256
        $region252: #{forward.1} parent=167 // pred_fallthru
          _
        // Predicated region
        $region253: #{forward.1} parent=167 // pred_check
          %p1339 = pneg %p686
        $region254: #{forward.1} parent=167 // pred_check_branch
          %1341 = sbr.rel (%p1339) target = $region256
        $region255: #{forward.1} parent=167 // pred_region
          %1342 = dma.done [#allocation35], 256
        $region256: #{forward.1} parent=167 // pred_fallthru
          _
        %p1343 = scmp.lt.s32.totalorder %s98, 1
        %s1344 = scalar_select %p1343, %s98, 1
        %s1345 = smul.addr %s1344, 2
        %s1346 = smul.addr %s1345, 4
        %s1347 = scalar_lea.vmem %s1, %s1346
        %p1348 = pneg %p119
        %p1349 = pneg %p116
        %p1350 = pneg %p140
        %p1351 = pneg %p137
        %p1352 = pneg %p161
        %p1353 = pneg %p158
        %p1354 = pneg %p182
        %p1355 = pneg %p179
        %p1356 = pneg %p203
        %p1357 = pneg %p200
        %p1358 = pneg %p224
        %p1359 = pneg %p221
        %p1360 = pneg %p245
        %p1361 = pneg %p242
        %p1362 = pneg %p266
        %p1363 = pneg %p263
        %p1364 = pneg %p287
        %p1365 = pneg %p284
        %p1366 = pneg %p308
        %p1367 = pneg %p305
        %p1368 = pneg %p329
        %p1369 = pneg %p326
        %p1370 = pneg %p350
        %p1371 = pneg %p347
        %p1372 = pneg %p371
        %p1373 = pneg %p368
        %p1374 = pneg %p392
        %p1375 = pneg %p389
        %p1376 = pneg %p413
        %p1377 = pneg %p410
        %p1378 = pneg %p434
        %p1379 = pneg %p431
        %p1380 = pneg %p455
        %p1381 = pneg %p452
        %p1382 = pneg %p476
        %p1383 = pneg %p473
        %p1384 = pneg %p497
        %p1385 = pneg %p494
        %p1386 = pneg %p518
        %p1387 = pneg %p515
        %p1388 = pneg %p539
        %p1389 = pneg %p536
        %p1390 = pneg %p560
        %p1391 = pneg %p557
        %p1392 = pneg %p581
        %p1393 = pneg %p578
        %p1394 = pneg %p602
        %p1395 = pneg %p599
        %p1396 = pneg %p623
        %p1397 = pneg %p620
        %p1398 = pneg %p644
        %p1399 = pneg %p641
        %p1400 = pneg %p665
        %p1401 = pneg %p662
        %p1402 = pneg %p686
        %p1403 = pneg %p683
        %p1404 = pneg %p707
        %p1405 = pneg %p704
        %p1406 = pneg %p728
        %p1407 = pneg %p725
        %p1408 = pneg %p749
        %p1409 = pneg %p746
        %p1410 = pneg %p770
        %p1411 = pneg %p767
        %p1412 = pneg %p791
        %p1413 = pneg %p788
        %p1414 = pneg %p812
        %p1415 = pneg %p809
        %p1416 = pneg %p833
        %p1417 = pneg %p830
        %p1418 = pneg %p854
        %p1419 = pneg %p851
        %p1420 = pneg %p875
        %p1421 = pneg %p872
        %p1422 = pneg %p901
        %p1423 = pneg %p898
        %p1424 = scmp.lt.s32.totalorder %s98, 1
        %s1425 = scalar_select %p1424, %s98, 1
        %s1426 = smul.addr %s1425, 4
        %s1427 = smul.addr %s1426, 8
        %s1428 = scalar_lea.vmem %s75, %s1427
        %p1429 = scmp.lt.s32.totalorder %s98, 1
        %s1430 = scalar_select %p1429, %s98, 1
        %s1431 = smul.addr %s1430, 2
        %s1432 = smul.addr %s1431, 4
        %s1433 = scalar_lea.vmem %s1, %s1432
        %p1434 = scmp.lt.s32.totalorder %s98, 1
        %s1435 = scalar_select %p1434, %s98, 1
        %s1436 = smul.addr %s1435, 4
        %s1437 = smul.addr %s1436, 8
        %s1438 = scalar_lea.vmem %s75, %s1437
        %v1439 = vlaneseq
        %v1440 = vand.u32 %v1439, 127
        %v1441 = vadd.s32 %v1440, 128
        %v1442 = vand.u32 %v1440, 15
        %v1443 = vand.u32 %v1441, 15
        %v1444 = vld [vmem:[%s1433] sm:$0x77]
        %v1446 = vcombine.high %v1444, %v1444
        %1447 = vrot.lane.b32.xlu0 %v1444, 1
        %v1448 = vpop.permute.xlu0 %1447
        %1449 = vrot.lane.b32.xlu0 %v1446, 1
        %v1450 = vpop.permute.xlu0 %1449
        %vm1451 = vcmask 7168
        %v1452 = vsel %vm1451, %v1448, %v1450
        %v1455 = vsel %vm1451, 0.0, %v1448
        %vm1456 = vcmp.ge.s32.totalorder %v1442, 1
        %vm1457 = vcmp.ge.s32.totalorder %v1443, 1
        %v1458 = vsel %vm1456, 1, 0
        %v1459 = vsel %vm1457, 1, 0
        %vm1460 = vcmp.eq.s32.totalorder %v1458, 1
        %vm1461 = vcmp.eq.s32.totalorder %v1459, 1
        %v1462 = vsel %vm1460, %v1455, 0.0
        %v1463 = vsel %vm1461, %v1452, 0.0
        %1464 = vrot.lane.b32.xlu0 %v1444, 127
        %v1465 = vpop.permute.xlu0 %1464
        %1466 = vrot.lane.b32.xlu0 %v1446, 127
        %v1467 = vpop.permute.xlu0 %1466
        %vm1468 = vcmask 1039360
        %v1469 = vsel %vm1468, %v1465, %v1467
        %v1472 = vsel %vm1468, %v1467, 0.0
        %vm1473 = vcmp.lt.s32.totalorder %v1442, 15
        %vm1474 = vcmp.lt.s32.totalorder %v1443, 15
        %v1475 = vsel %vm1473, 1, 0
        %v1476 = vsel %vm1474, 1, 0
        %vm1477 = vcmp.eq.s32.totalorder %v1475, 1
        %vm1478 = vcmp.eq.s32.totalorder %v1476, 1
        %v1479 = vsel %vm1477, %v1469, 0.0
        %v1480 = vsel %vm1478, %v1472, 0.0
        %v1481 = vrot.slane %v1444, 5
        %v1482 = vrot.slane %v1446, 5
        %v1487 = vrot.slane %v1479, 2
        %v1488 = vrot.slane %v1480, 2
        %vm1491 = vcmask 1042432
        %v1492 = vsel %vm1491, %v1462, %v1481
        %v1493 = vsel %vm1491, %v1463, %v1482
        %vm1494 = vcmask 1045504
        %v1495 = vsel %vm1494, %v1492, %v1487
        %v1496 = vsel %vm1494, %v1493, %v1488
        %v1497 = vld [vmem:[%s73] sm:$0xff]
        %v1498 = vld [vmem:[%s73 + $0x8] sm:$0xf]
        %vm1499 = vcmask 72704
        %v1501 = vsel %vm1499, %v1497, 0
        %v1504 = vsel %vm1499, %v1498, 0
        %vm1506 = vcmask 1040384
        %v1507 = vsel %vm1506, %v1487, 0
        %v1509 = vsel %vm1506, %v1488, 0
        %1511 = vmatprep.subr.mxu0 %v1496
        %1512 = vmatpush1.msra.mxu0 %v1495
        %1513 = vmatprep.subr.mxu0 %v1509
        %1514 = vmatpush1.msra.mxu0 %v1507
        %1515 = vmatprep.subr.mxu0 0.0
        %1516 = vmatpush1.msra.mxu0 0.0
        %1517 = vmatprep.subr.mxu0 0.0
        %1518 = vmatpush1.msra.mxu0 0.0
        %1519 = vmatprep.subr.mxu0 0.0
        %1520 = vmatpush1.msra.mxu0 0.0
        %1521 = vmatprep.subr.mxu0 0.0
        %1522 = vmatpush1.msra.mxu0 0.0
        %1523 = vmatprep.subr.mxu0 0.0
        %1524 = vmatpush1.msra.mxu0 0.0
        %1525 = vmatprep.subr.mxu0 0.0
        %1526 = vmatpush1.msra.mxu0 0.0
        %1527 = vmatprep.subr.mxu0 0.0
        %1528 = vmatpush1.msra.mxu0 0.0
        %1529 = vmatprep.subr.mxu0 0.0
        %1530 = vmatpush1.msra.mxu0 0.0
        %1531 = vmatprep.subr.mxu0 0.0
        %1532 = vmatpush1.msra.mxu0 0.0
        %1533 = vmatprep.subr.mxu0 0.0
        %1534 = vmatpush1.msra.mxu0 0.0
        %1535 = vmatprep.subr.mxu0 0.0
        %1536 = vmatpush1.msra.mxu0 0.0
        %1537 = vmatprep.subr.mxu0 0.0
        %1538 = vmatpush1.msra.mxu0 0.0
        %1539 = vmatprep.subr.mxu0 0.0
        %1540 = vmatpush1.msra.mxu0 0.0
        %1541 = vmatprep.subr.mxu0 0.0
        %1542 = vmatpush1.msra.mxu0 0.0
        %1543 = vmatprep.subr.mxu0 0.0
        %1544 = vmatpush1.msra.mxu0 0.0
        %1545 = vmatprep.subr.mxu0 0.0
        %1546 = vmatpush1.msra.mxu0 0.0
        %1547 = vmatprep.subr.mxu0 0.0
        %1548 = vmatpush1.msra.mxu0 0.0
        %1549 = vmatprep.subr.mxu0 0.0
        %1550 = vmatpush1.msra.mxu0 0.0
        %1551 = vmatprep.subr.mxu0 0.0
        %1552 = vmatpush1.msra.mxu0 0.0
        %1553 = vmatprep.subr.mxu0 0.0
        %1554 = vmatpush1.msra.mxu0 0.0
        %1555 = vmatprep.subr.mxu0 0.0
        %1556 = vmatpush1.msra.mxu0 0.0
        %1557 = vmatprep.subr.mxu0 0.0
        %1558 = vmatpush1.msra.mxu0 0.0
        %1559 = vmatprep.subr.mxu0 0.0
        %1560 = vmatpush1.msra.mxu0 0.0
        %1561 = vmatprep.subr.mxu0 0.0
        %1562 = vmatpush1.msra.mxu0 0.0
        %1563 = vmatprep.subr.mxu0 0.0
        %1564 = vmatpush1.msra.mxu0 0.0
        %1565 = vmatprep.subr.mxu0 0.0
        %1566 = vmatpush1.msra.mxu0 0.0
        %1567 = vmatprep.subr.mxu0 0.0
        %1568 = vmatpush1.msra.mxu0 0.0
        %1569 = vmatprep.subr.mxu0 0.0
        %1570 = vmatpush1.msra.mxu0 0.0
        %1571 = vmatprep.subr.mxu0 0.0
        %1572 = vmatpush1.msra.mxu0 0.0
        %1573 = vmatprep.subr.mxu0 0.0
        %1574 = vmatpush1.msra.mxu0 0.0
        %1575 = vmatprep.mubr.f32.mxu0 0.0
        %1576 = vmatmul.mubr.f32.gmra.mrb[0].mxu0 %v1501
        %v1577 = vpop.f32.mrb[0].mxu0
        %v1578 = vadd.f32 0.0, %v1577
        %v1579 = vpop.f32.mrb[0].mxu0
        %v1580 = vadd.f32 0.0, %v1579
        %1581 = vmatprep.mubr.f32.mxu0 0.0
        %1582 = vmatmul.mubr.f32.gmra.mrb[0].mxu0 %v1504
        %v1583 = vpop.f32.mrb[0].mxu0
        %v1584 = vadd.f32 0.0, %v1583
        %v1585 = vpop.f32.mrb[0].mxu0
        %v1586 = vadd.f32 0.0, %v1585
        %1587 = vdwg.mxu0
        %1592 = vrot.lane.b32.xlu0 %v1578, 16
        %v1593 = vpop.permute.xlu0 %1592
        %1594 = vrot.lane.b32.xlu0 %v1580, 16
        %v1595 = vpop.permute.xlu0 %1594
        %1596 = vrot.lane.b32.xlu0 %v1584, 16
        %v1597 = vpop.permute.xlu0 %1596
        %1598 = vrot.lane.b32.xlu0 %v1586, 16
        %v1599 = vpop.permute.xlu0 %1598
        %vm1600 = vcmask 130048
        %v1601 = vsel %vm1600, %v1593, %v1595
        %v1602 = vsel %vm1600, %v1597, %v1599
        %v1607 = vsel %vm1600, 0.0, %v1593
        %v1608 = vsel %vm1600, 0.0, %v1597
        %v1609 = vadd.f32 %v1607, 0.0
        %v1610 = vadd.f32 %v1601, 0.0
        %v1611 = vadd.f32 %v1608, 0.0
        %v1612 = vadd.f32 %v1602, 0.0
        %s1613 = scalar_lea.vmem %s73, 16
        %v1614 = vld [vmem:[%s1613] sm:$0xff]
        %v1615 = vld [vmem:[%s1613 + $0x8] sm:$0xf]
        %v1617 = vsel %vm1499, %v1614, 0
        %v1620 = vsel %vm1499, %v1615, 0
        %1622 = vmatprep.subr.mxu0 %v1496
        %1623 = vmatpush1.msra.mxu0 %v1495
        %1624 = vmatprep.subr.mxu0 %v1509
        %1625 = vmatpush1.msra.mxu0 %v1507
        %1626 = vmatprep.subr.mxu0 0.0
        %1627 = vmatpush1.msra.mxu0 0.0
        %1628 = vmatprep.subr.mxu0 0.0
        %1629 = vmatpush1.msra.mxu0 0.0
        %1630 = vmatprep.subr.mxu0 0.0
        %1631 = vmatpush1.msra.mxu0 0.0
        %1632 = vmatprep.subr.mxu0 0.0
        %1633 = vmatpush1.msra.mxu0 0.0
        %1634 = vmatprep.subr.mxu0 0.0
        %1635 = vmatpush1.msra.mxu0 0.0
        %1636 = vmatprep.subr.mxu0 0.0
        %1637 = vmatpush1.msra.mxu0 0.0
        %1638 = vmatprep.subr.mxu0 0.0
        %1639 = vmatpush1.msra.mxu0 0.0
        %1640 = vmatprep.subr.mxu0 0.0
        %1641 = vmatpush1.msra.mxu0 0.0
        %1642 = vmatprep.subr.mxu0 0.0
        %1643 = vmatpush1.msra.mxu0 0.0
        %1644 = vmatprep.subr.mxu0 0.0
        %1645 = vmatpush1.msra.mxu0 0.0
        %1646 = vmatprep.subr.mxu0 0.0
        %1647 = vmatpush1.msra.mxu0 0.0
        %1648 = vmatprep.subr.mxu0 0.0
        %1649 = vmatpush1.msra.mxu0 0.0
        %1650 = vmatprep.subr.mxu0 0.0
        %1651 = vmatpush1.msra.mxu0 0.0
        %1652 = vmatprep.subr.mxu0 0.0
        %1653 = vmatpush1.msra.mxu0 0.0
        %1654 = vmatprep.subr.mxu0 0.0
        %1655 = vmatpush1.msra.mxu0 0.0
        %1656 = vmatprep.subr.mxu0 0.0
        %1657 = vmatpush1.msra.mxu0 0.0
        %1658 = vmatprep.subr.mxu0 0.0
        %1659 = vmatpush1.msra.mxu0 0.0
        %1660 = vmatprep.subr.mxu0 0.0
        %1661 = vmatpush1.msra.mxu0 0.0
        %1662 = vmatprep.subr.mxu0 0.0
        %1663 = vmatpush1.msra.mxu0 0.0
        %1664 = vmatprep.subr.mxu0 0.0
        %1665 = vmatpush1.msra.mxu0 0.0
        %1666 = vmatprep.subr.mxu0 0.0
        %1667 = vmatpush1.msra.mxu0 0.0
        %1668 = vmatprep.subr.mxu0 0.0
        %1669 = vmatpush1.msra.mxu0 0.0
        %1670 = vmatprep.subr.mxu0 0.0
        %1671 = vmatpush1.msra.mxu0 0.0
        %1672 = vmatprep.subr.mxu0 0.0
        %1673 = vmatpush1.msra.mxu0 0.0
        %1674 = vmatprep.subr.mxu0 0.0
        %1675 = vmatpush1.msra.mxu0 0.0
        %1676 = vmatprep.subr.mxu0 0.0
        %1677 = vmatpush1.msra.mxu0 0.0
        %1678 = vmatprep.subr.mxu0 0.0
        %1679 = vmatpush1.msra.mxu0 0.0
        %1680 = vmatprep.subr.mxu0 0.0
        %1681 = vmatpush1.msra.mxu0 0.0
        %1682 = vmatprep.subr.mxu0 0.0
        %1683 = vmatpush1.msra.mxu0 0.0
        %1684 = vmatprep.subr.mxu0 0.0
        %1685 = vmatpush1.msra.mxu0 0.0
        %1686 = vmatprep.mubr.f32.mxu0 0.0
        %1687 = vmatmul.mubr.f32.gmra.mrb[0].mxu0 %v1617
        %v1688 = vpop.f32.mrb[0].mxu0
        %v1689 = vadd.f32 0.0, %v1688
        %v1690 = vpop.f32.mrb[0].mxu0
        %v1691 = vadd.f32 0.0, %v1690
        %1692 = vmatprep.mubr.f32.mxu0 0.0
        %1693 = vmatmul.mubr.f32.gmra.mrb[0].mxu0 %v1620
        %v1694 = vpop.f32.mrb[0].mxu0
        %v1695 = vadd.f32 0.0, %v1694
        %v1696 = vpop.f32.mrb[0].mxu0
        %v1697 = vadd.f32 0.0, %v1696
        %1698 = vdwg.mxu0
        %v1699 = vadd.f32 %v1609, %v1689
        %v1700 = vadd.f32 %v1610, %v1691
        %v1701 = vadd.f32 %v1611, %v1695
        %v1702 = vadd.f32 %v1612, %v1697
        %s1703 = scalar_lea.vmem %s73, 32
        %v1704 = vld [vmem:[%s1703] sm:$0xff]
        %v1705 = vld [vmem:[%s1703 + $0x8] sm:$0xf]
        %v1707 = vsel %vm1499, %v1704, 0
        %v1710 = vsel %vm1499, %v1705, 0
        %1712 = vmatprep.subr.mxu0 %v1496
        %1713 = vmatpush1.msra.mxu0 %v1495
        %1714 = vmatprep.subr.mxu0 %v1509
        %1715 = vmatpush1.msra.mxu0 %v1507
        %1716 = vmatprep.subr.mxu0 0.0
        %1717 = vmatpush1.msra.mxu0 0.0
        %1718 = vmatprep.subr.mxu0 0.0
        %1719 = vmatpush1.msra.mxu0 0.0
        %1720 = vmatprep.subr.mxu0 0.0
        %1721 = vmatpush1.msra.mxu0 0.0
        %1722 = vmatprep.subr.mxu0 0.0
        %1723 = vmatpush1.msra.mxu0 0.0
        %1724 = vmatprep.subr.mxu0 0.0
        %1725 = vmatpush1.msra.mxu0 0.0
        %1726 = vmatprep.subr.mxu0 0.0
        %1727 = vmatpush1.msra.mxu0 0.0
        %1728 = vmatprep.subr.mxu0 0.0
        %1729 = vmatpush1.msra.mxu0 0.0
        %1730 = vmatprep.subr.mxu0 0.0
        %1731 = vmatpush1.msra.mxu0 0.0
        %1732 = vmatprep.subr.mxu0 0.0
        %1733 = vmatpush1.msra.mxu0 0.0
        %1734 = vmatprep.subr.mxu0 0.0
        %1735 = vmatpush1.msra.mxu0 0.0
        %1736 = vmatprep.subr.mxu0 0.0
        %1737 = vmatpush1.msra.mxu0 0.0
        %1738 = vmatprep.subr.mxu0 0.0
        %1739 = vmatpush1.msra.mxu0 0.0
        %1740 = vmatprep.subr.mxu0 0.0
        %1741 = vmatpush1.msra.mxu0 0.0
        %1742 = vmatprep.subr.mxu0 0.0
        %1743 = vmatpush1.msra.mxu0 0.0
        %1744 = vmatprep.subr.mxu0 0.0
        %1745 = vmatpush1.msra.mxu0 0.0
        %1746 = vmatprep.subr.mxu0 0.0
        %1747 = vmatpush1.msra.mxu0 0.0
        %1748 = vmatprep.subr.mxu0 0.0
        %1749 = vmatpush1.msra.mxu0 0.0
        %1750 = vmatprep.subr.mxu0 0.0
        %1751 = vmatpush1.msra.mxu0 0.0
        %1752 = vmatprep.subr.mxu0 0.0
        %1753 = vmatpush1.msra.mxu0 0.0
        %1754 = vmatprep.subr.mxu0 0.0
        %1755 = vmatpush1.msra.mxu0 0.0
        %1756 = vmatprep.subr.mxu0 0.0
        %1757 = vmatpush1.msra.mxu0 0.0
        %1758 = vmatprep.subr.mxu0 0.0
        %1759 = vmatpush1.msra.mxu0 0.0
        %1760 = vmatprep.subr.mxu0 0.0
        %1761 = vmatpush1.msra.mxu0 0.0
        %1762 = vmatprep.subr.mxu0 0.0
        %1763 = vmatpush1.msra.mxu0 0.0
        %1764 = vmatprep.subr.mxu0 0.0
        %1765 = vmatpush1.msra.mxu0 0.0
        %1766 = vmatprep.subr.mxu0 0.0
        %1767 = vmatpush1.msra.mxu0 0.0
        %1768 = vmatprep.subr.mxu0 0.0
        %1769 = vmatpush1.msra.mxu0 0.0
        %1770 = vmatprep.subr.mxu0 0.0
        %1771 = vmatpush1.msra.mxu0 0.0
        %1772 = vmatprep.subr.mxu0 0.0
        %1773 = vmatpush1.msra.mxu0 0.0
        %1774 = vmatprep.subr.mxu0 0.0
        %1775 = vmatpush1.msra.mxu0 0.0
        %1776 = vmatprep.mubr.f32.mxu0 0.0
        %1777 = vmatmul.mubr.f32.gmra.mrb[0].mxu0 %v1707
        %v1778 = vpop.f32.mrb[0].mxu0
        %v1779 = vadd.f32 0.0, %v1778
        %v1780 = vpop.f32.mrb[0].mxu0
        %v1781 = vadd.f32 0.0, %v1780
        %1782 = vmatprep.mubr.f32.mxu0 0.0
        %1783 = vmatmul.mubr.f32.gmra.mrb[0].mxu0 %v1710
        %v1784 = vpop.f32.mrb[0].mxu0
        %v1785 = vadd.f32 0.0, %v1784
        %v1786 = vpop.f32.mrb[0].mxu0
        %v1787 = vadd.f32 0.0, %v1786
        %1788 = vdwg.mxu0
        %1793 = vrot.lane.b32.xlu0 %v1779, 112
        %v1794 = vpop.permute.xlu0 %1793
        %1795 = vrot.lane.b32.xlu0 %v1781, 112
        %v1796 = vpop.permute.xlu0 %1795
        %1797 = vrot.lane.b32.xlu0 %v1785, 112
        %v1798 = vpop.permute.xlu0 %1797
        %1799 = vrot.lane.b32.xlu0 %v1787, 112
        %v1800 = vpop.permute.xlu0 %1799
        %vm1801 = vcmask 916480
        %v1802 = vsel %vm1801, %v1794, %v1796
        %v1803 = vsel %vm1801, %v1798, %v1800
        %v1808 = vsel %vm1801, %v1796, 0.0
        %v1809 = vsel %vm1801, %v1800, 0.0
        %v1810 = vadd.f32 %v1699, %v1802
        %v1811 = vadd.f32 %v1700, %v1808
        %v1812 = vadd.f32 %v1701, %v1803
        %v1813 = vadd.f32 %v1702, %v1809
        %v1814 = vld [vmem:[%s71] sm:$0xff]
        %v1815 = vld [vmem:[%s71 + $0x8] sm:$0xf]
        %1817 = vset.pattern.permute.xlu0 0
        %1818 = vperm.xlu0 %1817, %v1814
        %v1819 = vpop.permute.xlu0 %1818
        %1822 = vset.pattern.permute.xlu0 0
        %1823 = vperm.xlu0 %1822, %v1815
        %v1824 = vpop.permute.xlu0 %1823
        %v1826 = vadd.f32 %v1810, %v1819
        %v1827 = vadd.f32 %v1811, %v1819
        %v1828 = vadd.f32 %v1812, %v1824
        %v1829 = vadd.f32 %v1813, %v1824
        %v1830 = vmul.f32 %v1826, 0.5
        %v1831 = vmul.f32 %v1827, 0.5
        %v1832 = vmul.f32 %v1828, 0.5
        %v1833 = vmul.f32 %v1829, 0.5
        %v1834 = vmul.f32 %v1826, 0.70710677
        %v1835 = vmul.f32 %v1827, 0.70710677
        %v1836 = vmul.f32 %v1828, 0.70710677
        %v1837 = vmul.f32 %v1829, 0.70710677
        %v1838 = verf.f32.pop %v1834
        %v1839 = verf.f32.pop %v1835
        %v1840 = verf.f32.pop %v1836
        %v1841 = verf.f32.pop %v1837
        %v1842 = vadd.f32 %v1838, 1.0
        %v1843 = vadd.f32 %v1839, 1.0
        %v1844 = vadd.f32 %v1840, 1.0
        %v1845 = vadd.f32 %v1841, 1.0
        %v1846 = vmul.f32 %v1830, %v1842
        %v1847 = vmul.f32 %v1831, %v1843
        %v1848 = vmul.f32 %v1832, %v1844
        %v1849 = vmul.f32 %v1833, %v1845
        %1852 = vrot.lane.b32.xlu0 %v1846, 1
        %v1853 = vpop.permute.xlu0 %1852
        %1854 = vrot.lane.b32.xlu0 %v1847, 1
        %v1855 = vpop.permute.xlu0 %1854
        %v1856 = vsel %vm1451, %v1853, %v1855
        %v1859 = vsel %vm1451, 0.0, %v1853
        %v1860 = vsel %vm1460, %v1859, 0.0
        %v1861 = vsel %vm1461, %v1856, 0.0
        %1862 = vrot.lane.b32.xlu0 %v1846, 127
        %v1863 = vpop.permute.xlu0 %1862
        %1864 = vrot.lane.b32.xlu0 %v1847, 127
        %v1865 = vpop.permute.xlu0 %1864
        %v1866 = vsel %vm1468, %v1863, %v1865
        %v1869 = vsel %vm1468, %v1865, 0.0
        %v1870 = vsel %vm1477, %v1866, 0.0
        %v1871 = vsel %vm1478, %v1869, 0.0
        %v1872 = vrot.slane %v1846, 2
        %v1873 = vrot.slane %v1847, 2
        %v1878 = vrot.slane %v1870, 4
        %v1879 = vrot.slane %v1871, 4
        %v1882 = vsel %vm1494, %v1860, %v1872
        %v1883 = vsel %vm1494, %v1861, %v1873
        %vm1884 = vcmask 1043456
        %v1885 = vsel %vm1884, %v1872, %v1878
        %v1886 = vsel %vm1884, %v1873, %v1879
        %v1887 = vld [vmem:[#allocation10] sm:$0x3f]
        %vm1888 = vcmask 146432
        %v1890 = vsel %vm1888, %v1887, 0
        %vm1892 = vcmask 1041408
        %v1893 = vsel %vm1892, %v1878, 0
        %v1895 = vsel %vm1892, %v1879, 0
        %1897 = vmatprep.subr.mxu0 %v1883
        %1898 = vmatpush1.msra.mxu0 %v1882
        %1899 = vmatprep.subr.mxu0 %v1886
        %1900 = vmatpush1.msra.mxu0 %v1885
        %1901 = vmatprep.subr.mxu0 %v1895
        %1902 = vmatpush1.msra.mxu0 %v1893
        %1903 = vmatprep.subr.mxu0 0.0
        %1904 = vmatpush1.msra.mxu0 0.0
        %1905 = vmatprep.subr.mxu0 0.0
        %1906 = vmatpush1.msra.mxu0 0.0
        %1907 = vmatprep.subr.mxu0 0.0
        %1908 = vmatpush1.msra.mxu0 0.0
        %1909 = vmatprep.subr.mxu0 0.0
        %1910 = vmatpush1.msra.mxu0 0.0
        %1911 = vmatprep.subr.mxu0 0.0
        %1912 = vmatpush1.msra.mxu0 0.0
        %1913 = vmatprep.subr.mxu0 0.0
        %1914 = vmatpush1.msra.mxu0 0.0
        %1915 = vmatprep.subr.mxu0 0.0
        %1916 = vmatpush1.msra.mxu0 0.0
        %1917 = vmatprep.subr.mxu0 0.0
        %1918 = vmatpush1.msra.mxu0 0.0
        %1919 = vmatprep.subr.mxu0 0.0
        %1920 = vmatpush1.msra.mxu0 0.0
        %1921 = vmatprep.subr.mxu0 0.0
        %1922 = vmatpush1.msra.mxu0 0.0
        %1923 = vmatprep.subr.mxu0 0.0
        %1924 = vmatpush1.msra.mxu0 0.0
        %1925 = vmatprep.subr.mxu0 0.0
        %1926 = vmatpush1.msra.mxu0 0.0
        %1927 = vmatprep.subr.mxu0 0.0
        %1928 = vmatpush1.msra.mxu0 0.0
        %1929 = vmatprep.subr.mxu0 0.0
        %1930 = vmatpush1.msra.mxu0 0.0
        %1931 = vmatprep.subr.mxu0 0.0
        %1932 = vmatpush1.msra.mxu0 0.0
        %1933 = vmatprep.subr.mxu0 0.0
        %1934 = vmatpush1.msra.mxu0 0.0
        %1935 = vmatprep.subr.mxu0 0.0
        %1936 = vmatpush1.msra.mxu0 0.0
        %1937 = vmatprep.subr.mxu0 0.0
        %1938 = vmatpush1.msra.mxu0 0.0
        %1939 = vmatprep.subr.mxu0 0.0
        %1940 = vmatpush1.msra.mxu0 0.0
        %1941 = vmatprep.subr.mxu0 0.0
        %1942 = vmatpush1.msra.mxu0 0.0
        %1943 = vmatprep.subr.mxu0 0.0
        %1944 = vmatpush1.msra.mxu0 0.0
        %1945 = vmatprep.subr.mxu0 0.0
        %1946 = vmatpush1.msra.mxu0 0.0
        %1947 = vmatprep.subr.mxu0 0.0
        %1948 = vmatpush1.msra.mxu0 0.0
        %1949 = vmatprep.subr.mxu0 0.0
        %1950 = vmatpush1.msra.mxu0 0.0
        %1951 = vmatprep.subr.mxu0 0.0
        %1952 = vmatpush1.msra.mxu0 0.0
        %1953 = vmatprep.subr.mxu0 0.0
        %1954 = vmatpush1.msra.mxu0 0.0
        %1955 = vmatprep.subr.mxu0 0.0
        %1956 = vmatpush1.msra.mxu0 0.0
        %1957 = vmatprep.subr.mxu0 0.0
        %1958 = vmatpush1.msra.mxu0 0.0
        %1959 = vmatprep.subr.mxu0 0.0
        %1960 = vmatpush1.msra.mxu0 0.0
        %1961 = vmatprep.mubr.f32.mxu0 0.0
        %1962 = vmatmul.mubr.f32.gmra.mrb[0].mxu0 %v1890
        %v1963 = vpop.f32.mrb[0].mxu0
        %v1964 = vadd.f32 0.0, %v1963
        %v1965 = vpop.f32.mrb[0].mxu0
        %v1966 = vadd.f32 0.0, %v1965
        %1967 = vdwg.mxu0
        %1970 = vrot.lane.b32.xlu0 %v1964, 16
        %v1971 = vpop.permute.xlu0 %1970
        %1972 = vrot.lane.b32.xlu0 %v1966, 16
        %v1973 = vpop.permute.xlu0 %1972
        %v1974 = vsel %vm1600, %v1971, %v1973
        %v1977 = vsel %vm1600, 0.0, %v1971
        %v1978 = vadd.f32 %v1977, 0.0
        %v1979 = vadd.f32 %v1974, 0.0
        %s1980 = scalar_lea.vmem [#allocation10], 8
        %v1981 = vld [vmem:[%s1980] sm:$0x3f]
        %v1983 = vsel %vm1888, %v1981, 0
        %1985 = vmatprep.subr.mxu0 %v1883
        %1986 = vmatpush1.msra.mxu0 %v1882
        %1987 = vmatprep.subr.mxu0 %v1886
        %1988 = vmatpush1.msra.mxu0 %v1885
        %1989 = vmatprep.subr.mxu0 %v1895
        %1990 = vmatpush1.msra.mxu0 %v1893
        %1991 = vmatprep.subr.mxu0 0.0
        %1992 = vmatpush1.msra.mxu0 0.0
        %1993 = vmatprep.subr.mxu0 0.0
        %1994 = vmatpush1.msra.mxu0 0.0
        %1995 = vmatprep.subr.mxu0 0.0
        %1996 = vmatpush1.msra.mxu0 0.0
        %1997 = vmatprep.subr.mxu0 0.0
        %1998 = vmatpush1.msra.mxu0 0.0
        %1999 = vmatprep.subr.mxu0 0.0
        %2000 = vmatpush1.msra.mxu0 0.0
        %2001 = vmatprep.subr.mxu0 0.0
        %2002 = vmatpush1.msra.mxu0 0.0
        %2003 = vmatprep.subr.mxu0 0.0
        %2004 = vmatpush1.msra.mxu0 0.0
        %2005 = vmatprep.subr.mxu0 0.0
        %2006 = vmatpush1.msra.mxu0 0.0
        %2007 = vmatprep.subr.mxu0 0.0
        %2008 = vmatpush1.msra.mxu0 0.0
        %2009 = vmatprep.subr.mxu0 0.0
        %2010 = vmatpush1.msra.mxu0 0.0
        %2011 = vmatprep.subr.mxu0 0.0
        %2012 = vmatpush1.msra.mxu0 0.0
        %2013 = vmatprep.subr.mxu0 0.0
        %2014 = vmatpush1.msra.mxu0 0.0
        %2015 = vmatprep.subr.mxu0 0.0
        %2016 = vmatpush1.msra.mxu0 0.0
        %2017 = vmatprep.subr.mxu0 0.0
        %2018 = vmatpush1.msra.mxu0 0.0
        %2019 = vmatprep.subr.mxu0 0.0
        %2020 = vmatpush1.msra.mxu0 0.0
        %2021 = vmatprep.subr.mxu0 0.0
        %2022 = vmatpush1.msra.mxu0 0.0
        %2023 = vmatprep.subr.mxu0 0.0
        %2024 = vmatpush1.msra.mxu0 0.0
        %2025 = vmatprep.subr.mxu0 0.0
        %2026 = vmatpush1.msra.mxu0 0.0
        %2027 = vmatprep.subr.mxu0 0.0
        %2028 = vmatpush1.msra.mxu0 0.0
        %2029 = vmatprep.subr.mxu0 0.0
        %2030 = vmatpush1.msra.mxu0 0.0
        %2031 = vmatprep.subr.mxu0 0.0
        %2032 = vmatpush1.msra.mxu0 0.0
        %2033 = vmatprep.subr.mxu0 0.0
        %2034 = vmatpush1.msra.mxu0 0.0
        %2035 = vmatprep.subr.mxu0 0.0
        %2036 = vmatpush1.msra.mxu0 0.0
        %2037 = vmatprep.subr.mxu0 0.0
        %2038 = vmatpush1.msra.mxu0 0.0
        %2039 = vmatprep.subr.mxu0 0.0
        %2040 = vmatpush1.msra.mxu0 0.0
        %2041 = vmatprep.subr.mxu0 0.0
        %2042 = vmatpush1.msra.mxu0 0.0
        %2043 = vmatprep.subr.mxu0 0.0
        %2044 = vmatpush1.msra.mxu0 0.0
        %2045 = vmatprep.subr.mxu0 0.0
        %2046 = vmatpush1.msra.mxu0 0.0
        %2047 = vmatprep.subr.mxu0 0.0
        %2048 = vmatpush1.msra.mxu0 0.0
        %2049 = vmatprep.mubr.f32.mxu0 0.0
        %2050 = vmatmul.mubr.f32.gmra.mrb[0].mxu0 %v1983
        %v2051 = vpop.f32.mrb[0].mxu0
        %v2052 = vadd.f32 0.0, %v2051
        %v2053 = vpop.f32.mrb[0].mxu0
        %v2054 = vadd.f32 0.0, %v2053
        %2055 = vdwg.mxu0
        %v2056 = vadd.f32 %v1978, %v2052
        %v2057 = vadd.f32 %v1979, %v2054
        %s2058 = scalar_lea.vmem [#allocation10], 16
        %v2059 = vld [vmem:[%s2058] sm:$0x3f]
        %v2061 = vsel %vm1888, %v2059, 0
        %2063 = vmatprep.subr.mxu0 %v1883
        %2064 = vmatpush1.msra.mxu0 %v1882
        %2065 = vmatprep.subr.mxu0 %v1886
        %2066 = vmatpush1.msra.mxu0 %v1885
        %2067 = vmatprep.subr.mxu0 %v1895
        %2068 = vmatpush1.msra.mxu0 %v1893
        %2069 = vmatprep.subr.mxu0 0.0
        %2070 = vmatpush1.msra.mxu0 0.0
        %2071 = vmatprep.subr.mxu0 0.0
        %2072 = vmatpush1.msra.mxu0 0.0
        %2073 = vmatprep.subr.mxu0 0.0
        %2074 = vmatpush1.msra.mxu0 0.0
        %2075 = vmatprep.subr.mxu0 0.0
        %2076 = vmatpush1.msra.mxu0 0.0
        %2077 = vmatprep.subr.mxu0 0.0
        %2078 = vmatpush1.msra.mxu0 0.0
        %2079 = vmatprep.subr.mxu0 0.0
        %2080 = vmatpush1.msra.mxu0 0.0
        %2081 = vmatprep.subr.mxu0 0.0
        %2082 = vmatpush1.msra.mxu0 0.0
        %2083 = vmatprep.subr.mxu0 0.0
        %2084 = vmatpush1.msra.mxu0 0.0
        %2085 = vmatprep.subr.mxu0 0.0
        %2086 = vmatpush1.msra.mxu0 0.0
        %2087 = vmatprep.subr.mxu0 0.0
        %2088 = vmatpush1.msra.mxu0 0.0
        %2089 = vmatprep.subr.mxu0 0.0
        %2090 = vmatpush1.msra.mxu0 0.0
        %2091 = vmatprep.subr.mxu0 0.0
        %2092 = vmatpush1.msra.mxu0 0.0
        %2093 = vmatprep.subr.mxu0 0.0
        %2094 = vmatpush1.msra.mxu0 0.0
        %2095 = vmatprep.subr.mxu0 0.0
        %2096 = vmatpush1.msra.mxu0 0.0
        %2097 = vmatprep.subr.mxu0 0.0
        %2098 = vmatpush1.msra.mxu0 0.0
        %2099 = vmatprep.subr.mxu0 0.0
        %2100 = vmatpush1.msra.mxu0 0.0
        %2101 = vmatprep.subr.mxu0 0.0
        %2102 = vmatpush1.msra.mxu0 0.0
        %2103 = vmatprep.subr.mxu0 0.0
        %2104 = vmatpush1.msra.mxu0 0.0
        %2105 = vmatprep.subr.mxu0 0.0
        %2106 = vmatpush1.msra.mxu0 0.0
        %2107 = vmatprep.subr.mxu0 0.0
        %2108 = vmatpush1.msra.mxu0 0.0
        %2109 = vmatprep.subr.mxu0 0.0
        %2110 = vmatpush1.msra.mxu0 0.0
        %2111 = vmatprep.subr.mxu0 0.0
        %2112 = vmatpush1.msra.mxu0 0.0
        %2113 = vmatprep.subr.mxu0 0.0
        %2114 = vmatpush1.msra.mxu0 0.0
        %2115 = vmatprep.subr.mxu0 0.0
        %2116 = vmatpush1.msra.mxu0 0.0
        %2117 = vmatprep.subr.mxu0 0.0
        %2118 = vmatpush1.msra.mxu0 0.0
        %2119 = vmatprep.subr.mxu0 0.0
        %2120 = vmatpush1.msra.mxu0 0.0
        %2121 = vmatprep.subr.mxu0 0.0
        %2122 = vmatpush1.msra.mxu0 0.0
        %2123 = vmatprep.subr.mxu0 0.0
        %2124 = vmatpush1.msra.mxu0 0.0
        %2125 = vmatprep.subr.mxu0 0.0
        %2126 = vmatpush1.msra.mxu0 0.0
        %2127 = vmatprep.mubr.f32.mxu0 0.0
        %2128 = vmatmul.mubr.f32.gmra.mrb[0].mxu0 %v2061
        %v2129 = vpop.f32.mrb[0].mxu0
        %v2130 = vadd.f32 0.0, %v2129
        %v2131 = vpop.f32.mrb[0].mxu0
        %v2132 = vadd.f32 0.0, %v2131
        %2133 = vdwg.mxu0
        %2136 = vrot.lane.b32.xlu0 %v2130, 112
        %v2137 = vpop.permute.xlu0 %2136
        %2138 = vrot.lane.b32.xlu0 %v2132, 112
        %v2139 = vpop.permute.xlu0 %2138
        %v2140 = vsel %vm1801, %v2137, %v2139
        %v2143 = vsel %vm1801, %v2139, 0.0
        %v2144 = vadd.f32 %v2056, %v2140
        %v2145 = vadd.f32 %v2057, %v2143
        %v2146 = vsel %vm1494, %v2144, %v1846
        %v2147 = vsel %vm1494, %v2145, %v1847
        %v2148 = vadd.f32 %v2146, %v2147
        %2149 = vadd.xlane.f32.xlu0 %v2148
        %v2150 = vpop.xlane.xlu0 %2149
        %v2151 = vsel %vm1884, %v1848, 0.0
        %v2152 = vsel %vm1884, %v1849, 0.0
        %v2153 = vadd.f32 %v2151, %v2152
        %2154 = vadd.xlane.f32.xlu0 %v2153
        %v2155 = vpop.xlane.xlu0 %2154
        %v2156 = vrcp.pop 256.0
        %v2157 = vmul.f32 %v2150, %v2156
        %v2158 = vmul.f32 %v2155, %v2156
        %v2159 = vmax.f32 %v2146, %v2147
        %2160 = vmax.xlane.f32.xlu0 %v2159
        %v2161 = vpop.xlane.xlu0 %2160
        %v2162 = vsel %vm1884, %v1848, -inf
        %v2163 = vsel %vm1884, %v1849, -inf
        %v2164 = vmax.f32 %v2162, %v2163
        %2165 = vmax.xlane.f32.xlu0 %v2164
        %v2166 = vpop.xlane.xlu0 %2165
        %v2167 = vsel %vm1451, %v2157, %v2161
        %v2168 = vsel %vm1451, %v2158, %v2166
        %v2169 = vld [vmem:[#allocation2] sm:$0x7]
        %vm2170 = vcmask 97280
        %v2172 = vsel %vm2170, %v2169, 0
        %v2175 = vsel %vm1884, %v2168, 0
        %2177 = vmatprep.subr.mxu0 0.0
        %2178 = vmatpush1.msra.mxu0 %v2167
        %2179 = vmatprep.subr.mxu0 0.0
        %2180 = vmatpush1.msra.mxu0 %v2175
        %2181 = vmatprep.subr.mxu0 0.0
        %2182 = vmatpush1.msra.mxu0 0.0
        %2183 = vmatprep.subr.mxu0 0.0
        %2184 = vmatpush1.msra.mxu0 0.0
        %2185 = vmatprep.subr.mxu0 0.0
        %2186 = vmatpush1.msra.mxu0 0.0
        %2187 = vmatprep.subr.mxu0 0.0
        %2188 = vmatpush1.msra.mxu0 0.0
        %2189 = vmatprep.subr.mxu0 0.0
        %2190 = vmatpush1.msra.mxu0 0.0
        %2191 = vmatprep.subr.mxu0 0.0
        %2192 = vmatpush1.msra.mxu0 0.0
        %2193 = vmatprep.subr.mxu0 0.0
        %2194 = vmatpush1.msra.mxu0 0.0
        %2195 = vmatprep.subr.mxu0 0.0
        %2196 = vmatpush1.msra.mxu0 0.0
        %2197 = vmatprep.subr.mxu0 0.0
        %2198 = vmatpush1.msra.mxu0 0.0
        %2199 = vmatprep.subr.mxu0 0.0
        %2200 = vmatpush1.msra.mxu0 0.0
        %2201 = vmatprep.subr.mxu0 0.0
        %2202 = vmatpush1.msra.mxu0 0.0
        %2203 = vmatprep.subr.mxu0 0.0
        %2204 = vmatpush1.msra.mxu0 0.0
        %2205 = vmatprep.subr.mxu0 0.0
        %2206 = vmatpush1.msra.mxu0 0.0
        %2207 = vmatprep.subr.mxu0 0.0
        %2208 = vmatpush1.msra.mxu0 0.0
        %2209 = vmatprep.subr.mxu0 0.0
        %2210 = vmatpush1.msra.mxu0 0.0
        %2211 = vmatprep.subr.mxu0 0.0
        %2212 = vmatpush1.msra.mxu0 0.0
        %2213 = vmatprep.subr.mxu0 0.0
        %2214 = vmatpush1.msra.mxu0 0.0
        %2215 = vmatprep.subr.mxu0 0.0
        %2216 = vmatpush1.msra.mxu0 0.0
        %2217 = vmatprep.subr.mxu0 0.0
        %2218 = vmatpush1.msra.mxu0 0.0
        %2219 = vmatprep.subr.mxu0 0.0
        %2220 = vmatpush1.msra.mxu0 0.0
        %2221 = vmatprep.subr.mxu0 0.0
        %2222 = vmatpush1.msra.mxu0 0.0
        %2223 = vmatprep.subr.mxu0 0.0
        %2224 = vmatpush1.msra.mxu0 0.0
        %2225 = vmatprep.subr.mxu0 0.0
        %2226 = vmatpush1.msra.mxu0 0.0
        %2227 = vmatprep.subr.mxu0 0.0
        %2228 = vmatpush1.msra.mxu0 0.0
        %2229 = vmatprep.subr.mxu0 0.0
        %2230 = vmatpush1.msra.mxu0 0.0
        %2231 = vmatprep.subr.mxu0 0.0
        %2232 = vmatpush1.msra.mxu0 0.0
        %2233 = vmatprep.subr.mxu0 0.0
        %2234 = vmatpush1.msra.mxu0 0.0
        %2235 = vmatprep.subr.mxu0 0.0
        %2236 = vmatpush1.msra.mxu0 0.0
        %2237 = vmatprep.subr.mxu0 0.0
        %2238 = vmatpush1.msra.mxu0 0.0
        %2239 = vmatprep.subr.mxu0 0.0
        %2240 = vmatpush1.msra.mxu0 0.0
        %2241 = vmatprep.mubr.f32.mxu0 0.0
        %2242 = vmatmul.mubr.f32.gmra.mrb[0].mxu0 %v2172
        %v2243 = vpop.f32.mrb[0].mxu0
        %v2244 = vadd.f32 0.0, %v2243
        %v2245 = vpop.f32.mrb[0].mxu0
        %2246 = vdwg.mxu0
        %v2247 = vmax.f32 %v2244, 0.0
        %v2248 = vld [vmem:[#allocation4] sm:$0xff]
        %v2249 = vld [vmem:[#allocation4 + $0x8] sm:$0xf]
        %vm2250 = vcmask 23552
        %v2252 = vsel %vm2250, %v2248, 0
        %v2255 = vsel %vm2250, %v2249, 0
        %v2258 = vsel %vm1491, %v2247, 0
        %2260 = vmatprep.subr.mxu0 0.0
        %2261 = vmatpush1.msra.mxu0 %v2258
        %2262 = vmatprep.subr.mxu0 0.0
        %2263 = vmatpush1.msra.mxu0 0.0
        %2264 = vmatprep.subr.mxu0 0.0
        %2265 = vmatpush1.msra.mxu0 0.0
        %2266 = vmatprep.subr.mxu0 0.0
        %2267 = vmatpush1.msra.mxu0 0.0
        %2268 = vmatprep.subr.mxu0 0.0
        %2269 = vmatpush1.msra.mxu0 0.0
        %2270 = vmatprep.subr.mxu0 0.0
        %2271 = vmatpush1.msra.mxu0 0.0
        %2272 = vmatprep.subr.mxu0 0.0
        %2273 = vmatpush1.msra.mxu0 0.0
        %2274 = vmatprep.subr.mxu0 0.0
        %2275 = vmatpush1.msra.mxu0 0.0
        %2276 = vmatprep.subr.mxu0 0.0
        %2277 = vmatpush1.msra.mxu0 0.0
        %2278 = vmatprep.subr.mxu0 0.0
        %2279 = vmatpush1.msra.mxu0 0.0
        %2280 = vmatprep.subr.mxu0 0.0
        %2281 = vmatpush1.msra.mxu0 0.0
        %2282 = vmatprep.subr.mxu0 0.0
        %2283 = vmatpush1.msra.mxu0 0.0
        %2284 = vmatprep.subr.mxu0 0.0
        %2285 = vmatpush1.msra.mxu0 0.0
        %2286 = vmatprep.subr.mxu0 0.0
        %2287 = vmatpush1.msra.mxu0 0.0
        %2288 = vmatprep.subr.mxu0 0.0
        %2289 = vmatpush1.msra.mxu0 0.0
        %2290 = vmatprep.subr.mxu0 0.0
        %2291 = vmatpush1.msra.mxu0 0.0
        %2292 = vmatprep.subr.mxu0 0.0
        %2293 = vmatpush1.msra.mxu0 0.0
        %2294 = vmatprep.subr.mxu0 0.0
        %2295 = vmatpush1.msra.mxu0 0.0
        %2296 = vmatprep.subr.mxu0 0.0
        %2297 = vmatpush1.msra.mxu0 0.0
        %2298 = vmatprep.subr.mxu0 0.0
        %2299 = vmatpush1.msra.mxu0 0.0
        %2300 = vmatprep.subr.mxu0 0.0
        %2301 = vmatpush1.msra.mxu0 0.0
        %2302 = vmatprep.subr.mxu0 0.0
        %2303 = vmatpush1.msra.mxu0 0.0
        %2304 = vmatprep.subr.mxu0 0.0
        %2305 = vmatpush1.msra.mxu0 0.0
        %2306 = vmatprep.subr.mxu0 0.0
        %2307 = vmatpush1.msra.mxu0 0.0
        %2308 = vmatprep.subr.mxu0 0.0
        %2309 = vmatpush1.msra.mxu0 0.0
        %2310 = vmatprep.subr.mxu0 0.0
        %2311 = vmatpush1.msra.mxu0 0.0
        %2312 = vmatprep.subr.mxu0 0.0
        %2313 = vmatpush1.msra.mxu0 0.0
        %2314 = vmatprep.subr.mxu0 0.0
        %2315 = vmatpush1.msra.mxu0 0.0
        %2316 = vmatprep.subr.mxu0 0.0
        %2317 = vmatpush1.msra.mxu0 0.0
        %2318 = vmatprep.subr.mxu0 0.0
        %2319 = vmatpush1.msra.mxu0 0.0
        %2320 = vmatprep.subr.mxu0 0.0
        %2321 = vmatpush1.msra.mxu0 0.0
        %2322 = vmatprep.subr.mxu0 0.0
        %2323 = vmatpush1.msra.mxu0 0.0
        %2324 = vmatprep.mubr.f32.mxu0 0.0
        %2325 = vmatmul.mubr.f32.gmra.mrb[0].mxu0 %v2252
        %v2326 = vpop.f32.mrb[0].mxu0
        %v2327 = vadd.f32 0.0, %v2326
        %v2328 = vpop.f32.mrb[0].mxu0
        %2329 = vmatprep.mubr.f32.mxu0 0.0
        %2330 = vmatmul.mubr.f32.gmra.mrb[0].mxu0 %v2255
        %v2331 = vpop.f32.mrb[0].mxu0
        %v2332 = vadd.f32 0.0, %v2331
        %v2333 = vpop.f32.mrb[0].mxu0
        %2334 = vdwg.mxu0
        %2337 = vrot.lane.b32.xlu0 %v2327, 127
        %v2338 = vpop.permute.xlu0 %2337
        %2339 = vrot.lane.b32.xlu0 %v2332, 127
        %v2340 = vpop.permute.xlu0 %2339
        %v2343 = vadd.f32 %v2327, %v2338
        %v2344 = vadd.f32 %v2332, %v2340
        %v2345 = vxor.u32 %v2343, 2147483648
        %v2346 = vxor.u32 %v2344, 2147483648
        %v2347 = vmul.f32 %v2345, 1.442695
        %v2348 = vpow.pop %v2347
        %v2349 = vmul.f32 %v2346, 1.442695
        %v2350 = vpow.pop %v2349
        %v2351 = vadd.f32 %v2348, 1.0
        %v2352 = vadd.f32 %v2350, 1.0
        %v2353 = vrcp.pop %v2351
        %v2354 = vmul.f32 1.0, %v2353
        %v2355 = vrcp.pop %v2352
        %v2356 = vmul.f32 1.0, %v2355
        %2358 = vset.pattern.permute.xlu0 0
        %2359 = vperm.xlu0 %2358, %v2354
        %v2360 = vpop.permute.xlu0 %2359
        %2363 = vset.pattern.permute.xlu0 0
        %2364 = vperm.xlu0 %2363, %v2356
        %v2365 = vpop.permute.xlu0 %2364
        %v2367 = vmul.f32 %v2146, %v2360
        %v2368 = vmul.f32 %v2147, %v2360
        %v2369 = vmul.f32 %v1848, %v2365
        %v2370 = vmul.f32 %v1849, %v2365
        %v2371 = vsel %vm1884, %v2369, 0.0
        %v2372 = vadd.f32 %v2367, %v2371
        %v2373 = vrot.slane %v2372, 4
        %v2374 = vadd.f32 %v2372, %v2373
        %v2375 = vrot.slane %v2374, 2
        %v2376 = vadd.f32 %v2374, %v2375
        %v2377 = vrot.slane %v2376, 1
        %v2378 = vadd.f32 %v2376, %v2377
        %v2379 = vsel %vm1884, %v2370, 0.0
        %v2380 = vadd.f32 %v2368, %v2379
        %v2381 = vrot.slane %v2380, 4
        %v2382 = vadd.f32 %v2380, %v2381
        %v2383 = vrot.slane %v2382, 2
        %v2384 = vadd.f32 %v2382, %v2383
        %v2385 = vrot.slane %v2384, 1
        %v2386 = vadd.f32 %v2384, %v2385
        %v2387 = vrcp.pop 12.0
        %v2388 = vmul.f32 %v2378, %v2387
        %v2389 = vmul.f32 %v2386, %v2387
        %v2390 = vsel %vm1884, %v2369, -inf
        %v2391 = vmax.f32 %v2367, %v2390
        %v2392 = vrot.slane %v2391, 4
        %v2393 = vmax.f32 %v2391, %v2392
        %v2394 = vrot.slane %v2393, 2
        %v2395 = vmax.f32 %v2393, %v2394
        %v2396 = vrot.slane %v2395, 1
        %v2397 = vmax.f32 %v2395, %v2396
        %v2398 = vsel %vm1884, %v2370, -inf
        %v2399 = vmax.f32 %v2368, %v2398
        %v2400 = vrot.slane %v2399, 4
        %v2401 = vmax.f32 %v2399, %v2400
        %v2402 = vrot.slane %v2401, 2
        %v2403 = vmax.f32 %v2401, %v2402
        %v2404 = vrot.slane %v2403, 1
        %v2405 = vmax.f32 %v2403, %v2404
        %2408 = vrot.lane.b32.xlu0 %v2388, 3
        %v2409 = vpop.permute.xlu0 %2408
        %2410 = vrot.lane.b32.xlu0 %v2389, 3
        %v2411 = vpop.permute.xlu0 %2410
        %v2412 = vsel %vm2250, %v2409, %v2411
        %v2415 = vsel %vm2250, 0.0, %v2409
        %vm2416 = vcmp.ge.s32.totalorder %v1442, 3
        %vm2417 = vcmp.ge.s32.totalorder %v1443, 3
        %v2418 = vsel %vm2416, %v2415, 0.0
        %v2419 = vsel %vm2417, %v2412, 0.0
        %2420 = vrot.lane.b32.xlu0 %v2388, 2
        %v2421 = vpop.permute.xlu0 %2420
        %2422 = vrot.lane.b32.xlu0 %v2389, 2
        %v2423 = vpop.permute.xlu0 %2422
        %vm2424 = vcmask 15360
        %v2425 = vsel %vm2424, %v2421, %v2423
        %v2428 = vsel %vm2424, 0.0, %v2421
        %vm2429 = vcmp.ge.s32.totalorder %v1442, 2
        %vm2430 = vcmp.ge.s32.totalorder %v1443, 2
        %v2431 = vsel %vm2429, %v2428, 0.0
        %v2432 = vsel %vm2430, %v2425, 0.0
        %2433 = vrot.lane.b32.xlu0 %v2388, 1
        %v2434 = vpop.permute.xlu0 %2433
        %2435 = vrot.lane.b32.xlu0 %v2389, 1
        %v2436 = vpop.permute.xlu0 %2435
        %v2437 = vsel %vm1451, %v2434, %v2436
        %v2440 = vsel %vm1451, 0.0, %v2434
        %v2441 = vsel %vm1456, %v2440, 0.0
        %v2442 = vsel %vm1457, %v2437, 0.0
        %2443 = vrot.lane.b32.xlu0 %v2388, 127
        %v2444 = vpop.permute.xlu0 %2443
        %2445 = vrot.lane.b32.xlu0 %v2389, 127
        %v2446 = vpop.permute.xlu0 %2445
        %v2447 = vsel %vm1468, %v2444, %v2446
        %v2450 = vsel %vm1468, %v2446, 0.0
        %v2451 = vsel %vm1473, %v2447, 0.0
        %v2452 = vsel %vm1474, %v2450, 0.0
        %2453 = vrot.lane.b32.xlu0 %v2388, 126
        %v2454 = vpop.permute.xlu0 %2453
        %2455 = vrot.lane.b32.xlu0 %v2389, 126
        %v2456 = vpop.permute.xlu0 %2455
        %vm2457 = vcmask 1031168
        %v2458 = vsel %vm2457, %v2454, %v2456
        %v2461 = vsel %vm2457, %v2456, 0.0
        %vm2462 = vcmp.lt.s32.totalorder %v1442, 14
        %vm2463 = vcmp.lt.s32.totalorder %v1443, 14
        %v2464 = vsel %vm2462, %v2458, 0.0
        %v2465 = vsel %vm2463, %v2461, 0.0
        %2466 = vrot.lane.b32.xlu0 %v2388, 125
        %v2467 = vpop.permute.xlu0 %2466
        %2468 = vrot.lane.b32.xlu0 %v2389, 125
        %v2469 = vpop.permute.xlu0 %2468
        %vm2470 = vcmask 1022976
        %v2471 = vsel %vm2470, %v2467, %v2469
        %v2474 = vsel %vm2470, %v2469, 0.0
        %vm2475 = vcmp.lt.s32.totalorder %v1442, 13
        %vm2476 = vcmp.lt.s32.totalorder %v1443, 13
        %v2477 = vsel %vm2475, %v2471, 0.0
        %v2478 = vsel %vm2476, %v2474, 0.0
        %2481 = vrot.lane.b32.xlu0 %v2397, 3
        %v2482 = vpop.permute.xlu0 %2481
        %2483 = vrot.lane.b32.xlu0 %v2405, 3
        %v2484 = vpop.permute.xlu0 %2483
        %v2485 = vsel %vm2250, %v2482, %v2484
        %v2488 = vsel %vm2250, 0.0, %v2482
        %v2489 = vsel %vm2416, %v2488, 0.0
        %v2490 = vsel %vm2417, %v2485, 0.0
        %2491 = vrot.lane.b32.xlu0 %v2397, 2
        %v2492 = vpop.permute.xlu0 %2491
        %2493 = vrot.lane.b32.xlu0 %v2405, 2
        %v2494 = vpop.permute.xlu0 %2493
        %v2495 = vsel %vm2424, %v2492, %v2494
        %v2498 = vsel %vm2424, 0.0, %v2492
        %v2499 = vsel %vm2429, %v2498, 0.0
        %v2500 = vsel %vm2430, %v2495, 0.0
        %2501 = vrot.lane.b32.xlu0 %v2397, 1
        %v2502 = vpop.permute.xlu0 %2501
        %2503 = vrot.lane.b32.xlu0 %v2405, 1
        %v2504 = vpop.permute.xlu0 %2503
        %v2505 = vsel %vm1451, %v2502, %v2504
        %v2508 = vsel %vm1451, 0.0, %v2502
        %v2509 = vsel %vm1456, %v2508, 0.0
        %v2510 = vsel %vm1457, %v2505, 0.0
        %2511 = vrot.lane.b32.xlu0 %v2397, 127
        %v2512 = vpop.permute.xlu0 %2511
        %2513 = vrot.lane.b32.xlu0 %v2405, 127
        %v2514 = vpop.permute.xlu0 %2513
        %v2515 = vsel %vm1468, %v2512, %v2514
        %v2518 = vsel %vm1468, %v2514, 0.0
        %v2519 = vsel %vm1473, %v2515, 0.0
        %v2520 = vsel %vm1474, %v2518, 0.0
        %2521 = vrot.lane.b32.xlu0 %v2397, 126
        %v2522 = vpop.permute.xlu0 %2521
        %2523 = vrot.lane.b32.xlu0 %v2405, 126
        %v2524 = vpop.permute.xlu0 %2523
        %v2525 = vsel %vm2457, %v2522, %v2524
        %v2528 = vsel %vm2457, %v2524, 0.0
        %v2529 = vsel %vm2462, %v2525, 0.0
        %v2530 = vsel %vm2463, %v2528, 0.0
        %2531 = vrot.lane.b32.xlu0 %v2397, 125
        %v2532 = vpop.permute.xlu0 %2531
        %2533 = vrot.lane.b32.xlu0 %v2405, 125
        %v2534 = vpop.permute.xlu0 %2533
        %v2535 = vsel %vm2470, %v2532, %v2534
        %v2538 = vsel %vm2470, %v2534, 0.0
        %v2539 = vsel %vm2475, %v2535, 0.0
        %v2540 = vsel %vm2476, %v2538, 0.0
        %v2543 = vrot.slane %v2431, 7
        %v2544 = vrot.slane %v2432, 7
        %v2549 = vrot.slane %v2441, 6
        %v2550 = vrot.slane %v2442, 6
        %v2555 = vrot.slane %v2451, 4
        %v2556 = vrot.slane %v2452, 4
        %v2561 = vrot.slane %v2464, 3
        %v2562 = vrot.slane %v2465, 3
        %v2567 = vrot.slane %v2477, 2
        %v2568 = vrot.slane %v2478, 2
        %v2573 = vrot.slane %v2489, 1
        %v2574 = vrot.slane %v2490, 1
        %v2579 = vrot.slane %v2509, 7
        %v2580 = vrot.slane %v2510, 7
        %v2585 = vrot.slane %v2519, 5
        %v2586 = vrot.slane %v2520, 5
        %v2591 = vrot.slane %v2529, 4
        %v2592 = vrot.slane %v2530, 4
        %v2597 = vrot.slane %v2539, 3
        %v2598 = vrot.slane %v2540, 3
        %v2601 = vsel %vm1506, %v2418, %v2543
        %v2602 = vsel %vm1506, %v2419, %v2544
        %v2603 = vsel %vm1892, %v2601, %v2549
        %v2604 = vsel %vm1892, %v2602, %v2550
        %v2605 = vsel %vm1491, %v2603, %v2388
        %v2606 = vsel %vm1491, %v2604, %v2389
        %v2607 = vsel %vm1884, %v2605, %v2555
        %v2608 = vsel %vm1884, %v2606, %v2556
        %vm2609 = vcmask 1044480
        %v2610 = vsel %vm2609, %v2607, %v2561
        %v2611 = vsel %vm2609, %v2608, %v2562
        %v2612 = vsel %vm1494, %v2610, %v2567
        %v2613 = vsel %vm1494, %v2611, %v2568
        %vm2614 = vcmask 1046528
        %v2615 = vsel %vm2614, %v2612, %v2573
        %v2616 = vsel %vm2614, %v2613, %v2574
        %v2617 = vsel %vm1506, %v2499, %v2579
        %v2618 = vsel %vm1506, %v2500, %v2580
        %v2619 = vsel %vm1892, %v2617, %v2397
        %v2620 = vsel %vm1892, %v2618, %v2405
        %v2621 = vsel %vm1491, %v2619, %v2585
        %v2622 = vsel %vm1491, %v2620, %v2586
        %v2623 = vsel %vm1884, %v2621, %v2591
        %v2624 = vsel %vm1884, %v2622, %v2592
        %v2625 = vsel %vm2609, %v2623, %v2597
        %v2626 = vsel %vm2609, %v2624, %v2598
        %v2627 = vld [vmem:[#allocation6] sm:$0xff]
        %v2628 = vld [vmem:[#allocation6 + $0x8] sm:$0x3f]
        %2630 = vset.pattern.permute.xlu0 0
        %2631 = vperm.xlu0 %2630, %v2627
        %v2632 = vpop.permute.xlu0 %2631
        %2635 = vset.pattern.permute.xlu0 0
        %2636 = vperm.xlu0 %2635, %v2628
        %v2637 = vpop.permute.xlu0 %2636
        %v2639 = vmul.f32 %v2615, %v2632
        %v2640 = vmul.f32 %v2616, %v2632
        %v2641 = vmul.f32 %v2625, %v2637
        %v2642 = vmul.f32 %v2626, %v2637
        %v2643 = vsel %vm1494, %v2641, 0.0
        %v2644 = vadd.f32 %v2639, %v2643
        %v2645 = vrot.slane %v2644, 4
        %v2646 = vadd.f32 %v2644, %v2645
        %v2647 = vrot.slane %v2646, 2
        %v2648 = vadd.f32 %v2646, %v2647
        %v2649 = vrot.slane %v2648, 1
        %v2650 = vadd.f32 %v2648, %v2649
        %v2651 = vsel %vm1494, %v2642, 0.0
        %v2652 = vadd.f32 %v2640, %v2651
        %v2653 = vrot.slane %v2652, 4
        %v2654 = vadd.f32 %v2652, %v2653
        %v2655 = vrot.slane %v2654, 2
        %v2656 = vadd.f32 %v2654, %v2655
        %v2657 = vrot.slane %v2656, 1
        %v2658 = vadd.f32 %v2656, %v2657
        %2661 = vrot.lane.b32.xlu0 %v2650, 48
        %v2662 = vpop.permute.xlu0 %2661
        %2663 = vrot.lane.b32.xlu0 %v2658, 48
        %v2664 = vpop.permute.xlu0 %2663
        %vm2665 = vcmask 392192
        %v2666 = vsel %vm2665, %v2662, %v2664
        %v2669 = vsel %vm2665, 0.0, %v2662
        %v2670 = vadd.f32 %v2669, 0.0
        %v2671 = vadd.f32 %v2666, 0.0
        %2672 = vset.pattern.permute.xlu0 1
        %2673 = vperm.xlu0 %2672, %v2627
        %v2674 = vpop.permute.xlu0 %2673
        %2676 = vset.pattern.permute.xlu0 1
        %2677 = vperm.xlu0 %2676, %v2628
        %v2678 = vpop.permute.xlu0 %2677
        %v2680 = vmul.f32 %v2615, %v2674
        %v2681 = vmul.f32 %v2616, %v2674
        %v2682 = vmul.f32 %v2625, %v2678
        %v2683 = vmul.f32 %v2626, %v2678
        %v2684 = vsel %vm1494, %v2682, 0.0
        %v2685 = vadd.f32 %v2680, %v2684
        %v2686 = vrot.slane %v2685, 4
        %v2687 = vadd.f32 %v2685, %v2686
        %v2688 = vrot.slane %v2687, 2
        %v2689 = vadd.f32 %v2687, %v2688
        %v2690 = vrot.slane %v2689, 1
        %v2691 = vadd.f32 %v2689, %v2690
        %v2692 = vsel %vm1494, %v2683, 0.0
        %v2693 = vadd.f32 %v2681, %v2692
        %v2694 = vrot.slane %v2693, 4
        %v2695 = vadd.f32 %v2693, %v2694
        %v2696 = vrot.slane %v2695, 2
        %v2697 = vadd.f32 %v2695, %v2696
        %v2698 = vrot.slane %v2697, 1
        %v2699 = vadd.f32 %v2697, %v2698
        %2702 = vrot.lane.b32.xlu0 %v2691, 32
        %v2703 = vpop.permute.xlu0 %2702
        %2704 = vrot.lane.b32.xlu0 %v2699, 32
        %v2705 = vpop.permute.xlu0 %2704
        %vm2706 = vcmask 261120
        %v2707 = vsel %vm2706, %v2703, %v2705
        %v2710 = vsel %vm2706, 0.0, %v2703
        %v2711 = vadd.f32 %v2670, %v2710
        %v2712 = vadd.f32 %v2671, %v2707
        %2713 = vset.pattern.permute.xlu0 2
        %2714 = vperm.xlu0 %2713, %v2627
        %v2715 = vpop.permute.xlu0 %2714
        %2717 = vset.pattern.permute.xlu0 2
        %2718 = vperm.xlu0 %2717, %v2628
        %v2719 = vpop.permute.xlu0 %2718
        %v2721 = vmul.f32 %v2615, %v2715
        %v2722 = vmul.f32 %v2616, %v2715
        %v2723 = vmul.f32 %v2625, %v2719
        %v2724 = vmul.f32 %v2626, %v2719
        %v2725 = vsel %vm1494, %v2723, 0.0
        %v2726 = vadd.f32 %v2721, %v2725
        %v2727 = vrot.slane %v2726, 4
        %v2728 = vadd.f32 %v2726, %v2727
        %v2729 = vrot.slane %v2728, 2
        %v2730 = vadd.f32 %v2728, %v2729
        %v2731 = vrot.slane %v2730, 1
        %v2732 = vadd.f32 %v2730, %v2731
        %v2733 = vsel %vm1494, %v2724, 0.0
        %v2734 = vadd.f32 %v2722, %v2733
        %v2735 = vrot.slane %v2734, 4
        %v2736 = vadd.f32 %v2734, %v2735
        %v2737 = vrot.slane %v2736, 2
        %v2738 = vadd.f32 %v2736, %v2737
        %v2739 = vrot.slane %v2738, 1
        %v2740 = vadd.f32 %v2738, %v2739
        %2743 = vrot.lane.b32.xlu0 %v2732, 16
        %v2744 = vpop.permute.xlu0 %2743
        %2745 = vrot.lane.b32.xlu0 %v2740, 16
        %v2746 = vpop.permute.xlu0 %2745
        %v2747 = vsel %vm1600, %v2744, %v2746
        %v2750 = vsel %vm1600, 0.0, %v2744
        %v2751 = vadd.f32 %v2711, %v2750
        %v2752 = vadd.f32 %v2712, %v2747
        %2753 = vset.pattern.permute.xlu0 3
        %2754 = vperm.xlu0 %2753, %v2627
        %v2755 = vpop.permute.xlu0 %2754
        %2757 = vset.pattern.permute.xlu0 3
        %2758 = vperm.xlu0 %2757, %v2628
        %v2759 = vpop.permute.xlu0 %2758
        %v2761 = vmul.f32 %v2615, %v2755
        %v2762 = vmul.f32 %v2616, %v2755
        %v2763 = vmul.f32 %v2625, %v2759
        %v2764 = vmul.f32 %v2626, %v2759
        %v2765 = vsel %vm1494, %v2763, 0.0
        %v2766 = vadd.f32 %v2761, %v2765
        %v2767 = vrot.slane %v2766, 4
        %v2768 = vadd.f32 %v2766, %v2767
        %v2769 = vrot.slane %v2768, 2
        %v2770 = vadd.f32 %v2768, %v2769
        %v2771 = vrot.slane %v2770, 1
        %v2772 = vadd.f32 %v2770, %v2771
        %v2773 = vsel %vm1494, %v2764, 0.0
        %v2774 = vadd.f32 %v2762, %v2773
        %v2775 = vrot.slane %v2774, 4
        %v2776 = vadd.f32 %v2774, %v2775
        %v2777 = vrot.slane %v2776, 2
        %v2778 = vadd.f32 %v2776, %v2777
        %v2779 = vrot.slane %v2778, 1
        %v2780 = vadd.f32 %v2778, %v2779
        %v2781 = vadd.f32 %v2751, %v2772
        %v2782 = vadd.f32 %v2752, %v2780
        %2783 = vset.pattern.permute.xlu0 4
        %2784 = vperm.xlu0 %2783, %v2627
        %v2785 = vpop.permute.xlu0 %2784
        %2787 = vset.pattern.permute.xlu0 4
        %2788 = vperm.xlu0 %2787, %v2628
        %v2789 = vpop.permute.xlu0 %2788
        %v2791 = vmul.f32 %v2615, %v2785
        %v2792 = vmul.f32 %v2616, %v2785
        %v2793 = vmul.f32 %v2625, %v2789
        %v2794 = vmul.f32 %v2626, %v2789
        %v2795 = vsel %vm1494, %v2793, 0.0
        %v2796 = vadd.f32 %v2791, %v2795
        %v2797 = vrot.slane %v2796, 4
        %v2798 = vadd.f32 %v2796, %v2797
        %v2799 = vrot.slane %v2798, 2
        %v2800 = vadd.f32 %v2798, %v2799
        %v2801 = vrot.slane %v2800, 1
        %v2802 = vadd.f32 %v2800, %v2801
        %v2803 = vsel %vm1494, %v2794, 0.0
        %v2804 = vadd.f32 %v2792, %v2803
        %v2805 = vrot.slane %v2804, 4
        %v2806 = vadd.f32 %v2804, %v2805
        %v2807 = vrot.slane %v2806, 2
        %v2808 = vadd.f32 %v2806, %v2807
        %v2809 = vrot.slane %v2808, 1
        %v2810 = vadd.f32 %v2808, %v2809
        %2813 = vrot.lane.b32.xlu0 %v2802, 112
        %v2814 = vpop.permute.xlu0 %2813
        %2815 = vrot.lane.b32.xlu0 %v2810, 112
        %v2816 = vpop.permute.xlu0 %2815
        %v2817 = vsel %vm1801, %v2814, %v2816
        %v2820 = vsel %vm1801, %v2816, 0.0
        %v2821 = vadd.f32 %v2781, %v2817
        %v2822 = vadd.f32 %v2782, %v2820
        %2823 = vset.pattern.permute.xlu0 5
        %2824 = vperm.xlu0 %2823, %v2627
        %v2825 = vpop.permute.xlu0 %2824
        %2827 = vset.pattern.permute.xlu0 5
        %2828 = vperm.xlu0 %2827, %v2628
        %v2829 = vpop.permute.xlu0 %2828
        %v2831 = vmul.f32 %v2615, %v2825
        %v2832 = vmul.f32 %v2616, %v2825
        %v2833 = vmul.f32 %v2625, %v2829
        %v2834 = vmul.f32 %v2626, %v2829
        %v2835 = vsel %vm1494, %v2833, 0.0
        %v2836 = vadd.f32 %v2831, %v2835
        %v2837 = vrot.slane %v2836, 4
        %v2838 = vadd.f32 %v2836, %v2837
        %v2839 = vrot.slane %v2838, 2
        %v2840 = vadd.f32 %v2838, %v2839
        %v2841 = vrot.slane %v2840, 1
        %v2842 = vadd.f32 %v2840, %v2841
        %v2843 = vsel %vm1494, %v2834, 0.0
        %v2844 = vadd.f32 %v2832, %v2843
        %v2845 = vrot.slane %v2844, 4
        %v2846 = vadd.f32 %v2844, %v2845
        %v2847 = vrot.slane %v2846, 2
        %v2848 = vadd.f32 %v2846, %v2847
        %v2849 = vrot.slane %v2848, 1
        %v2850 = vadd.f32 %v2848, %v2849
        %2853 = vrot.lane.b32.xlu0 %v2842, 96
        %v2854 = vpop.permute.xlu0 %2853
        %2855 = vrot.lane.b32.xlu0 %v2850, 96
        %v2856 = vpop.permute.xlu0 %2855
        %vm2857 = vcmask 785408
        %v2858 = vsel %vm2857, %v2854, %v2856
        %v2861 = vsel %vm2857, %v2856, 0.0
        %v2862 = vadd.f32 %v2821, %v2858
        %v2863 = vadd.f32 %v2822, %v2861
        %2864 = vset.pattern.permute.xlu0 6
        %2865 = vperm.xlu0 %2864, %v2627
        %v2866 = vpop.permute.xlu0 %2865
        %2868 = vset.pattern.permute.xlu0 6
        %2869 = vperm.xlu0 %2868, %v2628
        %v2870 = vpop.permute.xlu0 %2869
        %v2872 = vmul.f32 %v2615, %v2866
        %v2873 = vmul.f32 %v2616, %v2866
        %v2874 = vmul.f32 %v2625, %v2870
        %v2875 = vmul.f32 %v2626, %v2870
        %v2876 = vsel %vm1494, %v2874, 0.0
        %v2877 = vadd.f32 %v2872, %v2876
        %v2878 = vrot.slane %v2877, 4
        %v2879 = vadd.f32 %v2877, %v2878
        %v2880 = vrot.slane %v2879, 2
        %v2881 = vadd.f32 %v2879, %v2880
        %v2882 = vrot.slane %v2881, 1
        %v2883 = vadd.f32 %v2881, %v2882
        %v2884 = vsel %vm1494, %v2875, 0.0
        %v2885 = vadd.f32 %v2873, %v2884
        %v2886 = vrot.slane %v2885, 4
        %v2887 = vadd.f32 %v2885, %v2886
        %v2888 = vrot.slane %v2887, 2
        %v2889 = vadd.f32 %v2887, %v2888
        %v2890 = vrot.slane %v2889, 1
        %v2891 = vadd.f32 %v2889, %v2890
        %2894 = vrot.lane.b32.xlu0 %v2883, 80
        %v2895 = vpop.permute.xlu0 %2894
        %2896 = vrot.lane.b32.xlu0 %v2891, 80
        %v2897 = vpop.permute.xlu0 %2896
        %vm2898 = vcmask 654336
        %v2899 = vsel %vm2898, %v2895, %v2897
        %v2902 = vsel %vm2898, %v2897, 0.0
        %v2903 = vadd.f32 %v2862, %v2899
        %v2904 = vadd.f32 %v2863, %v2902
        %v2905 = vxor.u32 %v2903, 2147483648
        %v2906 = vxor.u32 %v2904, 2147483648
        %v2907 = vmul.f32 %v2905, 1.442695
        %v2908 = vpow.pop %v2907
        %v2909 = vmul.f32 %v2906, 1.442695
        %v2910 = vpow.pop %v2909
        %v2911 = vadd.f32 %v2908, 1.0
        %v2912 = vadd.f32 %v2910, 1.0
        %v2913 = vrcp.pop %v2911
        %v2914 = vmul.f32 1.0, %v2913
        %v2915 = vrcp.pop %v2912
        %v2916 = vmul.f32 1.0, %v2915
        %v2917 = vlaneseq
        %v2918 = vshrl.u32 %v2917, 7
        %v2919 = vsub.s32 0, %v2918
        %v2920 = vrot.slane %v2914, %v2919
        %v2921 = vlaneseq
        %v2922 = vshrl.u32 %v2921, 7
        %v2923 = vsub.s32 0, %v2922
        %v2924 = vrot.slane %v2916, %v2923
        %v2925 = vmul.f32 %v2367, %v2920
        %v2926 = vmul.f32 %v2368, %v2924
        %v2927 = vmul.f32 %v2369, %v2920
        %v2928 = vmul.f32 %v2370, %v2924
        %v2929 = vld [vmem:[#allocation7] sm:$0xff]
        %v2930 = vld [vmem:[#allocation7 + $0x8] sm:$0xff]
        %v2931 = vld [vmem:[#allocation7 + $0x10] sm:$0xff]
        %v2932 = vld [vmem:[%s3] sm:$0xff]
        %v2933 = vld [vmem:[%s3 + $0x8] sm:$0xff]
        %v2934 = vld [vmem:[%s3 + $0x10] sm:$0xff]
        %2936 = vset.pattern.permute.xlu0 0
        %2937 = vperm.xlu0 %2936, %v2932
        %v2938 = vpop.permute.xlu0 %2937
        %2941 = vset.pattern.permute.xlu0 0
        %2942 = vperm.xlu0 %2941, %v2933
        %v2943 = vpop.permute.xlu0 %2942
        %2946 = vset.pattern.permute.xlu0 0
        %2947 = vperm.xlu0 %2946, %v2934
        %v2948 = vpop.permute.xlu0 %2947
        %v2951 = vsel %vm2170, %v2929, 0
        %v2954 = vsel %vm2170, %v2930, 0
        %v2957 = vsel %vm2170, %v2931, 0
        %v2960 = vsel %vm1884, %v2927, 0
        %v2963 = vsel %vm1884, %v2928, 0
        %2965 = vmatprep.subr.mxu0 %v2926
        %2966 = vmatpush1.msra.mxu0 %v2925
        %2967 = vmatprep.subr.mxu0 %v2963
        %2968 = vmatpush1.msra.mxu0 %v2960
        %2969 = vmatprep.subr.mxu0 0.0
        %2970 = vmatpush1.msra.mxu0 0.0
        %2971 = vmatprep.subr.mxu0 0.0
        %2972 = vmatpush1.msra.mxu0 0.0
        %2973 = vmatprep.subr.mxu0 0.0
        %2974 = vmatpush1.msra.mxu0 0.0
        %2975 = vmatprep.subr.mxu0 0.0
        %2976 = vmatpush1.msra.mxu0 0.0
        %2977 = vmatprep.subr.mxu0 0.0
        %2978 = vmatpush1.msra.mxu0 0.0
        %2979 = vmatprep.subr.mxu0 0.0
        %2980 = vmatpush1.msra.mxu0 0.0
        %2981 = vmatprep.subr.mxu0 0.0
        %2982 = vmatpush1.msra.mxu0 0.0
        %2983 = vmatprep.subr.mxu0 0.0
        %2984 = vmatpush1.msra.mxu0 0.0
        %2985 = vmatprep.subr.mxu0 0.0
        %2986 = vmatpush1.msra.mxu0 0.0
        %2987 = vmatprep.subr.mxu0 0.0
        %2988 = vmatpush1.msra.mxu0 0.0
        %2989 = vmatprep.subr.mxu0 0.0
        %2990 = vmatpush1.msra.mxu0 0.0
        %2991 = vmatprep.subr.mxu0 0.0
        %2992 = vmatpush1.msra.mxu0 0.0
        %2993 = vmatprep.subr.mxu0 0.0
        %2994 = vmatpush1.msra.mxu0 0.0
        %2995 = vmatprep.subr.mxu0 0.0
        %2996 = vmatpush1.msra.mxu0 0.0
        %2997 = vmatprep.subr.mxu0 0.0
        %2998 = vmatpush1.msra.mxu0 0.0
        %2999 = vmatprep.subr.mxu0 0.0
        %3000 = vmatpush1.msra.mxu0 0.0
        %3001 = vmatprep.subr.mxu0 0.0
        %3002 = vmatpush1.msra.mxu0 0.0
        %3003 = vmatprep.subr.mxu0 0.0
        %3004 = vmatpush1.msra.mxu0 0.0
        %3005 = vmatprep.subr.mxu0 0.0
        %3006 = vmatpush1.msra.mxu0 0.0
        %3007 = vmatprep.subr.mxu0 0.0
        %3008 = vmatpush1.msra.mxu0 0.0
        %3009 = vmatprep.subr.mxu0 0.0
        %3010 = vmatpush1.msra.mxu0 0.0
        %3011 = vmatprep.subr.mxu0 0.0
        %3012 = vmatpush1.msra.mxu0 0.0
        %3013 = vmatprep.subr.mxu0 0.0
        %3014 = vmatpush1.msra.mxu0 0.0
        %3015 = vmatprep.subr.mxu0 0.0
        %3016 = vmatpush1.msra.mxu0 0.0
        %3017 = vmatprep.subr.mxu0 0.0
        %3018 = vmatpush1.msra.mxu0 0.0
        %3019 = vmatprep.subr.mxu0 0.0
        %3020 = vmatpush1.msra.mxu0 0.0
        %3021 = vmatprep.subr.mxu0 0.0
        %3022 = vmatpush1.msra.mxu0 0.0
        %3023 = vmatprep.subr.mxu0 0.0
        %3024 = vmatpush1.msra.mxu0 0.0
        %3025 = vmatprep.subr.mxu0 0.0
        %3026 = vmatpush1.msra.mxu0 0.0
        %3027 = vmatprep.subr.mxu0 0.0
        %3028 = vmatpush1.msra.mxu0 0.0
        %3029 = vmatprep.mubr.f32.mxu0 0.0
        %3030 = vmatmul.mubr.f32.gmra.mrb[0].mxu0 %v2951
        %v3031 = vpop.f32.mrb[0].mxu0
        %v3032 = vadd.f32 %v2938, %v3031
        %v3033 = vpop.f32.mrb[0].mxu0
        %v3034 = vadd.f32 %v2938, %v3033
        %3035 = vmatprep.mubr.f32.mxu0 0.0
        %3036 = vmatmul.mubr.f32.gmra.mrb[0].mxu0 %v2954
        %v3037 = vpop.f32.mrb[0].mxu0
        %v3038 = vadd.f32 %v2943, %v3037
        %v3039 = vpop.f32.mrb[0].mxu0
        %v3040 = vadd.f32 %v2943, %v3039
        %3041 = vmatprep.mubr.f32.mxu0 0.0
        %3042 = vmatmul.mubr.f32.gmra.mrb[0].mxu0 %v2957
        %v3043 = vpop.f32.mrb[0].mxu0
        %v3044 = vadd.f32 %v2948, %v3043
        %v3045 = vpop.f32.mrb[0].mxu0
        %v3046 = vadd.f32 %v2948, %v3045
        %3047 = vdwg.mxu0
        %v3048 = vmul.f32 %v3032, 0.5
        %v3049 = vmul.f32 %v3034, 0.5
        %v3050 = vmul.f32 %v3038, 0.5
        %v3051 = vmul.f32 %v3040, 0.5
        %v3052 = vmul.f32 %v3044, 0.5
        %v3053 = vmul.f32 %v3046, 0.5
        %v3054 = vmul.f32 %v3032, 0.70710677
        %v3055 = vmul.f32 %v3034, 0.70710677
        %v3056 = vmul.f32 %v3038, 0.70710677
        %v3057 = vmul.f32 %v3040, 0.70710677
        %v3058 = vmul.f32 %v3044, 0.70710677
        %v3059 = vmul.f32 %v3046, 0.70710677
        %v3060 = verf.f32.pop %v3054
        %v3061 = verf.f32.pop %v3055
        %v3062 = verf.f32.pop %v3056
        %v3063 = verf.f32.pop %v3057
        %v3064 = verf.f32.pop %v3058
        %v3065 = verf.f32.pop %v3059
        %v3066 = vadd.f32 %v3060, 1.0
        %v3067 = vadd.f32 %v3061, 1.0
        %v3068 = vadd.f32 %v3062, 1.0
        %v3069 = vadd.f32 %v3063, 1.0
        %v3070 = vadd.f32 %v3064, 1.0
        %v3071 = vadd.f32 %v3065, 1.0
        %v3072 = vmul.f32 %v3048, %v3066
        %v3073 = vmul.f32 %v3049, %v3067
        %v3074 = vmul.f32 %v3050, %v3068
        %v3075 = vmul.f32 %v3051, %v3069
        %v3076 = vmul.f32 %v3052, %v3070
        %v3077 = vmul.f32 %v3053, %v3071
        %v3078 = vld [vmem:[#allocation9] sm:$0xff]
        %v3079 = vld [vmem:[#allocation9 + $0x8] sm:$0xf]
        %vm3080 = vcmask 195584
        %v3082 = vsel %vm3080, %v3078, 0
        %v3085 = vsel %vm3080, %v3079, 0
        %3087 = vmatprep.subr.mxu0 %v3073
        %3088 = vmatpush1.msra.mxu0 %v3072
        %3089 = vmatprep.subr.mxu0 %v3075
        %3090 = vmatpush1.msra.mxu0 %v3074
        %3091 = vmatprep.subr.mxu0 %v3077
        %3092 = vmatpush1.msra.mxu0 %v3076
        %3093 = vmatprep.subr.mxu0 0.0
        %3094 = vmatpush1.msra.mxu0 0.0
        %3095 = vmatprep.subr.mxu0 0.0
        %3096 = vmatpush1.msra.mxu0 0.0
        %3097 = vmatprep.subr.mxu0 0.0
        %3098 = vmatpush1.msra.mxu0 0.0
        %3099 = vmatprep.subr.mxu0 0.0
        %3100 = vmatpush1.msra.mxu0 0.0
        %3101 = vmatprep.subr.mxu0 0.0
        %3102 = vmatpush1.msra.mxu0 0.0
        %3103 = vmatprep.subr.mxu0 0.0
        %3104 = vmatpush1.msra.mxu0 0.0
        %3105 = vmatprep.subr.mxu0 0.0
        %3106 = vmatpush1.msra.mxu0 0.0
        %3107 = vmatprep.subr.mxu0 0.0
        %3108 = vmatpush1.msra.mxu0 0.0
        %3109 = vmatprep.subr.mxu0 0.0
        %3110 = vmatpush1.msra.mxu0 0.0
        %3111 = vmatprep.subr.mxu0 0.0
        %3112 = vmatpush1.msra.mxu0 0.0
        %3113 = vmatprep.subr.mxu0 0.0
        %3114 = vmatpush1.msra.mxu0 0.0
        %3115 = vmatprep.subr.mxu0 0.0
        %3116 = vmatpush1.msra.mxu0 0.0
        %3117 = vmatprep.subr.mxu0 0.0
        %3118 = vmatpush1.msra.mxu0 0.0
        %3119 = vmatprep.subr.mxu0 0.0
        %3120 = vmatpush1.msra.mxu0 0.0
        %3121 = vmatprep.subr.mxu0 0.0
        %3122 = vmatpush1.msra.mxu0 0.0
        %3123 = vmatprep.subr.mxu0 0.0
        %3124 = vmatpush1.msra.mxu0 0.0
        %3125 = vmatprep.subr.mxu0 0.0
        %3126 = vmatpush1.msra.mxu0 0.0
        %3127 = vmatprep.subr.mxu0 0.0
        %3128 = vmatpush1.msra.mxu0 0.0
        %3129 = vmatprep.subr.mxu0 0.0
        %3130 = vmatpush1.msra.mxu0 0.0
        %3131 = vmatprep.subr.mxu0 0.0
        %3132 = vmatpush1.msra.mxu0 0.0
        %3133 = vmatprep.subr.mxu0 0.0
        %3134 = vmatpush1.msra.mxu0 0.0
        %3135 = vmatprep.subr.mxu0 0.0
        %3136 = vmatpush1.msra.mxu0 0.0
        %3137 = vmatprep.subr.mxu0 0.0
        %3138 = vmatpush1.msra.mxu0 0.0
        %3139 = vmatprep.subr.mxu0 0.0
        %3140 = vmatpush1.msra.mxu0 0.0
        %3141 = vmatprep.subr.mxu0 0.0
        %3142 = vmatpush1.msra.mxu0 0.0
        %3143 = vmatprep.subr.mxu0 0.0
        %3144 = vmatpush1.msra.mxu0 0.0
        %3145 = vmatprep.subr.mxu0 0.0
        %3146 = vmatpush1.msra.mxu0 0.0
        %3147 = vmatprep.subr.mxu0 0.0
        %3148 = vmatpush1.msra.mxu0 0.0
        %3149 = vmatprep.subr.mxu0 0.0
        %3150 = vmatpush1.msra.mxu0 0.0
        %3151 = vmatprep.mubr.f32.mxu0 0.0
        %3152 = vmatmul.mubr.f32.gmra.mrb[0].mxu0 %v3082
        %v3153 = vpop.f32.mrb[0].mxu0
        %v3154 = vadd.f32 0.0, %v3153
        %v3155 = vpop.f32.mrb[0].mxu0
        %v3156 = vadd.f32 0.0, %v3155
        %3157 = vmatprep.mubr.f32.mxu0 0.0
        %3158 = vmatmul.mubr.f32.gmra.mrb[0].mxu0 %v3085
        %v3159 = vpop.f32.mrb[0].mxu0
        %v3160 = vadd.f32 0.0, %v3159
        %v3161 = vpop.f32.mrb[0].mxu0
        %v3162 = vadd.f32 0.0, %v3161
        %3163 = vdwg.mxu0
        %v3164 = vadd.f32 %v1846, %v3154
        %v3165 = vadd.f32 %v1847, %v3156
        %v3166 = vadd.f32 %v1848, %v3160
        %v3167 = vadd.f32 %v1849, %v3162
        %3170 = vrot.lane.b32.xlu0 %v3164, 2
        %v3171 = vpop.permute.xlu0 %3170
        %3172 = vrot.lane.b32.xlu0 %v3165, 2
        %v3173 = vpop.permute.xlu0 %3172
        %v3174 = vsel %vm2424, %v3171, %v3173
        %v3177 = vsel %vm2424, 0.0, %v3171
        %v3178 = vsel %vm2429, 1, 0
        %v3179 = vsel %vm2430, 1, 0
        %vm3180 = vcmp.eq.s32.totalorder %v3178, 1
        %vm3181 = vcmp.eq.s32.totalorder %v3179, 1
        %v3182 = vsel %vm3180, %v3177, 0.0
        %v3183 = vsel %vm3181, %v3174, 0.0
        %3184 = vrot.lane.b32.xlu0 %v3164, 126
        %v3185 = vpop.permute.xlu0 %3184
        %3186 = vrot.lane.b32.xlu0 %v3165, 126
        %v3187 = vpop.permute.xlu0 %3186
        %v3188 = vsel %vm2457, %v3185, %v3187
        %v3191 = vsel %vm2457, %v3187, 0.0
        %v3192 = vsel %vm2462, 1, 0
        %v3193 = vsel %vm2463, 1, 0
        %vm3194 = vcmp.eq.s32.totalorder %v3192, 1
        %vm3195 = vcmp.eq.s32.totalorder %v3193, 1
        %v3196 = vsel %vm3194, %v3188, 0.0
        %v3197 = vsel %vm3195, %v3191, 0.0
        %v3198 = vrot.slane %v3164, 2
        %v3199 = vrot.slane %v3165, 2
        %v3204 = vrot.slane %v3196, 4
        %v3205 = vrot.slane %v3197, 4
        %v3208 = vsel %vm1494, %v3182, %v3198
        %v3209 = vsel %vm1494, %v3183, %v3199
        %v3210 = vsel %vm1884, %v3198, %v3204
        %v3211 = vsel %vm1884, %v3199, %v3205
        %v3212 = vld [vmem:[#allocation19] sm:$0x3f]
        %v3214 = vsel %vm1888, %v3212, 0
        %v3216 = vsel %vm1892, %v3204, 0
        %v3218 = vsel %vm1892, %v3205, 0
        %3220 = vmatprep.subr.mxu0 %v3209
        %3221 = vmatpush1.msra.mxu0 %v3208
        %3222 = vmatprep.subr.mxu0 %v3211
        %3223 = vmatpush1.msra.mxu0 %v3210
        %3224 = vmatprep.subr.mxu0 %v3218
        %3225 = vmatpush1.msra.mxu0 %v3216
        %3226 = vmatprep.subr.mxu0 0.0
        %3227 = vmatpush1.msra.mxu0 0.0
        %3228 = vmatprep.subr.mxu0 0.0
        %3229 = vmatpush1.msra.mxu0 0.0
        %3230 = vmatprep.subr.mxu0 0.0
        %3231 = vmatpush1.msra.mxu0 0.0
        %3232 = vmatprep.subr.mxu0 0.0
        %3233 = vmatpush1.msra.mxu0 0.0
        %3234 = vmatprep.subr.mxu0 0.0
        %3235 = vmatpush1.msra.mxu0 0.0
        %3236 = vmatprep.subr.mxu0 0.0
        %3237 = vmatpush1.msra.mxu0 0.0
        %3238 = vmatprep.subr.mxu0 0.0
        %3239 = vmatpush1.msra.mxu0 0.0
        %3240 = vmatprep.subr.mxu0 0.0
        %3241 = vmatpush1.msra.mxu0 0.0
        %3242 = vmatprep.subr.mxu0 0.0
        %3243 = vmatpush1.msra.mxu0 0.0
        %3244 = vmatprep.subr.mxu0 0.0
        %3245 = vmatpush1.msra.mxu0 0.0
        %3246 = vmatprep.subr.mxu0 0.0
        %3247 = vmatpush1.msra.mxu0 0.0
        %3248 = vmatprep.subr.mxu0 0.0
        %3249 = vmatpush1.msra.mxu0 0.0
        %3250 = vmatprep.subr.mxu0 0.0
        %3251 = vmatpush1.msra.mxu0 0.0
        %3252 = vmatprep.subr.mxu0 0.0
        %3253 = vmatpush1.msra.mxu0 0.0
        %3254 = vmatprep.subr.mxu0 0.0
        %3255 = vmatpush1.msra.mxu0 0.0
        %3256 = vmatprep.subr.mxu0 0.0
        %3257 = vmatpush1.msra.mxu0 0.0
        %3258 = vmatprep.subr.mxu0 0.0
        %3259 = vmatpush1.msra.mxu0 0.0
        %3260 = vmatprep.subr.mxu0 0.0
        %3261 = vmatpush1.msra.mxu0 0.0
        %3262 = vmatprep.subr.mxu0 0.0
        %3263 = vmatpush1.msra.mxu0 0.0
        %3264 = vmatprep.subr.mxu0 0.0
        %3265 = vmatpush1.msra.mxu0 0.0
        %3266 = vmatprep.subr.mxu0 0.0
        %3267 = vmatpush1.msra.mxu0 0.0
        %3268 = vmatprep.subr.mxu0 0.0
        %3269 = vmatpush1.msra.mxu0 0.0
        %3270 = vmatprep.subr.mxu0 0.0
        %3271 = vmatpush1.msra.mxu0 0.0
        %3272 = vmatprep.subr.mxu0 0.0
        %3273 = vmatpush1.msra.mxu0 0.0
        %3274 = vmatprep.subr.mxu0 0.0
        %3275 = vmatpush1.msra.mxu0 0.0
        %3276 = vmatprep.subr.mxu0 0.0
        %3277 = vmatpush1.msra.mxu0 0.0
        %3278 = vmatprep.subr.mxu0 0.0
        %3279 = vmatpush1.msra.mxu0 0.0
        %3280 = vmatprep.subr.mxu0 0.0
        %3281 = vmatpush1.msra.mxu0 0.0
        %3282 = vmatprep.subr.mxu0 0.0
        %3283 = vmatpush1.msra.mxu0 0.0
        %3284 = vmatprep.mubr.f32.mxu0 0.0
        %3285 = vmatmul.mubr.f32.gmra.mrb[0].mxu0 %v3214
        %v3286 = vpop.f32.mrb[0].mxu0
        %v3287 = vadd.f32 0.0, %v3286
        %v3288 = vpop.f32.mrb[0].mxu0
        %v3289 = vadd.f32 0.0, %v3288
        %3290 = vdwg.mxu0
        %3293 = vrot.lane.b32.xlu0 %v3287, 32
        %v3294 = vpop.permute.xlu0 %3293
        %3295 = vrot.lane.b32.xlu0 %v3289, 32
        %v3296 = vpop.permute.xlu0 %3295
        %v3297 = vsel %vm2706, %v3294, %v3296
        %v3300 = vsel %vm2706, 0.0, %v3294
        %v3301 = vadd.f32 %v3300, 0.0
        %v3302 = vadd.f32 %v3297, 0.0
        %s3303 = scalar_lea.vmem [#allocation19], 8
        %v3304 = vld [vmem:[%s3303] sm:$0x3f]
        %v3306 = vsel %vm1888, %v3304, 0
        %3308 = vmatprep.subr.mxu0 %v3209
        %3309 = vmatpush1.msra.mxu0 %v3208
        %3310 = vmatprep.subr.mxu0 %v3211
        %3311 = vmatpush1.msra.mxu0 %v3210
        %3312 = vmatprep.subr.mxu0 %v3218
        %3313 = vmatpush1.msra.mxu0 %v3216
        %3314 = vmatprep.subr.mxu0 0.0
        %3315 = vmatpush1.msra.mxu0 0.0
        %3316 = vmatprep.subr.mxu0 0.0
        %3317 = vmatpush1.msra.mxu0 0.0
        %3318 = vmatprep.subr.mxu0 0.0
        %3319 = vmatpush1.msra.mxu0 0.0
        %3320 = vmatprep.subr.mxu0 0.0
        %3321 = vmatpush1.msra.mxu0 0.0
        %3322 = vmatprep.subr.mxu0 0.0
        %3323 = vmatpush1.msra.mxu0 0.0
        %3324 = vmatprep.subr.mxu0 0.0
        %3325 = vmatpush1.msra.mxu0 0.0
        %3326 = vmatprep.subr.mxu0 0.0
        %3327 = vmatpush1.msra.mxu0 0.0
        %3328 = vmatprep.subr.mxu0 0.0
        %3329 = vmatpush1.msra.mxu0 0.0
        %3330 = vmatprep.subr.mxu0 0.0
        %3331 = vmatpush1.msra.mxu0 0.0
        %3332 = vmatprep.subr.mxu0 0.0
        %3333 = vmatpush1.msra.mxu0 0.0
        %3334 = vmatprep.subr.mxu0 0.0
        %3335 = vmatpush1.msra.mxu0 0.0
        %3336 = vmatprep.subr.mxu0 0.0
        %3337 = vmatpush1.msra.mxu0 0.0
        %3338 = vmatprep.subr.mxu0 0.0
        %3339 = vmatpush1.msra.mxu0 0.0
        %3340 = vmatprep.subr.mxu0 0.0
        %3341 = vmatpush1.msra.mxu0 0.0
        %3342 = vmatprep.subr.mxu0 0.0
        %3343 = vmatpush1.msra.mxu0 0.0
        %3344 = vmatprep.subr.mxu0 0.0
        %3345 = vmatpush1.msra.mxu0 0.0
        %3346 = vmatprep.subr.mxu0 0.0
        %3347 = vmatpush1.msra.mxu0 0.0
        %3348 = vmatprep.subr.mxu0 0.0
        %3349 = vmatpush1.msra.mxu0 0.0
        %3350 = vmatprep.subr.mxu0 0.0
        %3351 = vmatpush1.msra.mxu0 0.0
        %3352 = vmatprep.subr.mxu0 0.0
        %3353 = vmatpush1.msra.mxu0 0.0
        %3354 = vmatprep.subr.mxu0 0.0
        %3355 = vmatpush1.msra.mxu0 0.0
        %3356 = vmatprep.subr.mxu0 0.0
        %3357 = vmatpush1.msra.mxu0 0.0
        %3358 = vmatprep.subr.mxu0 0.0
        %3359 = vmatpush1.msra.mxu0 0.0
        %3360 = vmatprep.subr.mxu0 0.0
        %3361 = vmatpush1.msra.mxu0 0.0
        %3362 = vmatprep.subr.mxu0 0.0
        %3363 = vmatpush1.msra.mxu0 0.0
        %3364 = vmatprep.subr.mxu0 0.0
        %3365 = vmatpush1.msra.mxu0 0.0
        %3366 = vmatprep.subr.mxu0 0.0
        %3367 = vmatpush1.msra.mxu0 0.0
        %3368 = vmatprep.subr.mxu0 0.0
        %3369 = vmatpush1.msra.mxu0 0.0
        %3370 = vmatprep.subr.mxu0 0.0
        %3371 = vmatpush1.msra.mxu0 0.0
        %3372 = vmatprep.mubr.f32.mxu0 0.0
        %3373 = vmatmul.mubr.f32.gmra.mrb[0].mxu0 %v3306
        %v3374 = vpop.f32.mrb[0].mxu0
        %v3375 = vadd.f32 0.0, %v3374
        %v3376 = vpop.f32.mrb[0].mxu0
        %v3377 = vadd.f32 0.0, %v3376
        %3378 = vdwg.mxu0
        %v3379 = vadd.f32 %v3301, %v3375
        %v3380 = vadd.f32 %v3302, %v3377
        %s3381 = scalar_lea.vmem [#allocation19], 16
        %v3382 = vld [vmem:[%s3381] sm:$0x3f]
        %v3384 = vsel %vm1888, %v3382, 0
        %3386 = vmatprep.subr.mxu0 %v3209
        %3387 = vmatpush1.msra.mxu0 %v3208
        %3388 = vmatprep.subr.mxu0 %v3211
        %3389 = vmatpush1.msra.mxu0 %v3210
        %3390 = vmatprep.subr.mxu0 %v3218
        %3391 = vmatpush1.msra.mxu0 %v3216
        %3392 = vmatprep.subr.mxu0 0.0
        %3393 = vmatpush1.msra.mxu0 0.0
        %3394 = vmatprep.subr.mxu0 0.0
        %3395 = vmatpush1.msra.mxu0 0.0
        %3396 = vmatprep.subr.mxu0 0.0
        %3397 = vmatpush1.msra.mxu0 0.0
        %3398 = vmatprep.subr.mxu0 0.0
        %3399 = vmatpush1.msra.mxu0 0.0
        %3400 = vmatprep.subr.mxu0 0.0
        %3401 = vmatpush1.msra.mxu0 0.0
        %3402 = vmatprep.subr.mxu0 0.0
        %3403 = vmatpush1.msra.mxu0 0.0
        %3404 = vmatprep.subr.mxu0 0.0
        %3405 = vmatpush1.msra.mxu0 0.0
        %3406 = vmatprep.subr.mxu0 0.0
        %3407 = vmatpush1.msra.mxu0 0.0
        %3408 = vmatprep.subr.mxu0 0.0
        %3409 = vmatpush1.msra.mxu0 0.0
        %3410 = vmatprep.subr.mxu0 0.0
        %3411 = vmatpush1.msra.mxu0 0.0
        %3412 = vmatprep.subr.mxu0 0.0
        %3413 = vmatpush1.msra.mxu0 0.0
        %3414 = vmatprep.subr.mxu0 0.0
        %3415 = vmatpush1.msra.mxu0 0.0
        %3416 = vmatprep.subr.mxu0 0.0
        %3417 = vmatpush1.msra.mxu0 0.0
        %3418 = vmatprep.subr.mxu0 0.0
        %3419 = vmatpush1.msra.mxu0 0.0
        %3420 = vmatprep.subr.mxu0 0.0
        %3421 = vmatpush1.msra.mxu0 0.0
        %3422 = vmatprep.subr.mxu0 0.0
        %3423 = vmatpush1.msra.mxu0 0.0
        %3424 = vmatprep.subr.mxu0 0.0
        %3425 = vmatpush1.msra.mxu0 0.0
        %3426 = vmatprep.subr.mxu0 0.0
        %3427 = vmatpush1.msra.mxu0 0.0
        %3428 = vmatprep.subr.mxu0 0.0
        %3429 = vmatpush1.msra.mxu0 0.0
        %3430 = vmatprep.subr.mxu0 0.0
        %3431 = vmatpush1.msra.mxu0 0.0
        %3432 = vmatprep.subr.mxu0 0.0
        %3433 = vmatpush1.msra.mxu0 0.0
        %3434 = vmatprep.subr.mxu0 0.0
        %3435 = vmatpush1.msra.mxu0 0.0
        %3436 = vmatprep.subr.mxu0 0.0
        %3437 = vmatpush1.msra.mxu0 0.0
        %3438 = vmatprep.subr.mxu0 0.0
        %3439 = vmatpush1.msra.mxu0 0.0
        %3440 = vmatprep.subr.mxu0 0.0
        %3441 = vmatpush1.msra.mxu0 0.0
        %3442 = vmatprep.subr.mxu0 0.0
        %3443 = vmatpush1.msra.mxu0 0.0
        %3444 = vmatprep.subr.mxu0 0.0
        %3445 = vmatpush1.msra.mxu0 0.0
        %3446 = vmatprep.subr.mxu0 0.0
        %3447 = vmatpush1.msra.mxu0 0.0
        %3448 = vmatprep.subr.mxu0 0.0
        %3449 = vmatpush1.msra.mxu0 0.0
        %3450 = vmatprep.mubr.f32.mxu0 0.0
        %3451 = vmatmul.mubr.f32.gmra.mrb[0].mxu0 %v3384
        %v3452 = vpop.f32.mrb[0].mxu0
        %v3453 = vadd.f32 0.0, %v3452
        %v3454 = vpop.f32.mrb[0].mxu0
        %v3455 = vadd.f32 0.0, %v3454
        %3456 = vdwg.mxu0
        %3459 = vrot.lane.b32.xlu0 %v3453, 96
        %v3460 = vpop.permute.xlu0 %3459
        %3461 = vrot.lane.b32.xlu0 %v3455, 96
        %v3462 = vpop.permute.xlu0 %3461
        %v3463 = vsel %vm2857, %v3460, %v3462
        %v3466 = vsel %vm2857, %v3462, 0.0
        %v3467 = vadd.f32 %v3379, %v3463
        %v3468 = vadd.f32 %v3380, %v3466
        %v3469 = vsel %vm1494, %v3467, %v3164
        %v3470 = vsel %vm1494, %v3468, %v3165
        %v3471 = vadd.f32 %v3469, %v3470
        %3472 = vadd.xlane.f32.xlu0 %v3471
        %v3473 = vpop.xlane.xlu0 %3472
        %v3474 = vsel %vm1884, %v3166, 0.0
        %v3475 = vsel %vm1884, %v3167, 0.0
        %v3476 = vadd.f32 %v3474, %v3475
        %3477 = vadd.xlane.f32.xlu0 %v3476
        %v3478 = vpop.xlane.xlu0 %3477
        %v3479 = vmul.f32 %v3473, %v2156
        %v3480 = vmul.f32 %v3478, %v2156
        %v3481 = vmax.f32 %v3469, %v3470
        %3482 = vmax.xlane.f32.xlu0 %v3481
        %v3483 = vpop.xlane.xlu0 %3482
        %v3484 = vsel %vm1884, %v3166, -inf
        %v3485 = vsel %vm1884, %v3167, -inf
        %v3486 = vmax.f32 %v3484, %v3485
        %3487 = vmax.xlane.f32.xlu0 %v3486
        %v3488 = vpop.xlane.xlu0 %3487
        %v3489 = vsel %vm1451, %v3479, %v3483
        %v3490 = vsel %vm1451, %v3480, %v3488
        %v3491 = vld [vmem:[#allocation12] sm:$0x7]
        %v3493 = vsel %vm2170, %v3491, 0
        %v3496 = vsel %vm1884, %v3490, 0
        %3498 = vmatprep.subr.mxu0 0.0
        %3499 = vmatpush1.msra.mxu0 %v3489
        %3500 = vmatprep.subr.mxu0 0.0
        %3501 = vmatpush1.msra.mxu0 %v3496
        %3502 = vmatprep.subr.mxu0 0.0
        %3503 = vmatpush1.msra.mxu0 0.0
        %3504 = vmatprep.subr.mxu0 0.0
        %3505 = vmatpush1.msra.mxu0 0.0
        %3506 = vmatprep.subr.mxu0 0.0
        %3507 = vmatpush1.msra.mxu0 0.0
        %3508 = vmatprep.subr.mxu0 0.0
        %3509 = vmatpush1.msra.mxu0 0.0
        %3510 = vmatprep.subr.mxu0 0.0
        %3511 = vmatpush1.msra.mxu0 0.0
        %3512 = vmatprep.subr.mxu0 0.0
        %3513 = vmatpush1.msra.mxu0 0.0
        %3514 = vmatprep.subr.mxu0 0.0
        %3515 = vmatpush1.msra.mxu0 0.0
        %3516 = vmatprep.subr.mxu0 0.0
        %3517 = vmatpush1.msra.mxu0 0.0
        %3518 = vmatprep.subr.mxu0 0.0
        %3519 = vmatpush1.msra.mxu0 0.0
        %3520 = vmatprep.subr.mxu0 0.0
        %3521 = vmatpush1.msra.mxu0 0.0
        %3522 = vmatprep.subr.mxu0 0.0
        %3523 = vmatpush1.msra.mxu0 0.0
        %3524 = vmatprep.subr.mxu0 0.0
        %3525 = vmatpush1.msra.mxu0 0.0
        %3526 = vmatprep.subr.mxu0 0.0
        %3527 = vmatpush1.msra.mxu0 0.0
        %3528 = vmatprep.subr.mxu0 0.0
        %3529 = vmatpush1.msra.mxu0 0.0
        %3530 = vmatprep.subr.mxu0 0.0
        %3531 = vmatpush1.msra.mxu0 0.0
        %3532 = vmatprep.subr.mxu0 0.0
        %3533 = vmatpush1.msra.mxu0 0.0
        %3534 = vmatprep.subr.mxu0 0.0
        %3535 = vmatpush1.msra.mxu0 0.0
        %3536 = vmatprep.subr.mxu0 0.0
        %3537 = vmatpush1.msra.mxu0 0.0
        %3538 = vmatprep.subr.mxu0 0.0
        %3539 = vmatpush1.msra.mxu0 0.0
        %3540 = vmatprep.subr.mxu0 0.0
        %3541 = vmatpush1.msra.mxu0 0.0
        %3542 = vmatprep.subr.mxu0 0.0
        %3543 = vmatpush1.msra.mxu0 0.0
        %3544 = vmatprep.subr.mxu0 0.0
        %3545 = vmatpush1.msra.mxu0 0.0
        %3546 = vmatprep.subr.mxu0 0.0
        %3547 = vmatpush1.msra.mxu0 0.0
        %3548 = vmatprep.subr.mxu0 0.0
        %3549 = vmatpush1.msra.mxu0 0.0
        %3550 = vmatprep.subr.mxu0 0.0
        %3551 = vmatpush1.msra.mxu0 0.0
        %3552 = vmatprep.subr.mxu0 0.0
        %3553 = vmatpush1.msra.mxu0 0.0
        %3554 = vmatprep.subr.mxu0 0.0
        %3555 = vmatpush1.msra.mxu0 0.0
        %3556 = vmatprep.subr.mxu0 0.0
        %3557 = vmatpush1.msra.mxu0 0.0
        %3558 = vmatprep.subr.mxu0 0.0
        %3559 = vmatpush1.msra.mxu0 0.0
        %3560 = vmatprep.subr.mxu0 0.0
        %3561 = vmatpush1.msra.mxu0 0.0
        %3562 = vmatprep.mubr.f32.mxu0 0.0
        %3563 = vmatmul.mubr.f32.gmra.mrb[0].mxu0 %v3493
        %v3564 = vpop.f32.mrb[0].mxu0
        %v3565 = vadd.f32 0.0, %v3564
        %v3566 = vpop.f32.mrb[0].mxu0
        %3567 = vdwg.mxu0
        %v3568 = vmax.f32 %v3565, 0.0
        %v3569 = vld [vmem:[#allocation13] sm:$0xff]
        %v3570 = vld [vmem:[#allocation13 + $0x8] sm:$0xf]
        %v3572 = vsel %vm2250, %v3569, 0
        %v3575 = vsel %vm2250, %v3570, 0
        %v3578 = vsel %vm1491, %v3568, 0
        %3580 = vmatprep.subr.mxu0 0.0
        %3581 = vmatpush1.msra.mxu0 %v3578
        %3582 = vmatprep.subr.mxu0 0.0
        %3583 = vmatpush1.msra.mxu0 0.0
        %3584 = vmatprep.subr.mxu0 0.0
        %3585 = vmatpush1.msra.mxu0 0.0
        %3586 = vmatprep.subr.mxu0 0.0
        %3587 = vmatpush1.msra.mxu0 0.0
        %3588 = vmatprep.subr.mxu0 0.0
        %3589 = vmatpush1.msra.mxu0 0.0
        %3590 = vmatprep.subr.mxu0 0.0
        %3591 = vmatpush1.msra.mxu0 0.0
        %3592 = vmatprep.subr.mxu0 0.0
        %3593 = vmatpush1.msra.mxu0 0.0
        %3594 = vmatprep.subr.mxu0 0.0
        %3595 = vmatpush1.msra.mxu0 0.0
        %3596 = vmatprep.subr.mxu0 0.0
        %3597 = vmatpush1.msra.mxu0 0.0
        %3598 = vmatprep.subr.mxu0 0.0
        %3599 = vmatpush1.msra.mxu0 0.0
        %3600 = vmatprep.subr.mxu0 0.0
        %3601 = vmatpush1.msra.mxu0 0.0
        %3602 = vmatprep.subr.mxu0 0.0
        %3603 = vmatpush1.msra.mxu0 0.0
        %3604 = vmatprep.subr.mxu0 0.0
        %3605 = vmatpush1.msra.mxu0 0.0
        %3606 = vmatprep.subr.mxu0 0.0
        %3607 = vmatpush1.msra.mxu0 0.0
        %3608 = vmatprep.subr.mxu0 0.0
        %3609 = vmatpush1.msra.mxu0 0.0
        %3610 = vmatprep.subr.mxu0 0.0
        %3611 = vmatpush1.msra.mxu0 0.0
        %3612 = vmatprep.subr.mxu0 0.0
        %3613 = vmatpush1.msra.mxu0 0.0
        %3614 = vmatprep.subr.mxu0 0.0
        %3615 = vmatpush1.msra.mxu0 0.0
        %3616 = vmatprep.subr.mxu0 0.0
        %3617 = vmatpush1.msra.mxu0 0.0
        %3618 = vmatprep.subr.mxu0 0.0
        %3619 = vmatpush1.msra.mxu0 0.0
        %3620 = vmatprep.subr.mxu0 0.0
        %3621 = vmatpush1.msra.mxu0 0.0
        %3622 = vmatprep.subr.mxu0 0.0
        %3623 = vmatpush1.msra.mxu0 0.0
        %3624 = vmatprep.subr.mxu0 0.0
        %3625 = vmatpush1.msra.mxu0 0.0
        %3626 = vmatprep.subr.mxu0 0.0
        %3627 = vmatpush1.msra.mxu0 0.0
        %3628 = vmatprep.subr.mxu0 0.0
        %3629 = vmatpush1.msra.mxu0 0.0
        %3630 = vmatprep.subr.mxu0 0.0
        %3631 = vmatpush1.msra.mxu0 0.0
        %3632 = vmatprep.subr.mxu0 0.0
        %3633 = vmatpush1.msra.mxu0 0.0
        %3634 = vmatprep.subr.mxu0 0.0
        %3635 = vmatpush1.msra.mxu0 0.0
        %3636 = vmatprep.subr.mxu0 0.0
        %3637 = vmatpush1.msra.mxu0 0.0
        %3638 = vmatprep.subr.mxu0 0.0
        %3639 = vmatpush1.msra.mxu0 0.0
        %3640 = vmatprep.subr.mxu0 0.0
        %3641 = vmatpush1.msra.mxu0 0.0
        %3642 = vmatprep.subr.mxu0 0.0
        %3643 = vmatpush1.msra.mxu0 0.0
        %3644 = vmatprep.mubr.f32.mxu0 0.0
        %3645 = vmatmul.mubr.f32.gmra.mrb[0].mxu0 %v3572
        %v3646 = vpop.f32.mrb[0].mxu0
        %v3647 = vadd.f32 0.0, %v3646
        %v3648 = vpop.f32.mrb[0].mxu0
        %3649 = vmatprep.mubr.f32.mxu0 0.0
        %3650 = vmatmul.mubr.f32.gmra.mrb[0].mxu0 %v3575
        %v3651 = vpop.f32.mrb[0].mxu0
        %v3652 = vadd.f32 0.0, %v3651
        %v3653 = vpop.f32.mrb[0].mxu0
        %3654 = vdwg.mxu0
        %3657 = vrot.lane.b32.xlu0 %v3647, 127
        %v3658 = vpop.permute.xlu0 %3657
        %3659 = vrot.lane.b32.xlu0 %v3652, 127
        %v3660 = vpop.permute.xlu0 %3659
        %v3663 = vadd.f32 %v3647, %v3658
        %v3664 = vadd.f32 %v3652, %v3660
        %v3665 = vxor.u32 %v3663, 2147483648
        %v3666 = vxor.u32 %v3664, 2147483648
        %v3667 = vmul.f32 %v3665, 1.442695
        %v3668 = vpow.pop %v3667
        %v3669 = vmul.f32 %v3666, 1.442695
        %v3670 = vpow.pop %v3669
        %v3671 = vadd.f32 %v3668, 1.0
        %v3672 = vadd.f32 %v3670, 1.0
        %v3673 = vrcp.pop %v3671
        %v3674 = vmul.f32 1.0, %v3673
        %v3675 = vrcp.pop %v3672
        %v3676 = vmul.f32 1.0, %v3675
        %3678 = vset.pattern.permute.xlu0 0
        %3679 = vperm.xlu0 %3678, %v3674
        %v3680 = vpop.permute.xlu0 %3679
        %3683 = vset.pattern.permute.xlu0 0
        %3684 = vperm.xlu0 %3683, %v3676
        %v3685 = vpop.permute.xlu0 %3684
        %v3687 = vmul.f32 %v3469, %v3680
        %v3688 = vmul.f32 %v3470, %v3680
        %v3689 = vmul.f32 %v3166, %v3685
        %v3690 = vmul.f32 %v3167, %v3685
        %v3691 = vsel %vm1884, %v3689, 0.0
        %v3692 = vadd.f32 %v3687, %v3691
        %v3693 = vrot.slane %v3692, 4
        %v3694 = vadd.f32 %v3692, %v3693
        %v3695 = vrot.slane %v3694, 2
        %v3696 = vadd.f32 %v3694, %v3695
        %v3697 = vrot.slane %v3696, 1
        %v3698 = vadd.f32 %v3696, %v3697
        %v3699 = vsel %vm1884, %v3690, 0.0
        %v3700 = vadd.f32 %v3688, %v3699
        %v3701 = vrot.slane %v3700, 4
        %v3702 = vadd.f32 %v3700, %v3701
        %v3703 = vrot.slane %v3702, 2
        %v3704 = vadd.f32 %v3702, %v3703
        %v3705 = vrot.slane %v3704, 1
        %v3706 = vadd.f32 %v3704, %v3705
        %v3707 = vmul.f32 %v3698, %v2387
        %v3708 = vmul.f32 %v3706, %v2387
        %v3709 = vsel %vm1884, %v3689, -inf
        %v3710 = vmax.f32 %v3687, %v3709
        %v3711 = vrot.slane %v3710, 4
        %v3712 = vmax.f32 %v3710, %v3711
        %v3713 = vrot.slane %v3712, 2
        %v3714 = vmax.f32 %v3712, %v3713
        %v3715 = vrot.slane %v3714, 1
        %v3716 = vmax.f32 %v3714, %v3715
        %v3717 = vsel %vm1884, %v3690, -inf
        %v3718 = vmax.f32 %v3688, %v3717
        %v3719 = vrot.slane %v3718, 4
        %v3720 = vmax.f32 %v3718, %v3719
        %v3721 = vrot.slane %v3720, 2
        %v3722 = vmax.f32 %v3720, %v3721
        %v3723 = vrot.slane %v3722, 1
        %v3724 = vmax.f32 %v3722, %v3723
        %3727 = vrot.lane.b32.xlu0 %v3707, 3
        %v3728 = vpop.permute.xlu0 %3727
        %3729 = vrot.lane.b32.xlu0 %v3708, 3
        %v3730 = vpop.permute.xlu0 %3729
        %v3731 = vsel %vm2250, %v3728, %v3730
        %v3734 = vsel %vm2250, 0.0, %v3728
        %v3735 = vsel %vm2416, %v3734, 0.0
        %v3736 = vsel %vm2417, %v3731, 0.0
        %3737 = vrot.lane.b32.xlu0 %v3707, 2
        %v3738 = vpop.permute.xlu0 %3737
        %3739 = vrot.lane.b32.xlu0 %v3708, 2
        %v3740 = vpop.permute.xlu0 %3739
        %v3741 = vsel %vm2424, %v3738, %v3740
        %v3744 = vsel %vm2424, 0.0, %v3738
        %v3745 = vsel %vm2429, %v3744, 0.0
        %v3746 = vsel %vm2430, %v3741, 0.0
        %3747 = vrot.lane.b32.xlu0 %v3707, 1
        %v3748 = vpop.permute.xlu0 %3747
        %3749 = vrot.lane.b32.xlu0 %v3708, 1
        %v3750 = vpop.permute.xlu0 %3749
        %v3751 = vsel %vm1451, %v3748, %v3750
        %v3754 = vsel %vm1451, 0.0, %v3748
        %v3755 = vsel %vm1456, %v3754, 0.0
        %v3756 = vsel %vm1457, %v3751, 0.0
        %3757 = vrot.lane.b32.xlu0 %v3707, 127
        %v3758 = vpop.permute.xlu0 %3757
        %3759 = vrot.lane.b32.xlu0 %v3708, 127
        %v3760 = vpop.permute.xlu0 %3759
        %v3761 = vsel %vm1468, %v3758, %v3760
        %v3764 = vsel %vm1468, %v3760, 0.0
        %v3765 = vsel %vm1473, %v3761, 0.0
        %v3766 = vsel %vm1474, %v3764, 0.0
        %3767 = vrot.lane.b32.xlu0 %v3707, 126
        %v3768 = vpop.permute.xlu0 %3767
        %3769 = vrot.lane.b32.xlu0 %v3708, 126
        %v3770 = vpop.permute.xlu0 %3769
        %v3771 = vsel %vm2457, %v3768, %v3770
        %v3774 = vsel %vm2457, %v3770, 0.0
        %v3775 = vsel %vm2462, %v3771, 0.0
        %v3776 = vsel %vm2463, %v3774, 0.0
        %3777 = vrot.lane.b32.xlu0 %v3707, 125
        %v3778 = vpop.permute.xlu0 %3777
        %3779 = vrot.lane.b32.xlu0 %v3708, 125
        %v3780 = vpop.permute.xlu0 %3779
        %v3781 = vsel %vm2470, %v3778, %v3780
        %v3784 = vsel %vm2470, %v3780, 0.0
        %v3785 = vsel %vm2475, %v3781, 0.0
        %v3786 = vsel %vm2476, %v3784, 0.0
        %3789 = vrot.lane.b32.xlu0 %v3716, 3
        %v3790 = vpop.permute.xlu0 %3789
        %3791 = vrot.lane.b32.xlu0 %v3724, 3
        %v3792 = vpop.permute.xlu0 %3791
        %v3793 = vsel %vm2250, %v3790, %v3792
        %v3796 = vsel %vm2250, 0.0, %v3790
        %v3797 = vsel %vm2416, %v3796, 0.0
        %v3798 = vsel %vm2417, %v3793, 0.0
        %3799 = vrot.lane.b32.xlu0 %v3716, 2
        %v3800 = vpop.permute.xlu0 %3799
        %3801 = vrot.lane.b32.xlu0 %v3724, 2
        %v3802 = vpop.permute.xlu0 %3801
        %v3803 = vsel %vm2424, %v3800, %v3802
        %v3806 = vsel %vm2424, 0.0, %v3800
        %v3807 = vsel %vm2429, %v3806, 0.0
        %v3808 = vsel %vm2430, %v3803, 0.0
        %3809 = vrot.lane.b32.xlu0 %v3716, 1
        %v3810 = vpop.permute.xlu0 %3809
        %3811 = vrot.lane.b32.xlu0 %v3724, 1
        %v3812 = vpop.permute.xlu0 %3811
        %v3813 = vsel %vm1451, %v3810, %v3812
        %v3816 = vsel %vm1451, 0.0, %v3810
        %v3817 = vsel %vm1456, %v3816, 0.0
        %v3818 = vsel %vm1457, %v3813, 0.0
        %3819 = vrot.lane.b32.xlu0 %v3716, 127
        %v3820 = vpop.permute.xlu0 %3819
        %3821 = vrot.lane.b32.xlu0 %v3724, 127
        %v3822 = vpop.permute.xlu0 %3821
        %v3823 = vsel %vm1468, %v3820, %v3822
        %v3826 = vsel %vm1468, %v3822, 0.0
        %v3827 = vsel %vm1473, %v3823, 0.0
        %v3828 = vsel %vm1474, %v3826, 0.0
        %3829 = vrot.lane.b32.xlu0 %v3716, 126
        %v3830 = vpop.permute.xlu0 %3829
        %3831 = vrot.lane.b32.xlu0 %v3724, 126
        %v3832 = vpop.permute.xlu0 %3831
        %v3833 = vsel %vm2457, %v3830, %v3832
        %v3836 = vsel %vm2457, %v3832, 0.0
        %v3837 = vsel %vm2462, %v3833, 0.0
        %v3838 = vsel %vm2463, %v3836, 0.0
        %3839 = vrot.lane.b32.xlu0 %v3716, 125
        %v3840 = vpop.permute.xlu0 %3839
        %3841 = vrot.lane.b32.xlu0 %v3724, 125
        %v3842 = vpop.permute.xlu0 %3841
        %v3843 = vsel %vm2470, %v3840, %v3842
        %v3846 = vsel %vm2470, %v3842, 0.0
        %v3847 = vsel %vm2475, %v3843, 0.0
        %v3848 = vsel %vm2476, %v3846, 0.0
        %v3851 = vrot.slane %v3745, 7
        %v3852 = vrot.slane %v3746, 7
        %v3857 = vrot.slane %v3755, 6
        %v3858 = vrot.slane %v3756, 6
        %v3863 = vrot.slane %v3765, 4
        %v3864 = vrot.slane %v3766, 4
        %v3869 = vrot.slane %v3775, 3
        %v3870 = vrot.slane %v3776, 3
        %v3875 = vrot.slane %v3785, 2
        %v3876 = vrot.slane %v3786, 2
        %v3881 = vrot.slane %v3797, 1
        %v3882 = vrot.slane %v3798, 1
        %v3887 = vrot.slane %v3817, 7
        %v3888 = vrot.slane %v3818, 7
        %v3893 = vrot.slane %v3827, 5
        %v3894 = vrot.slane %v3828, 5
        %v3899 = vrot.slane %v3837, 4
        %v3900 = vrot.slane %v3838, 4
        %v3905 = vrot.slane %v3847, 3
        %v3906 = vrot.slane %v3848, 3
        %v3909 = vsel %vm1506, %v3735, %v3851
        %v3910 = vsel %vm1506, %v3736, %v3852
        %v3911 = vsel %vm1892, %v3909, %v3857
        %v3912 = vsel %vm1892, %v3910, %v3858
        %v3913 = vsel %vm1491, %v3911, %v3707
        %v3914 = vsel %vm1491, %v3912, %v3708
        %v3915 = vsel %vm1884, %v3913, %v3863
        %v3916 = vsel %vm1884, %v3914, %v3864
        %v3917 = vsel %vm2609, %v3915, %v3869
        %v3918 = vsel %vm2609, %v3916, %v3870
        %v3919 = vsel %vm1494, %v3917, %v3875
        %v3920 = vsel %vm1494, %v3918, %v3876
        %v3921 = vsel %vm2614, %v3919, %v3881
        %v3922 = vsel %vm2614, %v3920, %v3882
        %v3923 = vsel %vm1506, %v3807, %v3887
        %v3924 = vsel %vm1506, %v3808, %v3888
        %v3925 = vsel %vm1892, %v3923, %v3716
        %v3926 = vsel %vm1892, %v3924, %v3724
        %v3927 = vsel %vm1491, %v3925, %v3893
        %v3928 = vsel %vm1491, %v3926, %v3894
        %v3929 = vsel %vm1884, %v3927, %v3899
        %v3930 = vsel %vm1884, %v3928, %v3900
        %v3931 = vsel %vm2609, %v3929, %v3905
        %v3932 = vsel %vm2609, %v3930, %v3906
        %v3933 = vld [vmem:[#allocation15] sm:$0xff]
        %v3934 = vld [vmem:[#allocation15 + $0x8] sm:$0x3f]
        %3936 = vset.pattern.permute.xlu0 0
        %3937 = vperm.xlu0 %3936, %v3933
        %v3938 = vpop.permute.xlu0 %3937
        %3941 = vset.pattern.permute.xlu0 0
        %3942 = vperm.xlu0 %3941, %v3934
        %v3943 = vpop.permute.xlu0 %3942
        %v3945 = vmul.f32 %v3921, %v3938
        %v3946 = vmul.f32 %v3922, %v3938
        %v3947 = vmul.f32 %v3931, %v3943
        %v3948 = vmul.f32 %v3932, %v3943
        %v3949 = vsel %vm1494, %v3947, 0.0
        %v3950 = vadd.f32 %v3945, %v3949
        %v3951 = vrot.slane %v3950, 4
        %v3952 = vadd.f32 %v3950, %v3951
        %v3953 = vrot.slane %v3952, 2
        %v3954 = vadd.f32 %v3952, %v3953
        %v3955 = vrot.slane %v3954, 1
        %v3956 = vadd.f32 %v3954, %v3955
        %v3957 = vsel %vm1494, %v3948, 0.0
        %v3958 = vadd.f32 %v3946, %v3957
        %v3959 = vrot.slane %v3958, 4
        %v3960 = vadd.f32 %v3958, %v3959
        %v3961 = vrot.slane %v3960, 2
        %v3962 = vadd.f32 %v3960, %v3961
        %v3963 = vrot.slane %v3962, 1
        %v3964 = vadd.f32 %v3962, %v3963
        %3967 = vrot.lane.b32.xlu0 %v3956, 48
        %v3968 = vpop.permute.xlu0 %3967
        %3969 = vrot.lane.b32.xlu0 %v3964, 48
        %v3970 = vpop.permute.xlu0 %3969
        %v3971 = vsel %vm2665, %v3968, %v3970
        %v3974 = vsel %vm2665, 0.0, %v3968
        %v3975 = vadd.f32 %v3974, 0.0
        %v3976 = vadd.f32 %v3971, 0.0
        %3977 = vset.pattern.permute.xlu0 1
        %3978 = vperm.xlu0 %3977, %v3933
        %v3979 = vpop.permute.xlu0 %3978
        %3981 = vset.pattern.permute.xlu0 1
        %3982 = vperm.xlu0 %3981, %v3934
        %v3983 = vpop.permute.xlu0 %3982
        %v3985 = vmul.f32 %v3921, %v3979
        %v3986 = vmul.f32 %v3922, %v3979
        %v3987 = vmul.f32 %v3931, %v3983
        %v3988 = vmul.f32 %v3932, %v3983
        %v3989 = vsel %vm1494, %v3987, 0.0
        %v3990 = vadd.f32 %v3985, %v3989
        %v3991 = vrot.slane %v3990, 4
        %v3992 = vadd.f32 %v3990, %v3991
        %v3993 = vrot.slane %v3992, 2
        %v3994 = vadd.f32 %v3992, %v3993
        %v3995 = vrot.slane %v3994, 1
        %v3996 = vadd.f32 %v3994, %v3995
        %v3997 = vsel %vm1494, %v3988, 0.0
        %v3998 = vadd.f32 %v3986, %v3997
        %v3999 = vrot.slane %v3998, 4
        %v4000 = vadd.f32 %v3998, %v3999
        %v4001 = vrot.slane %v4000, 2
        %v4002 = vadd.f32 %v4000, %v4001
        %v4003 = vrot.slane %v4002, 1
        %v4004 = vadd.f32 %v4002, %v4003
        %4007 = vrot.lane.b32.xlu0 %v3996, 32
        %v4008 = vpop.permute.xlu0 %4007
        %4009 = vrot.lane.b32.xlu0 %v4004, 32
        %v4010 = vpop.permute.xlu0 %4009
        %v4011 = vsel %vm2706, %v4008, %v4010
        %v4014 = vsel %vm2706, 0.0, %v4008
        %v4015 = vadd.f32 %v3975, %v4014
        %v4016 = vadd.f32 %v3976, %v4011
        %4017 = vset.pattern.permute.xlu0 2
        %4018 = vperm.xlu0 %4017, %v3933
        %v4019 = vpop.permute.xlu0 %4018
        %4021 = vset.pattern.permute.xlu0 2
        %4022 = vperm.xlu0 %4021, %v3934
        %v4023 = vpop.permute.xlu0 %4022
        %v4025 = vmul.f32 %v3921, %v4019
        %v4026 = vmul.f32 %v3922, %v4019
        %v4027 = vmul.f32 %v3931, %v4023
        %v4028 = vmul.f32 %v3932, %v4023
        %v4029 = vsel %vm1494, %v4027, 0.0
        %v4030 = vadd.f32 %v4025, %v4029
        %v4031 = vrot.slane %v4030, 4
        %v4032 = vadd.f32 %v4030, %v4031
        %v4033 = vrot.slane %v4032, 2
        %v4034 = vadd.f32 %v4032, %v4033
        %v4035 = vrot.slane %v4034, 1
        %v4036 = vadd.f32 %v4034, %v4035
        %v4037 = vsel %vm1494, %v4028, 0.0
        %v4038 = vadd.f32 %v4026, %v4037
        %v4039 = vrot.slane %v4038, 4
        %v4040 = vadd.f32 %v4038, %v4039
        %v4041 = vrot.slane %v4040, 2
        %v4042 = vadd.f32 %v4040, %v4041
        %v4043 = vrot.slane %v4042, 1
        %v4044 = vadd.f32 %v4042, %v4043
        %4047 = vrot.lane.b32.xlu0 %v4036, 16
        %v4048 = vpop.permute.xlu0 %4047
        %4049 = vrot.lane.b32.xlu0 %v4044, 16
        %v4050 = vpop.permute.xlu0 %4049
        %v4051 = vsel %vm1600, %v4048, %v4050
        %v4054 = vsel %vm1600, 0.0, %v4048
        %v4055 = vadd.f32 %v4015, %v4054
        %v4056 = vadd.f32 %v4016, %v4051
        %4057 = vset.pattern.permute.xlu0 3
        %4058 = vperm.xlu0 %4057, %v3933
        %v4059 = vpop.permute.xlu0 %4058
        %4061 = vset.pattern.permute.xlu0 3
        %4062 = vperm.xlu0 %4061, %v3934
        %v4063 = vpop.permute.xlu0 %4062
        %v4065 = vmul.f32 %v3921, %v4059
        %v4066 = vmul.f32 %v3922, %v4059
        %v4067 = vmul.f32 %v3931, %v4063
        %v4068 = vmul.f32 %v3932, %v4063
        %v4069 = vsel %vm1494, %v4067, 0.0
        %v4070 = vadd.f32 %v4065, %v4069
        %v4071 = vrot.slane %v4070, 4
        %v4072 = vadd.f32 %v4070, %v4071
        %v4073 = vrot.slane %v4072, 2
        %v4074 = vadd.f32 %v4072, %v4073
        %v4075 = vrot.slane %v4074, 1
        %v4076 = vadd.f32 %v4074, %v4075
        %v4077 = vsel %vm1494, %v4068, 0.0
        %v4078 = vadd.f32 %v4066, %v4077
        %v4079 = vrot.slane %v4078, 4
        %v4080 = vadd.f32 %v4078, %v4079
        %v4081 = vrot.slane %v4080, 2
        %v4082 = vadd.f32 %v4080, %v4081
        %v4083 = vrot.slane %v4082, 1
        %v4084 = vadd.f32 %v4082, %v4083
        %v4085 = vadd.f32 %v4055, %v4076
        %v4086 = vadd.f32 %v4056, %v4084
        %4087 = vset.pattern.permute.xlu0 4
        %4088 = vperm.xlu0 %4087, %v3933
        %v4089 = vpop.permute.xlu0 %4088
        %4091 = vset.pattern.permute.xlu0 4
        %4092 = vperm.xlu0 %4091, %v3934
        %v4093 = vpop.permute.xlu0 %4092
        %v4095 = vmul.f32 %v3921, %v4089
        %v4096 = vmul.f32 %v3922, %v4089
        %v4097 = vmul.f32 %v3931, %v4093
        %v4098 = vmul.f32 %v3932, %v4093
        %v4099 = vsel %vm1494, %v4097, 0.0
        %v4100 = vadd.f32 %v4095, %v4099
        %v4101 = vrot.slane %v4100, 4
        %v4102 = vadd.f32 %v4100, %v4101
        %v4103 = vrot.slane %v4102, 2
        %v4104 = vadd.f32 %v4102, %v4103
        %v4105 = vrot.slane %v4104, 1
        %v4106 = vadd.f32 %v4104, %v4105
        %v4107 = vsel %vm1494, %v4098, 0.0
        %v4108 = vadd.f32 %v4096, %v4107
        %v4109 = vrot.slane %v4108, 4
        %v4110 = vadd.f32 %v4108, %v4109
        %v4111 = vrot.slane %v4110, 2
        %v4112 = vadd.f32 %v4110, %v4111
        %v4113 = vrot.slane %v4112, 1
        %v4114 = vadd.f32 %v4112, %v4113
        %4117 = vrot.lane.b32.xlu0 %v4106, 112
        %v4118 = vpop.permute.xlu0 %4117
        %4119 = vrot.lane.b32.xlu0 %v4114, 112
        %v4120 = vpop.permute.xlu0 %4119
        %v4121 = vsel %vm1801, %v4118, %v4120
        %v4124 = vsel %vm1801, %v4120, 0.0
        %v4125 = vadd.f32 %v4085, %v4121
        %v4126 = vadd.f32 %v4086, %v4124
        %4127 = vset.pattern.permute.xlu0 5
        %4128 = vperm.xlu0 %4127, %v3933
        %v4129 = vpop.permute.xlu0 %4128
        %4131 = vset.pattern.permute.xlu0 5
        %4132 = vperm.xlu0 %4131, %v3934
        %v4133 = vpop.permute.xlu0 %4132
        %v4135 = vmul.f32 %v3921, %v4129
        %v4136 = vmul.f32 %v3922, %v4129
        %v4137 = vmul.f32 %v3931, %v4133
        %v4138 = vmul.f32 %v3932, %v4133
        %v4139 = vsel %vm1494, %v4137, 0.0
        %v4140 = vadd.f32 %v4135, %v4139
        %v4141 = vrot.slane %v4140, 4
        %v4142 = vadd.f32 %v4140, %v4141
        %v4143 = vrot.slane %v4142, 2
        %v4144 = vadd.f32 %v4142, %v4143
        %v4145 = vrot.slane %v4144, 1
        %v4146 = vadd.f32 %v4144, %v4145
        %v4147 = vsel %vm1494, %v4138, 0.0
        %v4148 = vadd.f32 %v4136, %v4147
        %v4149 = vrot.slane %v4148, 4
        %v4150 = vadd.f32 %v4148, %v4149
        %v4151 = vrot.slane %v4150, 2
        %v4152 = vadd.f32 %v4150, %v4151
        %v4153 = vrot.slane %v4152, 1
        %v4154 = vadd.f32 %v4152, %v4153
        %4157 = vrot.lane.b32.xlu0 %v4146, 96
        %v4158 = vpop.permute.xlu0 %4157
        %4159 = vrot.lane.b32.xlu0 %v4154, 96
        %v4160 = vpop.permute.xlu0 %4159
        %v4161 = vsel %vm2857, %v4158, %v4160
        %v4164 = vsel %vm2857, %v4160, 0.0
        %v4165 = vadd.f32 %v4125, %v4161
        %v4166 = vadd.f32 %v4126, %v4164
        %4167 = vset.pattern.permute.xlu0 6
        %4168 = vperm.xlu0 %4167, %v3933
        %v4169 = vpop.permute.xlu0 %4168
        %4171 = vset.pattern.permute.xlu0 6
        %4172 = vperm.xlu0 %4171, %v3934
        %v4173 = vpop.permute.xlu0 %4172
        %v4175 = vmul.f32 %v3921, %v4169
        %v4176 = vmul.f32 %v3922, %v4169
        %v4177 = vmul.f32 %v3931, %v4173
        %v4178 = vmul.f32 %v3932, %v4173
        %v4179 = vsel %vm1494, %v4177, 0.0
        %v4180 = vadd.f32 %v4175, %v4179
        %v4181 = vrot.slane %v4180, 4
        %v4182 = vadd.f32 %v4180, %v4181
        %v4183 = vrot.slane %v4182, 2
        %v4184 = vadd.f32 %v4182, %v4183
        %v4185 = vrot.slane %v4184, 1
        %v4186 = vadd.f32 %v4184, %v4185
        %v4187 = vsel %vm1494, %v4178, 0.0
        %v4188 = vadd.f32 %v4176, %v4187
        %v4189 = vrot.slane %v4188, 4
        %v4190 = vadd.f32 %v4188, %v4189
        %v4191 = vrot.slane %v4190, 2
        %v4192 = vadd.f32 %v4190, %v4191
        %v4193 = vrot.slane %v4192, 1
        %v4194 = vadd.f32 %v4192, %v4193
        %4197 = vrot.lane.b32.xlu0 %v4186, 80
        %v4198 = vpop.permute.xlu0 %4197
        %4199 = vrot.lane.b32.xlu0 %v4194, 80
        %v4200 = vpop.permute.xlu0 %4199
        %v4201 = vsel %vm2898, %v4198, %v4200
        %v4204 = vsel %vm2898, %v4200, 0.0
        %v4205 = vadd.f32 %v4165, %v4201
        %v4206 = vadd.f32 %v4166, %v4204
        %v4207 = vxor.u32 %v4205, 2147483648
        %v4208 = vxor.u32 %v4206, 2147483648
        %v4209 = vmul.f32 %v4207, 1.442695
        %v4210 = vpow.pop %v4209
        %v4211 = vmul.f32 %v4208, 1.442695
        %v4212 = vpow.pop %v4211
        %v4213 = vadd.f32 %v4210, 1.0
        %v4214 = vadd.f32 %v4212, 1.0
        %v4215 = vrcp.pop %v4213
        %v4216 = vmul.f32 1.0, %v4215
        %v4217 = vrcp.pop %v4214
        %v4218 = vmul.f32 1.0, %v4217
        %v4219 = vlaneseq
        %v4220 = vshrl.u32 %v4219, 7
        %v4221 = vsub.s32 0, %v4220
        %v4222 = vrot.slane %v4216, %v4221
        %v4223 = vlaneseq
        %v4224 = vshrl.u32 %v4223, 7
        %v4225 = vsub.s32 0, %v4224
        %v4226 = vrot.slane %v4218, %v4225
        %v4227 = vmul.f32 %v3687, %v4222
        %v4228 = vmul.f32 %v3688, %v4226
        %v4229 = vmul.f32 %v3689, %v4222
        %v4230 = vmul.f32 %v3690, %v4226
        %v4231 = vld [vmem:[#allocation16] sm:$0xff]
        %v4232 = vld [vmem:[#allocation16 + $0x8] sm:$0xff]
        %v4233 = vld [vmem:[#allocation16 + $0x10] sm:$0xff]
        %v4234 = vld [vmem:[%s17] sm:$0xff]
        %v4235 = vld [vmem:[%s17 + $0x8] sm:$0xff]
        %v4236 = vld [vmem:[%s17 + $0x10] sm:$0xff]
        %4238 = vset.pattern.permute.xlu0 0
        %4239 = vperm.xlu0 %4238, %v4234
        %v4240 = vpop.permute.xlu0 %4239
        %4243 = vset.pattern.permute.xlu0 0
        %4244 = vperm.xlu0 %4243, %v4235
        %v4245 = vpop.permute.xlu0 %4244
        %4248 = vset.pattern.permute.xlu0 0
        %4249 = vperm.xlu0 %4248, %v4236
        %v4250 = vpop.permute.xlu0 %4249
        %v4253 = vsel %vm2170, %v4231, 0
        %v4256 = vsel %vm2170, %v4232, 0
        %v4259 = vsel %vm2170, %v4233, 0
        %v4262 = vsel %vm1884, %v4229, 0
        %v4265 = vsel %vm1884, %v4230, 0
        %4267 = vmatprep.subr.mxu0 %v4228
        %4268 = vmatpush1.msra.mxu0 %v4227
        %4269 = vmatprep.subr.mxu0 %v4265
        %4270 = vmatpush1.msra.mxu0 %v4262
        %4271 = vmatprep.subr.mxu0 0.0
        %4272 = vmatpush1.msra.mxu0 0.0
        %4273 = vmatprep.subr.mxu0 0.0
        %4274 = vmatpush1.msra.mxu0 0.0
        %4275 = vmatprep.subr.mxu0 0.0
        %4276 = vmatpush1.msra.mxu0 0.0
        %4277 = vmatprep.subr.mxu0 0.0
        %4278 = vmatpush1.msra.mxu0 0.0
        %4279 = vmatprep.subr.mxu0 0.0
        %4280 = vmatpush1.msra.mxu0 0.0
        %4281 = vmatprep.subr.mxu0 0.0
        %4282 = vmatpush1.msra.mxu0 0.0
        %4283 = vmatprep.subr.mxu0 0.0
        %4284 = vmatpush1.msra.mxu0 0.0
        %4285 = vmatprep.subr.mxu0 0.0
        %4286 = vmatpush1.msra.mxu0 0.0
        %4287 = vmatprep.subr.mxu0 0.0
        %4288 = vmatpush1.msra.mxu0 0.0
        %4289 = vmatprep.subr.mxu0 0.0
        %4290 = vmatpush1.msra.mxu0 0.0
        %4291 = vmatprep.subr.mxu0 0.0
        %4292 = vmatpush1.msra.mxu0 0.0
        %4293 = vmatprep.subr.mxu0 0.0
        %4294 = vmatpush1.msra.mxu0 0.0
        %4295 = vmatprep.subr.mxu0 0.0
        %4296 = vmatpush1.msra.mxu0 0.0
        %4297 = vmatprep.subr.mxu0 0.0
        %4298 = vmatpush1.msra.mxu0 0.0
        %4299 = vmatprep.subr.mxu0 0.0
        %4300 = vmatpush1.msra.mxu0 0.0
        %4301 = vmatprep.subr.mxu0 0.0
        %4302 = vmatpush1.msra.mxu0 0.0
        %4303 = vmatprep.subr.mxu0 0.0
        %4304 = vmatpush1.msra.mxu0 0.0
        %4305 = vmatprep.subr.mxu0 0.0
        %4306 = vmatpush1.msra.mxu0 0.0
        %4307 = vmatprep.subr.mxu0 0.0
        %4308 = vmatpush1.msra.mxu0 0.0
        %4309 = vmatprep.subr.mxu0 0.0
        %4310 = vmatpush1.msra.mxu0 0.0
        %4311 = vmatprep.subr.mxu0 0.0
        %4312 = vmatpush1.msra.mxu0 0.0
        %4313 = vmatprep.subr.mxu0 0.0
        %4314 = vmatpush1.msra.mxu0 0.0
        %4315 = vmatprep.subr.mxu0 0.0
        %4316 = vmatpush1.msra.mxu0 0.0
        %4317 = vmatprep.subr.mxu0 0.0
        %4318 = vmatpush1.msra.mxu0 0.0
        %4319 = vmatprep.subr.mxu0 0.0
        %4320 = vmatpush1.msra.mxu0 0.0
        %4321 = vmatprep.subr.mxu0 0.0
        %4322 = vmatpush1.msra.mxu0 0.0
        %4323 = vmatprep.subr.mxu0 0.0
        %4324 = vmatpush1.msra.mxu0 0.0
        %4325 = vmatprep.subr.mxu0 0.0
        %4326 = vmatpush1.msra.mxu0 0.0
        %4327 = vmatprep.subr.mxu0 0.0
        %4328 = vmatpush1.msra.mxu0 0.0
        %4329 = vmatprep.subr.mxu0 0.0
        %4330 = vmatpush1.msra.mxu0 0.0
        %4331 = vmatprep.mubr.f32.mxu0 0.0
        %4332 = vmatmul.mubr.f32.gmra.mrb[0].mxu0 %v4253
        %v4333 = vpop.f32.mrb[0].mxu0
        %v4334 = vadd.f32 %v4240, %v4333
        %v4335 = vpop.f32.mrb[0].mxu0
        %v4336 = vadd.f32 %v4240, %v4335
        %4337 = vmatprep.mubr.f32.mxu0 0.0
        %4338 = vmatmul.mubr.f32.gmra.mrb[0].mxu0 %v4256
        %v4339 = vpop.f32.mrb[0].mxu0
        %v4340 = vadd.f32 %v4245, %v4339
        %v4341 = vpop.f32.mrb[0].mxu0
        %v4342 = vadd.f32 %v4245, %v4341
        %4343 = vmatprep.mubr.f32.mxu0 0.0
        %4344 = vmatmul.mubr.f32.gmra.mrb[0].mxu0 %v4259
        %v4345 = vpop.f32.mrb[0].mxu0
        %v4346 = vadd.f32 %v4250, %v4345
        %v4347 = vpop.f32.mrb[0].mxu0
        %v4348 = vadd.f32 %v4250, %v4347
        %4349 = vdwg.mxu0
        %v4350 = vmul.f32 %v4334, 0.5
        %v4351 = vmul.f32 %v4336, 0.5
        %v4352 = vmul.f32 %v4340, 0.5
        %v4353 = vmul.f32 %v4342, 0.5
        %v4354 = vmul.f32 %v4346, 0.5
        %v4355 = vmul.f32 %v4348, 0.5
        %v4356 = vmul.f32 %v4334, 0.70710677
        %v4357 = vmul.f32 %v4336, 0.70710677
        %v4358 = vmul.f32 %v4340, 0.70710677
        %v4359 = vmul.f32 %v4342, 0.70710677
        %v4360 = vmul.f32 %v4346, 0.70710677
        %v4361 = vmul.f32 %v4348, 0.70710677
        %v4362 = verf.f32.pop %v4356
        %v4363 = verf.f32.pop %v4357
        %v4364 = verf.f32.pop %v4358
        %v4365 = verf.f32.pop %v4359
        %v4366 = verf.f32.pop %v4360
        %v4367 = verf.f32.pop %v4361
        %v4368 = vadd.f32 %v4362, 1.0
        %v4369 = vadd.f32 %v4363, 1.0
        %v4370 = vadd.f32 %v4364, 1.0
        %v4371 = vadd.f32 %v4365, 1.0
        %v4372 = vadd.f32 %v4366, 1.0
        %v4373 = vadd.f32 %v4367, 1.0
        %v4374 = vmul.f32 %v4350, %v4368
        %v4375 = vmul.f32 %v4351, %v4369
        %v4376 = vmul.f32 %v4352, %v4370
        %v4377 = vmul.f32 %v4353, %v4371
        %v4378 = vmul.f32 %v4354, %v4372
        %v4379 = vmul.f32 %v4355, %v4373
        %v4380 = vld [vmem:[#allocation18] sm:$0xff]
        %v4381 = vld [vmem:[#allocation18 + $0x8] sm:$0xf]
        %v4383 = vsel %vm3080, %v4380, 0
        %v4386 = vsel %vm3080, %v4381, 0
        %4388 = vmatprep.subr.mxu0 %v4375
        %4389 = vmatpush1.msra.mxu0 %v4374
        %4390 = vmatprep.subr.mxu0 %v4377
        %4391 = vmatpush1.msra.mxu0 %v4376
        %4392 = vmatprep.subr.mxu0 %v4379
        %4393 = vmatpush1.msra.mxu0 %v4378
        %4394 = vmatprep.subr.mxu0 0.0
        %4395 = vmatpush1.msra.mxu0 0.0
        %4396 = vmatprep.subr.mxu0 0.0
        %4397 = vmatpush1.msra.mxu0 0.0
        %4398 = vmatprep.subr.mxu0 0.0
        %4399 = vmatpush1.msra.mxu0 0.0
        %4400 = vmatprep.subr.mxu0 0.0
        %4401 = vmatpush1.msra.mxu0 0.0
        %4402 = vmatprep.subr.mxu0 0.0
        %4403 = vmatpush1.msra.mxu0 0.0
        %4404 = vmatprep.subr.mxu0 0.0
        %4405 = vmatpush1.msra.mxu0 0.0
        %4406 = vmatprep.subr.mxu0 0.0
        %4407 = vmatpush1.msra.mxu0 0.0
        %4408 = vmatprep.subr.mxu0 0.0
        %4409 = vmatpush1.msra.mxu0 0.0
        %4410 = vmatprep.subr.mxu0 0.0
        %4411 = vmatpush1.msra.mxu0 0.0
        %4412 = vmatprep.subr.mxu0 0.0
        %4413 = vmatpush1.msra.mxu0 0.0
        %4414 = vmatprep.subr.mxu0 0.0
        %4415 = vmatpush1.msra.mxu0 0.0
        %4416 = vmatprep.subr.mxu0 0.0
        %4417 = vmatpush1.msra.mxu0 0.0
        %4418 = vmatprep.subr.mxu0 0.0
        %4419 = vmatpush1.msra.mxu0 0.0
        %4420 = vmatprep.subr.mxu0 0.0
        %4421 = vmatpush1.msra.mxu0 0.0
        %4422 = vmatprep.subr.mxu0 0.0
        %4423 = vmatpush1.msra.mxu0 0.0
        %4424 = vmatprep.subr.mxu0 0.0
        %4425 = vmatpush1.msra.mxu0 0.0
        %4426 = vmatprep.subr.mxu0 0.0
        %4427 = vmatpush1.msra.mxu0 0.0
        %4428 = vmatprep.subr.mxu0 0.0
        %4429 = vmatpush1.msra.mxu0 0.0
        %4430 = vmatprep.subr.mxu0 0.0
        %4431 = vmatpush1.msra.mxu0 0.0
        %4432 = vmatprep.subr.mxu0 0.0
        %4433 = vmatpush1.msra.mxu0 0.0
        %4434 = vmatprep.subr.mxu0 0.0
        %4435 = vmatpush1.msra.mxu0 0.0
        %4436 = vmatprep.subr.mxu0 0.0
        %4437 = vmatpush1.msra.mxu0 0.0
        %4438 = vmatprep.subr.mxu0 0.0
        %4439 = vmatpush1.msra.mxu0 0.0
        %4440 = vmatprep.subr.mxu0 0.0
        %4441 = vmatpush1.msra.mxu0 0.0
        %4442 = vmatprep.subr.mxu0 0.0
        %4443 = vmatpush1.msra.mxu0 0.0
        %4444 = vmatprep.subr.mxu0 0.0
        %4445 = vmatpush1.msra.mxu0 0.0
        %4446 = vmatprep.subr.mxu0 0.0
        %4447 = vmatpush1.msra.mxu0 0.0
        %4448 = vmatprep.subr.mxu0 0.0
        %4449 = vmatpush1.msra.mxu0 0.0
        %4450 = vmatprep.subr.mxu0 0.0
        %4451 = vmatpush1.msra.mxu0 0.0
        %4452 = vmatprep.mubr.f32.mxu0 0.0
        %4453 = vmatmul.mubr.f32.gmra.mrb[0].mxu0 %v4383
        %v4454 = vpop.f32.mrb[0].mxu0
        %v4455 = vadd.f32 0.0, %v4454
        %v4456 = vpop.f32.mrb[0].mxu0
        %v4457 = vadd.f32 0.0, %v4456
        %4458 = vmatprep.mubr.f32.mxu0 0.0
        %4459 = vmatmul.mubr.f32.gmra.mrb[0].mxu0 %v4386
        %v4460 = vpop.f32.mrb[0].mxu0
        %v4461 = vadd.f32 0.0, %v4460
        %v4462 = vpop.f32.mrb[0].mxu0
        %v4463 = vadd.f32 0.0, %v4462
        %4464 = vdwg.mxu0
        %v4465 = vadd.f32 %v3164, %v4455
        %v4466 = vadd.f32 %v3165, %v4457
        %v4467 = vadd.f32 %v3166, %v4461
        %v4468 = vadd.f32 %v3167, %v4463
        %4471 = vrot.lane.b32.xlu0 %v4465, 4
        %v4472 = vpop.permute.xlu0 %4471
        %4473 = vrot.lane.b32.xlu0 %v4466, 4
        %v4474 = vpop.permute.xlu0 %4473
        %vm4475 = vcmask 31744
        %v4476 = vsel %vm4475, %v4472, %v4474
        %v4479 = vsel %vm4475, 0.0, %v4472
        %vm4480 = vcmp.ge.s32.totalorder %v1442, 4
        %vm4481 = vcmp.ge.s32.totalorder %v1443, 4
        %v4482 = vsel %vm4480, 1, 0
        %v4483 = vsel %vm4481, 1, 0
        %vm4484 = vcmp.eq.s32.totalorder %v4482, 1
        %vm4485 = vcmp.eq.s32.totalorder %v4483, 1
        %v4486 = vsel %vm4484, %v4479, 0.0
        %v4487 = vsel %vm4485, %v4476, 0.0
        %4488 = vrot.lane.b32.xlu0 %v4465, 124
        %v4489 = vpop.permute.xlu0 %4488
        %4490 = vrot.lane.b32.xlu0 %v4466, 124
        %v4491 = vpop.permute.xlu0 %4490
        %vm4492 = vcmask 1014784
        %v4493 = vsel %vm4492, %v4489, %v4491
        %v4496 = vsel %vm4492, %v4491, 0.0
        %vm4497 = vcmp.lt.s32.totalorder %v1442, 12
        %vm4498 = vcmp.lt.s32.totalorder %v1443, 12
        %v4499 = vsel %vm4497, 1, 0
        %v4500 = vsel %vm4498, 1, 0
        %vm4501 = vcmp.eq.s32.totalorder %v4499, 1
        %vm4502 = vcmp.eq.s32.totalorder %v4500, 1
        %v4503 = vsel %vm4501, %v4493, 0.0
        %v4504 = vsel %vm4502, %v4496, 0.0
        %v4505 = vrot.slane %v4465, 2
        %v4506 = vrot.slane %v4466, 2
        %v4511 = vrot.slane %v4503, 4
        %v4512 = vrot.slane %v4504, 4
        %v4515 = vsel %vm1494, %v4486, %v4505
        %v4516 = vsel %vm1494, %v4487, %v4506
        %v4517 = vsel %vm1884, %v4505, %v4511
        %v4518 = vsel %vm1884, %v4506, %v4512
        %v4519 = vld [vmem:[#allocation28] sm:$0x3f]
        %v4521 = vsel %vm1888, %v4519, 0
        %v4523 = vsel %vm1892, %v4511, 0
        %v4525 = vsel %vm1892, %v4512, 0
        %4527 = vmatprep.subr.mxu0 %v4516
        %4528 = vmatpush1.msra.mxu0 %v4515
        %4529 = vmatprep.subr.mxu0 %v4518
        %4530 = vmatpush1.msra.mxu0 %v4517
        %4531 = vmatprep.subr.mxu0 %v4525
        %4532 = vmatpush1.msra.mxu0 %v4523
        %4533 = vmatprep.subr.mxu0 0.0
        %4534 = vmatpush1.msra.mxu0 0.0
        %4535 = vmatprep.subr.mxu0 0.0
        %4536 = vmatpush1.msra.mxu0 0.0
        %4537 = vmatprep.subr.mxu0 0.0
        %4538 = vmatpush1.msra.mxu0 0.0
        %4539 = vmatprep.subr.mxu0 0.0
        %4540 = vmatpush1.msra.mxu0 0.0
        %4541 = vmatprep.subr.mxu0 0.0
        %4542 = vmatpush1.msra.mxu0 0.0
        %4543 = vmatprep.subr.mxu0 0.0
        %4544 = vmatpush1.msra.mxu0 0.0
        %4545 = vmatprep.subr.mxu0 0.0
        %4546 = vmatpush1.msra.mxu0 0.0
        %4547 = vmatprep.subr.mxu0 0.0
        %4548 = vmatpush1.msra.mxu0 0.0
        %4549 = vmatprep.subr.mxu0 0.0
        %4550 = vmatpush1.msra.mxu0 0.0
        %4551 = vmatprep.subr.mxu0 0.0
        %4552 = vmatpush1.msra.mxu0 0.0
        %4553 = vmatprep.subr.mxu0 0.0
        %4554 = vmatpush1.msra.mxu0 0.0
        %4555 = vmatprep.subr.mxu0 0.0
        %4556 = vmatpush1.msra.mxu0 0.0
        %4557 = vmatprep.subr.mxu0 0.0
        %4558 = vmatpush1.msra.mxu0 0.0
        %4559 = vmatprep.subr.mxu0 0.0
        %4560 = vmatpush1.msra.mxu0 0.0
        %4561 = vmatprep.subr.mxu0 0.0
        %4562 = vmatpush1.msra.mxu0 0.0
        %4563 = vmatprep.subr.mxu0 0.0
        %4564 = vmatpush1.msra.mxu0 0.0
        %4565 = vmatprep.subr.mxu0 0.0
        %4566 = vmatpush1.msra.mxu0 0.0
        %4567 = vmatprep.subr.mxu0 0.0
        %4568 = vmatpush1.msra.mxu0 0.0
        %4569 = vmatprep.subr.mxu0 0.0
        %4570 = vmatpush1.msra.mxu0 0.0
        %4571 = vmatprep.subr.mxu0 0.0
        %4572 = vmatpush1.msra.mxu0 0.0
        %4573 = vmatprep.subr.mxu0 0.0
        %4574 = vmatpush1.msra.mxu0 0.0
        %4575 = vmatprep.subr.mxu0 0.0
        %4576 = vmatpush1.msra.mxu0 0.0
        %4577 = vmatprep.subr.mxu0 0.0
        %4578 = vmatpush1.msra.mxu0 0.0
        %4579 = vmatprep.subr.mxu0 0.0
        %4580 = vmatpush1.msra.mxu0 0.0
        %4581 = vmatprep.subr.mxu0 0.0
        %4582 = vmatpush1.msra.mxu0 0.0
        %4583 = vmatprep.subr.mxu0 0.0
        %4584 = vmatpush1.msra.mxu0 0.0
        %4585 = vmatprep.subr.mxu0 0.0
        %4586 = vmatpush1.msra.mxu0 0.0
        %4587 = vmatprep.subr.mxu0 0.0
        %4588 = vmatpush1.msra.mxu0 0.0
        %4589 = vmatprep.subr.mxu0 0.0
        %4590 = vmatpush1.msra.mxu0 0.0
        %4591 = vmatprep.mubr.f32.mxu0 0.0
        %4592 = vmatmul.mubr.f32.gmra.mrb[0].mxu0 %v4521
        %v4593 = vpop.f32.mrb[0].mxu0
        %v4594 = vadd.f32 0.0, %v4593
        %v4595 = vpop.f32.mrb[0].mxu0
        %v4596 = vadd.f32 0.0, %v4595
        %4597 = vdwg.mxu0
        %4600 = vrot.lane.b32.xlu0 %v4594, 64
        %v4601 = vpop.permute.xlu0 %4600
        %4602 = vrot.lane.b32.xlu0 %v4596, 64
        %v4603 = vpop.permute.xlu0 %4602
        %vm4604 = vcmask 523264
        %v4605 = vsel %vm4604, %v4601, %v4603
        %v4608 = vsel %vm4604, 0.0, %v4601
        %v4609 = vadd.f32 %v4608, 0.0
        %v4610 = vadd.f32 %v4605, 0.0
        %s4611 = scalar_lea.vmem [#allocation28], 8
        %v4612 = vld [vmem:[%s4611] sm:$0x3f]
        %v4614 = vsel %vm1888, %v4612, 0
        %4616 = vmatprep.subr.mxu0 %v4516
        %4617 = vmatpush1.msra.mxu0 %v4515
        %4618 = vmatprep.subr.mxu0 %v4518
        %4619 = vmatpush1.msra.mxu0 %v4517
        %4620 = vmatprep.subr.mxu0 %v4525
        %4621 = vmatpush1.msra.mxu0 %v4523
        %4622 = vmatprep.subr.mxu0 0.0
        %4623 = vmatpush1.msra.mxu0 0.0
        %4624 = vmatprep.subr.mxu0 0.0
        %4625 = vmatpush1.msra.mxu0 0.0
        %4626 = vmatprep.subr.mxu0 0.0
        %4627 = vmatpush1.msra.mxu0 0.0
        %4628 = vmatprep.subr.mxu0 0.0
        %4629 = vmatpush1.msra.mxu0 0.0
        %4630 = vmatprep.subr.mxu0 0.0
        %4631 = vmatpush1.msra.mxu0 0.0
        %4632 = vmatprep.subr.mxu0 0.0
        %4633 = vmatpush1.msra.mxu0 0.0
        %4634 = vmatprep.subr.mxu0 0.0
        %4635 = vmatpush1.msra.mxu0 0.0
        %4636 = vmatprep.subr.mxu0 0.0
        %4637 = vmatpush1.msra.mxu0 0.0
        %4638 = vmatprep.subr.mxu0 0.0
        %4639 = vmatpush1.msra.mxu0 0.0
        %4640 = vmatprep.subr.mxu0 0.0
        %4641 = vmatpush1.msra.mxu0 0.0
        %4642 = vmatprep.subr.mxu0 0.0
        %4643 = vmatpush1.msra.mxu0 0.0
        %4644 = vmatprep.subr.mxu0 0.0
        %4645 = vmatpush1.msra.mxu0 0.0
        %4646 = vmatprep.subr.mxu0 0.0
        %4647 = vmatpush1.msra.mxu0 0.0
        %4648 = vmatprep.subr.mxu0 0.0
        %4649 = vmatpush1.msra.mxu0 0.0
        %4650 = vmatprep.subr.mxu0 0.0
        %4651 = vmatpush1.msra.mxu0 0.0
        %4652 = vmatprep.subr.mxu0 0.0
        %4653 = vmatpush1.msra.mxu0 0.0
        %4654 = vmatprep.subr.mxu0 0.0
        %4655 = vmatpush1.msra.mxu0 0.0
        %4656 = vmatprep.subr.mxu0 0.0
        %4657 = vmatpush1.msra.mxu0 0.0
        %4658 = vmatprep.subr.mxu0 0.0
        %4659 = vmatpush1.msra.mxu0 0.0
        %4660 = vmatprep.subr.mxu0 0.0
        %4661 = vmatpush1.msra.mxu0 0.0
        %4662 = vmatprep.subr.mxu0 0.0
        %4663 = vmatpush1.msra.mxu0 0.0
        %4664 = vmatprep.subr.mxu0 0.0
        %4665 = vmatpush1.msra.mxu0 0.0
        %4666 = vmatprep.subr.mxu0 0.0
        %4667 = vmatpush1.msra.mxu0 0.0
        %4668 = vmatprep.subr.mxu0 0.0
        %4669 = vmatpush1.msra.mxu0 0.0
        %4670 = vmatprep.subr.mxu0 0.0
        %4671 = vmatpush1.msra.mxu0 0.0
        %4672 = vmatprep.subr.mxu0 0.0
        %4673 = vmatpush1.msra.mxu0 0.0
        %4674 = vmatprep.subr.mxu0 0.0
        %4675 = vmatpush1.msra.mxu0 0.0
        %4676 = vmatprep.subr.mxu0 0.0
        %4677 = vmatpush1.msra.mxu0 0.0
        %4678 = vmatprep.subr.mxu0 0.0
        %4679 = vmatpush1.msra.mxu0 0.0
        %4680 = vmatprep.mubr.f32.mxu0 0.0
        %4681 = vmatmul.mubr.f32.gmra.mrb[0].mxu0 %v4614
        %v4682 = vpop.f32.mrb[0].mxu0
        %v4683 = vadd.f32 0.0, %v4682
        %v4684 = vpop.f32.mrb[0].mxu0
        %v4685 = vadd.f32 0.0, %v4684
        %4686 = vdwg.mxu0
        %v4687 = vadd.f32 %v4609, %v4683
        %v4688 = vadd.f32 %v4610, %v4685
        %s4689 = scalar_lea.vmem [#allocation28], 16
        %v4690 = vld [vmem:[%s4689] sm:$0x3f]
        %v4692 = vsel %vm1888, %v4690, 0
        %4694 = vmatprep.subr.mxu0 %v4516
        %4695 = vmatpush1.msra.mxu0 %v4515
        %4696 = vmatprep.subr.mxu0 %v4518
        %4697 = vmatpush1.msra.mxu0 %v4517
        %4698 = vmatprep.subr.mxu0 %v4525
        %4699 = vmatpush1.msra.mxu0 %v4523
        %4700 = vmatprep.subr.mxu0 0.0
        %4701 = vmatpush1.msra.mxu0 0.0
        %4702 = vmatprep.subr.mxu0 0.0
        %4703 = vmatpush1.msra.mxu0 0.0
        %4704 = vmatprep.subr.mxu0 0.0
        %4705 = vmatpush1.msra.mxu0 0.0
        %4706 = vmatprep.subr.mxu0 0.0
        %4707 = vmatpush1.msra.mxu0 0.0
        %4708 = vmatprep.subr.mxu0 0.0
        %4709 = vmatpush1.msra.mxu0 0.0
        %4710 = vmatprep.subr.mxu0 0.0
        %4711 = vmatpush1.msra.mxu0 0.0
        %4712 = vmatprep.subr.mxu0 0.0
        %4713 = vmatpush1.msra.mxu0 0.0
        %4714 = vmatprep.subr.mxu0 0.0
        %4715 = vmatpush1.msra.mxu0 0.0
        %4716 = vmatprep.subr.mxu0 0.0
        %4717 = vmatpush1.msra.mxu0 0.0
        %4718 = vmatprep.subr.mxu0 0.0
        %4719 = vmatpush1.msra.mxu0 0.0
        %4720 = vmatprep.subr.mxu0 0.0
        %4721 = vmatpush1.msra.mxu0 0.0
        %4722 = vmatprep.subr.mxu0 0.0
        %4723 = vmatpush1.msra.mxu0 0.0
        %4724 = vmatprep.subr.mxu0 0.0
        %4725 = vmatpush1.msra.mxu0 0.0
        %4726 = vmatprep.subr.mxu0 0.0
        %4727 = vmatpush1.msra.mxu0 0.0
        %4728 = vmatprep.subr.mxu0 0.0
        %4729 = vmatpush1.msra.mxu0 0.0
        %4730 = vmatprep.subr.mxu0 0.0
        %4731 = vmatpush1.msra.mxu0 0.0
        %4732 = vmatprep.subr.mxu0 0.0
        %4733 = vmatpush1.msra.mxu0 0.0
        %4734 = vmatprep.subr.mxu0 0.0
        %4735 = vmatpush1.msra.mxu0 0.0
        %4736 = vmatprep.subr.mxu0 0.0
        %4737 = vmatpush1.msra.mxu0 0.0
        %4738 = vmatprep.subr.mxu0 0.0
        %4739 = vmatpush1.msra.mxu0 0.0
        %4740 = vmatprep.subr.mxu0 0.0
        %4741 = vmatpush1.msra.mxu0 0.0
        %4742 = vmatprep.subr.mxu0 0.0
        %4743 = vmatpush1.msra.mxu0 0.0
        %4744 = vmatprep.subr.mxu0 0.0
        %4745 = vmatpush1.msra.mxu0 0.0
        %4746 = vmatprep.subr.mxu0 0.0
        %4747 = vmatpush1.msra.mxu0 0.0
        %4748 = vmatprep.subr.mxu0 0.0
        %4749 = vmatpush1.msra.mxu0 0.0
        %4750 = vmatprep.subr.mxu0 0.0
        %4751 = vmatpush1.msra.mxu0 0.0
        %4752 = vmatprep.subr.mxu0 0.0
        %4753 = vmatpush1.msra.mxu0 0.0
        %4754 = vmatprep.subr.mxu0 0.0
        %4755 = vmatpush1.msra.mxu0 0.0
        %4756 = vmatprep.subr.mxu0 0.0
        %4757 = vmatpush1.msra.mxu0 0.0
        %4758 = vmatprep.mubr.f32.mxu0 0.0
        %4759 = vmatmul.mubr.f32.gmra.mrb[0].mxu0 %v4692
        %v4760 = vpop.f32.mrb[0].mxu0
        %v4761 = vadd.f32 0.0, %v4760
        %v4762 = vpop.f32.mrb[0].mxu0
        %v4763 = vadd.f32 0.0, %v4762
        %4764 = vdwg.mxu0
        %4767 = vrot.lane.b32.xlu0 %v4761, 64
        %v4768 = vpop.permute.xlu0 %4767
        %4769 = vrot.lane.b32.xlu0 %v4763, 64
        %v4770 = vpop.permute.xlu0 %4769
        %v4771 = vsel %vm4604, %v4768, %v4770
        %v4774 = vsel %vm4604, %v4770, 0.0
        %v4775 = vadd.f32 %v4687, %v4771
        %v4776 = vadd.f32 %v4688, %v4774
        %v4777 = vsel %vm1494, %v4775, %v4465
        %v4778 = vsel %vm1494, %v4776, %v4466
        %v4779 = vadd.f32 %v4777, %v4778
        %4780 = vadd.xlane.f32.xlu0 %v4779
        %v4781 = vpop.xlane.xlu0 %4780
        %v4782 = vsel %vm1884, %v4467, 0.0
        %v4783 = vsel %vm1884, %v4468, 0.0
        %v4784 = vadd.f32 %v4782, %v4783
        %4785 = vadd.xlane.f32.xlu0 %v4784
        %v4786 = vpop.xlane.xlu0 %4785
        %v4787 = vmul.f32 %v4781, %v2156
        %v4788 = vmul.f32 %v4786, %v2156
        %v4789 = vmax.f32 %v4777, %v4778
        %4790 = vmax.xlane.f32.xlu0 %v4789
        %v4791 = vpop.xlane.xlu0 %4790
        %v4792 = vsel %vm1884, %v4467, -inf
        %v4793 = vsel %vm1884, %v4468, -inf
        %v4794 = vmax.f32 %v4792, %v4793
        %4795 = vmax.xlane.f32.xlu0 %v4794
        %v4796 = vpop.xlane.xlu0 %4795
        %v4797 = vsel %vm1451, %v4787, %v4791
        %v4798 = vsel %vm1451, %v4788, %v4796
        %v4799 = vld [vmem:[#allocation21] sm:$0x7]
        %v4801 = vsel %vm2170, %v4799, 0
        %v4804 = vsel %vm1884, %v4798, 0
        %4806 = vmatprep.subr.mxu0 0.0
        %4807 = vmatpush1.msra.mxu0 %v4797
        %4808 = vmatprep.subr.mxu0 0.0
        %4809 = vmatpush1.msra.mxu0 %v4804
        %4810 = vmatprep.subr.mxu0 0.0
        %4811 = vmatpush1.msra.mxu0 0.0
        %4812 = vmatprep.subr.mxu0 0.0
        %4813 = vmatpush1.msra.mxu0 0.0
        %4814 = vmatprep.subr.mxu0 0.0
        %4815 = vmatpush1.msra.mxu0 0.0
        %4816 = vmatprep.subr.mxu0 0.0
        %4817 = vmatpush1.msra.mxu0 0.0
        %4818 = vmatprep.subr.mxu0 0.0
        %4819 = vmatpush1.msra.mxu0 0.0
        %4820 = vmatprep.subr.mxu0 0.0
        %4821 = vmatpush1.msra.mxu0 0.0
        %4822 = vmatprep.subr.mxu0 0.0
        %4823 = vmatpush1.msra.mxu0 0.0
        %4824 = vmatprep.subr.mxu0 0.0
        %4825 = vmatpush1.msra.mxu0 0.0
        %4826 = vmatprep.subr.mxu0 0.0
        %4827 = vmatpush1.msra.mxu0 0.0
        %4828 = vmatprep.subr.mxu0 0.0
        %4829 = vmatpush1.msra.mxu0 0.0
        %4830 = vmatprep.subr.mxu0 0.0
        %4831 = vmatpush1.msra.mxu0 0.0
        %4832 = vmatprep.subr.mxu0 0.0
        %4833 = vmatpush1.msra.mxu0 0.0
        %4834 = vmatprep.subr.mxu0 0.0
        %4835 = vmatpush1.msra.mxu0 0.0
        %4836 = vmatprep.subr.mxu0 0.0
        %4837 = vmatpush1.msra.mxu0 0.0
        %4838 = vmatprep.subr.mxu0 0.0
        %4839 = vmatpush1.msra.mxu0 0.0
        %4840 = vmatprep.subr.mxu0 0.0
        %4841 = vmatpush1.msra.mxu0 0.0
        %4842 = vmatprep.subr.mxu0 0.0
        %4843 = vmatpush1.msra.mxu0 0.0
        %4844 = vmatprep.subr.mxu0 0.0
        %4845 = vmatpush1.msra.mxu0 0.0
        %4846 = vmatprep.subr.mxu0 0.0
        %4847 = vmatpush1.msra.mxu0 0.0
        %4848 = vmatprep.subr.mxu0 0.0
        %4849 = vmatpush1.msra.mxu0 0.0
        %4850 = vmatprep.subr.mxu0 0.0
        %4851 = vmatpush1.msra.mxu0 0.0
        %4852 = vmatprep.subr.mxu0 0.0
        %4853 = vmatpush1.msra.mxu0 0.0
        %4854 = vmatprep.subr.mxu0 0.0
        %4855 = vmatpush1.msra.mxu0 0.0
        %4856 = vmatprep.subr.mxu0 0.0
        %4857 = vmatpush1.msra.mxu0 0.0
        %4858 = vmatprep.subr.mxu0 0.0
        %4859 = vmatpush1.msra.mxu0 0.0
        %4860 = vmatprep.subr.mxu0 0.0
        %4861 = vmatpush1.msra.mxu0 0.0
        %4862 = vmatprep.subr.mxu0 0.0
        %4863 = vmatpush1.msra.mxu0 0.0
        %4864 = vmatprep.subr.mxu0 0.0
        %4865 = vmatpush1.msra.mxu0 0.0
        %4866 = vmatprep.subr.mxu0 0.0
        %4867 = vmatpush1.msra.mxu0 0.0
        %4868 = vmatprep.subr.mxu0 0.0
        %4869 = vmatpush1.msra.mxu0 0.0
        %4870 = vmatprep.mubr.f32.mxu0 0.0
        %4871 = vmatmul.mubr.f32.gmra.mrb[0].mxu0 %v4801
        %v4872 = vpop.f32.mrb[0].mxu0
        %v4873 = vadd.f32 0.0, %v4872
        %v4874 = vpop.f32.mrb[0].mxu0
        %4875 = vdwg.mxu0
        %v4876 = vmax.f32 %v4873, 0.0
        %v4877 = vld [vmem:[#allocation22] sm:$0xff]
        %v4878 = vld [vmem:[#allocation22 + $0x8] sm:$0xf]
        %v4880 = vsel %vm2250, %v4877, 0
        %v4883 = vsel %vm2250, %v4878, 0
        %v4886 = vsel %vm1491, %v4876, 0
        %4888 = vmatprep.subr.mxu0 0.0
        %4889 = vmatpush1.msra.mxu0 %v4886
        %4890 = vmatprep.subr.mxu0 0.0
        %4891 = vmatpush1.msra.mxu0 0.0
        %4892 = vmatprep.subr.mxu0 0.0
        %4893 = vmatpush1.msra.mxu0 0.0
        %4894 = vmatprep.subr.mxu0 0.0
        %4895 = vmatpush1.msra.mxu0 0.0
        %4896 = vmatprep.subr.mxu0 0.0
        %4897 = vmatpush1.msra.mxu0 0.0
        %4898 = vmatprep.subr.mxu0 0.0
        %4899 = vmatpush1.msra.mxu0 0.0
        %4900 = vmatprep.subr.mxu0 0.0
        %4901 = vmatpush1.msra.mxu0 0.0
        %4902 = vmatprep.subr.mxu0 0.0
        %4903 = vmatpush1.msra.mxu0 0.0
        %4904 = vmatprep.subr.mxu0 0.0
        %4905 = vmatpush1.msra.mxu0 0.0
        %4906 = vmatprep.subr.mxu0 0.0
        %4907 = vmatpush1.msra.mxu0 0.0
        %4908 = vmatprep.subr.mxu0 0.0
        %4909 = vmatpush1.msra.mxu0 0.0
        %4910 = vmatprep.subr.mxu0 0.0
        %4911 = vmatpush1.msra.mxu0 0.0
        %4912 = vmatprep.subr.mxu0 0.0
        %4913 = vmatpush1.msra.mxu0 0.0
        %4914 = vmatprep.subr.mxu0 0.0
        %4915 = vmatpush1.msra.mxu0 0.0
        %4916 = vmatprep.subr.mxu0 0.0
        %4917 = vmatpush1.msra.mxu0 0.0
        %4918 = vmatprep.subr.mxu0 0.0
        %4919 = vmatpush1.msra.mxu0 0.0
        %4920 = vmatprep.subr.mxu0 0.0
        %4921 = vmatpush1.msra.mxu0 0.0
        %4922 = vmatprep.subr.mxu0 0.0
        %4923 = vmatpush1.msra.mxu0 0.0
        %4924 = vmatprep.subr.mxu0 0.0
        %4925 = vmatpush1.msra.mxu0 0.0
        %4926 = vmatprep.subr.mxu0 0.0
        %4927 = vmatpush1.msra.mxu0 0.0
        %4928 = vmatprep.subr.mxu0 0.0
        %4929 = vmatpush1.msra.mxu0 0.0
        %4930 = vmatprep.subr.mxu0 0.0
        %4931 = vmatpush1.msra.mxu0 0.0
        %4932 = vmatprep.subr.mxu0 0.0
        %4933 = vmatpush1.msra.mxu0 0.0
        %4934 = vmatprep.subr.mxu0 0.0
        %4935 = vmatpush1.msra.mxu0 0.0
        %4936 = vmatprep.subr.mxu0 0.0
        %4937 = vmatpush1.msra.mxu0 0.0
        %4938 = vmatprep.subr.mxu0 0.0
        %4939 = vmatpush1.msra.mxu0 0.0
        %4940 = vmatprep.subr.mxu0 0.0
        %4941 = vmatpush1.msra.mxu0 0.0
        %4942 = vmatprep.subr.mxu0 0.0
        %4943 = vmatpush1.msra.mxu0 0.0
        %4944 = vmatprep.subr.mxu0 0.0
        %4945 = vmatpush1.msra.mxu0 0.0
        %4946 = vmatprep.subr.mxu0 0.0
        %4947 = vmatpush1.msra.mxu0 0.0
        %4948 = vmatprep.subr.mxu0 0.0
        %4949 = vmatpush1.msra.mxu0 0.0
        %4950 = vmatprep.subr.mxu0 0.0
        %4951 = vmatpush1.msra.mxu0 0.0
        %4952 = vmatprep.mubr.f32.mxu0 0.0
        %4953 = vmatmul.mubr.f32.gmra.mrb[0].mxu0 %v4880
        %v4954 = vpop.f32.mrb[0].mxu0
        %v4955 = vadd.f32 0.0, %v4954
        %v4956 = vpop.f32.mrb[0].mxu0
        %4957 = vmatprep.mubr.f32.mxu0 0.0
        %4958 = vmatmul.mubr.f32.gmra.mrb[0].mxu0 %v4883
        %v4959 = vpop.f32.mrb[0].mxu0
        %v4960 = vadd.f32 0.0, %v4959
        %v4961 = vpop.f32.mrb[0].mxu0
        %4962 = vdwg.mxu0
        %4965 = vrot.lane.b32.xlu0 %v4955, 127
        %v4966 = vpop.permute.xlu0 %4965
        %4967 = vrot.lane.b32.xlu0 %v4960, 127
        %v4968 = vpop.permute.xlu0 %4967
        %v4971 = vadd.f32 %v4955, %v4966
        %v4972 = vadd.f32 %v4960, %v4968
        %v4973 = vxor.u32 %v4971, 2147483648
        %v4974 = vxor.u32 %v4972, 2147483648
        %v4975 = vmul.f32 %v4973, 1.442695
        %v4976 = vpow.pop %v4975
        %v4977 = vmul.f32 %v4974, 1.442695
        %v4978 = vpow.pop %v4977
        %v4979 = vadd.f32 %v4976, 1.0
        %v4980 = vadd.f32 %v4978, 1.0
        %v4981 = vrcp.pop %v4979
        %v4982 = vmul.f32 1.0, %v4981
        %v4983 = vrcp.pop %v4980
        %v4984 = vmul.f32 1.0, %v4983
        %4986 = vset.pattern.permute.xlu0 0
        %4987 = vperm.xlu0 %4986, %v4982
        %v4988 = vpop.permute.xlu0 %4987
        %4991 = vset.pattern.permute.xlu0 0
        %4992 = vperm.xlu0 %4991, %v4984
        %v4993 = vpop.permute.xlu0 %4992
        %v4995 = vmul.f32 %v4777, %v4988
        %v4996 = vmul.f32 %v4778, %v4988
        %v4997 = vmul.f32 %v4467, %v4993
        %v4998 = vmul.f32 %v4468, %v4993
        %v4999 = vsel %vm1884, %v4997, 0.0
        %v5000 = vadd.f32 %v4995, %v4999
        %v5001 = vrot.slane %v5000, 4
        %v5002 = vadd.f32 %v5000, %v5001
        %v5003 = vrot.slane %v5002, 2
        %v5004 = vadd.f32 %v5002, %v5003
        %v5005 = vrot.slane %v5004, 1
        %v5006 = vadd.f32 %v5004, %v5005
        %v5007 = vsel %vm1884, %v4998, 0.0
        %v5008 = vadd.f32 %v4996, %v5007
        %v5009 = vrot.slane %v5008, 4
        %v5010 = vadd.f32 %v5008, %v5009
        %v5011 = vrot.slane %v5010, 2
        %v5012 = vadd.f32 %v5010, %v5011
        %v5013 = vrot.slane %v5012, 1
        %v5014 = vadd.f32 %v5012, %v5013
        %v5015 = vmul.f32 %v5006, %v2387
        %v5016 = vmul.f32 %v5014, %v2387
        %v5017 = vsel %vm1884, %v4997, -inf
        %v5018 = vmax.f32 %v4995, %v5017
        %v5019 = vrot.slane %v5018, 4
        %v5020 = vmax.f32 %v5018, %v5019
        %v5021 = vrot.slane %v5020, 2
        %v5022 = vmax.f32 %v5020, %v5021
        %v5023 = vrot.slane %v5022, 1
        %v5024 = vmax.f32 %v5022, %v5023
        %v5025 = vsel %vm1884, %v4998, -inf
        %v5026 = vmax.f32 %v4996, %v5025
        %v5027 = vrot.slane %v5026, 4
        %v5028 = vmax.f32 %v5026, %v5027
        %v5029 = vrot.slane %v5028, 2
        %v5030 = vmax.f32 %v5028, %v5029
        %v5031 = vrot.slane %v5030, 1
        %v5032 = vmax.f32 %v5030, %v5031
        %5035 = vrot.lane.b32.xlu0 %v5015, 3
        %v5036 = vpop.permute.xlu0 %5035
        %5037 = vrot.lane.b32.xlu0 %v5016, 3
        %v5038 = vpop.permute.xlu0 %5037
        %v5039 = vsel %vm2250, %v5036, %v5038
        %v5042 = vsel %vm2250, 0.0, %v5036
        %v5043 = vsel %vm2416, %v5042, 0.0
        %v5044 = vsel %vm2417, %v5039, 0.0
        %5045 = vrot.lane.b32.xlu0 %v5015, 2
        %v5046 = vpop.permute.xlu0 %5045
        %5047 = vrot.lane.b32.xlu0 %v5016, 2
        %v5048 = vpop.permute.xlu0 %5047
        %v5049 = vsel %vm2424, %v5046, %v5048
        %v5052 = vsel %vm2424, 0.0, %v5046
        %v5053 = vsel %vm2429, %v5052, 0.0
        %v5054 = vsel %vm2430, %v5049, 0.0
        %5055 = vrot.lane.b32.xlu0 %v5015, 1
        %v5056 = vpop.permute.xlu0 %5055
        %5057 = vrot.lane.b32.xlu0 %v5016, 1
        %v5058 = vpop.permute.xlu0 %5057
        %v5059 = vsel %vm1451, %v5056, %v5058
        %v5062 = vsel %vm1451, 0.0, %v5056
        %v5063 = vsel %vm1456, %v5062, 0.0
        %v5064 = vsel %vm1457, %v5059, 0.0
        %5065 = vrot.lane.b32.xlu0 %v5015, 127
        %v5066 = vpop.permute.xlu0 %5065
        %5067 = vrot.lane.b32.xlu0 %v5016, 127
        %v5068 = vpop.permute.xlu0 %5067
        %v5069 = vsel %vm1468, %v5066, %v5068
        %v5072 = vsel %vm1468, %v5068, 0.0
        %v5073 = vsel %vm1473, %v5069, 0.0
        %v5074 = vsel %vm1474, %v5072, 0.0
        %5075 = vrot.lane.b32.xlu0 %v5015, 126
        %v5076 = vpop.permute.xlu0 %5075
        %5077 = vrot.lane.b32.xlu0 %v5016, 126
        %v5078 = vpop.permute.xlu0 %5077
        %v5079 = vsel %vm2457, %v5076, %v5078
        %v5082 = vsel %vm2457, %v5078, 0.0
        %v5083 = vsel %vm2462, %v5079, 0.0
        %v5084 = vsel %vm2463, %v5082, 0.0
        %5085 = vrot.lane.b32.xlu0 %v5015, 125
        %v5086 = vpop.permute.xlu0 %5085
        %5087 = vrot.lane.b32.xlu0 %v5016, 125
        %v5088 = vpop.permute.xlu0 %5087
        %v5089 = vsel %vm2470, %v5086, %v5088
        %v5092 = vsel %vm2470, %v5088, 0.0
        %v5093 = vsel %vm2475, %v5089, 0.0
        %v5094 = vsel %vm2476, %v5092, 0.0
        %5097 = vrot.lane.b32.xlu0 %v5024, 3
        %v5098 = vpop.permute.xlu0 %5097
        %5099 = vrot.lane.b32.xlu0 %v5032, 3
        %v5100 = vpop.permute.xlu0 %5099
        %v5101 = vsel %vm2250, %v5098, %v5100
        %v5104 = vsel %vm2250, 0.0, %v5098
        %v5105 = vsel %vm2416, %v5104, 0.0
        %v5106 = vsel %vm2417, %v5101, 0.0
        %5107 = vrot.lane.b32.xlu0 %v5024, 2
        %v5108 = vpop.permute.xlu0 %5107
        %5109 = vrot.lane.b32.xlu0 %v5032, 2
        %v5110 = vpop.permute.xlu0 %5109
        %v5111 = vsel %vm2424, %v5108, %v5110
        %v5114 = vsel %vm2424, 0.0, %v5108
        %v5115 = vsel %vm2429, %v5114, 0.0
        %v5116 = vsel %vm2430, %v5111, 0.0
        %5117 = vrot.lane.b32.xlu0 %v5024, 1
        %v5118 = vpop.permute.xlu0 %5117
        %5119 = vrot.lane.b32.xlu0 %v5032, 1
        %v5120 = vpop.permute.xlu0 %5119
        %v5121 = vsel %vm1451, %v5118, %v5120
        %v5124 = vsel %vm1451, 0.0, %v5118
        %v5125 = vsel %vm1456, %v5124, 0.0
        %v5126 = vsel %vm1457, %v5121, 0.0
        %5127 = vrot.lane.b32.xlu0 %v5024, 127
        %v5128 = vpop.permute.xlu0 %5127
        %5129 = vrot.lane.b32.xlu0 %v5032, 127
        %v5130 = vpop.permute.xlu0 %5129
        %v5131 = vsel %vm1468, %v5128, %v5130
        %v5134 = vsel %vm1468, %v5130, 0.0
        %v5135 = vsel %vm1473, %v5131, 0.0
        %v5136 = vsel %vm1474, %v5134, 0.0
        %5137 = vrot.lane.b32.xlu0 %v5024, 126
        %v5138 = vpop.permute.xlu0 %5137
        %5139 = vrot.lane.b32.xlu0 %v5032, 126
        %v5140 = vpop.permute.xlu0 %5139
        %v5141 = vsel %vm2457, %v5138, %v5140
        %v5144 = vsel %vm2457, %v5140, 0.0
        %v5145 = vsel %vm2462, %v5141, 0.0
        %v5146 = vsel %vm2463, %v5144, 0.0
        %5147 = vrot.lane.b32.xlu0 %v5024, 125
        %v5148 = vpop.permute.xlu0 %5147
        %5149 = vrot.lane.b32.xlu0 %v5032, 125
        %v5150 = vpop.permute.xlu0 %5149
        %v5151 = vsel %vm2470, %v5148, %v5150
        %v5154 = vsel %vm2470, %v5150, 0.0
        %v5155 = vsel %vm2475, %v5151, 0.0
        %v5156 = vsel %vm2476, %v5154, 0.0
        %v5159 = vrot.slane %v5053, 7
        %v5160 = vrot.slane %v5054, 7
        %v5165 = vrot.slane %v5063, 6
        %v5166 = vrot.slane %v5064, 6
        %v5171 = vrot.slane %v5073, 4
        %v5172 = vrot.slane %v5074, 4
        %v5177 = vrot.slane %v5083, 3
        %v5178 = vrot.slane %v5084, 3
        %v5183 = vrot.slane %v5093, 2
        %v5184 = vrot.slane %v5094, 2
        %v5189 = vrot.slane %v5105, 1
        %v5190 = vrot.slane %v5106, 1
        %v5195 = vrot.slane %v5125, 7
        %v5196 = vrot.slane %v5126, 7
        %v5201 = vrot.slane %v5135, 5
        %v5202 = vrot.slane %v5136, 5
        %v5207 = vrot.slane %v5145, 4
        %v5208 = vrot.slane %v5146, 4
        %v5213 = vrot.slane %v5155, 3
        %v5214 = vrot.slane %v5156, 3
        %v5217 = vsel %vm1506, %v5043, %v5159
        %v5218 = vsel %vm1506, %v5044, %v5160
        %v5219 = vsel %vm1892, %v5217, %v5165
        %v5220 = vsel %vm1892, %v5218, %v5166
        %v5221 = vsel %vm1491, %v5219, %v5015
        %v5222 = vsel %vm1491, %v5220, %v5016
        %v5223 = vsel %vm1884, %v5221, %v5171
        %v5224 = vsel %vm1884, %v5222, %v5172
        %v5225 = vsel %vm2609, %v5223, %v5177
        %v5226 = vsel %vm2609, %v5224, %v5178
        %v5227 = vsel %vm1494, %v5225, %v5183
        %v5228 = vsel %vm1494, %v5226, %v5184
        %v5229 = vsel %vm2614, %v5227, %v5189
        %v5230 = vsel %vm2614, %v5228, %v5190
        %v5231 = vsel %vm1506, %v5115, %v5195
        %v5232 = vsel %vm1506, %v5116, %v5196
        %v5233 = vsel %vm1892, %v5231, %v5024
        %v5234 = vsel %vm1892, %v5232, %v5032
        %v5235 = vsel %vm1491, %v5233, %v5201
        %v5236 = vsel %vm1491, %v5234, %v5202
        %v5237 = vsel %vm1884, %v5235, %v5207
        %v5238 = vsel %vm1884, %v5236, %v5208
        %v5239 = vsel %vm2609, %v5237, %v5213
        %v5240 = vsel %vm2609, %v5238, %v5214
        %v5241 = vld [vmem:[#allocation24] sm:$0xff]
        %v5242 = vld [vmem:[#allocation24 + $0x8] sm:$0x3f]
        %5244 = vset.pattern.permute.xlu0 0
        %5245 = vperm.xlu0 %5244, %v5241
        %v5246 = vpop.permute.xlu0 %5245
        %5249 = vset.pattern.permute.xlu0 0
        %5250 = vperm.xlu0 %5249, %v5242
        %v5251 = vpop.permute.xlu0 %5250
        %v5253 = vmul.f32 %v5229, %v5246
        %v5254 = vmul.f32 %v5230, %v5246
        %v5255 = vmul.f32 %v5239, %v5251
        %v5256 = vmul.f32 %v5240, %v5251
        %v5257 = vsel %vm1494, %v5255, 0.0
        %v5258 = vadd.f32 %v5253, %v5257
        %v5259 = vrot.slane %v5258, 4
        %v5260 = vadd.f32 %v5258, %v5259
        %v5261 = vrot.slane %v5260, 2
        %v5262 = vadd.f32 %v5260, %v5261
        %v5263 = vrot.slane %v5262, 1
        %v5264 = vadd.f32 %v5262, %v5263
        %v5265 = vsel %vm1494, %v5256, 0.0
        %v5266 = vadd.f32 %v5254, %v5265
        %v5267 = vrot.slane %v5266, 4
        %v5268 = vadd.f32 %v5266, %v5267
        %v5269 = vrot.slane %v5268, 2
        %v5270 = vadd.f32 %v5268, %v5269
        %v5271 = vrot.slane %v5270, 1
        %v5272 = vadd.f32 %v5270, %v5271
        %5275 = vrot.lane.b32.xlu0 %v5264, 48
        %v5276 = vpop.permute.xlu0 %5275
        %5277 = vrot.lane.b32.xlu0 %v5272, 48
        %v5278 = vpop.permute.xlu0 %5277
        %v5279 = vsel %vm2665, %v5276, %v5278
        %v5282 = vsel %vm2665, 0.0, %v5276
        %v5283 = vadd.f32 %v5282, 0.0
        %v5284 = vadd.f32 %v5279, 0.0
        %5285 = vset.pattern.permute.xlu0 1
        %5286 = vperm.xlu0 %5285, %v5241
        %v5287 = vpop.permute.xlu0 %5286
        %5289 = vset.pattern.permute.xlu0 1
        %5290 = vperm.xlu0 %5289, %v5242
        %v5291 = vpop.permute.xlu0 %5290
        %v5293 = vmul.f32 %v5229, %v5287
        %v5294 = vmul.f32 %v5230, %v5287
        %v5295 = vmul.f32 %v5239, %v5291
        %v5296 = vmul.f32 %v5240, %v5291
        %v5297 = vsel %vm1494, %v5295, 0.0
        %v5298 = vadd.f32 %v5293, %v5297
        %v5299 = vrot.slane %v5298, 4
        %v5300 = vadd.f32 %v5298, %v5299
        %v5301 = vrot.slane %v5300, 2
        %v5302 = vadd.f32 %v5300, %v5301
        %v5303 = vrot.slane %v5302, 1
        %v5304 = vadd.f32 %v5302, %v5303
        %v5305 = vsel %vm1494, %v5296, 0.0
        %v5306 = vadd.f32 %v5294, %v5305
        %v5307 = vrot.slane %v5306, 4
        %v5308 = vadd.f32 %v5306, %v5307
        %v5309 = vrot.slane %v5308, 2
        %v5310 = vadd.f32 %v5308, %v5309
        %v5311 = vrot.slane %v5310, 1
        %v5312 = vadd.f32 %v5310, %v5311
        %5315 = vrot.lane.b32.xlu0 %v5304, 32
        %v5316 = vpop.permute.xlu0 %5315
        %5317 = vrot.lane.b32.xlu0 %v5312, 32
        %v5318 = vpop.permute.xlu0 %5317
        %v5319 = vsel %vm2706, %v5316, %v5318
        %v5322 = vsel %vm2706, 0.0, %v5316
        %v5323 = vadd.f32 %v5283, %v5322
        %v5324 = vadd.f32 %v5284, %v5319
        %5325 = vset.pattern.permute.xlu0 2
        %5326 = vperm.xlu0 %5325, %v5241
        %v5327 = vpop.permute.xlu0 %5326
        %5329 = vset.pattern.permute.xlu0 2
        %5330 = vperm.xlu0 %5329, %v5242
        %v5331 = vpop.permute.xlu0 %5330
        %v5333 = vmul.f32 %v5229, %v5327
        %v5334 = vmul.f32 %v5230, %v5327
        %v5335 = vmul.f32 %v5239, %v5331
        %v5336 = vmul.f32 %v5240, %v5331
        %v5337 = vsel %vm1494, %v5335, 0.0
        %v5338 = vadd.f32 %v5333, %v5337
        %v5339 = vrot.slane %v5338, 4
        %v5340 = vadd.f32 %v5338, %v5339
        %v5341 = vrot.slane %v5340, 2
        %v5342 = vadd.f32 %v5340, %v5341
        %v5343 = vrot.slane %v5342, 1
        %v5344 = vadd.f32 %v5342, %v5343
        %v5345 = vsel %vm1494, %v5336, 0.0
        %v5346 = vadd.f32 %v5334, %v5345
        %v5347 = vrot.slane %v5346, 4
        %v5348 = vadd.f32 %v5346, %v5347
        %v5349 = vrot.slane %v5348, 2
        %v5350 = vadd.f32 %v5348, %v5349
        %v5351 = vrot.slane %v5350, 1
        %v5352 = vadd.f32 %v5350, %v5351
        %5355 = vrot.lane.b32.xlu0 %v5344, 16
        %v5356 = vpop.permute.xlu0 %5355
        %5357 = vrot.lane.b32.xlu0 %v5352, 16
        %v5358 = vpop.permute.xlu0 %5357
        %v5359 = vsel %vm1600, %v5356, %v5358
        %v5362 = vsel %vm1600, 0.0, %v5356
        %v5363 = vadd.f32 %v5323, %v5362
        %v5364 = vadd.f32 %v5324, %v5359
        %5365 = vset.pattern.permute.xlu0 3
        %5366 = vperm.xlu0 %5365, %v5241
        %v5367 = vpop.permute.xlu0 %5366
        %5369 = vset.pattern.permute.xlu0 3
        %5370 = vperm.xlu0 %5369, %v5242
        %v5371 = vpop.permute.xlu0 %5370
        %v5373 = vmul.f32 %v5229, %v5367
        %v5374 = vmul.f32 %v5230, %v5367
        %v5375 = vmul.f32 %v5239, %v5371
        %v5376 = vmul.f32 %v5240, %v5371
        %v5377 = vsel %vm1494, %v5375, 0.0
        %v5378 = vadd.f32 %v5373, %v5377
        %v5379 = vrot.slane %v5378, 4
        %v5380 = vadd.f32 %v5378, %v5379
        %v5381 = vrot.slane %v5380, 2
        %v5382 = vadd.f32 %v5380, %v5381
        %v5383 = vrot.slane %v5382, 1
        %v5384 = vadd.f32 %v5382, %v5383
        %v5385 = vsel %vm1494, %v5376, 0.0
        %v5386 = vadd.f32 %v5374, %v5385
        %v5387 = vrot.slane %v5386, 4
        %v5388 = vadd.f32 %v5386, %v5387
        %v5389 = vrot.slane %v5388, 2
        %v5390 = vadd.f32 %v5388, %v5389
        %v5391 = vrot.slane %v5390, 1
        %v5392 = vadd.f32 %v5390, %v5391
        %v5393 = vadd.f32 %v5363, %v5384
        %v5394 = vadd.f32 %v5364, %v5392
        %5395 = vset.pattern.permute.xlu0 4
        %5396 = vperm.xlu0 %5395, %v5241
        %v5397 = vpop.permute.xlu0 %5396
        %5399 = vset.pattern.permute.xlu0 4
        %5400 = vperm.xlu0 %5399, %v5242
        %v5401 = vpop.permute.xlu0 %5400
        %v5403 = vmul.f32 %v5229, %v5397
        %v5404 = vmul.f32 %v5230, %v5397
        %v5405 = vmul.f32 %v5239, %v5401
        %v5406 = vmul.f32 %v5240, %v5401
        %v5407 = vsel %vm1494, %v5405, 0.0
        %v5408 = vadd.f32 %v5403, %v5407
        %v5409 = vrot.slane %v5408, 4
        %v5410 = vadd.f32 %v5408, %v5409
        %v5411 = vrot.slane %v5410, 2
        %v5412 = vadd.f32 %v5410, %v5411
        %v5413 = vrot.slane %v5412, 1
        %v5414 = vadd.f32 %v5412, %v5413
        %v5415 = vsel %vm1494, %v5406, 0.0
        %v5416 = vadd.f32 %v5404, %v5415
        %v5417 = vrot.slane %v5416, 4
        %v5418 = vadd.f32 %v5416, %v5417
        %v5419 = vrot.slane %v5418, 2
        %v5420 = vadd.f32 %v5418, %v5419
        %v5421 = vrot.slane %v5420, 1
        %v5422 = vadd.f32 %v5420, %v5421
        %5425 = vrot.lane.b32.xlu0 %v5414, 112
        %v5426 = vpop.permute.xlu0 %5425
        %5427 = vrot.lane.b32.xlu0 %v5422, 112
        %v5428 = vpop.permute.xlu0 %5427
        %v5429 = vsel %vm1801, %v5426, %v5428
        %v5432 = vsel %vm1801, %v5428, 0.0
        %v5433 = vadd.f32 %v5393, %v5429
        %v5434 = vadd.f32 %v5394, %v5432
        %5435 = vset.pattern.permute.xlu0 5
        %5436 = vperm.xlu0 %5435, %v5241
        %v5437 = vpop.permute.xlu0 %5436
        %5439 = vset.pattern.permute.xlu0 5
        %5440 = vperm.xlu0 %5439, %v5242
        %v5441 = vpop.permute.xlu0 %5440
        %v5443 = vmul.f32 %v5229, %v5437
        %v5444 = vmul.f32 %v5230, %v5437
        %v5445 = vmul.f32 %v5239, %v5441
        %v5446 = vmul.f32 %v5240, %v5441
        %v5447 = vsel %vm1494, %v5445, 0.0
        %v5448 = vadd.f32 %v5443, %v5447
        %v5449 = vrot.slane %v5448, 4
        %v5450 = vadd.f32 %v5448, %v5449
        %v5451 = vrot.slane %v5450, 2
        %v5452 = vadd.f32 %v5450, %v5451
        %v5453 = vrot.slane %v5452, 1
        %v5454 = vadd.f32 %v5452, %v5453
        %v5455 = vsel %vm1494, %v5446, 0.0
        %v5456 = vadd.f32 %v5444, %v5455
        %v5457 = vrot.slane %v5456, 4
        %v5458 = vadd.f32 %v5456, %v5457
        %v5459 = vrot.slane %v5458, 2
        %v5460 = vadd.f32 %v5458, %v5459
        %v5461 = vrot.slane %v5460, 1
        %v5462 = vadd.f32 %v5460, %v5461
        %5465 = vrot.lane.b32.xlu0 %v5454, 96
        %v5466 = vpop.permute.xlu0 %5465
        %5467 = vrot.lane.b32.xlu0 %v5462, 96
        %v5468 = vpop.permute.xlu0 %5467
        %v5469 = vsel %vm2857, %v5466, %v5468
        %v5472 = vsel %vm2857, %v5468, 0.0
        %v5473 = vadd.f32 %v5433, %v5469
        %v5474 = vadd.f32 %v5434, %v5472
        %5475 = vset.pattern.permute.xlu0 6
        %5476 = vperm.xlu0 %5475, %v5241
        %v5477 = vpop.permute.xlu0 %5476
        %5479 = vset.pattern.permute.xlu0 6
        %5480 = vperm.xlu0 %5479, %v5242
        %v5481 = vpop.permute.xlu0 %5480
        %v5483 = vmul.f32 %v5229, %v5477
        %v5484 = vmul.f32 %v5230, %v5477
        %v5485 = vmul.f32 %v5239, %v5481
        %v5486 = vmul.f32 %v5240, %v5481
        %v5487 = vsel %vm1494, %v5485, 0.0
        %v5488 = vadd.f32 %v5483, %v5487
        %v5489 = vrot.slane %v5488, 4
        %v5490 = vadd.f32 %v5488, %v5489
        %v5491 = vrot.slane %v5490, 2
        %v5492 = vadd.f32 %v5490, %v5491
        %v5493 = vrot.slane %v5492, 1
        %v5494 = vadd.f32 %v5492, %v5493
        %v5495 = vsel %vm1494, %v5486, 0.0
        %v5496 = vadd.f32 %v5484, %v5495
        %v5497 = vrot.slane %v5496, 4
        %v5498 = vadd.f32 %v5496, %v5497
        %v5499 = vrot.slane %v5498, 2
        %v5500 = vadd.f32 %v5498, %v5499
        %v5501 = vrot.slane %v5500, 1
        %v5502 = vadd.f32 %v5500, %v5501
        %5505 = vrot.lane.b32.xlu0 %v5494, 80
        %v5506 = vpop.permute.xlu0 %5505
        %5507 = vrot.lane.b32.xlu0 %v5502, 80
        %v5508 = vpop.permute.xlu0 %5507
        %v5509 = vsel %vm2898, %v5506, %v5508
        %v5512 = vsel %vm2898, %v5508, 0.0
        %v5513 = vadd.f32 %v5473, %v5509
        %v5514 = vadd.f32 %v5474, %v5512
        %v5515 = vxor.u32 %v5513, 2147483648
        %v5516 = vxor.u32 %v5514, 2147483648
        %v5517 = vmul.f32 %v5515, 1.442695
        %v5518 = vpow.pop %v5517
        %v5519 = vmul.f32 %v5516, 1.442695
        %v5520 = vpow.pop %v5519
        %v5521 = vadd.f32 %v5518, 1.0
        %v5522 = vadd.f32 %v5520, 1.0
        %v5523 = vrcp.pop %v5521
        %v5524 = vmul.f32 1.0, %v5523
        %v5525 = vrcp.pop %v5522
        %v5526 = vmul.f32 1.0, %v5525
        %v5527 = vlaneseq
        %v5528 = vshrl.u32 %v5527, 7
        %v5529 = vsub.s32 0, %v5528
        %v5530 = vrot.slane %v5524, %v5529
        %v5531 = vlaneseq
        %v5532 = vshrl.u32 %v5531, 7
        %v5533 = vsub.s32 0, %v5532
        %v5534 = vrot.slane %v5526, %v5533
        %v5535 = vmul.f32 %v4995, %v5530
        %v5536 = vmul.f32 %v4996, %v5534
        %v5537 = vmul.f32 %v4997, %v5530
        %v5538 = vmul.f32 %v4998, %v5534
        %v5539 = vld [vmem:[#allocation25] sm:$0xff]
        %v5540 = vld [vmem:[#allocation25 + $0x8] sm:$0xff]
        %v5541 = vld [vmem:[#allocation25 + $0x10] sm:$0xff]
        %v5542 = vld [vmem:[%s31] sm:$0xff]
        %v5543 = vld [vmem:[%s31 + $0x8] sm:$0xff]
        %v5544 = vld [vmem:[%s31 + $0x10] sm:$0xff]
        %5546 = vset.pattern.permute.xlu0 0
        %5547 = vperm.xlu0 %5546, %v5542
        %v5548 = vpop.permute.xlu0 %5547
        %5551 = vset.pattern.permute.xlu0 0
        %5552 = vperm.xlu0 %5551, %v5543
        %v5553 = vpop.permute.xlu0 %5552
        %5556 = vset.pattern.permute.xlu0 0
        %5557 = vperm.xlu0 %5556, %v5544
        %v5558 = vpop.permute.xlu0 %5557
        %v5561 = vsel %vm2170, %v5539, 0
        %v5564 = vsel %vm2170, %v5540, 0
        %v5567 = vsel %vm2170, %v5541, 0
        %v5570 = vsel %vm1884, %v5537, 0
        %v5573 = vsel %vm1884, %v5538, 0
        %5575 = vmatprep.subr.mxu0 %v5536
        %5576 = vmatpush1.msra.mxu0 %v5535
        %5577 = vmatprep.subr.mxu0 %v5573
        %5578 = vmatpush1.msra.mxu0 %v5570
        %5579 = vmatprep.subr.mxu0 0.0
        %5580 = vmatpush1.msra.mxu0 0.0
        %5581 = vmatprep.subr.mxu0 0.0
        %5582 = vmatpush1.msra.mxu0 0.0
        %5583 = vmatprep.subr.mxu0 0.0
        %5584 = vmatpush1.msra.mxu0 0.0
        %5585 = vmatprep.subr.mxu0 0.0
        %5586 = vmatpush1.msra.mxu0 0.0
        %5587 = vmatprep.subr.mxu0 0.0
        %5588 = vmatpush1.msra.mxu0 0.0
        %5589 = vmatprep.subr.mxu0 0.0
        %5590 = vmatpush1.msra.mxu0 0.0
        %5591 = vmatprep.subr.mxu0 0.0
        %5592 = vmatpush1.msra.mxu0 0.0
        %5593 = vmatprep.subr.mxu0 0.0
        %5594 = vmatpush1.msra.mxu0 0.0
        %5595 = vmatprep.subr.mxu0 0.0
        %5596 = vmatpush1.msra.mxu0 0.0
        %5597 = vmatprep.subr.mxu0 0.0
        %5598 = vmatpush1.msra.mxu0 0.0
        %5599 = vmatprep.subr.mxu0 0.0
        %5600 = vmatpush1.msra.mxu0 0.0
        %5601 = vmatprep.subr.mxu0 0.0
        %5602 = vmatpush1.msra.mxu0 0.0
        %5603 = vmatprep.subr.mxu0 0.0
        %5604 = vmatpush1.msra.mxu0 0.0
        %5605 = vmatprep.subr.mxu0 0.0
        %5606 = vmatpush1.msra.mxu0 0.0
        %5607 = vmatprep.subr.mxu0 0.0
        %5608 = vmatpush1.msra.mxu0 0.0
        %5609 = vmatprep.subr.mxu0 0.0
        %5610 = vmatpush1.msra.mxu0 0.0
        %5611 = vmatprep.subr.mxu0 0.0
        %5612 = vmatpush1.msra.mxu0 0.0
        %5613 = vmatprep.subr.mxu0 0.0
        %5614 = vmatpush1.msra.mxu0 0.0
        %5615 = vmatprep.subr.mxu0 0.0
        %5616 = vmatpush1.msra.mxu0 0.0
        %5617 = vmatprep.subr.mxu0 0.0
        %5618 = vmatpush1.msra.mxu0 0.0
        %5619 = vmatprep.subr.mxu0 0.0
        %5620 = vmatpush1.msra.mxu0 0.0
        %5621 = vmatprep.subr.mxu0 0.0
        %5622 = vmatpush1.msra.mxu0 0.0
        %5623 = vmatprep.subr.mxu0 0.0
        %5624 = vmatpush1.msra.mxu0 0.0
        %5625 = vmatprep.subr.mxu0 0.0
        %5626 = vmatpush1.msra.mxu0 0.0
        %5627 = vmatprep.subr.mxu0 0.0
        %5628 = vmatpush1.msra.mxu0 0.0
        %5629 = vmatprep.subr.mxu0 0.0
        %5630 = vmatpush1.msra.mxu0 0.0
        %5631 = vmatprep.subr.mxu0 0.0
        %5632 = vmatpush1.msra.mxu0 0.0
        %5633 = vmatprep.subr.mxu0 0.0
        %5634 = vmatpush1.msra.mxu0 0.0
        %5635 = vmatprep.subr.mxu0 0.0
        %5636 = vmatpush1.msra.mxu0 0.0
        %5637 = vmatprep.subr.mxu0 0.0
        %5638 = vmatpush1.msra.mxu0 0.0
        %5639 = vmatprep.mubr.f32.mxu0 0.0
        %5640 = vmatmul.mubr.f32.gmra.mrb[0].mxu0 %v5561
        %v5641 = vpop.f32.mrb[0].mxu0
        %v5642 = vadd.f32 %v5548, %v5641
        %v5643 = vpop.f32.mrb[0].mxu0
        %v5644 = vadd.f32 %v5548, %v5643
        %5645 = vmatprep.mubr.f32.mxu0 0.0
        %5646 = vmatmul.mubr.f32.gmra.mrb[0].mxu0 %v5564
        %v5647 = vpop.f32.mrb[0].mxu0
        %v5648 = vadd.f32 %v5553, %v5647
        %v5649 = vpop.f32.mrb[0].mxu0
        %v5650 = vadd.f32 %v5553, %v5649
        %5651 = vmatprep.mubr.f32.mxu0 0.0
        %5652 = vmatmul.mubr.f32.gmra.mrb[0].mxu0 %v5567
        %v5653 = vpop.f32.mrb[0].mxu0
        %v5654 = vadd.f32 %v5558, %v5653
        %v5655 = vpop.f32.mrb[0].mxu0
        %v5656 = vadd.f32 %v5558, %v5655
        %5657 = vdwg.mxu0
        %v5658 = vmul.f32 %v5642, 0.5
        %v5659 = vmul.f32 %v5644, 0.5
        %v5660 = vmul.f32 %v5648, 0.5
        %v5661 = vmul.f32 %v5650, 0.5
        %v5662 = vmul.f32 %v5654, 0.5
        %v5663 = vmul.f32 %v5656, 0.5
        %v5664 = vmul.f32 %v5642, 0.70710677
        %v5665 = vmul.f32 %v5644, 0.70710677
        %v5666 = vmul.f32 %v5648, 0.70710677
        %v5667 = vmul.f32 %v5650, 0.70710677
        %v5668 = vmul.f32 %v5654, 0.70710677
        %v5669 = vmul.f32 %v5656, 0.70710677
        %v5670 = verf.f32.pop %v5664
        %v5671 = verf.f32.pop %v5665
        %v5672 = verf.f32.pop %v5666
        %v5673 = verf.f32.pop %v5667
        %v5674 = verf.f32.pop %v5668
        %v5675 = verf.f32.pop %v5669
        %v5676 = vadd.f32 %v5670, 1.0
        %v5677 = vadd.f32 %v5671, 1.0
        %v5678 = vadd.f32 %v5672, 1.0
        %v5679 = vadd.f32 %v5673, 1.0
        %v5680 = vadd.f32 %v5674, 1.0
        %v5681 = vadd.f32 %v5675, 1.0
        %v5682 = vmul.f32 %v5658, %v5676
        %v5683 = vmul.f32 %v5659, %v5677
        %v5684 = vmul.f32 %v5660, %v5678
        %v5685 = vmul.f32 %v5661, %v5679
        %v5686 = vmul.f32 %v5662, %v5680
        %v5687 = vmul.f32 %v5663, %v5681
        %v5688 = vld [vmem:[#allocation27] sm:$0xff]
        %v5689 = vld [vmem:[#allocation27 + $0x8] sm:$0xf]
        %v5691 = vsel %vm3080, %v5688, 0
        %v5694 = vsel %vm3080, %v5689, 0
        %5696 = vmatprep.subr.mxu0 %v5683
        %5697 = vmatpush1.msra.mxu0 %v5682
        %5698 = vmatprep.subr.mxu0 %v5685
        %5699 = vmatpush1.msra.mxu0 %v5684
        %5700 = vmatprep.subr.mxu0 %v5687
        %5701 = vmatpush1.msra.mxu0 %v5686
        %5702 = vmatprep.subr.mxu0 0.0
        %5703 = vmatpush1.msra.mxu0 0.0
        %5704 = vmatprep.subr.mxu0 0.0
        %5705 = vmatpush1.msra.mxu0 0.0
        %5706 = vmatprep.subr.mxu0 0.0
        %5707 = vmatpush1.msra.mxu0 0.0
        %5708 = vmatprep.subr.mxu0 0.0
        %5709 = vmatpush1.msra.mxu0 0.0
        %5710 = vmatprep.subr.mxu0 0.0
        %5711 = vmatpush1.msra.mxu0 0.0
        %5712 = vmatprep.subr.mxu0 0.0
        %5713 = vmatpush1.msra.mxu0 0.0
        %5714 = vmatprep.subr.mxu0 0.0
        %5715 = vmatpush1.msra.mxu0 0.0
        %5716 = vmatprep.subr.mxu0 0.0
        %5717 = vmatpush1.msra.mxu0 0.0
        %5718 = vmatprep.subr.mxu0 0.0
        %5719 = vmatpush1.msra.mxu0 0.0
        %5720 = vmatprep.subr.mxu0 0.0
        %5721 = vmatpush1.msra.mxu0 0.0
        %5722 = vmatprep.subr.mxu0 0.0
        %5723 = vmatpush1.msra.mxu0 0.0
        %5724 = vmatprep.subr.mxu0 0.0
        %5725 = vmatpush1.msra.mxu0 0.0
        %5726 = vmatprep.subr.mxu0 0.0
        %5727 = vmatpush1.msra.mxu0 0.0
        %5728 = vmatprep.subr.mxu0 0.0
        %5729 = vmatpush1.msra.mxu0 0.0
        %5730 = vmatprep.subr.mxu0 0.0
        %5731 = vmatpush1.msra.mxu0 0.0
        %5732 = vmatprep.subr.mxu0 0.0
        %5733 = vmatpush1.msra.mxu0 0.0
        %5734 = vmatprep.subr.mxu0 0.0
        %5735 = vmatpush1.msra.mxu0 0.0
        %5736 = vmatprep.subr.mxu0 0.0
        %5737 = vmatpush1.msra.mxu0 0.0
        %5738 = vmatprep.subr.mxu0 0.0
        %5739 = vmatpush1.msra.mxu0 0.0
        %5740 = vmatprep.subr.mxu0 0.0
        %5741 = vmatpush1.msra.mxu0 0.0
        %5742 = vmatprep.subr.mxu0 0.0
        %5743 = vmatpush1.msra.mxu0 0.0
        %5744 = vmatprep.subr.mxu0 0.0
        %5745 = vmatpush1.msra.mxu0 0.0
        %5746 = vmatprep.subr.mxu0 0.0
        %5747 = vmatpush1.msra.mxu0 0.0
        %5748 = vmatprep.subr.mxu0 0.0
        %5749 = vmatpush1.msra.mxu0 0.0
        %5750 = vmatprep.subr.mxu0 0.0
        %5751 = vmatpush1.msra.mxu0 0.0
        %5752 = vmatprep.subr.mxu0 0.0
        %5753 = vmatpush1.msra.mxu0 0.0
        %5754 = vmatprep.subr.mxu0 0.0
        %5755 = vmatpush1.msra.mxu0 0.0
        %5756 = vmatprep.subr.mxu0 0.0
        %5757 = vmatpush1.msra.mxu0 0.0
        %5758 = vmatprep.subr.mxu0 0.0
        %5759 = vmatpush1.msra.mxu0 0.0
        %5760 = vmatprep.mubr.f32.mxu0 0.0
        %5761 = vmatmul.mubr.f32.gmra.mrb[0].mxu0 %v5691
        %v5762 = vpop.f32.mrb[0].mxu0
        %v5763 = vadd.f32 0.0, %v5762
        %v5764 = vpop.f32.mrb[0].mxu0
        %v5765 = vadd.f32 0.0, %v5764
        %5766 = vmatprep.mubr.f32.mxu0 0.0
        %5767 = vmatmul.mubr.f32.gmra.mrb[0].mxu0 %v5694
        %v5768 = vpop.f32.mrb[0].mxu0
        %v5769 = vadd.f32 0.0, %v5768
        %v5770 = vpop.f32.mrb[0].mxu0
        %v5771 = vadd.f32 0.0, %v5770
        %5772 = vdwg.mxu0
        %v5773 = vadd.f32 %v4465, %v5763
        %v5774 = vadd.f32 %v4466, %v5765
        %v5775 = vadd.f32 %v4467, %v5769
        %v5776 = vadd.f32 %v4468, %v5771
        %5779 = vrot.lane.b32.xlu0 %v5773, 8
        %v5780 = vpop.permute.xlu0 %5779
        %5781 = vrot.lane.b32.xlu0 %v5774, 8
        %v5782 = vpop.permute.xlu0 %5781
        %vm5783 = vcmask 64512
        %v5784 = vsel %vm5783, %v5780, %v5782
        %v5787 = vsel %vm5783, 0.0, %v5780
        %vm5788 = vcmp.ge.s32.totalorder %v1442, 8
        %vm5789 = vcmp.ge.s32.totalorder %v1443, 8
        %v5790 = vsel %vm5788, 1, 0
        %v5791 = vsel %vm5789, 1, 0
        %vm5792 = vcmp.eq.s32.totalorder %v5790, 1
        %vm5793 = vcmp.eq.s32.totalorder %v5791, 1
        %v5794 = vsel %vm5792, %v5787, 0.0
        %v5795 = vsel %vm5793, %v5784, 0.0
        %5796 = vrot.lane.b32.xlu0 %v5773, 120
        %v5797 = vpop.permute.xlu0 %5796
        %5798 = vrot.lane.b32.xlu0 %v5774, 120
        %v5799 = vpop.permute.xlu0 %5798
        %vm5800 = vcmask 982016
        %v5801 = vsel %vm5800, %v5797, %v5799
        %v5804 = vsel %vm5800, %v5799, 0.0
        %vm5805 = vcmp.lt.s32.totalorder %v1442, 8
        %vm5806 = vcmp.lt.s32.totalorder %v1443, 8
        %v5807 = vsel %vm5805, 1, 0
        %v5808 = vsel %vm5806, 1, 0
        %vm5809 = vcmp.eq.s32.totalorder %v5807, 1
        %vm5810 = vcmp.eq.s32.totalorder %v5808, 1
        %v5811 = vsel %vm5809, %v5801, 0.0
        %v5812 = vsel %vm5810, %v5804, 0.0
        %v5813 = vrot.slane %v5773, 2
        %v5814 = vrot.slane %v5774, 2
        %v5819 = vrot.slane %v5811, 4
        %v5820 = vrot.slane %v5812, 4
        %v5823 = vsel %vm1494, %v5794, %v5813
        %v5824 = vsel %vm1494, %v5795, %v5814
        %v5825 = vsel %vm1884, %v5813, %v5819
        %v5826 = vsel %vm1884, %v5814, %v5820
        %v5827 = vld [vmem:[%s57] sm:$0x3f]
        %v5829 = vsel %vm1888, %v5827, 0
        %v5831 = vsel %vm1892, %v5819, 0
        %v5833 = vsel %vm1892, %v5820, 0
        %5835 = vmatprep.subr.mxu0 %v5824
        %5836 = vmatpush1.msra.mxu0 %v5823
        %5837 = vmatprep.subr.mxu0 %v5826
        %5838 = vmatpush1.msra.mxu0 %v5825
        %5839 = vmatprep.subr.mxu0 %v5833
        %5840 = vmatpush1.msra.mxu0 %v5831
        %5841 = vmatprep.subr.mxu0 0.0
        %5842 = vmatpush1.msra.mxu0 0.0
        %5843 = vmatprep.subr.mxu0 0.0
        %5844 = vmatpush1.msra.mxu0 0.0
        %5845 = vmatprep.subr.mxu0 0.0
        %5846 = vmatpush1.msra.mxu0 0.0
        %5847 = vmatprep.subr.mxu0 0.0
        %5848 = vmatpush1.msra.mxu0 0.0
        %5849 = vmatprep.subr.mxu0 0.0
        %5850 = vmatpush1.msra.mxu0 0.0
        %5851 = vmatprep.subr.mxu0 0.0
        %5852 = vmatpush1.msra.mxu0 0.0
        %5853 = vmatprep.subr.mxu0 0.0
        %5854 = vmatpush1.msra.mxu0 0.0
        %5855 = vmatprep.subr.mxu0 0.0
        %5856 = vmatpush1.msra.mxu0 0.0
        %5857 = vmatprep.subr.mxu0 0.0
        %5858 = vmatpush1.msra.mxu0 0.0
        %5859 = vmatprep.subr.mxu0 0.0
        %5860 = vmatpush1.msra.mxu0 0.0
        %5861 = vmatprep.subr.mxu0 0.0
        %5862 = vmatpush1.msra.mxu0 0.0
        %5863 = vmatprep.subr.mxu0 0.0
        %5864 = vmatpush1.msra.mxu0 0.0
        %5865 = vmatprep.subr.mxu0 0.0
        %5866 = vmatpush1.msra.mxu0 0.0
        %5867 = vmatprep.subr.mxu0 0.0
        %5868 = vmatpush1.msra.mxu0 0.0
        %5869 = vmatprep.subr.mxu0 0.0
        %5870 = vmatpush1.msra.mxu0 0.0
        %5871 = vmatprep.subr.mxu0 0.0
        %5872 = vmatpush1.msra.mxu0 0.0
        %5873 = vmatprep.subr.mxu0 0.0
        %5874 = vmatpush1.msra.mxu0 0.0
        %5875 = vmatprep.subr.mxu0 0.0
        %5876 = vmatpush1.msra.mxu0 0.0
        %5877 = vmatprep.subr.mxu0 0.0
        %5878 = vmatpush1.msra.mxu0 0.0
        %5879 = vmatprep.subr.mxu0 0.0
        %5880 = vmatpush1.msra.mxu0 0.0
        %5881 = vmatprep.subr.mxu0 0.0
        %5882 = vmatpush1.msra.mxu0 0.0
        %5883 = vmatprep.subr.mxu0 0.0
        %5884 = vmatpush1.msra.mxu0 0.0
        %5885 = vmatprep.subr.mxu0 0.0
        %5886 = vmatpush1.msra.mxu0 0.0
        %5887 = vmatprep.subr.mxu0 0.0
        %5888 = vmatpush1.msra.mxu0 0.0
        %5889 = vmatprep.subr.mxu0 0.0
        %5890 = vmatpush1.msra.mxu0 0.0
        %5891 = vmatprep.subr.mxu0 0.0
        %5892 = vmatpush1.msra.mxu0 0.0
        %5893 = vmatprep.subr.mxu0 0.0
        %5894 = vmatpush1.msra.mxu0 0.0
        %5895 = vmatprep.subr.mxu0 0.0
        %5896 = vmatpush1.msra.mxu0 0.0
        %5897 = vmatprep.subr.mxu0 0.0
        %5898 = vmatpush1.msra.mxu0 0.0
        %5899 = vmatprep.mubr.f32.mxu0 0.0
        %5900 = vmatmul.mubr.f32.gmra.mrb[0].mxu0 %v5829
        %v5901 = vpop.f32.mrb[0].mxu0
        %v5902 = vadd.f32 0.0, %v5901
        %v5903 = vpop.f32.mrb[0].mxu0
        %5904 = vdwg.mxu0
        %v5905 = vadd.f32 %v5902, 0.0
        %s5906 = scalar_lea.vmem %s57, 8
        %v5907 = vld [vmem:[%s5906] sm:$0x3f]
        %v5909 = vsel %vm1888, %v5907, 0
        %5911 = vmatprep.subr.mxu0 %v5824
        %5912 = vmatpush1.msra.mxu0 %v5823
        %5913 = vmatprep.subr.mxu0 %v5826
        %5914 = vmatpush1.msra.mxu0 %v5825
        %5915 = vmatprep.subr.mxu0 %v5833
        %5916 = vmatpush1.msra.mxu0 %v5831
        %5917 = vmatprep.subr.mxu0 0.0
        %5918 = vmatpush1.msra.mxu0 0.0
        %5919 = vmatprep.subr.mxu0 0.0
        %5920 = vmatpush1.msra.mxu0 0.0
        %5921 = vmatprep.subr.mxu0 0.0
        %5922 = vmatpush1.msra.mxu0 0.0
        %5923 = vmatprep.subr.mxu0 0.0
        %5924 = vmatpush1.msra.mxu0 0.0
        %5925 = vmatprep.subr.mxu0 0.0
        %5926 = vmatpush1.msra.mxu0 0.0
        %5927 = vmatprep.subr.mxu0 0.0
        %5928 = vmatpush1.msra.mxu0 0.0
        %5929 = vmatprep.subr.mxu0 0.0
        %5930 = vmatpush1.msra.mxu0 0.0
        %5931 = vmatprep.subr.mxu0 0.0
        %5932 = vmatpush1.msra.mxu0 0.0
        %5933 = vmatprep.subr.mxu0 0.0
        %5934 = vmatpush1.msra.mxu0 0.0
        %5935 = vmatprep.subr.mxu0 0.0
        %5936 = vmatpush1.msra.mxu0 0.0
        %5937 = vmatprep.subr.mxu0 0.0
        %5938 = vmatpush1.msra.mxu0 0.0
        %5939 = vmatprep.subr.mxu0 0.0
        %5940 = vmatpush1.msra.mxu0 0.0
        %5941 = vmatprep.subr.mxu0 0.0
        %5942 = vmatpush1.msra.mxu0 0.0
        %5943 = vmatprep.subr.mxu0 0.0
        %5944 = vmatpush1.msra.mxu0 0.0
        %5945 = vmatprep.subr.mxu0 0.0
        %5946 = vmatpush1.msra.mxu0 0.0
        %5947 = vmatprep.subr.mxu0 0.0
        %5948 = vmatpush1.msra.mxu0 0.0
        %5949 = vmatprep.subr.mxu0 0.0
        %5950 = vmatpush1.msra.mxu0 0.0
        %5951 = vmatprep.subr.mxu0 0.0
        %5952 = vmatpush1.msra.mxu0 0.0
        %5953 = vmatprep.subr.mxu0 0.0
        %5954 = vmatpush1.msra.mxu0 0.0
        %5955 = vmatprep.subr.mxu0 0.0
        %5956 = vmatpush1.msra.mxu0 0.0
        %5957 = vmatprep.subr.mxu0 0.0
        %5958 = vmatpush1.msra.mxu0 0.0
        %5959 = vmatprep.subr.mxu0 0.0
        %5960 = vmatpush1.msra.mxu0 0.0
        %5961 = vmatprep.subr.mxu0 0.0
        %5962 = vmatpush1.msra.mxu0 0.0
        %5963 = vmatprep.subr.mxu0 0.0
        %5964 = vmatpush1.msra.mxu0 0.0
        %5965 = vmatprep.subr.mxu0 0.0
        %5966 = vmatpush1.msra.mxu0 0.0
        %5967 = vmatprep.subr.mxu0 0.0
        %5968 = vmatpush1.msra.mxu0 0.0
        %5969 = vmatprep.subr.mxu0 0.0
        %5970 = vmatpush1.msra.mxu0 0.0
        %5971 = vmatprep.subr.mxu0 0.0
        %5972 = vmatpush1.msra.mxu0 0.0
        %5973 = vmatprep.subr.mxu0 0.0
        %5974 = vmatpush1.msra.mxu0 0.0
        %5975 = vmatprep.mubr.f32.mxu0 0.0
        %5976 = vmatmul.mubr.f32.gmra.mrb[0].mxu0 %v5909
        %v5977 = vpop.f32.mrb[0].mxu0
        %v5978 = vadd.f32 0.0, %v5977
        %v5979 = vpop.f32.mrb[0].mxu0
        %v5980 = vadd.f32 0.0, %v5979
        %5981 = vdwg.mxu0
        %v5982 = vadd.f32 %v5978, 0.0
        %v5983 = vadd.f32 %v5905, %v5980
        %s5984 = scalar_lea.vmem %s57, 16
        %v5985 = vld [vmem:[%s5984] sm:$0x3f]
        %v5987 = vsel %vm1888, %v5985, 0
        %5989 = vmatprep.subr.mxu0 %v5824
        %5990 = vmatpush1.msra.mxu0 %v5823
        %5991 = vmatprep.subr.mxu0 %v5826
        %5992 = vmatpush1.msra.mxu0 %v5825
        %5993 = vmatprep.subr.mxu0 %v5833
        %5994 = vmatpush1.msra.mxu0 %v5831
        %5995 = vmatprep.subr.mxu0 0.0
        %5996 = vmatpush1.msra.mxu0 0.0
        %5997 = vmatprep.subr.mxu0 0.0
        %5998 = vmatpush1.msra.mxu0 0.0
        %5999 = vmatprep.subr.mxu0 0.0
        %6000 = vmatpush1.msra.mxu0 0.0
        %6001 = vmatprep.subr.mxu0 0.0
        %6002 = vmatpush1.msra.mxu0 0.0
        %6003 = vmatprep.subr.mxu0 0.0
        %6004 = vmatpush1.msra.mxu0 0.0
        %6005 = vmatprep.subr.mxu0 0.0
        %6006 = vmatpush1.msra.mxu0 0.0
        %6007 = vmatprep.subr.mxu0 0.0
        %6008 = vmatpush1.msra.mxu0 0.0
        %6009 = vmatprep.subr.mxu0 0.0
        %6010 = vmatpush1.msra.mxu0 0.0
        %6011 = vmatprep.subr.mxu0 0.0
        %6012 = vmatpush1.msra.mxu0 0.0
        %6013 = vmatprep.subr.mxu0 0.0
        %6014 = vmatpush1.msra.mxu0 0.0
        %6015 = vmatprep.subr.mxu0 0.0
        %6016 = vmatpush1.msra.mxu0 0.0
        %6017 = vmatprep.subr.mxu0 0.0
        %6018 = vmatpush1.msra.mxu0 0.0
        %6019 = vmatprep.subr.mxu0 0.0
        %6020 = vmatpush1.msra.mxu0 0.0
        %6021 = vmatprep.subr.mxu0 0.0
        %6022 = vmatpush1.msra.mxu0 0.0
        %6023 = vmatprep.subr.mxu0 0.0
        %6024 = vmatpush1.msra.mxu0 0.0
        %6025 = vmatprep.subr.mxu0 0.0
        %6026 = vmatpush1.msra.mxu0 0.0
        %6027 = vmatprep.subr.mxu0 0.0
        %6028 = vmatpush1.msra.mxu0 0.0
        %6029 = vmatprep.subr.mxu0 0.0
        %6030 = vmatpush1.msra.mxu0 0.0
        %6031 = vmatprep.subr.mxu0 0.0
        %6032 = vmatpush1.msra.mxu0 0.0
        %6033 = vmatprep.subr.mxu0 0.0
        %6034 = vmatpush1.msra.mxu0 0.0
        %6035 = vmatprep.subr.mxu0 0.0
        %6036 = vmatpush1.msra.mxu0 0.0
        %6037 = vmatprep.subr.mxu0 0.0
        %6038 = vmatpush1.msra.mxu0 0.0
        %6039 = vmatprep.subr.mxu0 0.0
        %6040 = vmatpush1.msra.mxu0 0.0
        %6041 = vmatprep.subr.mxu0 0.0
        %6042 = vmatpush1.msra.mxu0 0.0
        %6043 = vmatprep.subr.mxu0 0.0
        %6044 = vmatpush1.msra.mxu0 0.0
        %6045 = vmatprep.subr.mxu0 0.0
        %6046 = vmatpush1.msra.mxu0 0.0
        %6047 = vmatprep.subr.mxu0 0.0
        %6048 = vmatpush1.msra.mxu0 0.0
        %6049 = vmatprep.subr.mxu0 0.0
        %6050 = vmatpush1.msra.mxu0 0.0
        %6051 = vmatprep.subr.mxu0 0.0
        %6052 = vmatpush1.msra.mxu0 0.0
        %6053 = vmatprep.mubr.f32.mxu0 0.0
        %6054 = vmatmul.mubr.f32.gmra.mrb[0].mxu0 %v5987
        %v6055 = vpop.f32.mrb[0].mxu0
        %v6056 = vpop.f32.mrb[0].mxu0
        %v6057 = vadd.f32 0.0, %v6056
        %6058 = vdwg.mxu0
        %v6059 = vadd.f32 %v5982, %v6057
        %v6060 = vadd.f32 %v5983, 0.0
        %v6061 = vsel %vm1494, %v6059, %v5773
        %v6062 = vsel %vm1494, %v6060, %v5774
        %v6063 = vadd.f32 %v6061, %v6062
        %6064 = vadd.xlane.f32.xlu0 %v6063
        %v6065 = vpop.xlane.xlu0 %6064
        %v6066 = vsel %vm1884, %v5775, 0.0
        %v6067 = vsel %vm1884, %v5776, 0.0
        %v6068 = vadd.f32 %v6066, %v6067
        %6069 = vadd.xlane.f32.xlu0 %v6068
        %v6070 = vpop.xlane.xlu0 %6069
        %v6071 = vmul.f32 %v6065, %v2156
        %v6072 = vmul.f32 %v6070, %v2156
        %v6073 = vmax.f32 %v6061, %v6062
        %6074 = vmax.xlane.f32.xlu0 %v6073
        %v6075 = vpop.xlane.xlu0 %6074
        %v6076 = vsel %vm1884, %v5775, -inf
        %v6077 = vsel %vm1884, %v5776, -inf
        %v6078 = vmax.f32 %v6076, %v6077
        %6079 = vmax.xlane.f32.xlu0 %v6078
        %v6080 = vpop.xlane.xlu0 %6079
        %v6081 = vsel %vm1451, %v6071, %v6075
        %v6082 = vsel %vm1451, %v6072, %v6080
        %v6083 = vld [vmem:[#allocation30] sm:$0x7]
        %v6085 = vsel %vm2170, %v6083, 0
        %v6088 = vsel %vm1884, %v6082, 0
        %6090 = vmatprep.subr.mxu0 0.0
        %6091 = vmatpush1.msra.mxu0 %v6081
        %6092 = vmatprep.subr.mxu0 0.0
        %6093 = vmatpush1.msra.mxu0 %v6088
        %6094 = vmatprep.subr.mxu0 0.0
        %6095 = vmatpush1.msra.mxu0 0.0
        %6096 = vmatprep.subr.mxu0 0.0
        %6097 = vmatpush1.msra.mxu0 0.0
        %6098 = vmatprep.subr.mxu0 0.0
        %6099 = vmatpush1.msra.mxu0 0.0
        %6100 = vmatprep.subr.mxu0 0.0
        %6101 = vmatpush1.msra.mxu0 0.0
        %6102 = vmatprep.subr.mxu0 0.0
        %6103 = vmatpush1.msra.mxu0 0.0
        %6104 = vmatprep.subr.mxu0 0.0
        %6105 = vmatpush1.msra.mxu0 0.0
        %6106 = vmatprep.subr.mxu0 0.0
        %6107 = vmatpush1.msra.mxu0 0.0
        %6108 = vmatprep.subr.mxu0 0.0
        %6109 = vmatpush1.msra.mxu0 0.0
        %6110 = vmatprep.subr.mxu0 0.0
        %6111 = vmatpush1.msra.mxu0 0.0
        %6112 = vmatprep.subr.mxu0 0.0
        %6113 = vmatpush1.msra.mxu0 0.0
        %6114 = vmatprep.subr.mxu0 0.0
        %6115 = vmatpush1.msra.mxu0 0.0
        %6116 = vmatprep.subr.mxu0 0.0
        %6117 = vmatpush1.msra.mxu0 0.0
        %6118 = vmatprep.subr.mxu0 0.0
        %6119 = vmatpush1.msra.mxu0 0.0
        %6120 = vmatprep.subr.mxu0 0.0
        %6121 = vmatpush1.msra.mxu0 0.0
        %6122 = vmatprep.subr.mxu0 0.0
        %6123 = vmatpush1.msra.mxu0 0.0
        %6124 = vmatprep.subr.mxu0 0.0
        %6125 = vmatpush1.msra.mxu0 0.0
        %6126 = vmatprep.subr.mxu0 0.0
        %6127 = vmatpush1.msra.mxu0 0.0
        %6128 = vmatprep.subr.mxu0 0.0
        %6129 = vmatpush1.msra.mxu0 0.0
        %6130 = vmatprep.subr.mxu0 0.0
        %6131 = vmatpush1.msra.mxu0 0.0
        %6132 = vmatprep.subr.mxu0 0.0
        %6133 = vmatpush1.msra.mxu0 0.0
        %6134 = vmatprep.subr.mxu0 0.0
        %6135 = vmatpush1.msra.mxu0 0.0
        %6136 = vmatprep.subr.mxu0 0.0
        %6137 = vmatpush1.msra.mxu0 0.0
        %6138 = vmatprep.subr.mxu0 0.0
        %6139 = vmatpush1.msra.mxu0 0.0
        %6140 = vmatprep.subr.mxu0 0.0
        %6141 = vmatpush1.msra.mxu0 0.0
        %6142 = vmatprep.subr.mxu0 0.0
        %6143 = vmatpush1.msra.mxu0 0.0
        %6144 = vmatprep.subr.mxu0 0.0
        %6145 = vmatpush1.msra.mxu0 0.0
        %6146 = vmatprep.subr.mxu0 0.0
        %6147 = vmatpush1.msra.mxu0 0.0
        %6148 = vmatprep.subr.mxu0 0.0
        %6149 = vmatpush1.msra.mxu0 0.0
        %6150 = vmatprep.subr.mxu0 0.0
        %6151 = vmatpush1.msra.mxu0 0.0
        %6152 = vmatprep.subr.mxu0 0.0
        %6153 = vmatpush1.msra.mxu0 0.0
        %6154 = vmatprep.mubr.f32.mxu0 0.0
        %6155 = vmatmul.mubr.f32.gmra.mrb[0].mxu0 %v6085
        %v6156 = vpop.f32.mrb[0].mxu0
        %v6157 = vadd.f32 0.0, %v6156
        %v6158 = vpop.f32.mrb[0].mxu0
        %6159 = vdwg.mxu0
        %v6160 = vmax.f32 %v6157, 0.0
        %v6161 = vld [vmem:[#allocation31] sm:$0xff]
        %v6162 = vld [vmem:[#allocation31 + $0x8] sm:$0xf]
        %v6164 = vsel %vm2250, %v6161, 0
        %v6167 = vsel %vm2250, %v6162, 0
        %v6170 = vsel %vm1491, %v6160, 0
        %6172 = vmatprep.subr.mxu0 0.0
        %6173 = vmatpush1.msra.mxu0 %v6170
        %6174 = vmatprep.subr.mxu0 0.0
        %6175 = vmatpush1.msra.mxu0 0.0
        %6176 = vmatprep.subr.mxu0 0.0
        %6177 = vmatpush1.msra.mxu0 0.0
        %6178 = vmatprep.subr.mxu0 0.0
        %6179 = vmatpush1.msra.mxu0 0.0
        %6180 = vmatprep.subr.mxu0 0.0
        %6181 = vmatpush1.msra.mxu0 0.0
        %6182 = vmatprep.subr.mxu0 0.0
        %6183 = vmatpush1.msra.mxu0 0.0
        %6184 = vmatprep.subr.mxu0 0.0
        %6185 = vmatpush1.msra.mxu0 0.0
        %6186 = vmatprep.subr.mxu0 0.0
        %6187 = vmatpush1.msra.mxu0 0.0
        %6188 = vmatprep.subr.mxu0 0.0
        %6189 = vmatpush1.msra.mxu0 0.0
        %6190 = vmatprep.subr.mxu0 0.0
        %6191 = vmatpush1.msra.mxu0 0.0
        %6192 = vmatprep.subr.mxu0 0.0
        %6193 = vmatpush1.msra.mxu0 0.0
        %6194 = vmatprep.subr.mxu0 0.0
        %6195 = vmatpush1.msra.mxu0 0.0
        %6196 = vmatprep.subr.mxu0 0.0
        %6197 = vmatpush1.msra.mxu0 0.0
        %6198 = vmatprep.subr.mxu0 0.0
        %6199 = vmatpush1.msra.mxu0 0.0
        %6200 = vmatprep.subr.mxu0 0.0
        %6201 = vmatpush1.msra.mxu0 0.0
        %6202 = vmatprep.subr.mxu0 0.0
        %6203 = vmatpush1.msra.mxu0 0.0
        %6204 = vmatprep.subr.mxu0 0.0
        %6205 = vmatpush1.msra.mxu0 0.0
        %6206 = vmatprep.subr.mxu0 0.0
        %6207 = vmatpush1.msra.mxu0 0.0
        %6208 = vmatprep.subr.mxu0 0.0
        %6209 = vmatpush1.msra.mxu0 0.0
        %6210 = vmatprep.subr.mxu0 0.0
        %6211 = vmatpush1.msra.mxu0 0.0
        %6212 = vmatprep.subr.mxu0 0.0
        %6213 = vmatpush1.msra.mxu0 0.0
        %6214 = vmatprep.subr.mxu0 0.0
        %6215 = vmatpush1.msra.mxu0 0.0
        %6216 = vmatprep.subr.mxu0 0.0
        %6217 = vmatpush1.msra.mxu0 0.0
        %6218 = vmatprep.subr.mxu0 0.0
        %6219 = vmatpush1.msra.mxu0 0.0
        %6220 = vmatprep.subr.mxu0 0.0
        %6221 = vmatpush1.msra.mxu0 0.0
        %6222 = vmatprep.subr.mxu0 0.0
        %6223 = vmatpush1.msra.mxu0 0.0
        %6224 = vmatprep.subr.mxu0 0.0
        %6225 = vmatpush1.msra.mxu0 0.0
        %6226 = vmatprep.subr.mxu0 0.0
        %6227 = vmatpush1.msra.mxu0 0.0
        %6228 = vmatprep.subr.mxu0 0.0
        %6229 = vmatpush1.msra.mxu0 0.0
        %6230 = vmatprep.subr.mxu0 0.0
        %6231 = vmatpush1.msra.mxu0 0.0
        %6232 = vmatprep.subr.mxu0 0.0
        %6233 = vmatpush1.msra.mxu0 0.0
        %6234 = vmatprep.subr.mxu0 0.0
        %6235 = vmatpush1.msra.mxu0 0.0
        %6236 = vmatprep.mubr.f32.mxu0 0.0
        %6237 = vmatmul.mubr.f32.gmra.mrb[0].mxu0 %v6164
        %v6238 = vpop.f32.mrb[0].mxu0
        %v6239 = vadd.f32 0.0, %v6238
        %v6240 = vpop.f32.mrb[0].mxu0
        %6241 = vmatprep.mubr.f32.mxu0 0.0
        %6242 = vmatmul.mubr.f32.gmra.mrb[0].mxu0 %v6167
        %v6243 = vpop.f32.mrb[0].mxu0
        %v6244 = vadd.f32 0.0, %v6243
        %v6245 = vpop.f32.mrb[0].mxu0
        %6246 = vdwg.mxu0
        %6249 = vrot.lane.b32.xlu0 %v6239, 127
        %v6250 = vpop.permute.xlu0 %6249
        %6251 = vrot.lane.b32.xlu0 %v6244, 127
        %v6252 = vpop.permute.xlu0 %6251
        %v6255 = vadd.f32 %v6239, %v6250
        %v6256 = vadd.f32 %v6244, %v6252
        %v6257 = vxor.u32 %v6255, 2147483648
        %v6258 = vxor.u32 %v6256, 2147483648
        %v6259 = vmul.f32 %v6257, 1.442695
        %v6260 = vpow.pop %v6259
        %v6261 = vmul.f32 %v6258, 1.442695
        %v6262 = vpow.pop %v6261
        %v6263 = vadd.f32 %v6260, 1.0
        %v6264 = vadd.f32 %v6262, 1.0
        %v6265 = vrcp.pop %v6263
        %v6266 = vmul.f32 1.0, %v6265
        %v6267 = vrcp.pop %v6264
        %v6268 = vmul.f32 1.0, %v6267
        %6270 = vset.pattern.permute.xlu0 0
        %6271 = vperm.xlu0 %6270, %v6266
        %v6272 = vpop.permute.xlu0 %6271
        %6275 = vset.pattern.permute.xlu0 0
        %6276 = vperm.xlu0 %6275, %v6268
        %v6277 = vpop.permute.xlu0 %6276
        %v6279 = vmul.f32 %v6061, %v6272
        %v6280 = vmul.f32 %v6062, %v6272
        %v6281 = vmul.f32 %v5775, %v6277
        %v6282 = vmul.f32 %v5776, %v6277
        %v6283 = vsel %vm1884, %v6281, 0.0
        %v6284 = vadd.f32 %v6279, %v6283
        %v6285 = vrot.slane %v6284, 4
        %v6286 = vadd.f32 %v6284, %v6285
        %v6287 = vrot.slane %v6286, 2
        %v6288 = vadd.f32 %v6286, %v6287
        %v6289 = vrot.slane %v6288, 1
        %v6290 = vadd.f32 %v6288, %v6289
        %v6291 = vsel %vm1884, %v6282, 0.0
        %v6292 = vadd.f32 %v6280, %v6291
        %v6293 = vrot.slane %v6292, 4
        %v6294 = vadd.f32 %v6292, %v6293
        %v6295 = vrot.slane %v6294, 2
        %v6296 = vadd.f32 %v6294, %v6295
        %v6297 = vrot.slane %v6296, 1
        %v6298 = vadd.f32 %v6296, %v6297
        %v6299 = vmul.f32 %v6290, %v2387
        %v6300 = vmul.f32 %v6298, %v2387
        %v6301 = vsel %vm1884, %v6281, -inf
        %v6302 = vmax.f32 %v6279, %v6301
        %v6303 = vrot.slane %v6302, 4
        %v6304 = vmax.f32 %v6302, %v6303
        %v6305 = vrot.slane %v6304, 2
        %v6306 = vmax.f32 %v6304, %v6305
        %v6307 = vrot.slane %v6306, 1
        %v6308 = vmax.f32 %v6306, %v6307
        %v6309 = vsel %vm1884, %v6282, -inf
        %v6310 = vmax.f32 %v6280, %v6309
        %v6311 = vrot.slane %v6310, 4
        %v6312 = vmax.f32 %v6310, %v6311
        %v6313 = vrot.slane %v6312, 2
        %v6314 = vmax.f32 %v6312, %v6313
        %v6315 = vrot.slane %v6314, 1
        %v6316 = vmax.f32 %v6314, %v6315
        %6319 = vrot.lane.b32.xlu0 %v6299, 3
        %v6320 = vpop.permute.xlu0 %6319
        %6321 = vrot.lane.b32.xlu0 %v6300, 3
        %v6322 = vpop.permute.xlu0 %6321
        %v6323 = vsel %vm2250, %v6320, %v6322
        %v6326 = vsel %vm2250, 0.0, %v6320
        %v6327 = vsel %vm2416, %v6326, 0.0
        %v6328 = vsel %vm2417, %v6323, 0.0
        %6329 = vrot.lane.b32.xlu0 %v6299, 2
        %v6330 = vpop.permute.xlu0 %6329
        %6331 = vrot.lane.b32.xlu0 %v6300, 2
        %v6332 = vpop.permute.xlu0 %6331
        %v6333 = vsel %vm2424, %v6330, %v6332
        %v6336 = vsel %vm2424, 0.0, %v6330
        %v6337 = vsel %vm2429, %v6336, 0.0
        %v6338 = vsel %vm2430, %v6333, 0.0
        %6339 = vrot.lane.b32.xlu0 %v6299, 1
        %v6340 = vpop.permute.xlu0 %6339
        %6341 = vrot.lane.b32.xlu0 %v6300, 1
        %v6342 = vpop.permute.xlu0 %6341
        %v6343 = vsel %vm1451, %v6340, %v6342
        %v6346 = vsel %vm1451, 0.0, %v6340
        %v6347 = vsel %vm1456, %v6346, 0.0
        %v6348 = vsel %vm1457, %v6343, 0.0
        %6349 = vrot.lane.b32.xlu0 %v6299, 127
        %v6350 = vpop.permute.xlu0 %6349
        %6351 = vrot.lane.b32.xlu0 %v6300, 127
        %v6352 = vpop.permute.xlu0 %6351
        %v6353 = vsel %vm1468, %v6350, %v6352
        %v6356 = vsel %vm1468, %v6352, 0.0
        %v6357 = vsel %vm1473, %v6353, 0.0
        %v6358 = vsel %vm1474, %v6356, 0.0
        %6359 = vrot.lane.b32.xlu0 %v6299, 126
        %v6360 = vpop.permute.xlu0 %6359
        %6361 = vrot.lane.b32.xlu0 %v6300, 126
        %v6362 = vpop.permute.xlu0 %6361
        %v6363 = vsel %vm2457, %v6360, %v6362
        %v6366 = vsel %vm2457, %v6362, 0.0
        %v6367 = vsel %vm2462, %v6363, 0.0
        %v6368 = vsel %vm2463, %v6366, 0.0
        %6369 = vrot.lane.b32.xlu0 %v6299, 125
        %v6370 = vpop.permute.xlu0 %6369
        %6371 = vrot.lane.b32.xlu0 %v6300, 125
        %v6372 = vpop.permute.xlu0 %6371
        %v6373 = vsel %vm2470, %v6370, %v6372
        %v6376 = vsel %vm2470, %v6372, 0.0
        %v6377 = vsel %vm2475, %v6373, 0.0
        %v6378 = vsel %vm2476, %v6376, 0.0
        %6381 = vrot.lane.b32.xlu0 %v6308, 3
        %v6382 = vpop.permute.xlu0 %6381
        %6383 = vrot.lane.b32.xlu0 %v6316, 3
        %v6384 = vpop.permute.xlu0 %6383
        %v6385 = vsel %vm2250, %v6382, %v6384
        %v6388 = vsel %vm2250, 0.0, %v6382
        %v6389 = vsel %vm2416, %v6388, 0.0
        %v6390 = vsel %vm2417, %v6385, 0.0
        %6391 = vrot.lane.b32.xlu0 %v6308, 2
        %v6392 = vpop.permute.xlu0 %6391
        %6393 = vrot.lane.b32.xlu0 %v6316, 2
        %v6394 = vpop.permute.xlu0 %6393
        %v6395 = vsel %vm2424, %v6392, %v6394
        %v6398 = vsel %vm2424, 0.0, %v6392
        %v6399 = vsel %vm2429, %v6398, 0.0
        %v6400 = vsel %vm2430, %v6395, 0.0
        %6401 = vrot.lane.b32.xlu0 %v6308, 1
        %v6402 = vpop.permute.xlu0 %6401
        %6403 = vrot.lane.b32.xlu0 %v6316, 1
        %v6404 = vpop.permute.xlu0 %6403
        %v6405 = vsel %vm1451, %v6402, %v6404
        %v6408 = vsel %vm1451, 0.0, %v6402
        %v6409 = vsel %vm1456, %v6408, 0.0
        %v6410 = vsel %vm1457, %v6405, 0.0
        %6411 = vrot.lane.b32.xlu0 %v6308, 127
        %v6412 = vpop.permute.xlu0 %6411
        %6413 = vrot.lane.b32.xlu0 %v6316, 127
        %v6414 = vpop.permute.xlu0 %6413
        %v6415 = vsel %vm1468, %v6412, %v6414
        %v6418 = vsel %vm1468, %v6414, 0.0
        %v6419 = vsel %vm1473, %v6415, 0.0
        %v6420 = vsel %vm1474, %v6418, 0.0
        %6421 = vrot.lane.b32.xlu0 %v6308, 126
        %v6422 = vpop.permute.xlu0 %6421
        %6423 = vrot.lane.b32.xlu0 %v6316, 126
        %v6424 = vpop.permute.xlu0 %6423
        %v6425 = vsel %vm2457, %v6422, %v6424
        %v6428 = vsel %vm2457, %v6424, 0.0
        %v6429 = vsel %vm2462, %v6425, 0.0
        %v6430 = vsel %vm2463, %v6428, 0.0
        %6431 = vrot.lane.b32.xlu0 %v6308, 125
        %v6432 = vpop.permute.xlu0 %6431
        %6433 = vrot.lane.b32.xlu0 %v6316, 125
        %v6434 = vpop.permute.xlu0 %6433
        %v6435 = vsel %vm2470, %v6432, %v6434
        %v6438 = vsel %vm2470, %v6434, 0.0
        %v6439 = vsel %vm2475, %v6435, 0.0
        %v6440 = vsel %vm2476, %v6438, 0.0
        %v6443 = vrot.slane %v6337, 7
        %v6444 = vrot.slane %v6338, 7
        %v6449 = vrot.slane %v6347, 6
        %v6450 = vrot.slane %v6348, 6
        %v6455 = vrot.slane %v6357, 4
        %v6456 = vrot.slane %v6358, 4
        %v6461 = vrot.slane %v6367, 3
        %v6462 = vrot.slane %v6368, 3
        %v6467 = vrot.slane %v6377, 2
        %v6468 = vrot.slane %v6378, 2
        %v6473 = vrot.slane %v6389, 1
        %v6474 = vrot.slane %v6390, 1
        %v6479 = vrot.slane %v6409, 7
        %v6480 = vrot.slane %v6410, 7
        %v6485 = vrot.slane %v6419, 5
        %v6486 = vrot.slane %v6420, 5
        %v6491 = vrot.slane %v6429, 4
        %v6492 = vrot.slane %v6430, 4
        %v6497 = vrot.slane %v6439, 3
        %v6498 = vrot.slane %v6440, 3
        %v6501 = vsel %vm1506, %v6327, %v6443
        %v6502 = vsel %vm1506, %v6328, %v6444
        %v6503 = vsel %vm1892, %v6501, %v6449
        %v6504 = vsel %vm1892, %v6502, %v6450
        %v6505 = vsel %vm1491, %v6503, %v6299
        %v6506 = vsel %vm1491, %v6504, %v6300
        %v6507 = vsel %vm1884, %v6505, %v6455
        %v6508 = vsel %vm1884, %v6506, %v6456
        %v6509 = vsel %vm2609, %v6507, %v6461
        %v6510 = vsel %vm2609, %v6508, %v6462
        %v6511 = vsel %vm1494, %v6509, %v6467
        %v6512 = vsel %vm1494, %v6510, %v6468
        %v6513 = vsel %vm2614, %v6511, %v6473
        %v6514 = vsel %vm2614, %v6512, %v6474
        %v6515 = vsel %vm1506, %v6399, %v6479
        %v6516 = vsel %vm1506, %v6400, %v6480
        %v6517 = vsel %vm1892, %v6515, %v6308
        %v6518 = vsel %vm1892, %v6516, %v6316
        %v6519 = vsel %vm1491, %v6517, %v6485
        %v6520 = vsel %vm1491, %v6518, %v6486
        %v6521 = vsel %vm1884, %v6519, %v6491
        %v6522 = vsel %vm1884, %v6520, %v6492
        %v6523 = vsel %vm2609, %v6521, %v6497
        %v6524 = vsel %vm2609, %v6522, %v6498
        %v6525 = vld [vmem:[#allocation33] sm:$0xff]
        %v6526 = vld [vmem:[#allocation33 + $0x8] sm:$0x3f]
        %6528 = vset.pattern.permute.xlu0 0
        %6529 = vperm.xlu0 %6528, %v6525
        %v6530 = vpop.permute.xlu0 %6529
        %6533 = vset.pattern.permute.xlu0 0
        %6534 = vperm.xlu0 %6533, %v6526
        %v6535 = vpop.permute.xlu0 %6534
        %v6537 = vmul.f32 %v6513, %v6530
        %v6538 = vmul.f32 %v6514, %v6530
        %v6539 = vmul.f32 %v6523, %v6535
        %v6540 = vmul.f32 %v6524, %v6535
        %v6541 = vsel %vm1494, %v6539, 0.0
        %v6542 = vadd.f32 %v6537, %v6541
        %v6543 = vrot.slane %v6542, 4
        %v6544 = vadd.f32 %v6542, %v6543
        %v6545 = vrot.slane %v6544, 2
        %v6546 = vadd.f32 %v6544, %v6545
        %v6547 = vrot.slane %v6546, 1
        %v6548 = vadd.f32 %v6546, %v6547
        %v6549 = vsel %vm1494, %v6540, 0.0
        %v6550 = vadd.f32 %v6538, %v6549
        %v6551 = vrot.slane %v6550, 4
        %v6552 = vadd.f32 %v6550, %v6551
        %v6553 = vrot.slane %v6552, 2
        %v6554 = vadd.f32 %v6552, %v6553
        %v6555 = vrot.slane %v6554, 1
        %v6556 = vadd.f32 %v6554, %v6555
        %6559 = vrot.lane.b32.xlu0 %v6548, 48
        %v6560 = vpop.permute.xlu0 %6559
        %6561 = vrot.lane.b32.xlu0 %v6556, 48
        %v6562 = vpop.permute.xlu0 %6561
        %v6563 = vsel %vm2665, %v6560, %v6562
        %v6566 = vsel %vm2665, 0.0, %v6560
        %v6567 = vadd.f32 %v6566, 0.0
        %v6568 = vadd.f32 %v6563, 0.0
        %6569 = vset.pattern.permute.xlu0 1
        %6570 = vperm.xlu0 %6569, %v6525
        %v6571 = vpop.permute.xlu0 %6570
        %6573 = vset.pattern.permute.xlu0 1
        %6574 = vperm.xlu0 %6573, %v6526
        %v6575 = vpop.permute.xlu0 %6574
        %v6577 = vmul.f32 %v6513, %v6571
        %v6578 = vmul.f32 %v6514, %v6571
        %v6579 = vmul.f32 %v6523, %v6575
        %v6580 = vmul.f32 %v6524, %v6575
        %v6581 = vsel %vm1494, %v6579, 0.0
        %v6582 = vadd.f32 %v6577, %v6581
        %v6583 = vrot.slane %v6582, 4
        %v6584 = vadd.f32 %v6582, %v6583
        %v6585 = vrot.slane %v6584, 2
        %v6586 = vadd.f32 %v6584, %v6585
        %v6587 = vrot.slane %v6586, 1
        %v6588 = vadd.f32 %v6586, %v6587
        %v6589 = vsel %vm1494, %v6580, 0.0
        %v6590 = vadd.f32 %v6578, %v6589
        %v6591 = vrot.slane %v6590, 4
        %v6592 = vadd.f32 %v6590, %v6591
        %v6593 = vrot.slane %v6592, 2
        %v6594 = vadd.f32 %v6592, %v6593
        %v6595 = vrot.slane %v6594, 1
        %v6596 = vadd.f32 %v6594, %v6595
        %6599 = vrot.lane.b32.xlu0 %v6588, 32
        %v6600 = vpop.permute.xlu0 %6599
        %6601 = vrot.lane.b32.xlu0 %v6596, 32
        %v6602 = vpop.permute.xlu0 %6601
        %v6603 = vsel %vm2706, %v6600, %v6602
        %v6606 = vsel %vm2706, 0.0, %v6600
        %v6607 = vadd.f32 %v6567, %v6606
        %v6608 = vadd.f32 %v6568, %v6603
        %6609 = vset.pattern.permute.xlu0 2
        %6610 = vperm.xlu0 %6609, %v6525
        %v6611 = vpop.permute.xlu0 %6610
        %6613 = vset.pattern.permute.xlu0 2
        %6614 = vperm.xlu0 %6613, %v6526
        %v6615 = vpop.permute.xlu0 %6614
        %v6617 = vmul.f32 %v6513, %v6611
        %v6618 = vmul.f32 %v6514, %v6611
        %v6619 = vmul.f32 %v6523, %v6615
        %v6620 = vmul.f32 %v6524, %v6615
        %v6621 = vsel %vm1494, %v6619, 0.0
        %v6622 = vadd.f32 %v6617, %v6621
        %v6623 = vrot.slane %v6622, 4
        %v6624 = vadd.f32 %v6622, %v6623
        %v6625 = vrot.slane %v6624, 2
        %v6626 = vadd.f32 %v6624, %v6625
        %v6627 = vrot.slane %v6626, 1
        %v6628 = vadd.f32 %v6626, %v6627
        %v6629 = vsel %vm1494, %v6620, 0.0
        %v6630 = vadd.f32 %v6618, %v6629
        %v6631 = vrot.slane %v6630, 4
        %v6632 = vadd.f32 %v6630, %v6631
        %v6633 = vrot.slane %v6632, 2
        %v6634 = vadd.f32 %v6632, %v6633
        %v6635 = vrot.slane %v6634, 1
        %v6636 = vadd.f32 %v6634, %v6635
        %6639 = vrot.lane.b32.xlu0 %v6628, 16
        %v6640 = vpop.permute.xlu0 %6639
        %6641 = vrot.lane.b32.xlu0 %v6636, 16
        %v6642 = vpop.permute.xlu0 %6641
        %v6643 = vsel %vm1600, %v6640, %v6642
        %v6646 = vsel %vm1600, 0.0, %v6640
        %v6647 = vadd.f32 %v6607, %v6646
        %v6648 = vadd.f32 %v6608, %v6643
        %6649 = vset.pattern.permute.xlu0 3
        %6650 = vperm.xlu0 %6649, %v6525
        %v6651 = vpop.permute.xlu0 %6650
        %6653 = vset.pattern.permute.xlu0 3
        %6654 = vperm.xlu0 %6653, %v6526
        %v6655 = vpop.permute.xlu0 %6654
        %v6657 = vmul.f32 %v6513, %v6651
        %v6658 = vmul.f32 %v6514, %v6651
        %v6659 = vmul.f32 %v6523, %v6655
        %v6660 = vmul.f32 %v6524, %v6655
        %v6661 = vsel %vm1494, %v6659, 0.0
        %v6662 = vadd.f32 %v6657, %v6661
        %v6663 = vrot.slane %v6662, 4
        %v6664 = vadd.f32 %v6662, %v6663
        %v6665 = vrot.slane %v6664, 2
        %v6666 = vadd.f32 %v6664, %v6665
        %v6667 = vrot.slane %v6666, 1
        %v6668 = vadd.f32 %v6666, %v6667
        %v6669 = vsel %vm1494, %v6660, 0.0
        %v6670 = vadd.f32 %v6658, %v6669
        %v6671 = vrot.slane %v6670, 4
        %v6672 = vadd.f32 %v6670, %v6671
        %v6673 = vrot.slane %v6672, 2
        %v6674 = vadd.f32 %v6672, %v6673
        %v6675 = vrot.slane %v6674, 1
        %v6676 = vadd.f32 %v6674, %v6675
        %v6677 = vadd.f32 %v6647, %v6668
        %v6678 = vadd.f32 %v6648, %v6676
        %6679 = vset.pattern.permute.xlu0 4
        %6680 = vperm.xlu0 %6679, %v6525
        %v6681 = vpop.permute.xlu0 %6680
        %6683 = vset.pattern.permute.xlu0 4
        %6684 = vperm.xlu0 %6683, %v6526
        %v6685 = vpop.permute.xlu0 %6684
        %v6687 = vmul.f32 %v6513, %v6681
        %v6688 = vmul.f32 %v6514, %v6681
        %v6689 = vmul.f32 %v6523, %v6685
        %v6690 = vmul.f32 %v6524, %v6685
        %v6691 = vsel %vm1494, %v6689, 0.0
        %v6692 = vadd.f32 %v6687, %v6691
        %v6693 = vrot.slane %v6692, 4
        %v6694 = vadd.f32 %v6692, %v6693
        %v6695 = vrot.slane %v6694, 2
        %v6696 = vadd.f32 %v6694, %v6695
        %v6697 = vrot.slane %v6696, 1
        %v6698 = vadd.f32 %v6696, %v6697
        %v6699 = vsel %vm1494, %v6690, 0.0
        %v6700 = vadd.f32 %v6688, %v6699
        %v6701 = vrot.slane %v6700, 4
        %v6702 = vadd.f32 %v6700, %v6701
        %v6703 = vrot.slane %v6702, 2
        %v6704 = vadd.f32 %v6702, %v6703
        %v6705 = vrot.slane %v6704, 1
        %v6706 = vadd.f32 %v6704, %v6705
        %6709 = vrot.lane.b32.xlu0 %v6698, 112
        %v6710 = vpop.permute.xlu0 %6709
        %6711 = vrot.lane.b32.xlu0 %v6706, 112
        %v6712 = vpop.permute.xlu0 %6711
        %v6713 = vsel %vm1801, %v6710, %v6712
        %v6716 = vsel %vm1801, %v6712, 0.0
        %v6717 = vadd.f32 %v6677, %v6713
        %v6718 = vadd.f32 %v6678, %v6716
        %6719 = vset.pattern.permute.xlu0 5
        %6720 = vperm.xlu0 %6719, %v6525
        %v6721 = vpop.permute.xlu0 %6720
        %6723 = vset.pattern.permute.xlu0 5
        %6724 = vperm.xlu0 %6723, %v6526
        %v6725 = vpop.permute.xlu0 %6724
        %v6727 = vmul.f32 %v6513, %v6721
        %v6728 = vmul.f32 %v6514, %v6721
        %v6729 = vmul.f32 %v6523, %v6725
        %v6730 = vmul.f32 %v6524, %v6725
        %v6731 = vsel %vm1494, %v6729, 0.0
        %v6732 = vadd.f32 %v6727, %v6731
        %v6733 = vrot.slane %v6732, 4
        %v6734 = vadd.f32 %v6732, %v6733
        %v6735 = vrot.slane %v6734, 2
        %v6736 = vadd.f32 %v6734, %v6735
        %v6737 = vrot.slane %v6736, 1
        %v6738 = vadd.f32 %v6736, %v6737
        %v6739 = vsel %vm1494, %v6730, 0.0
        %v6740 = vadd.f32 %v6728, %v6739
        %v6741 = vrot.slane %v6740, 4
        %v6742 = vadd.f32 %v6740, %v6741
        %v6743 = vrot.slane %v6742, 2
        %v6744 = vadd.f32 %v6742, %v6743
        %v6745 = vrot.slane %v6744, 1
        %v6746 = vadd.f32 %v6744, %v6745
        %6749 = vrot.lane.b32.xlu0 %v6738, 96
        %v6750 = vpop.permute.xlu0 %6749
        %6751 = vrot.lane.b32.xlu0 %v6746, 96
        %v6752 = vpop.permute.xlu0 %6751
        %v6753 = vsel %vm2857, %v6750, %v6752
        %v6756 = vsel %vm2857, %v6752, 0.0
        %v6757 = vadd.f32 %v6717, %v6753
        %v6758 = vadd.f32 %v6718, %v6756
        %6759 = vset.pattern.permute.xlu0 6
        %6760 = vperm.xlu0 %6759, %v6525
        %v6761 = vpop.permute.xlu0 %6760
        %6763 = vset.pattern.permute.xlu0 6
        %6764 = vperm.xlu0 %6763, %v6526
        %v6765 = vpop.permute.xlu0 %6764
        %v6767 = vmul.f32 %v6513, %v6761
        %v6768 = vmul.f32 %v6514, %v6761
        %v6769 = vmul.f32 %v6523, %v6765
        %v6770 = vmul.f32 %v6524, %v6765
        %v6771 = vsel %vm1494, %v6769, 0.0
        %v6772 = vadd.f32 %v6767, %v6771
        %v6773 = vrot.slane %v6772, 4
        %v6774 = vadd.f32 %v6772, %v6773
        %v6775 = vrot.slane %v6774, 2
        %v6776 = vadd.f32 %v6774, %v6775
        %v6777 = vrot.slane %v6776, 1
        %v6778 = vadd.f32 %v6776, %v6777
        %v6779 = vsel %vm1494, %v6770, 0.0
        %v6780 = vadd.f32 %v6768, %v6779
        %v6781 = vrot.slane %v6780, 4
        %v6782 = vadd.f32 %v6780, %v6781
        %v6783 = vrot.slane %v6782, 2
        %v6784 = vadd.f32 %v6782, %v6783
        %v6785 = vrot.slane %v6784, 1
        %v6786 = vadd.f32 %v6784, %v6785
        %6789 = vrot.lane.b32.xlu0 %v6778, 80
        %v6790 = vpop.permute.xlu0 %6789
        %6791 = vrot.lane.b32.xlu0 %v6786, 80
        %v6792 = vpop.permute.xlu0 %6791
        %v6793 = vsel %vm2898, %v6790, %v6792
        %v6796 = vsel %vm2898, %v6792, 0.0
        %v6797 = vadd.f32 %v6757, %v6793
        %v6798 = vadd.f32 %v6758, %v6796
        %v6799 = vxor.u32 %v6797, 2147483648
        %v6800 = vxor.u32 %v6798, 2147483648
        %v6801 = vmul.f32 %v6799, 1.442695
        %v6802 = vpow.pop %v6801
        %v6803 = vmul.f32 %v6800, 1.442695
        %v6804 = vpow.pop %v6803
        %v6805 = vadd.f32 %v6802, 1.0
        %v6806 = vadd.f32 %v6804, 1.0
        %v6807 = vrcp.pop %v6805
        %v6808 = vmul.f32 1.0, %v6807
        %v6809 = vrcp.pop %v6806
        %v6810 = vmul.f32 1.0, %v6809
        %v6811 = vlaneseq
        %v6812 = vshrl.u32 %v6811, 7
        %v6813 = vsub.s32 0, %v6812
        %v6814 = vrot.slane %v6808, %v6813
        %v6815 = vlaneseq
        %v6816 = vshrl.u32 %v6815, 7
        %v6817 = vsub.s32 0, %v6816
        %v6818 = vrot.slane %v6810, %v6817
        %v6819 = vmul.f32 %v6279, %v6814
        %v6820 = vmul.f32 %v6280, %v6818
        %v6821 = vmul.f32 %v6281, %v6814
        %v6822 = vmul.f32 %v6282, %v6818
        %v6823 = vld [vmem:[%s53] sm:$0xff]
        %v6824 = vld [vmem:[%s53 + $0x8] sm:$0xff]
        %v6825 = vld [vmem:[%s53 + $0x10] sm:$0xff]
        %v6826 = vld [vmem:[%s45] sm:$0xff]
        %v6827 = vld [vmem:[%s45 + $0x8] sm:$0xff]
        %v6828 = vld [vmem:[%s45 + $0x10] sm:$0xff]
        %6830 = vset.pattern.permute.xlu0 0
        %6831 = vperm.xlu0 %6830, %v6826
        %v6832 = vpop.permute.xlu0 %6831
        %6835 = vset.pattern.permute.xlu0 0
        %6836 = vperm.xlu0 %6835, %v6827
        %v6837 = vpop.permute.xlu0 %6836
        %6840 = vset.pattern.permute.xlu0 0
        %6841 = vperm.xlu0 %6840, %v6828
        %v6842 = vpop.permute.xlu0 %6841
        %v6845 = vsel %vm2170, %v6823, 0
        %v6848 = vsel %vm2170, %v6824, 0
        %v6851 = vsel %vm2170, %v6825, 0
        %v6854 = vsel %vm1884, %v6821, 0
        %v6857 = vsel %vm1884, %v6822, 0
        %6859 = vmatprep.subr.mxu0 %v6820
        %6860 = vmatpush1.msra.mxu0 %v6819
        %6861 = vmatprep.subr.mxu0 %v6857
        %6862 = vmatpush1.msra.mxu0 %v6854
        %6863 = vmatprep.subr.mxu0 0.0
        %6864 = vmatpush1.msra.mxu0 0.0
        %6865 = vmatprep.subr.mxu0 0.0
        %6866 = vmatpush1.msra.mxu0 0.0
        %6867 = vmatprep.subr.mxu0 0.0
        %6868 = vmatpush1.msra.mxu0 0.0
        %6869 = vmatprep.subr.mxu0 0.0
        %6870 = vmatpush1.msra.mxu0 0.0
        %6871 = vmatprep.subr.mxu0 0.0
        %6872 = vmatpush1.msra.mxu0 0.0
        %6873 = vmatprep.subr.mxu0 0.0
        %6874 = vmatpush1.msra.mxu0 0.0
        %6875 = vmatprep.subr.mxu0 0.0
        %6876 = vmatpush1.msra.mxu0 0.0
        %6877 = vmatprep.subr.mxu0 0.0
        %6878 = vmatpush1.msra.mxu0 0.0
        %6879 = vmatprep.subr.mxu0 0.0
        %6880 = vmatpush1.msra.mxu0 0.0
        %6881 = vmatprep.subr.mxu0 0.0
        %6882 = vmatpush1.msra.mxu0 0.0
        %6883 = vmatprep.subr.mxu0 0.0
        %6884 = vmatpush1.msra.mxu0 0.0
        %6885 = vmatprep.subr.mxu0 0.0
        %6886 = vmatpush1.msra.mxu0 0.0
        %6887 = vmatprep.subr.mxu0 0.0
        %6888 = vmatpush1.msra.mxu0 0.0
        %6889 = vmatprep.subr.mxu0 0.0
        %6890 = vmatpush1.msra.mxu0 0.0
        %6891 = vmatprep.subr.mxu0 0.0
        %6892 = vmatpush1.msra.mxu0 0.0
        %6893 = vmatprep.subr.mxu0 0.0
        %6894 = vmatpush1.msra.mxu0 0.0
        %6895 = vmatprep.subr.mxu0 0.0
        %6896 = vmatpush1.msra.mxu0 0.0
        %6897 = vmatprep.subr.mxu0 0.0
        %6898 = vmatpush1.msra.mxu0 0.0
        %6899 = vmatprep.subr.mxu0 0.0
        %6900 = vmatpush1.msra.mxu0 0.0
        %6901 = vmatprep.subr.mxu0 0.0
        %6902 = vmatpush1.msra.mxu0 0.0
        %6903 = vmatprep.subr.mxu0 0.0
        %6904 = vmatpush1.msra.mxu0 0.0
        %6905 = vmatprep.subr.mxu0 0.0
        %6906 = vmatpush1.msra.mxu0 0.0
        %6907 = vmatprep.subr.mxu0 0.0
        %6908 = vmatpush1.msra.mxu0 0.0
        %6909 = vmatprep.subr.mxu0 0.0
        %6910 = vmatpush1.msra.mxu0 0.0
        %6911 = vmatprep.subr.mxu0 0.0
        %6912 = vmatpush1.msra.mxu0 0.0
        %6913 = vmatprep.subr.mxu0 0.0
        %6914 = vmatpush1.msra.mxu0 0.0
        %6915 = vmatprep.subr.mxu0 0.0
        %6916 = vmatpush1.msra.mxu0 0.0
        %6917 = vmatprep.subr.mxu0 0.0
        %6918 = vmatpush1.msra.mxu0 0.0
        %6919 = vmatprep.subr.mxu0 0.0
        %6920 = vmatpush1.msra.mxu0 0.0
        %6921 = vmatprep.subr.mxu0 0.0
        %6922 = vmatpush1.msra.mxu0 0.0
        %6923 = vmatprep.mubr.f32.mxu0 0.0
        %6924 = vmatmul.mubr.f32.gmra.mrb[0].mxu0 %v6845
        %v6925 = vpop.f32.mrb[0].mxu0
        %v6926 = vadd.f32 %v6832, %v6925
        %v6927 = vpop.f32.mrb[0].mxu0
        %v6928 = vadd.f32 %v6832, %v6927
        %6929 = vmatprep.mubr.f32.mxu0 0.0
        %6930 = vmatmul.mubr.f32.gmra.mrb[0].mxu0 %v6848
        %v6931 = vpop.f32.mrb[0].mxu0
        %v6932 = vadd.f32 %v6837, %v6931
        %v6933 = vpop.f32.mrb[0].mxu0
        %v6934 = vadd.f32 %v6837, %v6933
        %6935 = vmatprep.mubr.f32.mxu0 0.0
        %6936 = vmatmul.mubr.f32.gmra.mrb[0].mxu0 %v6851
        %v6937 = vpop.f32.mrb[0].mxu0
        %v6938 = vadd.f32 %v6842, %v6937
        %v6939 = vpop.f32.mrb[0].mxu0
        %v6940 = vadd.f32 %v6842, %v6939
        %6941 = vdwg.mxu0
        %v6942 = vmul.f32 %v6926, 0.5
        %v6943 = vmul.f32 %v6928, 0.5
        %v6944 = vmul.f32 %v6932, 0.5
        %v6945 = vmul.f32 %v6934, 0.5
        %v6946 = vmul.f32 %v6938, 0.5
        %v6947 = vmul.f32 %v6940, 0.5
        %v6948 = vmul.f32 %v6926, 0.70710677
        %v6949 = vmul.f32 %v6928, 0.70710677
        %v6950 = vmul.f32 %v6932, 0.70710677
        %v6951 = vmul.f32 %v6934, 0.70710677
        %v6952 = vmul.f32 %v6938, 0.70710677
        %v6953 = vmul.f32 %v6940, 0.70710677
        %v6954 = verf.f32.pop %v6948
        %v6955 = verf.f32.pop %v6949
        %v6956 = verf.f32.pop %v6950
        %v6957 = verf.f32.pop %v6951
        %v6958 = verf.f32.pop %v6952
        %v6959 = verf.f32.pop %v6953
        %v6960 = vadd.f32 %v6954, 1.0
        %v6961 = vadd.f32 %v6955, 1.0
        %v6962 = vadd.f32 %v6956, 1.0
        %v6963 = vadd.f32 %v6957, 1.0
        %v6964 = vadd.f32 %v6958, 1.0
        %v6965 = vadd.f32 %v6959, 1.0
        %v6966 = vmul.f32 %v6942, %v6960
        %v6967 = vmul.f32 %v6943, %v6961
        %v6968 = vmul.f32 %v6944, %v6962
        %v6969 = vmul.f32 %v6945, %v6963
        %v6970 = vmul.f32 %v6946, %v6964
        %v6971 = vmul.f32 %v6947, %v6965
        %v6972 = vld [vmem:[#allocation34] sm:$0xff]
        %v6973 = vld [vmem:[#allocation34 + $0x8] sm:$0xf]
        %v6975 = vsel %vm3080, %v6972, 0
        %v6978 = vsel %vm3080, %v6973, 0
        %6980 = vmatprep.subr.mxu0 %v6967
        %6981 = vmatpush1.msra.mxu0 %v6966
        %6982 = vmatprep.subr.mxu0 %v6969
        %6983 = vmatpush1.msra.mxu0 %v6968
        %6984 = vmatprep.subr.mxu0 %v6971
        %6985 = vmatpush1.msra.mxu0 %v6970
        %6986 = vmatprep.subr.mxu0 0.0
        %6987 = vmatpush1.msra.mxu0 0.0
        %6988 = vmatprep.subr.mxu0 0.0
        %6989 = vmatpush1.msra.mxu0 0.0
        %6990 = vmatprep.subr.mxu0 0.0
        %6991 = vmatpush1.msra.mxu0 0.0
        %6992 = vmatprep.subr.mxu0 0.0
        %6993 = vmatpush1.msra.mxu0 0.0
        %6994 = vmatprep.subr.mxu0 0.0
        %6995 = vmatpush1.msra.mxu0 0.0
        %6996 = vmatprep.subr.mxu0 0.0
        %6997 = vmatpush1.msra.mxu0 0.0
        %6998 = vmatprep.subr.mxu0 0.0
        %6999 = vmatpush1.msra.mxu0 0.0
        %7000 = vmatprep.subr.mxu0 0.0
        %7001 = vmatpush1.msra.mxu0 0.0
        %7002 = vmatprep.subr.mxu0 0.0
        %7003 = vmatpush1.msra.mxu0 0.0
        %7004 = vmatprep.subr.mxu0 0.0
        %7005 = vmatpush1.msra.mxu0 0.0
        %7006 = vmatprep.subr.mxu0 0.0
        %7007 = vmatpush1.msra.mxu0 0.0
        %7008 = vmatprep.subr.mxu0 0.0
        %7009 = vmatpush1.msra.mxu0 0.0
        %7010 = vmatprep.subr.mxu0 0.0
        %7011 = vmatpush1.msra.mxu0 0.0
        %7012 = vmatprep.subr.mxu0 0.0
        %7013 = vmatpush1.msra.mxu0 0.0
        %7014 = vmatprep.subr.mxu0 0.0
        %7015 = vmatpush1.msra.mxu0 0.0
        %7016 = vmatprep.subr.mxu0 0.0
        %7017 = vmatpush1.msra.mxu0 0.0
        %7018 = vmatprep.subr.mxu0 0.0
        %7019 = vmatpush1.msra.mxu0 0.0
        %7020 = vmatprep.subr.mxu0 0.0
        %7021 = vmatpush1.msra.mxu0 0.0
        %7022 = vmatprep.subr.mxu0 0.0
        %7023 = vmatpush1.msra.mxu0 0.0
        %7024 = vmatprep.subr.mxu0 0.0
        %7025 = vmatpush1.msra.mxu0 0.0
        %7026 = vmatprep.subr.mxu0 0.0
        %7027 = vmatpush1.msra.mxu0 0.0
        %7028 = vmatprep.subr.mxu0 0.0
        %7029 = vmatpush1.msra.mxu0 0.0
        %7030 = vmatprep.subr.mxu0 0.0
        %7031 = vmatpush1.msra.mxu0 0.0
        %7032 = vmatprep.subr.mxu0 0.0
        %7033 = vmatpush1.msra.mxu0 0.0
        %7034 = vmatprep.subr.mxu0 0.0
        %7035 = vmatpush1.msra.mxu0 0.0
        %7036 = vmatprep.subr.mxu0 0.0
        %7037 = vmatpush1.msra.mxu0 0.0
        %7038 = vmatprep.subr.mxu0 0.0
        %7039 = vmatpush1.msra.mxu0 0.0
        %7040 = vmatprep.subr.mxu0 0.0
        %7041 = vmatpush1.msra.mxu0 0.0
        %7042 = vmatprep.subr.mxu0 0.0
        %7043 = vmatpush1.msra.mxu0 0.0
        %7044 = vmatprep.mubr.f32.mxu0 0.0
        %7045 = vmatmul.mubr.f32.gmra.mrb[0].mxu0 %v6975
        %v7046 = vpop.f32.mrb[0].mxu0
        %v7047 = vadd.f32 0.0, %v7046
        %v7048 = vpop.f32.mrb[0].mxu0
        %v7049 = vadd.f32 0.0, %v7048
        %7050 = vmatprep.mubr.f32.mxu0 0.0
        %7051 = vmatmul.mubr.f32.gmra.mrb[0].mxu0 %v6978
        %v7052 = vpop.f32.mrb[0].mxu0
        %v7053 = vadd.f32 0.0, %v7052
        %v7054 = vpop.f32.mrb[0].mxu0
        %v7055 = vadd.f32 0.0, %v7054
        %7056 = vdwg.mxu0
        %v7057 = vadd.f32 %v5773, %v7047
        %v7058 = vadd.f32 %v5774, %v7049
        %v7059 = vadd.f32 %v5775, %v7053
        %v7060 = vadd.f32 %v5776, %v7055
        %v7063 = vrot.slane %v5773, 4
        %v7064 = vrot.slane %v5774, 4
        %v7065 = vrot.slane %v5775, 4
        %v7066 = vsel %vm1884, %v7063, %v7065
        %v7067 = vrot.slane %v5776, 4
        %v7068 = vsel %vm1884, %v7064, %v7067
        %v7073 = vsel %vm1884, %v7059, %v7063
        %v7074 = vsel %vm1884, %v7060, %v7064
        %7079 = vrot.lane.b32.xlu0 %v7057, 4
        %v7080 = vpop.permute.xlu0 %7079
        %7081 = vrot.lane.b32.xlu0 %v7058, 4
        %v7082 = vpop.permute.xlu0 %7081
        %7083 = vrot.lane.b32.xlu0 %v7073, 4
        %v7084 = vpop.permute.xlu0 %7083
        %7085 = vrot.lane.b32.xlu0 %v7074, 4
        %v7086 = vpop.permute.xlu0 %7085
        %7087 = vrot.lane.b32.xlu0 %v7066, 4
        %v7088 = vpop.permute.xlu0 %7087
        %7089 = vrot.lane.b32.xlu0 %v7068, 4
        %v7090 = vpop.permute.xlu0 %7089
        %v7091 = vsel %vm4475, %v7080, %v7082
        %v7092 = vsel %vm4475, %v7084, %v7086
        %v7093 = vsel %vm4475, %v7088, %v7090
        %v7100 = vsel %vm4475, 0.0, %v7080
        %v7101 = vsel %vm4475, 0.0, %v7084
        %v7102 = vsel %vm4475, 0.0, %v7088
        %v7103 = vsel %vm4484, %v7100, 0.0
        %v7104 = vsel %vm4485, %v7091, 0.0
        %v7105 = vsel %vm4484, %v7101, 0.0
        %v7106 = vsel %vm4485, %v7092, 0.0
        %v7107 = vsel %vm4484, %v7102, 0.0
        %v7108 = vsel %vm4485, %v7093, 0.0
        %7109 = vrot.lane.b32.xlu0 %v7057, 124
        %v7110 = vpop.permute.xlu0 %7109
        %7111 = vrot.lane.b32.xlu0 %v7058, 124
        %v7112 = vpop.permute.xlu0 %7111
        %7113 = vrot.lane.b32.xlu0 %v7073, 124
        %v7114 = vpop.permute.xlu0 %7113
        %7115 = vrot.lane.b32.xlu0 %v7074, 124
        %v7116 = vpop.permute.xlu0 %7115
        %7117 = vrot.lane.b32.xlu0 %v7066, 124
        %v7118 = vpop.permute.xlu0 %7117
        %7119 = vrot.lane.b32.xlu0 %v7068, 124
        %v7120 = vpop.permute.xlu0 %7119
        %v7121 = vsel %vm4492, %v7110, %v7112
        %v7122 = vsel %vm4492, %v7114, %v7116
        %v7123 = vsel %vm4492, %v7118, %v7120
        %v7130 = vsel %vm4492, %v7112, 0.0
        %v7131 = vsel %vm4492, %v7116, 0.0
        %v7132 = vsel %vm4492, %v7120, 0.0
        %v7133 = vsel %vm4501, %v7121, 0.0
        %v7134 = vsel %vm4502, %v7130, 0.0
        %v7135 = vsel %vm4501, %v7122, 0.0
        %v7136 = vsel %vm4502, %v7131, 0.0
        %v7137 = vsel %vm4501, %v7123, 0.0
        %v7138 = vsel %vm4502, %v7132, 0.0
        %v7139 = vld [vmem:[%s69] sm:$0xff]
        %v7140 = vld [vmem:[%s69 + $0x8] sm:$0xf]
        %vm7141 = vcmask 588800
        %v7143 = vsel %vm7141, %v7139, 0
        %v7146 = vsel %vm7141, %v7140, 0
        %7148 = vmatprep.subr.mxu0 %v7104
        %7149 = vmatpush1.msra.mxu0 %v7103
        %7150 = vmatprep.subr.mxu0 %v7106
        %7151 = vmatpush1.msra.mxu0 %v7105
        %7152 = vmatprep.subr.mxu0 %v7108
        %7153 = vmatpush1.msra.mxu0 %v7107
        %7154 = vmatprep.subr.mxu0 %v7058
        %7155 = vmatpush1.msra.mxu0 %v7057
        %7156 = vmatprep.subr.mxu0 %v7074
        %7157 = vmatpush1.msra.mxu0 %v7073
        %7158 = vmatprep.subr.mxu0 %v7068
        %7159 = vmatpush1.msra.mxu0 %v7066
        %7160 = vmatprep.subr.mxu0 %v7134
        %7161 = vmatpush1.msra.mxu0 %v7133
        %7162 = vmatprep.subr.mxu0 %v7136
        %7163 = vmatpush1.msra.mxu0 %v7135
        %7164 = vmatprep.subr.mxu0 %v7138
        %7165 = vmatpush1.msra.mxu0 %v7137
        %7166 = vmatprep.subr.mxu0 0.0
        %7167 = vmatpush1.msra.mxu0 0.0
        %7168 = vmatprep.subr.mxu0 0.0
        %7169 = vmatpush1.msra.mxu0 0.0
        %7170 = vmatprep.subr.mxu0 0.0
        %7171 = vmatpush1.msra.mxu0 0.0
        %7172 = vmatprep.subr.mxu0 0.0
        %7173 = vmatpush1.msra.mxu0 0.0
        %7174 = vmatprep.subr.mxu0 0.0
        %7175 = vmatpush1.msra.mxu0 0.0
        %7176 = vmatprep.subr.mxu0 0.0
        %7177 = vmatpush1.msra.mxu0 0.0
        %7178 = vmatprep.subr.mxu0 0.0
        %7179 = vmatpush1.msra.mxu0 0.0
        %7180 = vmatprep.subr.mxu0 0.0
        %7181 = vmatpush1.msra.mxu0 0.0
        %7182 = vmatprep.subr.mxu0 0.0
        %7183 = vmatpush1.msra.mxu0 0.0
        %7184 = vmatprep.subr.mxu0 0.0
        %7185 = vmatpush1.msra.mxu0 0.0
        %7186 = vmatprep.subr.mxu0 0.0
        %7187 = vmatpush1.msra.mxu0 0.0
        %7188 = vmatprep.subr.mxu0 0.0
        %7189 = vmatpush1.msra.mxu0 0.0
        %7190 = vmatprep.subr.mxu0 0.0
        %7191 = vmatpush1.msra.mxu0 0.0
        %7192 = vmatprep.subr.mxu0 0.0
        %7193 = vmatpush1.msra.mxu0 0.0
        %7194 = vmatprep.subr.mxu0 0.0
        %7195 = vmatpush1.msra.mxu0 0.0
        %7196 = vmatprep.subr.mxu0 0.0
        %7197 = vmatpush1.msra.mxu0 0.0
        %7198 = vmatprep.subr.mxu0 0.0
        %7199 = vmatpush1.msra.mxu0 0.0
        %7200 = vmatprep.subr.mxu0 0.0
        %7201 = vmatpush1.msra.mxu0 0.0
        %7202 = vmatprep.subr.mxu0 0.0
        %7203 = vmatpush1.msra.mxu0 0.0
        %7204 = vmatprep.subr.mxu0 0.0
        %7205 = vmatpush1.msra.mxu0 0.0
        %7206 = vmatprep.subr.mxu0 0.0
        %7207 = vmatpush1.msra.mxu0 0.0
        %7208 = vmatprep.subr.mxu0 0.0
        %7209 = vmatpush1.msra.mxu0 0.0
        %7210 = vmatprep.subr.mxu0 0.0
        %7211 = vmatpush1.msra.mxu0 0.0
        %7212 = vmatprep.mubr.f32.mxu0 0.0
        %7213 = vmatmul.mubr.f32.gmra.mrb[0].mxu0 %v7143
        %v7214 = vpop.f32.mrb[0].mxu0
        %v7215 = vadd.f32 0.0, %v7214
        %v7216 = vpop.f32.mrb[0].mxu0
        %v7217 = vadd.f32 0.0, %v7216
        %7218 = vmatprep.mubr.f32.mxu0 0.0
        %7219 = vmatmul.mubr.f32.gmra.mrb[0].mxu0 %v7146
        %v7220 = vpop.f32.mrb[0].mxu0
        %v7221 = vadd.f32 0.0, %v7220
        %v7222 = vpop.f32.mrb[0].mxu0
        %v7223 = vadd.f32 0.0, %v7222
        %7224 = vdwg.mxu0
        %7229 = vrot.lane.b32.xlu0 %v7215, 64
        %v7230 = vpop.permute.xlu0 %7229
        %7231 = vrot.lane.b32.xlu0 %v7217, 64
        %v7232 = vpop.permute.xlu0 %7231
        %7233 = vrot.lane.b32.xlu0 %v7221, 64
        %v7234 = vpop.permute.xlu0 %7233
        %7235 = vrot.lane.b32.xlu0 %v7223, 64
        %v7236 = vpop.permute.xlu0 %7235
        %v7237 = vsel %vm4604, %v7230, %v7232
        %v7238 = vsel %vm4604, %v7234, %v7236
        %v7243 = vsel %vm4604, 0.0, %v7230
        %v7244 = vsel %vm4604, 0.0, %v7234
        %v7245 = vadd.f32 %v7243, 0.0
        %v7246 = vadd.f32 %v7237, 0.0
        %v7247 = vadd.f32 %v7244, 0.0
        %v7248 = vadd.f32 %v7238, 0.0
        %s7249 = scalar_lea.vmem %s69, 16
        %v7250 = vld [vmem:[%s7249] sm:$0xff]
        %v7251 = vld [vmem:[%s7249 + $0x8] sm:$0xf]
        %v7253 = vsel %vm7141, %v7250, 0
        %v7256 = vsel %vm7141, %v7251, 0
        %7258 = vmatprep.subr.mxu0 %v7104
        %7259 = vmatpush1.msra.mxu0 %v7103
        %7260 = vmatprep.subr.mxu0 %v7106
        %7261 = vmatpush1.msra.mxu0 %v7105
        %7262 = vmatprep.subr.mxu0 %v7108
        %7263 = vmatpush1.msra.mxu0 %v7107
        %7264 = vmatprep.subr.mxu0 %v7058
        %7265 = vmatpush1.msra.mxu0 %v7057
        %7266 = vmatprep.subr.mxu0 %v7074
        %7267 = vmatpush1.msra.mxu0 %v7073
        %7268 = vmatprep.subr.mxu0 %v7068
        %7269 = vmatpush1.msra.mxu0 %v7066
        %7270 = vmatprep.subr.mxu0 %v7134
        %7271 = vmatpush1.msra.mxu0 %v7133
        %7272 = vmatprep.subr.mxu0 %v7136
        %7273 = vmatpush1.msra.mxu0 %v7135
        %7274 = vmatprep.subr.mxu0 %v7138
        %7275 = vmatpush1.msra.mxu0 %v7137
        %7276 = vmatprep.subr.mxu0 0.0
        %7277 = vmatpush1.msra.mxu0 0.0
        %7278 = vmatprep.subr.mxu0 0.0
        %7279 = vmatpush1.msra.mxu0 0.0
        %7280 = vmatprep.subr.mxu0 0.0
        %7281 = vmatpush1.msra.mxu0 0.0
        %7282 = vmatprep.subr.mxu0 0.0
        %7283 = vmatpush1.msra.mxu0 0.0
        %7284 = vmatprep.subr.mxu0 0.0
        %7285 = vmatpush1.msra.mxu0 0.0
        %7286 = vmatprep.subr.mxu0 0.0
        %7287 = vmatpush1.msra.mxu0 0.0
        %7288 = vmatprep.subr.mxu0 0.0
        %7289 = vmatpush1.msra.mxu0 0.0
        %7290 = vmatprep.subr.mxu0 0.0
        %7291 = vmatpush1.msra.mxu0 0.0
        %7292 = vmatprep.subr.mxu0 0.0
        %7293 = vmatpush1.msra.mxu0 0.0
        %7294 = vmatprep.subr.mxu0 0.0
        %7295 = vmatpush1.msra.mxu0 0.0
        %7296 = vmatprep.subr.mxu0 0.0
        %7297 = vmatpush1.msra.mxu0 0.0
        %7298 = vmatprep.subr.mxu0 0.0
        %7299 = vmatpush1.msra.mxu0 0.0
        %7300 = vmatprep.subr.mxu0 0.0
        %7301 = vmatpush1.msra.mxu0 0.0
        %7302 = vmatprep.subr.mxu0 0.0
        %7303 = vmatpush1.msra.mxu0 0.0
        %7304 = vmatprep.subr.mxu0 0.0
        %7305 = vmatpush1.msra.mxu0 0.0
        %7306 = vmatprep.subr.mxu0 0.0
        %7307 = vmatpush1.msra.mxu0 0.0
        %7308 = vmatprep.subr.mxu0 0.0
        %7309 = vmatpush1.msra.mxu0 0.0
        %7310 = vmatprep.subr.mxu0 0.0
        %7311 = vmatpush1.msra.mxu0 0.0
        %7312 = vmatprep.subr.mxu0 0.0
        %7313 = vmatpush1.msra.mxu0 0.0
        %7314 = vmatprep.subr.mxu0 0.0
        %7315 = vmatpush1.msra.mxu0 0.0
        %7316 = vmatprep.subr.mxu0 0.0
        %7317 = vmatpush1.msra.mxu0 0.0
        %7318 = vmatprep.subr.mxu0 0.0
        %7319 = vmatpush1.msra.mxu0 0.0
        %7320 = vmatprep.subr.mxu0 0.0
        %7321 = vmatpush1.msra.mxu0 0.0
        %7322 = vmatprep.mubr.f32.mxu0 0.0
        %7323 = vmatmul.mubr.f32.gmra.mrb[0].mxu0 %v7253
        %v7324 = vpop.f32.mrb[0].mxu0
        %v7325 = vadd.f32 0.0, %v7324
        %v7326 = vpop.f32.mrb[0].mxu0
        %v7327 = vadd.f32 0.0, %v7326
        %7328 = vmatprep.mubr.f32.mxu0 0.0
        %7329 = vmatmul.mubr.f32.gmra.mrb[0].mxu0 %v7256
        %v7330 = vpop.f32.mrb[0].mxu0
        %v7331 = vadd.f32 0.0, %v7330
        %v7332 = vpop.f32.mrb[0].mxu0
        %v7333 = vadd.f32 0.0, %v7332
        %7334 = vdwg.mxu0
        %v7335 = vadd.f32 %v7245, %v7325
        %v7336 = vadd.f32 %v7246, %v7327
        %v7337 = vadd.f32 %v7247, %v7331
        %v7338 = vadd.f32 %v7248, %v7333
        %s7339 = scalar_lea.vmem %s69, 32
        %v7340 = vld [vmem:[%s7339] sm:$0xff]
        %v7341 = vld [vmem:[%s7339 + $0x8] sm:$0xf]
        %v7343 = vsel %vm7141, %v7340, 0
        %v7346 = vsel %vm7141, %v7341, 0
        %7348 = vmatprep.subr.mxu0 %v7104
        %7349 = vmatpush1.msra.mxu0 %v7103
        %7350 = vmatprep.subr.mxu0 %v7106
        %7351 = vmatpush1.msra.mxu0 %v7105
        %7352 = vmatprep.subr.mxu0 %v7108
        %7353 = vmatpush1.msra.mxu0 %v7107
        %7354 = vmatprep.subr.mxu0 %v7058
        %7355 = vmatpush1.msra.mxu0 %v7057
        %7356 = vmatprep.subr.mxu0 %v7074
        %7357 = vmatpush1.msra.mxu0 %v7073
        %7358 = vmatprep.subr.mxu0 %v7068
        %7359 = vmatpush1.msra.mxu0 %v7066
        %7360 = vmatprep.subr.mxu0 %v7134
        %7361 = vmatpush1.msra.mxu0 %v7133
        %7362 = vmatprep.subr.mxu0 %v7136
        %7363 = vmatpush1.msra.mxu0 %v7135
        %7364 = vmatprep.subr.mxu0 %v7138
        %7365 = vmatpush1.msra.mxu0 %v7137
        %7366 = vmatprep.subr.mxu0 0.0
        %7367 = vmatpush1.msra.mxu0 0.0
        %7368 = vmatprep.subr.mxu0 0.0
        %7369 = vmatpush1.msra.mxu0 0.0
        %7370 = vmatprep.subr.mxu0 0.0
        %7371 = vmatpush1.msra.mxu0 0.0
        %7372 = vmatprep.subr.mxu0 0.0
        %7373 = vmatpush1.msra.mxu0 0.0
        %7374 = vmatprep.subr.mxu0 0.0
        %7375 = vmatpush1.msra.mxu0 0.0
        %7376 = vmatprep.subr.mxu0 0.0
        %7377 = vmatpush1.msra.mxu0 0.0
        %7378 = vmatprep.subr.mxu0 0.0
        %7379 = vmatpush1.msra.mxu0 0.0
        %7380 = vmatprep.subr.mxu0 0.0
        %7381 = vmatpush1.msra.mxu0 0.0
        %7382 = vmatprep.subr.mxu0 0.0
        %7383 = vmatpush1.msra.mxu0 0.0
        %7384 = vmatprep.subr.mxu0 0.0
        %7385 = vmatpush1.msra.mxu0 0.0
        %7386 = vmatprep.subr.mxu0 0.0
        %7387 = vmatpush1.msra.mxu0 0.0
        %7388 = vmatprep.subr.mxu0 0.0
        %7389 = vmatpush1.msra.mxu0 0.0
        %7390 = vmatprep.subr.mxu0 0.0
        %7391 = vmatpush1.msra.mxu0 0.0
        %7392 = vmatprep.subr.mxu0 0.0
        %7393 = vmatpush1.msra.mxu0 0.0
        %7394 = vmatprep.subr.mxu0 0.0
        %7395 = vmatpush1.msra.mxu0 0.0
        %7396 = vmatprep.subr.mxu0 0.0
        %7397 = vmatpush1.msra.mxu0 0.0
        %7398 = vmatprep.subr.mxu0 0.0
        %7399 = vmatpush1.msra.mxu0 0.0
        %7400 = vmatprep.subr.mxu0 0.0
        %7401 = vmatpush1.msra.mxu0 0.0
        %7402 = vmatprep.subr.mxu0 0.0
        %7403 = vmatpush1.msra.mxu0 0.0
        %7404 = vmatprep.subr.mxu0 0.0
        %7405 = vmatpush1.msra.mxu0 0.0
        %7406 = vmatprep.subr.mxu0 0.0
        %7407 = vmatpush1.msra.mxu0 0.0
        %7408 = vmatprep.subr.mxu0 0.0
        %7409 = vmatpush1.msra.mxu0 0.0
        %7410 = vmatprep.subr.mxu0 0.0
        %7411 = vmatpush1.msra.mxu0 0.0
        %7412 = vmatprep.mubr.f32.mxu0 0.0
        %7413 = vmatmul.mubr.f32.gmra.mrb[0].mxu0 %v7343
        %v7414 = vpop.f32.mrb[0].mxu0
        %v7415 = vadd.f32 0.0, %v7414
        %v7416 = vpop.f32.mrb[0].mxu0
        %v7417 = vadd.f32 0.0, %v7416
        %7418 = vmatprep.mubr.f32.mxu0 0.0
        %7419 = vmatmul.mubr.f32.gmra.mrb[0].mxu0 %v7346
        %v7420 = vpop.f32.mrb[0].mxu0
        %v7421 = vadd.f32 0.0, %v7420
        %v7422 = vpop.f32.mrb[0].mxu0
        %v7423 = vadd.f32 0.0, %v7422
        %7424 = vdwg.mxu0
        %7429 = vrot.lane.b32.xlu0 %v7415, 64
        %v7430 = vpop.permute.xlu0 %7429
        %7431 = vrot.lane.b32.xlu0 %v7417, 64
        %v7432 = vpop.permute.xlu0 %7431
        %7433 = vrot.lane.b32.xlu0 %v7421, 64
        %v7434 = vpop.permute.xlu0 %7433
        %7435 = vrot.lane.b32.xlu0 %v7423, 64
        %v7436 = vpop.permute.xlu0 %7435
        %v7437 = vsel %vm4604, %v7430, %v7432
        %v7438 = vsel %vm4604, %v7434, %v7436
        %v7443 = vsel %vm4604, %v7432, 0.0
        %v7444 = vsel %vm4604, %v7436, 0.0
        %v7445 = vadd.f32 %v7335, %v7437
        %v7446 = vadd.f32 %v7336, %v7443
        %v7447 = vadd.f32 %v7337, %v7438
        %v7448 = vadd.f32 %v7338, %v7444
        %v7449 = vld [vmem:[%s67] sm:$0xff]
        %v7450 = vld [vmem:[%s67 + $0x8] sm:$0xf]
        %7452 = vset.pattern.permute.xlu0 0
        %7453 = vperm.xlu0 %7452, %v7449
        %v7454 = vpop.permute.xlu0 %7453
        %7457 = vset.pattern.permute.xlu0 0
        %7458 = vperm.xlu0 %7457, %v7450
        %v7459 = vpop.permute.xlu0 %7458
        %v7461 = vadd.f32 %v7445, %v7454
        %v7462 = vadd.f32 %v7446, %v7454
        %v7463 = vadd.f32 %v7447, %v7459
        %v7464 = vadd.f32 %v7448, %v7459
        %v7465 = vmul.f32 %v7461, 0.5
        %v7466 = vmul.f32 %v7462, 0.5
        %v7467 = vmul.f32 %v7463, 0.5
        %v7468 = vmul.f32 %v7464, 0.5
        %v7469 = vmul.f32 %v7461, 0.70710677
        %v7470 = vmul.f32 %v7462, 0.70710677
        %v7471 = vmul.f32 %v7463, 0.70710677
        %v7472 = vmul.f32 %v7464, 0.70710677
        %v7473 = verf.f32.pop %v7469
        %v7474 = verf.f32.pop %v7470
        %v7475 = verf.f32.pop %v7471
        %v7476 = verf.f32.pop %v7472
        %v7477 = vadd.f32 %v7473, 1.0
        %v7478 = vadd.f32 %v7474, 1.0
        %v7479 = vadd.f32 %v7475, 1.0
        %v7480 = vadd.f32 %v7476, 1.0
        %v7481 = vmul.f32 %v7465, %v7477
        %v7482 = vmul.f32 %v7466, %v7478
        %v7483 = vmul.f32 %v7467, %v7479
        %v7484 = vmul.f32 %v7468, %v7480
        %v7487 = vrot.slane %v4465, 4
        %v7488 = vrot.slane %v4466, 4
        %v7489 = vrot.slane %v4467, 4
        %v7490 = vsel %vm1884, %v7487, %v7489
        %v7491 = vrot.slane %v4468, 4
        %v7492 = vsel %vm1884, %v7488, %v7491
        %v7497 = vsel %vm1884, %v7483, %v7487
        %v7498 = vsel %vm1884, %v7484, %v7488
        %7503 = vrot.lane.b32.xlu0 %v7481, 2
        %v7504 = vpop.permute.xlu0 %7503
        %7505 = vrot.lane.b32.xlu0 %v7482, 2
        %v7506 = vpop.permute.xlu0 %7505
        %7507 = vrot.lane.b32.xlu0 %v7497, 2
        %v7508 = vpop.permute.xlu0 %7507
        %7509 = vrot.lane.b32.xlu0 %v7498, 2
        %v7510 = vpop.permute.xlu0 %7509
        %7511 = vrot.lane.b32.xlu0 %v7490, 2
        %v7512 = vpop.permute.xlu0 %7511
        %7513 = vrot.lane.b32.xlu0 %v7492, 2
        %v7514 = vpop.permute.xlu0 %7513
        %v7515 = vsel %vm2424, %v7504, %v7506
        %v7516 = vsel %vm2424, %v7508, %v7510
        %v7517 = vsel %vm2424, %v7512, %v7514
        %v7524 = vsel %vm2424, 0.0, %v7504
        %v7525 = vsel %vm2424, 0.0, %v7508
        %v7526 = vsel %vm2424, 0.0, %v7512
        %v7527 = vsel %vm3180, %v7524, 0.0
        %v7528 = vsel %vm3181, %v7515, 0.0
        %v7529 = vsel %vm3180, %v7525, 0.0
        %v7530 = vsel %vm3181, %v7516, 0.0
        %v7531 = vsel %vm3180, %v7526, 0.0
        %v7532 = vsel %vm3181, %v7517, 0.0
        %7533 = vrot.lane.b32.xlu0 %v7481, 126
        %v7534 = vpop.permute.xlu0 %7533
        %7535 = vrot.lane.b32.xlu0 %v7482, 126
        %v7536 = vpop.permute.xlu0 %7535
        %7537 = vrot.lane.b32.xlu0 %v7497, 126
        %v7538 = vpop.permute.xlu0 %7537
        %7539 = vrot.lane.b32.xlu0 %v7498, 126
        %v7540 = vpop.permute.xlu0 %7539
        %7541 = vrot.lane.b32.xlu0 %v7490, 126
        %v7542 = vpop.permute.xlu0 %7541
        %7543 = vrot.lane.b32.xlu0 %v7492, 126
        %v7544 = vpop.permute.xlu0 %7543
        %v7545 = vsel %vm2457, %v7534, %v7536
        %v7546 = vsel %vm2457, %v7538, %v7540
        %v7547 = vsel %vm2457, %v7542, %v7544
        %v7554 = vsel %vm2457, %v7536, 0.0
        %v7555 = vsel %vm2457, %v7540, 0.0
        %v7556 = vsel %vm2457, %v7544, 0.0
        %v7557 = vsel %vm3194, %v7545, 0.0
        %v7558 = vsel %vm3195, %v7554, 0.0
        %v7559 = vsel %vm3194, %v7546, 0.0
        %v7560 = vsel %vm3195, %v7555, 0.0
        %v7561 = vsel %vm3194, %v7547, 0.0
        %v7562 = vsel %vm3195, %v7556, 0.0
        %v7563 = vld [vmem:[%s65] sm:$0xff]
        %v7564 = vld [vmem:[%s65 + $0x8] sm:$0xf]
        %v7566 = vsel %vm7141, %v7563, 0
        %v7569 = vsel %vm7141, %v7564, 0
        %7571 = vmatprep.subr.mxu0 %v7528
        %7572 = vmatpush1.msra.mxu0 %v7527
        %7573 = vmatprep.subr.mxu0 %v7530
        %7574 = vmatpush1.msra.mxu0 %v7529
        %7575 = vmatprep.subr.mxu0 %v7532
        %7576 = vmatpush1.msra.mxu0 %v7531
        %7577 = vmatprep.subr.mxu0 %v7482
        %7578 = vmatpush1.msra.mxu0 %v7481
        %7579 = vmatprep.subr.mxu0 %v7498
        %7580 = vmatpush1.msra.mxu0 %v7497
        %7581 = vmatprep.subr.mxu0 %v7492
        %7582 = vmatpush1.msra.mxu0 %v7490
        %7583 = vmatprep.subr.mxu0 %v7558
        %7584 = vmatpush1.msra.mxu0 %v7557
        %7585 = vmatprep.subr.mxu0 %v7560
        %7586 = vmatpush1.msra.mxu0 %v7559
        %7587 = vmatprep.subr.mxu0 %v7562
        %7588 = vmatpush1.msra.mxu0 %v7561
        %7589 = vmatprep.subr.mxu0 0.0
        %7590 = vmatpush1.msra.mxu0 0.0
        %7591 = vmatprep.subr.mxu0 0.0
        %7592 = vmatpush1.msra.mxu0 0.0
        %7593 = vmatprep.subr.mxu0 0.0
        %7594 = vmatpush1.msra.mxu0 0.0
        %7595 = vmatprep.subr.mxu0 0.0
        %7596 = vmatpush1.msra.mxu0 0.0
        %7597 = vmatprep.subr.mxu0 0.0
        %7598 = vmatpush1.msra.mxu0 0.0
        %7599 = vmatprep.subr.mxu0 0.0
        %7600 = vmatpush1.msra.mxu0 0.0
        %7601 = vmatprep.subr.mxu0 0.0
        %7602 = vmatpush1.msra.mxu0 0.0
        %7603 = vmatprep.subr.mxu0 0.0
        %7604 = vmatpush1.msra.mxu0 0.0
        %7605 = vmatprep.subr.mxu0 0.0
        %7606 = vmatpush1.msra.mxu0 0.0
        %7607 = vmatprep.subr.mxu0 0.0
        %7608 = vmatpush1.msra.mxu0 0.0
        %7609 = vmatprep.subr.mxu0 0.0
        %7610 = vmatpush1.msra.mxu0 0.0
        %7611 = vmatprep.subr.mxu0 0.0
        %7612 = vmatpush1.msra.mxu0 0.0
        %7613 = vmatprep.subr.mxu0 0.0
        %7614 = vmatpush1.msra.mxu0 0.0
        %7615 = vmatprep.subr.mxu0 0.0
        %7616 = vmatpush1.msra.mxu0 0.0
        %7617 = vmatprep.subr.mxu0 0.0
        %7618 = vmatpush1.msra.mxu0 0.0
        %7619 = vmatprep.subr.mxu0 0.0
        %7620 = vmatpush1.msra.mxu0 0.0
        %7621 = vmatprep.subr.mxu0 0.0
        %7622 = vmatpush1.msra.mxu0 0.0
        %7623 = vmatprep.subr.mxu0 0.0
        %7624 = vmatpush1.msra.mxu0 0.0
        %7625 = vmatprep.subr.mxu0 0.0
        %7626 = vmatpush1.msra.mxu0 0.0
        %7627 = vmatprep.subr.mxu0 0.0
        %7628 = vmatpush1.msra.mxu0 0.0
        %7629 = vmatprep.subr.mxu0 0.0
        %7630 = vmatpush1.msra.mxu0 0.0
        %7631 = vmatprep.subr.mxu0 0.0
        %7632 = vmatpush1.msra.mxu0 0.0
        %7633 = vmatprep.subr.mxu0 0.0
        %7634 = vmatpush1.msra.mxu0 0.0
        %7635 = vmatprep.mubr.f32.mxu0 0.0
        %7636 = vmatmul.mubr.f32.gmra.mrb[0].mxu0 %v7566
        %v7637 = vpop.f32.mrb[0].mxu0
        %v7638 = vadd.f32 0.0, %v7637
        %v7639 = vpop.f32.mrb[0].mxu0
        %v7640 = vadd.f32 0.0, %v7639
        %7641 = vmatprep.mubr.f32.mxu0 0.0
        %7642 = vmatmul.mubr.f32.gmra.mrb[0].mxu0 %v7569
        %v7643 = vpop.f32.mrb[0].mxu0
        %v7644 = vadd.f32 0.0, %v7643
        %v7645 = vpop.f32.mrb[0].mxu0
        %v7646 = vadd.f32 0.0, %v7645
        %7647 = vdwg.mxu0
        %7652 = vrot.lane.b32.xlu0 %v7638, 32
        %v7653 = vpop.permute.xlu0 %7652
        %7654 = vrot.lane.b32.xlu0 %v7640, 32
        %v7655 = vpop.permute.xlu0 %7654
        %7656 = vrot.lane.b32.xlu0 %v7644, 32
        %v7657 = vpop.permute.xlu0 %7656
        %7658 = vrot.lane.b32.xlu0 %v7646, 32
        %v7659 = vpop.permute.xlu0 %7658
        %v7660 = vsel %vm2706, %v7653, %v7655
        %v7661 = vsel %vm2706, %v7657, %v7659
        %v7666 = vsel %vm2706, 0.0, %v7653
        %v7667 = vsel %vm2706, 0.0, %v7657
        %v7668 = vadd.f32 %v7666, 0.0
        %v7669 = vadd.f32 %v7660, 0.0
        %v7670 = vadd.f32 %v7667, 0.0
        %v7671 = vadd.f32 %v7661, 0.0
        %s7672 = scalar_lea.vmem %s65, 16
        %v7673 = vld [vmem:[%s7672] sm:$0xff]
        %v7674 = vld [vmem:[%s7672 + $0x8] sm:$0xf]
        %v7676 = vsel %vm7141, %v7673, 0
        %v7679 = vsel %vm7141, %v7674, 0
        %7681 = vmatprep.subr.mxu0 %v7528
        %7682 = vmatpush1.msra.mxu0 %v7527
        %7683 = vmatprep.subr.mxu0 %v7530
        %7684 = vmatpush1.msra.mxu0 %v7529
        %7685 = vmatprep.subr.mxu0 %v7532
        %7686 = vmatpush1.msra.mxu0 %v7531
        %7687 = vmatprep.subr.mxu0 %v7482
        %7688 = vmatpush1.msra.mxu0 %v7481
        %7689 = vmatprep.subr.mxu0 %v7498
        %7690 = vmatpush1.msra.mxu0 %v7497
        %7691 = vmatprep.subr.mxu0 %v7492
        %7692 = vmatpush1.msra.mxu0 %v7490
        %7693 = vmatprep.subr.mxu0 %v7558
        %7694 = vmatpush1.msra.mxu0 %v7557
        %7695 = vmatprep.subr.mxu0 %v7560
        %7696 = vmatpush1.msra.mxu0 %v7559
        %7697 = vmatprep.subr.mxu0 %v7562
        %7698 = vmatpush1.msra.mxu0 %v7561
        %7699 = vmatprep.subr.mxu0 0.0
        %7700 = vmatpush1.msra.mxu0 0.0
        %7701 = vmatprep.subr.mxu0 0.0
        %7702 = vmatpush1.msra.mxu0 0.0
        %7703 = vmatprep.subr.mxu0 0.0
        %7704 = vmatpush1.msra.mxu0 0.0
        %7705 = vmatprep.subr.mxu0 0.0
        %7706 = vmatpush1.msra.mxu0 0.0
        %7707 = vmatprep.subr.mxu0 0.0
        %7708 = vmatpush1.msra.mxu0 0.0
        %7709 = vmatprep.subr.mxu0 0.0
        %7710 = vmatpush1.msra.mxu0 0.0
        %7711 = vmatprep.subr.mxu0 0.0
        %7712 = vmatpush1.msra.mxu0 0.0
        %7713 = vmatprep.subr.mxu0 0.0
        %7714 = vmatpush1.msra.mxu0 0.0
        %7715 = vmatprep.subr.mxu0 0.0
        %7716 = vmatpush1.msra.mxu0 0.0
        %7717 = vmatprep.subr.mxu0 0.0
        %7718 = vmatpush1.msra.mxu0 0.0
        %7719 = vmatprep.subr.mxu0 0.0
        %7720 = vmatpush1.msra.mxu0 0.0
        %7721 = vmatprep.subr.mxu0 0.0
        %7722 = vmatpush1.msra.mxu0 0.0
        %7723 = vmatprep.subr.mxu0 0.0
        %7724 = vmatpush1.msra.mxu0 0.0
        %7725 = vmatprep.subr.mxu0 0.0
        %7726 = vmatpush1.msra.mxu0 0.0
        %7727 = vmatprep.subr.mxu0 0.0
        %7728 = vmatpush1.msra.mxu0 0.0
        %7729 = vmatprep.subr.mxu0 0.0
        %7730 = vmatpush1.msra.mxu0 0.0
        %7731 = vmatprep.subr.mxu0 0.0
        %7732 = vmatpush1.msra.mxu0 0.0
        %7733 = vmatprep.subr.mxu0 0.0
        %7734 = vmatpush1.msra.mxu0 0.0
        %7735 = vmatprep.subr.mxu0 0.0
        %7736 = vmatpush1.msra.mxu0 0.0
        %7737 = vmatprep.subr.mxu0 0.0
        %7738 = vmatpush1.msra.mxu0 0.0
        %7739 = vmatprep.subr.mxu0 0.0
        %7740 = vmatpush1.msra.mxu0 0.0
        %7741 = vmatprep.subr.mxu0 0.0
        %7742 = vmatpush1.msra.mxu0 0.0
        %7743 = vmatprep.subr.mxu0 0.0
        %7744 = vmatpush1.msra.mxu0 0.0
        %7745 = vmatprep.mubr.f32.mxu0 0.0
        %7746 = vmatmul.mubr.f32.gmra.mrb[0].mxu0 %v7676
        %v7747 = vpop.f32.mrb[0].mxu0
        %v7748 = vadd.f32 0.0, %v7747
        %v7749 = vpop.f32.mrb[0].mxu0
        %v7750 = vadd.f32 0.0, %v7749
        %7751 = vmatprep.mubr.f32.mxu0 0.0
        %7752 = vmatmul.mubr.f32.gmra.mrb[0].mxu0 %v7679
        %v7753 = vpop.f32.mrb[0].mxu0
        %v7754 = vadd.f32 0.0, %v7753
        %v7755 = vpop.f32.mrb[0].mxu0
        %v7756 = vadd.f32 0.0, %v7755
        %7757 = vdwg.mxu0
        %v7758 = vadd.f32 %v7668, %v7748
        %v7759 = vadd.f32 %v7669, %v7750
        %v7760 = vadd.f32 %v7670, %v7754
        %v7761 = vadd.f32 %v7671, %v7756
        %s7762 = scalar_lea.vmem %s65, 32
        %v7763 = vld [vmem:[%s7762] sm:$0xff]
        %v7764 = vld [vmem:[%s7762 + $0x8] sm:$0xf]
        %v7766 = vsel %vm7141, %v7763, 0
        %v7769 = vsel %vm7141, %v7764, 0
        %7771 = vmatprep.subr.mxu0 %v7528
        %7772 = vmatpush1.msra.mxu0 %v7527
        %7773 = vmatprep.subr.mxu0 %v7530
        %7774 = vmatpush1.msra.mxu0 %v7529
        %7775 = vmatprep.subr.mxu0 %v7532
        %7776 = vmatpush1.msra.mxu0 %v7531
        %7777 = vmatprep.subr.mxu0 %v7482
        %7778 = vmatpush1.msra.mxu0 %v7481
        %7779 = vmatprep.subr.mxu0 %v7498
        %7780 = vmatpush1.msra.mxu0 %v7497
        %7781 = vmatprep.subr.mxu0 %v7492
        %7782 = vmatpush1.msra.mxu0 %v7490
        %7783 = vmatprep.subr.mxu0 %v7558
        %7784 = vmatpush1.msra.mxu0 %v7557
        %7785 = vmatprep.subr.mxu0 %v7560
        %7786 = vmatpush1.msra.mxu0 %v7559
        %7787 = vmatprep.subr.mxu0 %v7562
        %7788 = vmatpush1.msra.mxu0 %v7561
        %7789 = vmatprep.subr.mxu0 0.0
        %7790 = vmatpush1.msra.mxu0 0.0
        %7791 = vmatprep.subr.mxu0 0.0
        %7792 = vmatpush1.msra.mxu0 0.0
        %7793 = vmatprep.subr.mxu0 0.0
        %7794 = vmatpush1.msra.mxu0 0.0
        %7795 = vmatprep.subr.mxu0 0.0
        %7796 = vmatpush1.msra.mxu0 0.0
        %7797 = vmatprep.subr.mxu0 0.0
        %7798 = vmatpush1.msra.mxu0 0.0
        %7799 = vmatprep.subr.mxu0 0.0
        %7800 = vmatpush1.msra.mxu0 0.0
        %7801 = vmatprep.subr.mxu0 0.0
        %7802 = vmatpush1.msra.mxu0 0.0
        %7803 = vmatprep.subr.mxu0 0.0
        %7804 = vmatpush1.msra.mxu0 0.0
        %7805 = vmatprep.subr.mxu0 0.0
        %7806 = vmatpush1.msra.mxu0 0.0
        %7807 = vmatprep.subr.mxu0 0.0
        %7808 = vmatpush1.msra.mxu0 0.0
        %7809 = vmatprep.subr.mxu0 0.0
        %7810 = vmatpush1.msra.mxu0 0.0
        %7811 = vmatprep.subr.mxu0 0.0
        %7812 = vmatpush1.msra.mxu0 0.0
        %7813 = vmatprep.subr.mxu0 0.0
        %7814 = vmatpush1.msra.mxu0 0.0
        %7815 = vmatprep.subr.mxu0 0.0
        %7816 = vmatpush1.msra.mxu0 0.0
        %7817 = vmatprep.subr.mxu0 0.0
        %7818 = vmatpush1.msra.mxu0 0.0
        %7819 = vmatprep.subr.mxu0 0.0
        %7820 = vmatpush1.msra.mxu0 0.0
        %7821 = vmatprep.subr.mxu0 0.0
        %7822 = vmatpush1.msra.mxu0 0.0
        %7823 = vmatprep.subr.mxu0 0.0
        %7824 = vmatpush1.msra.mxu0 0.0
        %7825 = vmatprep.subr.mxu0 0.0
        %7826 = vmatpush1.msra.mxu0 0.0
        %7827 = vmatprep.subr.mxu0 0.0
        %7828 = vmatpush1.msra.mxu0 0.0
        %7829 = vmatprep.subr.mxu0 0.0
        %7830 = vmatpush1.msra.mxu0 0.0
        %7831 = vmatprep.subr.mxu0 0.0
        %7832 = vmatpush1.msra.mxu0 0.0
        %7833 = vmatprep.subr.mxu0 0.0
        %7834 = vmatpush1.msra.mxu0 0.0
        %7835 = vmatprep.mubr.f32.mxu0 0.0
        %7836 = vmatmul.mubr.f32.gmra.mrb[0].mxu0 %v7766
        %v7837 = vpop.f32.mrb[0].mxu0
        %v7838 = vadd.f32 0.0, %v7837
        %v7839 = vpop.f32.mrb[0].mxu0
        %v7840 = vadd.f32 0.0, %v7839
        %7841 = vmatprep.mubr.f32.mxu0 0.0
        %7842 = vmatmul.mubr.f32.gmra.mrb[0].mxu0 %v7769
        %v7843 = vpop.f32.mrb[0].mxu0
        %v7844 = vadd.f32 0.0, %v7843
        %v7845 = vpop.f32.mrb[0].mxu0
        %v7846 = vadd.f32 0.0, %v7845
        %7847 = vdwg.mxu0
        %7852 = vrot.lane.b32.xlu0 %v7838, 96
        %v7853 = vpop.permute.xlu0 %7852
        %7854 = vrot.lane.b32.xlu0 %v7840, 96
        %v7855 = vpop.permute.xlu0 %7854
        %7856 = vrot.lane.b32.xlu0 %v7844, 96
        %v7857 = vpop.permute.xlu0 %7856
        %7858 = vrot.lane.b32.xlu0 %v7846, 96
        %v7859 = vpop.permute.xlu0 %7858
        %v7860 = vsel %vm2857, %v7853, %v7855
        %v7861 = vsel %vm2857, %v7857, %v7859
        %v7866 = vsel %vm2857, %v7855, 0.0
        %v7867 = vsel %vm2857, %v7859, 0.0
        %v7868 = vadd.f32 %v7758, %v7860
        %v7869 = vadd.f32 %v7759, %v7866
        %v7870 = vadd.f32 %v7760, %v7861
        %v7871 = vadd.f32 %v7761, %v7867
        %v7872 = vld [vmem:[%s63] sm:$0xff]
        %v7873 = vld [vmem:[%s63 + $0x8] sm:$0xf]
        %7875 = vset.pattern.permute.xlu0 0
        %7876 = vperm.xlu0 %7875, %v7872
        %v7877 = vpop.permute.xlu0 %7876
        %7880 = vset.pattern.permute.xlu0 0
        %7881 = vperm.xlu0 %7880, %v7873
        %v7882 = vpop.permute.xlu0 %7881
        %v7884 = vadd.f32 %v7868, %v7877
        %v7885 = vadd.f32 %v7869, %v7877
        %v7886 = vadd.f32 %v7870, %v7882
        %v7887 = vadd.f32 %v7871, %v7882
        %v7888 = vmul.f32 %v7884, 0.5
        %v7889 = vmul.f32 %v7885, 0.5
        %v7890 = vmul.f32 %v7886, 0.5
        %v7891 = vmul.f32 %v7887, 0.5
        %v7892 = vmul.f32 %v7884, 0.70710677
        %v7893 = vmul.f32 %v7885, 0.70710677
        %v7894 = vmul.f32 %v7886, 0.70710677
        %v7895 = vmul.f32 %v7887, 0.70710677
        %v7896 = verf.f32.pop %v7892
        %v7897 = verf.f32.pop %v7893
        %v7898 = verf.f32.pop %v7894
        %v7899 = verf.f32.pop %v7895
        %v7900 = vadd.f32 %v7896, 1.0
        %v7901 = vadd.f32 %v7897, 1.0
        %v7902 = vadd.f32 %v7898, 1.0
        %v7903 = vadd.f32 %v7899, 1.0
        %v7904 = vmul.f32 %v7888, %v7900
        %v7905 = vmul.f32 %v7889, %v7901
        %v7906 = vmul.f32 %v7890, %v7902
        %v7907 = vmul.f32 %v7891, %v7903
        %v7910 = vrot.slane %v3164, 4
        %v7911 = vrot.slane %v3165, 4
        %v7912 = vrot.slane %v3166, 4
        %v7913 = vsel %vm1884, %v7910, %v7912
        %v7914 = vrot.slane %v3167, 4
        %v7915 = vsel %vm1884, %v7911, %v7914
        %v7920 = vsel %vm1884, %v7906, %v7910
        %v7921 = vsel %vm1884, %v7907, %v7911
        %7926 = vrot.lane.b32.xlu0 %v7904, 1
        %v7927 = vpop.permute.xlu0 %7926
        %7928 = vrot.lane.b32.xlu0 %v7905, 1
        %v7929 = vpop.permute.xlu0 %7928
        %7930 = vrot.lane.b32.xlu0 %v7920, 1
        %v7931 = vpop.permute.xlu0 %7930
        %7932 = vrot.lane.b32.xlu0 %v7921, 1
        %v7933 = vpop.permute.xlu0 %7932
        %7934 = vrot.lane.b32.xlu0 %v7913, 1
        %v7935 = vpop.permute.xlu0 %7934
        %7936 = vrot.lane.b32.xlu0 %v7915, 1
        %v7937 = vpop.permute.xlu0 %7936
        %v7938 = vsel %vm1451, %v7927, %v7929
        %v7939 = vsel %vm1451, %v7931, %v7933
        %v7940 = vsel %vm1451, %v7935, %v7937
        %v7947 = vsel %vm1451, 0.0, %v7927
        %v7948 = vsel %vm1451, 0.0, %v7931
        %v7949 = vsel %vm1451, 0.0, %v7935
        %v7950 = vsel %vm1460, %v7947, 0.0
        %v7951 = vsel %vm1461, %v7938, 0.0
        %v7952 = vsel %vm1460, %v7948, 0.0
        %v7953 = vsel %vm1461, %v7939, 0.0
        %v7954 = vsel %vm1460, %v7949, 0.0
        %v7955 = vsel %vm1461, %v7940, 0.0
        %7956 = vrot.lane.b32.xlu0 %v7904, 127
        %v7957 = vpop.permute.xlu0 %7956
        %7958 = vrot.lane.b32.xlu0 %v7905, 127
        %v7959 = vpop.permute.xlu0 %7958
        %7960 = vrot.lane.b32.xlu0 %v7920, 127
        %v7961 = vpop.permute.xlu0 %7960
        %7962 = vrot.lane.b32.xlu0 %v7921, 127
        %v7963 = vpop.permute.xlu0 %7962
        %7964 = vrot.lane.b32.xlu0 %v7913, 127
        %v7965 = vpop.permute.xlu0 %7964
        %7966 = vrot.lane.b32.xlu0 %v7915, 127
        %v7967 = vpop.permute.xlu0 %7966
        %v7968 = vsel %vm1468, %v7957, %v7959
        %v7969 = vsel %vm1468, %v7961, %v7963
        %v7970 = vsel %vm1468, %v7965, %v7967
        %v7977 = vsel %vm1468, %v7959, 0.0
        %v7978 = vsel %vm1468, %v7963, 0.0
        %v7979 = vsel %vm1468, %v7967, 0.0
        %v7980 = vsel %vm1477, %v7968, 0.0
        %v7981 = vsel %vm1478, %v7977, 0.0
        %v7982 = vsel %vm1477, %v7969, 0.0
        %v7983 = vsel %vm1478, %v7978, 0.0
        %v7984 = vsel %vm1477, %v7970, 0.0
        %v7985 = vsel %vm1478, %v7979, 0.0
        %v7986 = vld [vmem:[%s61] sm:$0xff]
        %v7987 = vld [vmem:[%s61 + $0x8] sm:$0xf]
        %v7989 = vsel %vm7141, %v7986, 0
        %v7992 = vsel %vm7141, %v7987, 0
        %7994 = vmatprep.subr.mxu0 %v7951
        %7995 = vmatpush1.msra.mxu0 %v7950
        %7996 = vmatprep.subr.mxu0 %v7953
        %7997 = vmatpush1.msra.mxu0 %v7952
        %7998 = vmatprep.subr.mxu0 %v7955
        %7999 = vmatpush1.msra.mxu0 %v7954
        %8000 = vmatprep.subr.mxu0 %v7905
        %8001 = vmatpush1.msra.mxu0 %v7904
        %8002 = vmatprep.subr.mxu0 %v7921
        %8003 = vmatpush1.msra.mxu0 %v7920
        %8004 = vmatprep.subr.mxu0 %v7915
        %8005 = vmatpush1.msra.mxu0 %v7913
        %8006 = vmatprep.subr.mxu0 %v7981
        %8007 = vmatpush1.msra.mxu0 %v7980
        %8008 = vmatprep.subr.mxu0 %v7983
        %8009 = vmatpush1.msra.mxu0 %v7982
        %8010 = vmatprep.subr.mxu0 %v7985
        %8011 = vmatpush1.msra.mxu0 %v7984
        %8012 = vmatprep.subr.mxu0 0.0
        %8013 = vmatpush1.msra.mxu0 0.0
        %8014 = vmatprep.subr.mxu0 0.0
        %8015 = vmatpush1.msra.mxu0 0.0
        %8016 = vmatprep.subr.mxu0 0.0
        %8017 = vmatpush1.msra.mxu0 0.0
        %8018 = vmatprep.subr.mxu0 0.0
        %8019 = vmatpush1.msra.mxu0 0.0
        %8020 = vmatprep.subr.mxu0 0.0
        %8021 = vmatpush1.msra.mxu0 0.0
        %8022 = vmatprep.subr.mxu0 0.0
        %8023 = vmatpush1.msra.mxu0 0.0
        %8024 = vmatprep.subr.mxu0 0.0
        %8025 = vmatpush1.msra.mxu0 0.0
        %8026 = vmatprep.subr.mxu0 0.0
        %8027 = vmatpush1.msra.mxu0 0.0
        %8028 = vmatprep.subr.mxu0 0.0
        %8029 = vmatpush1.msra.mxu0 0.0
        %8030 = vmatprep.subr.mxu0 0.0
        %8031 = vmatpush1.msra.mxu0 0.0
        %8032 = vmatprep.subr.mxu0 0.0
        %8033 = vmatpush1.msra.mxu0 0.0
        %8034 = vmatprep.subr.mxu0 0.0
        %8035 = vmatpush1.msra.mxu0 0.0
        %8036 = vmatprep.subr.mxu0 0.0
        %8037 = vmatpush1.msra.mxu0 0.0
        %8038 = vmatprep.subr.mxu0 0.0
        %8039 = vmatpush1.msra.mxu0 0.0
        %8040 = vmatprep.subr.mxu0 0.0
        %8041 = vmatpush1.msra.mxu0 0.0
        %8042 = vmatprep.subr.mxu0 0.0
        %8043 = vmatpush1.msra.mxu0 0.0
        %8044 = vmatprep.subr.mxu0 0.0
        %8045 = vmatpush1.msra.mxu0 0.0
        %8046 = vmatprep.subr.mxu0 0.0
        %8047 = vmatpush1.msra.mxu0 0.0
        %8048 = vmatprep.subr.mxu0 0.0
        %8049 = vmatpush1.msra.mxu0 0.0
        %8050 = vmatprep.subr.mxu0 0.0
        %8051 = vmatpush1.msra.mxu0 0.0
        %8052 = vmatprep.subr.mxu0 0.0
        %8053 = vmatpush1.msra.mxu0 0.0
        %8054 = vmatprep.subr.mxu0 0.0
        %8055 = vmatpush1.msra.mxu0 0.0
        %8056 = vmatprep.subr.mxu0 0.0
        %8057 = vmatpush1.msra.mxu0 0.0
        %8058 = vmatprep.mubr.f32.mxu0 0.0
        %8059 = vmatmul.mubr.f32.gmra.mrb[0].mxu0 %v7989
        %v8060 = vpop.f32.mrb[0].mxu0
        %v8061 = vadd.f32 0.0, %v8060
        %v8062 = vpop.f32.mrb[0].mxu0
        %v8063 = vadd.f32 0.0, %v8062
        %8064 = vmatprep.mubr.f32.mxu0 0.0
        %8065 = vmatmul.mubr.f32.gmra.mrb[0].mxu0 %v7992
        %v8066 = vpop.f32.mrb[0].mxu0
        %v8067 = vadd.f32 0.0, %v8066
        %v8068 = vpop.f32.mrb[0].mxu0
        %v8069 = vadd.f32 0.0, %v8068
        %8070 = vdwg.mxu0
        %8075 = vrot.lane.b32.xlu0 %v8061, 16
        %v8076 = vpop.permute.xlu0 %8075
        %8077 = vrot.lane.b32.xlu0 %v8063, 16
        %v8078 = vpop.permute.xlu0 %8077
        %8079 = vrot.lane.b32.xlu0 %v8067, 16
        %v8080 = vpop.permute.xlu0 %8079
        %8081 = vrot.lane.b32.xlu0 %v8069, 16
        %v8082 = vpop.permute.xlu0 %8081
        %v8083 = vsel %vm1600, %v8076, %v8078
        %v8084 = vsel %vm1600, %v8080, %v8082
        %v8089 = vsel %vm1600, 0.0, %v8076
        %v8090 = vsel %vm1600, 0.0, %v8080
        %v8091 = vadd.f32 %v8089, 0.0
        %v8092 = vadd.f32 %v8083, 0.0
        %v8093 = vadd.f32 %v8090, 0.0
        %v8094 = vadd.f32 %v8084, 0.0
        %s8095 = scalar_lea.vmem %s61, 16
        %v8096 = vld [vmem:[%s8095] sm:$0xff]
        %v8097 = vld [vmem:[%s8095 + $0x8] sm:$0xf]
        %v8099 = vsel %vm7141, %v8096, 0
        %v8102 = vsel %vm7141, %v8097, 0
        %8104 = vmatprep.subr.mxu0 %v7951
        %8105 = vmatpush1.msra.mxu0 %v7950
        %8106 = vmatprep.subr.mxu0 %v7953
        %8107 = vmatpush1.msra.mxu0 %v7952
        %8108 = vmatprep.subr.mxu0 %v7955
        %8109 = vmatpush1.msra.mxu0 %v7954
        %8110 = vmatprep.subr.mxu0 %v7905
        %8111 = vmatpush1.msra.mxu0 %v7904
        %8112 = vmatprep.subr.mxu0 %v7921
        %8113 = vmatpush1.msra.mxu0 %v7920
        %8114 = vmatprep.subr.mxu0 %v7915
        %8115 = vmatpush1.msra.mxu0 %v7913
        %8116 = vmatprep.subr.mxu0 %v7981
        %8117 = vmatpush1.msra.mxu0 %v7980
        %8118 = vmatprep.subr.mxu0 %v7983
        %8119 = vmatpush1.msra.mxu0 %v7982
        %8120 = vmatprep.subr.mxu0 %v7985
        %8121 = vmatpush1.msra.mxu0 %v7984
        %8122 = vmatprep.subr.mxu0 0.0
        %8123 = vmatpush1.msra.mxu0 0.0
        %8124 = vmatprep.subr.mxu0 0.0
        %8125 = vmatpush1.msra.mxu0 0.0
        %8126 = vmatprep.subr.mxu0 0.0
        %8127 = vmatpush1.msra.mxu0 0.0
        %8128 = vmatprep.subr.mxu0 0.0
        %8129 = vmatpush1.msra.mxu0 0.0
        %8130 = vmatprep.subr.mxu0 0.0
        %8131 = vmatpush1.msra.mxu0 0.0
        %8132 = vmatprep.subr.mxu0 0.0
        %8133 = vmatpush1.msra.mxu0 0.0
        %8134 = vmatprep.subr.mxu0 0.0
        %8135 = vmatpush1.msra.mxu0 0.0
        %8136 = vmatprep.subr.mxu0 0.0
        %8137 = vmatpush1.msra.mxu0 0.0
        %8138 = vmatprep.subr.mxu0 0.0
        %8139 = vmatpush1.msra.mxu0 0.0
        %8140 = vmatprep.subr.mxu0 0.0
        %8141 = vmatpush1.msra.mxu0 0.0
        %8142 = vmatprep.subr.mxu0 0.0
        %8143 = vmatpush1.msra.mxu0 0.0
        %8144 = vmatprep.subr.mxu0 0.0
        %8145 = vmatpush1.msra.mxu0 0.0
        %8146 = vmatprep.subr.mxu0 0.0
        %8147 = vmatpush1.msra.mxu0 0.0
        %8148 = vmatprep.subr.mxu0 0.0
        %8149 = vmatpush1.msra.mxu0 0.0
        %8150 = vmatprep.subr.mxu0 0.0
        %8151 = vmatpush1.msra.mxu0 0.0
        %8152 = vmatprep.subr.mxu0 0.0
        %8153 = vmatpush1.msra.mxu0 0.0
        %8154 = vmatprep.subr.mxu0 0.0
        %8155 = vmatpush1.msra.mxu0 0.0
        %8156 = vmatprep.subr.mxu0 0.0
        %8157 = vmatpush1.msra.mxu0 0.0
        %8158 = vmatprep.subr.mxu0 0.0
        %8159 = vmatpush1.msra.mxu0 0.0
        %8160 = vmatprep.subr.mxu0 0.0
        %8161 = vmatpush1.msra.mxu0 0.0
        %8162 = vmatprep.subr.mxu0 0.0
        %8163 = vmatpush1.msra.mxu0 0.0
        %8164 = vmatprep.subr.mxu0 0.0
        %8165 = vmatpush1.msra.mxu0 0.0
        %8166 = vmatprep.subr.mxu0 0.0
        %8167 = vmatpush1.msra.mxu0 0.0
        %8168 = vmatprep.mubr.f32.mxu0 0.0
        %8169 = vmatmul.mubr.f32.gmra.mrb[0].mxu0 %v8099
        %v8170 = vpop.f32.mrb[0].mxu0
        %v8171 = vadd.f32 0.0, %v8170
        %v8172 = vpop.f32.mrb[0].mxu0
        %v8173 = vadd.f32 0.0, %v8172
        %8174 = vmatprep.mubr.f32.mxu0 0.0
        %8175 = vmatmul.mubr.f32.gmra.mrb[0].mxu0 %v8102
        %v8176 = vpop.f32.mrb[0].mxu0
        %v8177 = vadd.f32 0.0, %v8176
        %v8178 = vpop.f32.mrb[0].mxu0
        %v8179 = vadd.f32 0.0, %v8178
        %8180 = vdwg.mxu0
        %v8181 = vadd.f32 %v8091, %v8171
        %v8182 = vadd.f32 %v8092, %v8173
        %v8183 = vadd.f32 %v8093, %v8177
        %v8184 = vadd.f32 %v8094, %v8179
        %s8185 = scalar_lea.vmem %s61, 32
        %v8186 = vld [vmem:[%s8185] sm:$0xff]
        %v8187 = vld [vmem:[%s8185 + $0x8] sm:$0xf]
        %v8189 = vsel %vm7141, %v8186, 0
        %v8192 = vsel %vm7141, %v8187, 0
        %8194 = vmatprep.subr.mxu0 %v7951
        %8195 = vmatpush1.msra.mxu0 %v7950
        %8196 = vmatprep.subr.mxu0 %v7953
        %8197 = vmatpush1.msra.mxu0 %v7952
        %8198 = vmatprep.subr.mxu0 %v7955
        %8199 = vmatpush1.msra.mxu0 %v7954
        %8200 = vmatprep.subr.mxu0 %v7905
        %8201 = vmatpush1.msra.mxu0 %v7904
        %8202 = vmatprep.subr.mxu0 %v7921
        %8203 = vmatpush1.msra.mxu0 %v7920
        %8204 = vmatprep.subr.mxu0 %v7915
        %8205 = vmatpush1.msra.mxu0 %v7913
        %8206 = vmatprep.subr.mxu0 %v7981
        %8207 = vmatpush1.msra.mxu0 %v7980
        %8208 = vmatprep.subr.mxu0 %v7983
        %8209 = vmatpush1.msra.mxu0 %v7982
        %8210 = vmatprep.subr.mxu0 %v7985
        %8211 = vmatpush1.msra.mxu0 %v7984
        %8212 = vmatprep.subr.mxu0 0.0
        %8213 = vmatpush1.msra.mxu0 0.0
        %8214 = vmatprep.subr.mxu0 0.0
        %8215 = vmatpush1.msra.mxu0 0.0
        %8216 = vmatprep.subr.mxu0 0.0
        %8217 = vmatpush1.msra.mxu0 0.0
        %8218 = vmatprep.subr.mxu0 0.0
        %8219 = vmatpush1.msra.mxu0 0.0
        %8220 = vmatprep.subr.mxu0 0.0
        %8221 = vmatpush1.msra.mxu0 0.0
        %8222 = vmatprep.subr.mxu0 0.0
        %8223 = vmatpush1.msra.mxu0 0.0
        %8224 = vmatprep.subr.mxu0 0.0
        %8225 = vmatpush1.msra.mxu0 0.0
        %8226 = vmatprep.subr.mxu0 0.0
        %8227 = vmatpush1.msra.mxu0 0.0
        %8228 = vmatprep.subr.mxu0 0.0
        %8229 = vmatpush1.msra.mxu0 0.0
        %8230 = vmatprep.subr.mxu0 0.0
        %8231 = vmatpush1.msra.mxu0 0.0
        %8232 = vmatprep.subr.mxu0 0.0
        %8233 = vmatpush1.msra.mxu0 0.0
        %8234 = vmatprep.subr.mxu0 0.0
        %8235 = vmatpush1.msra.mxu0 0.0
        %8236 = vmatprep.subr.mxu0 0.0
        %8237 = vmatpush1.msra.mxu0 0.0
        %8238 = vmatprep.subr.mxu0 0.0
        %8239 = vmatpush1.msra.mxu0 0.0
        %8240 = vmatprep.subr.mxu0 0.0
        %8241 = vmatpush1.msra.mxu0 0.0
        %8242 = vmatprep.subr.mxu0 0.0
        %8243 = vmatpush1.msra.mxu0 0.0
        %8244 = vmatprep.subr.mxu0 0.0
        %8245 = vmatpush1.msra.mxu0 0.0
        %8246 = vmatprep.subr.mxu0 0.0
        %8247 = vmatpush1.msra.mxu0 0.0
        %8248 = vmatprep.subr.mxu0 0.0
        %8249 = vmatpush1.msra.mxu0 0.0
        %8250 = vmatprep.subr.mxu0 0.0
        %8251 = vmatpush1.msra.mxu0 0.0
        %8252 = vmatprep.subr.mxu0 0.0
        %8253 = vmatpush1.msra.mxu0 0.0
        %8254 = vmatprep.subr.mxu0 0.0
        %8255 = vmatpush1.msra.mxu0 0.0
        %8256 = vmatprep.subr.mxu0 0.0
        %8257 = vmatpush1.msra.mxu0 0.0
        %8258 = vmatprep.mubr.f32.mxu0 0.0
        %8259 = vmatmul.mubr.f32.gmra.mrb[0].mxu0 %v8189
        %v8260 = vpop.f32.mrb[0].mxu0
        %v8261 = vadd.f32 0.0, %v8260
        %v8262 = vpop.f32.mrb[0].mxu0
        %v8263 = vadd.f32 0.0, %v8262
        %8264 = vmatprep.mubr.f32.mxu0 0.0
        %8265 = vmatmul.mubr.f32.gmra.mrb[0].mxu0 %v8192
        %v8266 = vpop.f32.mrb[0].mxu0
        %v8267 = vadd.f32 0.0, %v8266
        %v8268 = vpop.f32.mrb[0].mxu0
        %v8269 = vadd.f32 0.0, %v8268
        %8270 = vdwg.mxu0
        %8275 = vrot.lane.b32.xlu0 %v8261, 112
        %v8276 = vpop.permute.xlu0 %8275
        %8277 = vrot.lane.b32.xlu0 %v8263, 112
        %v8278 = vpop.permute.xlu0 %8277
        %8279 = vrot.lane.b32.xlu0 %v8267, 112
        %v8280 = vpop.permute.xlu0 %8279
        %8281 = vrot.lane.b32.xlu0 %v8269, 112
        %v8282 = vpop.permute.xlu0 %8281
        %v8283 = vsel %vm1801, %v8276, %v8278
        %v8284 = vsel %vm1801, %v8280, %v8282
        %v8289 = vsel %vm1801, %v8278, 0.0
        %v8290 = vsel %vm1801, %v8282, 0.0
        %v8291 = vadd.f32 %v8181, %v8283
        %v8292 = vadd.f32 %v8182, %v8289
        %v8293 = vadd.f32 %v8183, %v8284
        %v8294 = vadd.f32 %v8184, %v8290
        %v8295 = vld [vmem:[%s59] sm:$0xff]
        %v8296 = vld [vmem:[%s59 + $0x8] sm:$0xf]
        %8298 = vset.pattern.permute.xlu0 0
        %8299 = vperm.xlu0 %8298, %v8295
        %v8300 = vpop.permute.xlu0 %8299
        %8303 = vset.pattern.permute.xlu0 0
        %8304 = vperm.xlu0 %8303, %v8296
        %v8305 = vpop.permute.xlu0 %8304
        %v8307 = vadd.f32 %v8291, %v8300
        %v8308 = vadd.f32 %v8292, %v8300
        %v8309 = vadd.f32 %v8293, %v8305
        %v8310 = vadd.f32 %v8294, %v8305
        %v8311 = vmul.f32 %v8307, 0.5
        %v8312 = vmul.f32 %v8308, 0.5
        %v8313 = vmul.f32 %v8309, 0.5
        %v8314 = vmul.f32 %v8310, 0.5
        %v8315 = vmul.f32 %v8307, 0.70710677
        %v8316 = vmul.f32 %v8308, 0.70710677
        %v8317 = vmul.f32 %v8309, 0.70710677
        %v8318 = vmul.f32 %v8310, 0.70710677
        %v8319 = verf.f32.pop %v8315
        %v8320 = verf.f32.pop %v8316
        %v8321 = verf.f32.pop %v8317
        %v8322 = verf.f32.pop %v8318
        %v8323 = vadd.f32 %v8319, 1.0
        %v8324 = vadd.f32 %v8320, 1.0
        %v8325 = vadd.f32 %v8321, 1.0
        %v8326 = vadd.f32 %v8322, 1.0
        %v8327 = vmul.f32 %v8311, %v8323
        %v8328 = vmul.f32 %v8312, %v8324
        %v8329 = vmul.f32 %v8313, %v8325
        %v8330 = vmul.f32 %v8314, %v8326
        %v8331 = vadd.f32 %v8327, %v1846
        %v8332 = vadd.f32 %v8328, %v1847
        %v8333 = vadd.f32 %v8329, %v1848
        %v8334 = vadd.f32 %v8330, %v1849
        %8335 = vst [vmem:[%s1438] sm:$0xff] %v8331
        %8336 = vst [vmem:[%s1438 + $0x8] sm:$0xff] %v8332
        %8337 = vst [vmem:[%s1438 + $0x10] sm:$0xf] %v8333
        %8338 = vst [vmem:[%s1438 + $0x18] sm:$0xf] %v8334
        %p8339 = scmp.lt.s32.totalorder %s98, 1
        %s8340 = scalar_select %p8339, %s98, 1
        %s8341 = smul.addr %s8340, 4
        %s8342 = smul.addr %s8341, 8
        %s8343 = scalar_lea.vmem %s75, %s8342
        // Predicated region
        $region257: #{forward.1} parent=167 // pred_check
          %p8344 = pneg %p898
        $region258: #{forward.1} parent=167 // pred_check_branch
          %8346 = sbr.rel (%p8344) target = $region260
        $region259: #{forward.1} parent=167 // pred_region
          _
        $region260: #{forward.1} parent=167 // pred_fallthru
          _
      $region168: #{forward.1} parent=5 // pred_fallthru
        _
      %p8347 = scmp.le.s32.totalorder 2, %s93
      // Predicated region
      $region261: #{forward.1} parent=5 // pred_check
        %p8348 = pneg %p8347
      $region262: #{forward.1} parent=5 // pred_check_branch
        %8350 = sbr.rel (%p8348) target = $region264
      $region263: #{forward.1} parent=5 // pred_region
        %s8351 = ssub.s32 %s93, 2
        // Predicated region
        $region265: #{forward.1} parent=263 // pred_check
          %p8352 = pneg %p904
        $region266: #{forward.1} parent=263 // pred_check_branch
          %8354 = sbr.rel (%p8352) target = $region268
        $region267: #{forward.1} parent=263 // pred_region
          %p8355 = scmp.lt.s32.totalorder %s99, 1
          %s8356 = scalar_select %p8355, %s99, 1
          %s8357 = smul.addr %s8356, 4
          %s8358 = smul.addr %s8357, 8
          %s8359 = scalar_lea.vmem %s75, %s8358
        $region268: #{forward.1} parent=263 // pred_fallthru
          _
      $region264: #{forward.1} parent=5 // pred_fallthru
        _
    $region6: #{forward.1} parent=1 // loop_footer
      %s97 = sadd.s32 1, %s93
    $region7: #{forward.1} parent=1 // loop_footer_branch
      %92 = sbr.rel target = $region3
    $region8: #{forward.1} parent=1 // loop_exit
      _
    %8360 = vsyncpa [#allocation3], 1
    %s8361 = scalar_lea.sflag [#allocation3], 1
    %8362 = vsyncpa %s8361, 1
    %8363 = vsyncpa [#allocation5], 1
    %8364 = vsyncpa [#allocation8], 1
    %8365 = vsyncpa [#allocation11], 1
    %8366 = vsyncpa [#allocation14], 1
    %8367 = vsyncpa [#allocation17], 1
    %8368 = vsyncpa [#allocation20], 1
    %8369 = vsyncpa [#allocation23], 1
    %8370 = vsyncpa [#allocation26], 1
    %8371 = vsyncpa [#allocation29], 1
    %8372 = vsyncpa [#allocation32], 1
    %8373 = vsyncpa [#allocation35], 1

</llo_original>
